<compile_context>
chip_gen: v7x
topology: tpu7x:2x2x1
jax: 0.10.0
libtpu: 0.0.40
codegen_flags: <defaults>
</compile_context>

<pallas_src>
import functools

import jax
import jax.numpy as jnp
from jax import lax
from jax.experimental import pallas as pl
from jax.experimental.pallas import tpu as pltpu

IN_DIM = 768
OUT_DIM = 3072


def _round_up(x, m):
    return (x + m - 1) // m * m


def _ffn_kernel(x_ref, w_ref, b_ref, o_ref):
    # Single full-K MXU matmul (bf16 inputs, f32 accumulation).
    acc = jnp.dot(x_ref[...], w_ref[...], preferred_element_type=jnp.float32)
    h = acc + b_ref[...]  # bias already f32 in VMEM
    # Exact erf-gelu epilogue, once per output tile, in f32.
    g = h * 0.5 * (1.0 + lax.erf(h * 0.7071067811865475))
    o_ref[...] = g.astype(o_ref.dtype)


@functools.partial(jax.jit, static_argnames=("tm",))
def transformer_intermediate(hidden_states, w_t, bias, *, tm=256):
    """hidden_states: (..., 768); w_t: (768, 3072) (already W^T); bias: (3072,)."""
    orig_shape = hidden_states.shape
    out_dtype = hidden_states.dtype
    x = hidden_states.reshape(-1, IN_DIM)
    M, K = x.shape
    N = w_t.shape[1]

    # bf16 MXU inputs (halves HBM traffic for x and W); f32 bias.
    x = x.astype(jnp.bfloat16)
    w = w_t.astype(jnp.bfloat16)
    b2d = bias.reshape(1, N).astype(jnp.float32)

    # Row tiling: pad M so the grid divides evenly (padding sliced off after).
    tm_eff = min(tm, _round_up(M, 8))
    m_pad = _round_up(M, tm_eff)
    if m_pad != M:
        x = jnp.pad(x, ((0, m_pad - M), (0, 0)))

    out_bytes = m_pad * N * jnp.dtype(out_dtype).itemsize
    cost = pl.CostEstimate(
        flops=2 * m_pad * K * N,
        transcendentals=m_pad * N,
        bytes_accessed=m_pad * K * 2 + K * N * 2 + N * 4 + out_bytes,
    )

    out = pl.pallas_call(
        _ffn_kernel,
        out_shape=jax.ShapeDtypeStruct((m_pad, N), out_dtype),
        grid_spec=pltpu.PrefetchScalarGridSpec(
            num_scalar_prefetch=0,
            grid=(m_pad // tm_eff,),
            in_specs=[
                pl.BlockSpec((tm_eff, K), lambda i: (i, 0)),  # activation row tile
                pl.BlockSpec((K, N), lambda i: (0, 0)),       # W^T: VMEM-resident
                pl.BlockSpec((1, N), lambda i: (0, 0)),       # bias: VMEM-resident
            ],
            out_specs=pl.BlockSpec((tm_eff, N), lambda i: (i, 0)),
        ),
        compiler_params=pltpu.CompilerParams(
            dimension_semantics=("parallel",),
            vmem_limit_bytes=48 * 1024 * 1024,
        ),
        cost_estimate=cost,
    )(x, w, b2d)

    if m_pad != M:
        out = out[:M]
    return out.reshape(*orig_shape[:-1], N)


def _reference(hidden_states, w_t, bias):
    h = jnp.einsum(
        "...k,kn->...n",
        hidden_states.astype(jnp.float32),
        w_t.astype(jnp.float32),
    ) + bias.astype(jnp.float32)
    return h * 0.5 * (1.0 + lax.erf(h * 0.7071067811865475))


if __name__ == "__main__":
    key = jax.random.PRNGKey(0)
    k_x, k_w, k_b = jax.random.split(key, 3)

    batch, seq = 2, 8
    # Deterministic synthetic parameters (nn.Linear(768, 3072) shapes).
    # PyTorch weight is (3072, 768); we store its transpose (768, 3072).
    w_t = (jax.random.normal(k_w, (IN_DIM, OUT_DIM), jnp.float32)
           * (1.0 / jnp.sqrt(IN_DIM)))
    bias = jax.random.normal(k_b, (OUT_DIM,), jnp.float32) * 0.02

    hidden_states = jax.random.normal(k_x, (batch, seq, IN_DIM), jnp.float32)

    out = transformer_intermediate(hidden_states, w_t, bias)
    out = jax.block_until_ready(out)
    assert out.shape == (batch, seq, OUT_DIM), out.shape

    # Tight check vs a reference that uses the same bf16-quantized matmul
    # inputs (validates kernel logic independent of the bf16 cast).
    ref_q = _reference(
        hidden_states.astype(jnp.bfloat16).astype(jnp.float32),
        w_t.astype(jnp.bfloat16).astype(jnp.float32),
        bias,
    )
    assert jnp.allclose(out.astype(jnp.float32), ref_q, atol=2e-3, rtol=2e-3), \
        "mismatch vs bf16-input reference"

    # Loose check vs the exact f32 reference (bf16 MXU inputs -> ~0.4% rel err).
    ref = _reference(hidden_states, w_t, bias)
    assert jnp.allclose(out.astype(jnp.float32), ref, atol=3e-2, rtol=3e-2), \
        "mismatch vs exact f32 reference"

    print("KERNEL_OK")
</pallas_src>

<mosaic_0001>
module attributes {stable_mosaic.version = 11 : i64} {
  func.func @_ffn_kernel(%arg0: i32, %arg1: memref<16x768xbf16, #tpu.memory_space<vmem>>, %arg2: memref<768x3072xbf16, #tpu.memory_space<vmem>>, %arg3: memref<1x3072xf32, #tpu.memory_space<vmem>>, %arg4: memref<16x3072xf32, #tpu.memory_space<vmem>>) attributes {dimension_semantics = [#tpu.dimension_semantics<parallel>], iteration_bounds = array<i64: 1>, scalar_prefetch = 0 : i64, scratch_operands = 0 : i64, tpu.core_type = #tpu.core_type<tc>, window_params = [{transform_indices = @transform_0, window_bounds = array<i64: 16, 768>}, {pipeline_mode = #tpu.pipeline_mode<synchronous>, transform_indices = @transform_1, window_bounds = array<i64: 768, 3072>}, {pipeline_mode = #tpu.pipeline_mode<synchronous>, transform_indices = @transform_2, window_bounds = array<i64: 1, 3072>}, {transform_indices = @transform_3, window_bounds = array<i64: 16, 3072>}]} {
    %c0 = arith.constant 0 : index
    %c0_0 = arith.constant 0 : index
    %0 = vector.load %arg1[%c0, %c0_0] : memref<16x768xbf16, #tpu.memory_space<vmem>>, vector<16x768xbf16>
    %c0_1 = arith.constant 0 : index
    %c0_2 = arith.constant 0 : index
    %1 = vector.load %arg2[%c0_1, %c0_2] : memref<768x3072xbf16, #tpu.memory_space<vmem>>, vector<768x3072xbf16>
    %cst = arith.constant dense<0.000000e+00> : vector<16x3072xf32>
    %2 = tpu.matmul %0, %1, %cst {dimension_numbers = #tpu.dot_dimension_numbers<[1], [0], [0], [1], [0, 0, 1, 1], [], []>} : vector<16x768xbf16>, vector<768x3072xbf16>, vector<16x3072xf32> -> vector<16x3072xf32>
    %c0_3 = arith.constant 0 : index
    %c0_4 = arith.constant 0 : index
    %3 = vector.load %arg3[%c0_3, %c0_4] : memref<1x3072xf32, #tpu.memory_space<vmem>>, vector<1x3072xf32>
    %4 = vector.broadcast %3 : vector<1x3072xf32> to vector<16x3072xf32>
    %5 = arith.addf %2, %4 : vector<16x3072xf32>
    %cst_5 = arith.constant 5.000000e-01 : f32
    %6 = vector.broadcast %cst_5 : f32 to vector<16x3072xf32>
    %7 = arith.mulf %5, %6 : vector<16x3072xf32>
    %cst_6 = arith.constant 0.707106769 : f32
    %8 = vector.broadcast %cst_6 : f32 to vector<16x3072xf32>
    %9 = arith.mulf %5, %8 : vector<16x3072xf32>
    %10 = math.erf %9 : vector<16x3072xf32>
    %cst_7 = arith.constant 1.000000e+00 : f32
    %11 = vector.broadcast %cst_7 : f32 to vector<16x3072xf32>
    %12 = arith.addf %11, %10 : vector<16x3072xf32>
    %13 = arith.mulf %7, %12 : vector<16x3072xf32>
    %c0_8 = arith.constant 0 : index
    %c0_9 = arith.constant 0 : index
    %14 = vector.load %arg4[%c0_8, %c0_9] : memref<16x3072xf32, #tpu.memory_space<vmem>>, vector<16x3072xf32>
    tpu.vector_store %arg4[%c0_8, %c0_9], %13 {strides = array<i32>} : memref<16x3072xf32, #tpu.memory_space<vmem>>, vector<16x3072xf32>,
    return
  }
  func.func @transform_0(%arg0: i32) -> (i32, i32) {
    %c0_i32 = arith.constant 0 : i32
    %c0_i32_0 = arith.constant 0 : i32
    return %arg0, %c0_i32 : i32, i32
  }
  func.func @transform_1(%arg0: i32) -> (i32, i32) {
    %c0_i32 = arith.constant 0 : i32
    %c0_i32_0 = arith.constant 0 : i32
    %c0_i32_1 = arith.constant 0 : i32
    return %c0_i32, %c0_i32_0 : i32, i32
  }
  func.func @transform_2(%arg0: i32) -> (i32, i32) {
    %c0_i32 = arith.constant 0 : i32
    %c0_i32_0 = arith.constant 0 : i32
    %c0_i32_1 = arith.constant 0 : i32
    return %c0_i32, %c0_i32_0 : i32, i32
  }
  func.func @transform_3(%arg0: i32) -> (i32, i32) {
    %c0_i32 = arith.constant 0 : i32
    %c0_i32_0 = arith.constant 0 : i32
    return %arg0, %c0_i32 : i32, i32
  }
}

</mosaic_0001>

<llo_original>
// kernel: transformer_intermediate.1
$region0: #{transformer_intermediate.1}
  #allocation0 [shape = 'u32[]', space=smem, size = 0x4, offset = 0x4, fixed_abs, tag = 'smem constant byte address 0x4 - core index']
  #allocation1 [shape = 'u32[144,128]{1,0:T(1,128)}', space=vmem, size = 0x12000, scoped, tag = 'internal scratch']
  %s0 = inlined_call_operand.vmem [shape: bf16[16,768], index: 0, kind: input, shape index: {}]
  %s1 = inlined_call_operand.vmem [shape: bf16[768,3072], index: 1, kind: input, shape index: {}]
  %s2 = inlined_call_operand.vmem [shape: f32[1,3072], index: 2, kind: input, shape index: {}]
  %s3 = inlined_call_operand.hbm [shape: f32[16,3072], index: 3, kind: output, shape index: {}]
  %s4 = sld [smem:[#allocation0]]
  $region22: #{transformer_intermediate.1} parent=0
    _
  %s6 = ssub.s32 1, %s4
  %s7 = scalar_select 0, %s6, %s4
  $region1: #{transformer_intermediate.1} parent=0
    #allocation2 [shape = 'u8[196608]{0}', space=vmem, size = 0x30000, scoped, tag = 'output window, operand 0, single buffered']
    #allocation3 [shape = 's32[1]{0}', space=sflag, size = 0x4, scoped, tag = 'scoped memory for transformer_intermediate.1']
    %8 = vsyncpa [#allocation3], 0
    // Predicated region
    $region2: #{transformer_intermediate.1} parent=1 // pred_check
      _
    $region3: #{transformer_intermediate.1} parent=1 // pred_check_branch
      %10 = sbr.rel (0) target = $region5
    $region4: #{transformer_intermediate.1} parent=1 // pred_region
      _
    $region5: #{transformer_intermediate.1} parent=1 // pred_fallthru
      _
    // Predicated region
    $region6: #{transformer_intermediate.1} parent=1 // pred_check
      _
    $region7: #{transformer_intermediate.1} parent=1 // pred_check_branch
      %12 = sbr.rel (0) target = $region9
    $region8: #{transformer_intermediate.1} parent=1 // pred_region
      _
    $region9: #{transformer_intermediate.1} parent=1 // pred_fallthru
      _
    // Predicated region
    $region10: #{transformer_intermediate.1} parent=1 // pred_check
      _
    $region11: #{transformer_intermediate.1} parent=1 // pred_check_branch
      %14 = sbr.rel (0) target = $region13
    $region12: #{transformer_intermediate.1} parent=1 // pred_region
      _
    $region13: #{transformer_intermediate.1} parent=1 // pred_fallthru
      _
    %v15 = vld [vmem:[%s0] sm:$0xff]
    %v16 = vld [vmem:[%s0 + $0x8] sm:$0xff]
    %v17 = vld [vmem:[%s0 + $0x10] sm:$0xff]
    %v18 = vld [vmem:[%s0 + $0x18] sm:$0xff]
    %v19 = vld [vmem:[%s0 + $0x20] sm:$0xff]
    %v20 = vld [vmem:[%s0 + $0x28] sm:$0xff]
    %v21 = vld [vmem:[%s1] sm:$0xff]
    %v22 = vld [vmem:[%s1 + $0x8] sm:$0xff]
    %v23 = vld [vmem:[%s1 + $0x10] sm:$0xff]
    %v24 = vld [vmem:[%s1 + $0x18] sm:$0xff]
    %v25 = vld [vmem:[%s1 + $0x20] sm:$0xff]
    %v26 = vld [vmem:[%s1 + $0x28] sm:$0xff]
    %v27 = vld [vmem:[%s1 + $0x30] sm:$0xff]
    %v28 = vld [vmem:[%s1 + $0x38] sm:$0xff]
    %v29 = vld [vmem:[%s1 + $0x40] sm:$0xff]
    %v30 = vld [vmem:[%s1 + $0x48] sm:$0xff]
    %v31 = vld [vmem:[%s1 + $0x50] sm:$0xff]
    %v32 = vld [vmem:[%s1 + $0x58] sm:$0xff]
    %v33 = vld [vmem:[%s1 + $0x60] sm:$0xff]
    %v34 = vld [vmem:[%s1 + $0x68] sm:$0xff]
    %v35 = vld [vmem:[%s1 + $0x70] sm:$0xff]
    %v36 = vld [vmem:[%s1 + $0x78] sm:$0xff]
    %v37 = vld [vmem:[%s1 + $0x80] sm:$0xff]
    %v38 = vld [vmem:[%s1 + $0x88] sm:$0xff]
    %v39 = vld [vmem:[%s1 + $0x90] sm:$0xff]
    %v40 = vld [vmem:[%s1 + $0x98] sm:$0xff]
    %v41 = vld [vmem:[%s1 + $0xa0] sm:$0xff]
    %v42 = vld [vmem:[%s1 + $0xa8] sm:$0xff]
    %v43 = vld [vmem:[%s1 + $0xb0] sm:$0xff]
    %v44 = vld [vmem:[%s1 + $0xb8] sm:$0xff]
    %v45 = vld [vmem:[%s1 + $0xc0] sm:$0xff]
    %v46 = vld [vmem:[%s1 + $0xc8] sm:$0xff]
    %v47 = vld [vmem:[%s1 + $0xd0] sm:$0xff]
    %v48 = vld [vmem:[%s1 + $0xd8] sm:$0xff]
    %v49 = vld [vmem:[%s1 + $0xe0] sm:$0xff]
    %v50 = vld [vmem:[%s1 + $0xe8] sm:$0xff]
    %v51 = vld [vmem:[%s1 + $0xf0] sm:$0xff]
    %v52 = vld [vmem:[%s1 + $0xf8] sm:$0xff]
    %v53 = vld [vmem:[%s1 + $0x100] sm:$0xff]
    %v54 = vld [vmem:[%s1 + $0x108] sm:$0xff]
    %v55 = vld [vmem:[%s1 + $0x110] sm:$0xff]
    %v56 = vld [vmem:[%s1 + $0x118] sm:$0xff]
    %v57 = vld [vmem:[%s1 + $0x120] sm:$0xff]
    %v58 = vld [vmem:[%s1 + $0x128] sm:$0xff]
    %v59 = vld [vmem:[%s1 + $0x130] sm:$0xff]
    %v60 = vld [vmem:[%s1 + $0x138] sm:$0xff]
    %v61 = vld [vmem:[%s1 + $0x140] sm:$0xff]
    %v62 = vld [vmem:[%s1 + $0x148] sm:$0xff]
    %v63 = vld [vmem:[%s1 + $0x150] sm:$0xff]
    %v64 = vld [vmem:[%s1 + $0x158] sm:$0xff]
    %v65 = vld [vmem:[%s1 + $0x160] sm:$0xff]
    %v66 = vld [vmem:[%s1 + $0x168] sm:$0xff]
    %v67 = vld [vmem:[%s1 + $0x170] sm:$0xff]
    %v68 = vld [vmem:[%s1 + $0x178] sm:$0xff]
    %v69 = vld [vmem:[%s1 + $0x180] sm:$0xff]
    %v70 = vld [vmem:[%s1 + $0x188] sm:$0xff]
    %v71 = vld [vmem:[%s1 + $0x190] sm:$0xff]
    %v72 = vld [vmem:[%s1 + $0x198] sm:$0xff]
    %v73 = vld [vmem:[%s1 + $0x1a0] sm:$0xff]
    %v74 = vld [vmem:[%s1 + $0x1a8] sm:$0xff]
    %v75 = vld [vmem:[%s1 + $0x1b0] sm:$0xff]
    %v76 = vld [vmem:[%s1 + $0x1b8] sm:$0xff]
    %v77 = vld [vmem:[%s1 + $0x1c0] sm:$0xff]
    %v78 = vld [vmem:[%s1 + $0x1c8] sm:$0xff]
    %v79 = vld [vmem:[%s1 + $0x1d0] sm:$0xff]
    %v80 = vld [vmem:[%s1 + $0x1d8] sm:$0xff]
    %v81 = vld [vmem:[%s1 + $0x1e0] sm:$0xff]
    %v82 = vld [vmem:[%s1 + $0x1e8] sm:$0xff]
    %v83 = vld [vmem:[%s1 + $0x1f0] sm:$0xff]
    %v84 = vld [vmem:[%s1 + $0x1f8] sm:$0xff]
    %v85 = vld [vmem:[%s1 + $0x200] sm:$0xff]
    %v86 = vld [vmem:[%s1 + $0x208] sm:$0xff]
    %v87 = vld [vmem:[%s1 + $0x210] sm:$0xff]
    %v88 = vld [vmem:[%s1 + $0x218] sm:$0xff]
    %v89 = vld [vmem:[%s1 + $0x220] sm:$0xff]
    %v90 = vld [vmem:[%s1 + $0x228] sm:$0xff]
    %v91 = vld [vmem:[%s1 + $0x230] sm:$0xff]
    %v92 = vld [vmem:[%s1 + $0x238] sm:$0xff]
    %v93 = vld [vmem:[%s1 + $0x240] sm:$0xff]
    %v94 = vld [vmem:[%s1 + $0x248] sm:$0xff]
    %v95 = vld [vmem:[%s1 + $0x250] sm:$0xff]
    %v96 = vld [vmem:[%s1 + $0x258] sm:$0xff]
    %v97 = vld [vmem:[%s1 + $0x260] sm:$0xff]
    %v98 = vld [vmem:[%s1 + $0x268] sm:$0xff]
    %v99 = vld [vmem:[%s1 + $0x270] sm:$0xff]
    %v100 = vld [vmem:[%s1 + $0x278] sm:$0xff]
    %v101 = vld [vmem:[%s1 + $0x280] sm:$0xff]
    %v102 = vld [vmem:[%s1 + $0x288] sm:$0xff]
    %v103 = vld [vmem:[%s1 + $0x290] sm:$0xff]
    %v104 = vld [vmem:[%s1 + $0x298] sm:$0xff]
    %v105 = vld [vmem:[%s1 + $0x2a0] sm:$0xff]
    %v106 = vld [vmem:[%s1 + $0x2a8] sm:$0xff]
    %v107 = vld [vmem:[%s1 + $0x2b0] sm:$0xff]
    %v108 = vld [vmem:[%s1 + $0x2b8] sm:$0xff]
    %v109 = vld [vmem:[%s1 + $0x2c0] sm:$0xff]
    %v110 = vld [vmem:[%s1 + $0x2c8] sm:$0xff]
    %v111 = vld [vmem:[%s1 + $0x2d0] sm:$0xff]
    %v112 = vld [vmem:[%s1 + $0x2d8] sm:$0xff]
    %v113 = vld [vmem:[%s1 + $0x2e0] sm:$0xff]
    %v114 = vld [vmem:[%s1 + $0x2e8] sm:$0xff]
    %v115 = vld [vmem:[%s1 + $0x2f0] sm:$0xff]
    %v116 = vld [vmem:[%s1 + $0x2f8] sm:$0xff]
    %v117 = vld [vmem:[%s1 + $0x300] sm:$0xff]
    %v118 = vld [vmem:[%s1 + $0x308] sm:$0xff]
    %v119 = vld [vmem:[%s1 + $0x310] sm:$0xff]
    %v120 = vld [vmem:[%s1 + $0x318] sm:$0xff]
    %v121 = vld [vmem:[%s1 + $0x320] sm:$0xff]
    %v122 = vld [vmem:[%s1 + $0x328] sm:$0xff]
    %v123 = vld [vmem:[%s1 + $0x330] sm:$0xff]
    %v124 = vld [vmem:[%s1 + $0x338] sm:$0xff]
    %v125 = vld [vmem:[%s1 + $0x340] sm:$0xff]
    %v126 = vld [vmem:[%s1 + $0x348] sm:$0xff]
    %v127 = vld [vmem:[%s1 + $0x350] sm:$0xff]
    %v128 = vld [vmem:[%s1 + $0x358] sm:$0xff]
    %v129 = vld [vmem:[%s1 + $0x360] sm:$0xff]
    %v130 = vld [vmem:[%s1 + $0x368] sm:$0xff]
    %v131 = vld [vmem:[%s1 + $0x370] sm:$0xff]
    %v132 = vld [vmem:[%s1 + $0x378] sm:$0xff]
    %v133 = vld [vmem:[%s1 + $0x380] sm:$0xff]
    %v134 = vld [vmem:[%s1 + $0x388] sm:$0xff]
    %v135 = vld [vmem:[%s1 + $0x390] sm:$0xff]
    %v136 = vld [vmem:[%s1 + $0x398] sm:$0xff]
    %v137 = vld [vmem:[%s1 + $0x3a0] sm:$0xff]
    %v138 = vld [vmem:[%s1 + $0x3a8] sm:$0xff]
    %v139 = vld [vmem:[%s1 + $0x3b0] sm:$0xff]
    %v140 = vld [vmem:[%s1 + $0x3b8] sm:$0xff]
    %v141 = vld [vmem:[%s1 + $0x3c0] sm:$0xff]
    %v142 = vld [vmem:[%s1 + $0x3c8] sm:$0xff]
    %v143 = vld [vmem:[%s1 + $0x3d0] sm:$0xff]
    %v144 = vld [vmem:[%s1 + $0x3d8] sm:$0xff]
    %v145 = vld [vmem:[%s1 + $0x3e0] sm:$0xff]
    %v146 = vld [vmem:[%s1 + $0x3e8] sm:$0xff]
    %v147 = vld [vmem:[%s1 + $0x3f0] sm:$0xff]
    %v148 = vld [vmem:[%s1 + $0x3f8] sm:$0xff]
    %v149 = vld [vmem:[%s1 + $0x400] sm:$0xff]
    %v150 = vld [vmem:[%s1 + $0x408] sm:$0xff]
    %v151 = vld [vmem:[%s1 + $0x410] sm:$0xff]
    %v152 = vld [vmem:[%s1 + $0x418] sm:$0xff]
    %v153 = vld [vmem:[%s1 + $0x420] sm:$0xff]
    %v154 = vld [vmem:[%s1 + $0x428] sm:$0xff]
    %v155 = vld [vmem:[%s1 + $0x430] sm:$0xff]
    %v156 = vld [vmem:[%s1 + $0x438] sm:$0xff]
    %v157 = vld [vmem:[%s1 + $0x440] sm:$0xff]
    %v158 = vld [vmem:[%s1 + $0x448] sm:$0xff]
    %v159 = vld [vmem:[%s1 + $0x450] sm:$0xff]
    %v160 = vld [vmem:[%s1 + $0x458] sm:$0xff]
    %v161 = vld [vmem:[%s1 + $0x460] sm:$0xff]
    %v162 = vld [vmem:[%s1 + $0x468] sm:$0xff]
    %v163 = vld [vmem:[%s1 + $0x470] sm:$0xff]
    %v164 = vld [vmem:[%s1 + $0x478] sm:$0xff]
    %v165 = vld [vmem:[%s1 + $0x480] sm:$0xff]
    %v166 = vld [vmem:[%s1 + $0x488] sm:$0xff]
    %v167 = vld [vmem:[%s1 + $0x490] sm:$0xff]
    %v168 = vld [vmem:[%s1 + $0x498] sm:$0xff]
    %v169 = vld [vmem:[%s1 + $0x4a0] sm:$0xff]
    %v170 = vld [vmem:[%s1 + $0x4a8] sm:$0xff]
    %v171 = vld [vmem:[%s1 + $0x4b0] sm:$0xff]
    %v172 = vld [vmem:[%s1 + $0x4b8] sm:$0xff]
    %v173 = vld [vmem:[%s1 + $0x4c0] sm:$0xff]
    %v174 = vld [vmem:[%s1 + $0x4c8] sm:$0xff]
    %v175 = vld [vmem:[%s1 + $0x4d0] sm:$0xff]
    %v176 = vld [vmem:[%s1 + $0x4d8] sm:$0xff]
    %v177 = vld [vmem:[%s1 + $0x4e0] sm:$0xff]
    %v178 = vld [vmem:[%s1 + $0x4e8] sm:$0xff]
    %v179 = vld [vmem:[%s1 + $0x4f0] sm:$0xff]
    %v180 = vld [vmem:[%s1 + $0x4f8] sm:$0xff]
    %v181 = vld [vmem:[%s1 + $0x500] sm:$0xff]
    %v182 = vld [vmem:[%s1 + $0x508] sm:$0xff]
    %v183 = vld [vmem:[%s1 + $0x510] sm:$0xff]
    %v184 = vld [vmem:[%s1 + $0x518] sm:$0xff]
    %v185 = vld [vmem:[%s1 + $0x520] sm:$0xff]
    %v186 = vld [vmem:[%s1 + $0x528] sm:$0xff]
    %v187 = vld [vmem:[%s1 + $0x530] sm:$0xff]
    %v188 = vld [vmem:[%s1 + $0x538] sm:$0xff]
    %v189 = vld [vmem:[%s1 + $0x540] sm:$0xff]
    %v190 = vld [vmem:[%s1 + $0x548] sm:$0xff]
    %v191 = vld [vmem:[%s1 + $0x550] sm:$0xff]
    %v192 = vld [vmem:[%s1 + $0x558] sm:$0xff]
    %v193 = vld [vmem:[%s1 + $0x560] sm:$0xff]
    %v194 = vld [vmem:[%s1 + $0x568] sm:$0xff]
    %v195 = vld [vmem:[%s1 + $0x570] sm:$0xff]
    %v196 = vld [vmem:[%s1 + $0x578] sm:$0xff]
    %v197 = vld [vmem:[%s1 + $0x580] sm:$0xff]
    %v198 = vld [vmem:[%s1 + $0x588] sm:$0xff]
    %v199 = vld [vmem:[%s1 + $0x590] sm:$0xff]
    %v200 = vld [vmem:[%s1 + $0x598] sm:$0xff]
    %v201 = vld [vmem:[%s1 + $0x5a0] sm:$0xff]
    %v202 = vld [vmem:[%s1 + $0x5a8] sm:$0xff]
    %v203 = vld [vmem:[%s1 + $0x5b0] sm:$0xff]
    %v204 = vld [vmem:[%s1 + $0x5b8] sm:$0xff]
    %v205 = vld [vmem:[%s1 + $0x5c0] sm:$0xff]
    %v206 = vld [vmem:[%s1 + $0x5c8] sm:$0xff]
    %v207 = vld [vmem:[%s1 + $0x5d0] sm:$0xff]
    %v208 = vld [vmem:[%s1 + $0x5d8] sm:$0xff]
    %v209 = vld [vmem:[%s1 + $0x5e0] sm:$0xff]
    %v210 = vld [vmem:[%s1 + $0x5e8] sm:$0xff]
    %v211 = vld [vmem:[%s1 + $0x5f0] sm:$0xff]
    %v212 = vld [vmem:[%s1 + $0x5f8] sm:$0xff]
    %v213 = vld [vmem:[%s1 + $0x600] sm:$0xff]
    %v214 = vld [vmem:[%s1 + $0x608] sm:$0xff]
    %v215 = vld [vmem:[%s1 + $0x610] sm:$0xff]
    %v216 = vld [vmem:[%s1 + $0x618] sm:$0xff]
    %v217 = vld [vmem:[%s1 + $0x620] sm:$0xff]
    %v218 = vld [vmem:[%s1 + $0x628] sm:$0xff]
    %v219 = vld [vmem:[%s1 + $0x630] sm:$0xff]
    %v220 = vld [vmem:[%s1 + $0x638] sm:$0xff]
    %v221 = vld [vmem:[%s1 + $0x640] sm:$0xff]
    %v222 = vld [vmem:[%s1 + $0x648] sm:$0xff]
    %v223 = vld [vmem:[%s1 + $0x650] sm:$0xff]
    %v224 = vld [vmem:[%s1 + $0x658] sm:$0xff]
    %v225 = vld [vmem:[%s1 + $0x660] sm:$0xff]
    %v226 = vld [vmem:[%s1 + $0x668] sm:$0xff]
    %v227 = vld [vmem:[%s1 + $0x670] sm:$0xff]
    %v228 = vld [vmem:[%s1 + $0x678] sm:$0xff]
    %v229 = vld [vmem:[%s1 + $0x680] sm:$0xff]
    %v230 = vld [vmem:[%s1 + $0x688] sm:$0xff]
    %v231 = vld [vmem:[%s1 + $0x690] sm:$0xff]
    %v232 = vld [vmem:[%s1 + $0x698] sm:$0xff]
    %v233 = vld [vmem:[%s1 + $0x6a0] sm:$0xff]
    %v234 = vld [vmem:[%s1 + $0x6a8] sm:$0xff]
    %v235 = vld [vmem:[%s1 + $0x6b0] sm:$0xff]
    %v236 = vld [vmem:[%s1 + $0x6b8] sm:$0xff]
    %v237 = vld [vmem:[%s1 + $0x6c0] sm:$0xff]
    %v238 = vld [vmem:[%s1 + $0x6c8] sm:$0xff]
    %v239 = vld [vmem:[%s1 + $0x6d0] sm:$0xff]
    %v240 = vld [vmem:[%s1 + $0x6d8] sm:$0xff]
    %v241 = vld [vmem:[%s1 + $0x6e0] sm:$0xff]
    %v242 = vld [vmem:[%s1 + $0x6e8] sm:$0xff]
    %v243 = vld [vmem:[%s1 + $0x6f0] sm:$0xff]
    %v244 = vld [vmem:[%s1 + $0x6f8] sm:$0xff]
    %v245 = vld [vmem:[%s1 + $0x700] sm:$0xff]
    %v246 = vld [vmem:[%s1 + $0x708] sm:$0xff]
    %v247 = vld [vmem:[%s1 + $0x710] sm:$0xff]
    %v248 = vld [vmem:[%s1 + $0x718] sm:$0xff]
    %v249 = vld [vmem:[%s1 + $0x720] sm:$0xff]
    %v250 = vld [vmem:[%s1 + $0x728] sm:$0xff]
    %v251 = vld [vmem:[%s1 + $0x730] sm:$0xff]
    %v252 = vld [vmem:[%s1 + $0x738] sm:$0xff]
    %v253 = vld [vmem:[%s1 + $0x740] sm:$0xff]
    %v254 = vld [vmem:[%s1 + $0x748] sm:$0xff]
    %v255 = vld [vmem:[%s1 + $0x750] sm:$0xff]
    %v256 = vld [vmem:[%s1 + $0x758] sm:$0xff]
    %v257 = vld [vmem:[%s1 + $0x760] sm:$0xff]
    %v258 = vld [vmem:[%s1 + $0x768] sm:$0xff]
    %v259 = vld [vmem:[%s1 + $0x770] sm:$0xff]
    %v260 = vld [vmem:[%s1 + $0x778] sm:$0xff]
    %v261 = vld [vmem:[%s1 + $0x780] sm:$0xff]
    %v262 = vld [vmem:[%s1 + $0x788] sm:$0xff]
    %v263 = vld [vmem:[%s1 + $0x790] sm:$0xff]
    %v264 = vld [vmem:[%s1 + $0x798] sm:$0xff]
    %v265 = vld [vmem:[%s1 + $0x7a0] sm:$0xff]
    %v266 = vld [vmem:[%s1 + $0x7a8] sm:$0xff]
    %v267 = vld [vmem:[%s1 + $0x7b0] sm:$0xff]
    %v268 = vld [vmem:[%s1 + $0x7b8] sm:$0xff]
    %v269 = vld [vmem:[%s1 + $0x7c0] sm:$0xff]
    %v270 = vld [vmem:[%s1 + $0x7c8] sm:$0xff]
    %v271 = vld [vmem:[%s1 + $0x7d0] sm:$0xff]
    %v272 = vld [vmem:[%s1 + $0x7d8] sm:$0xff]
    %v273 = vld [vmem:[%s1 + $0x7e0] sm:$0xff]
    %v274 = vld [vmem:[%s1 + $0x7e8] sm:$0xff]
    %v275 = vld [vmem:[%s1 + $0x7f0] sm:$0xff]
    %v276 = vld [vmem:[%s1 + $0x7f8] sm:$0xff]
    %v277 = vld [vmem:[%s1 + $0x800] sm:$0xff]
    %v278 = vld [vmem:[%s1 + $0x808] sm:$0xff]
    %v279 = vld [vmem:[%s1 + $0x810] sm:$0xff]
    %v280 = vld [vmem:[%s1 + $0x818] sm:$0xff]
    %v281 = vld [vmem:[%s1 + $0x820] sm:$0xff]
    %v282 = vld [vmem:[%s1 + $0x828] sm:$0xff]
    %v283 = vld [vmem:[%s1 + $0x830] sm:$0xff]
    %v284 = vld [vmem:[%s1 + $0x838] sm:$0xff]
    %v285 = vld [vmem:[%s1 + $0x840] sm:$0xff]
    %v286 = vld [vmem:[%s1 + $0x848] sm:$0xff]
    %v287 = vld [vmem:[%s1 + $0x850] sm:$0xff]
    %v288 = vld [vmem:[%s1 + $0x858] sm:$0xff]
    %v289 = vld [vmem:[%s1 + $0x860] sm:$0xff]
    %v290 = vld [vmem:[%s1 + $0x868] sm:$0xff]
    %v291 = vld [vmem:[%s1 + $0x870] sm:$0xff]
    %v292 = vld [vmem:[%s1 + $0x878] sm:$0xff]
    %v293 = vld [vmem:[%s1 + $0x880] sm:$0xff]
    %v294 = vld [vmem:[%s1 + $0x888] sm:$0xff]
    %v295 = vld [vmem:[%s1 + $0x890] sm:$0xff]
    %v296 = vld [vmem:[%s1 + $0x898] sm:$0xff]
    %v297 = vld [vmem:[%s1 + $0x8a0] sm:$0xff]
    %v298 = vld [vmem:[%s1 + $0x8a8] sm:$0xff]
    %v299 = vld [vmem:[%s1 + $0x8b0] sm:$0xff]
    %v300 = vld [vmem:[%s1 + $0x8b8] sm:$0xff]
    %v301 = vld [vmem:[%s1 + $0x8c0] sm:$0xff]
    %v302 = vld [vmem:[%s1 + $0x8c8] sm:$0xff]
    %v303 = vld [vmem:[%s1 + $0x8d0] sm:$0xff]
    %v304 = vld [vmem:[%s1 + $0x8d8] sm:$0xff]
    %v305 = vld [vmem:[%s1 + $0x8e0] sm:$0xff]
    %v306 = vld [vmem:[%s1 + $0x8e8] sm:$0xff]
    %v307 = vld [vmem:[%s1 + $0x8f0] sm:$0xff]
    %v308 = vld [vmem:[%s1 + $0x8f8] sm:$0xff]
    %v309 = vld [vmem:[%s1 + $0x900] sm:$0xff]
    %v310 = vld [vmem:[%s1 + $0x908] sm:$0xff]
    %v311 = vld [vmem:[%s1 + $0x910] sm:$0xff]
    %v312 = vld [vmem:[%s1 + $0x918] sm:$0xff]
    %v313 = vld [vmem:[%s1 + $0x920] sm:$0xff]
    %v314 = vld [vmem:[%s1 + $0x928] sm:$0xff]
    %v315 = vld [vmem:[%s1 + $0x930] sm:$0xff]
    %v316 = vld [vmem:[%s1 + $0x938] sm:$0xff]
    %v317 = vld [vmem:[%s1 + $0x940] sm:$0xff]
    %v318 = vld [vmem:[%s1 + $0x948] sm:$0xff]
    %v319 = vld [vmem:[%s1 + $0x950] sm:$0xff]
    %v320 = vld [vmem:[%s1 + $0x958] sm:$0xff]
    %v321 = vld [vmem:[%s1 + $0x960] sm:$0xff]
    %v322 = vld [vmem:[%s1 + $0x968] sm:$0xff]
    %v323 = vld [vmem:[%s1 + $0x970] sm:$0xff]
    %v324 = vld [vmem:[%s1 + $0x978] sm:$0xff]
    %v325 = vld [vmem:[%s1 + $0x980] sm:$0xff]
    %v326 = vld [vmem:[%s1 + $0x988] sm:$0xff]
    %v327 = vld [vmem:[%s1 + $0x990] sm:$0xff]
    %v328 = vld [vmem:[%s1 + $0x998] sm:$0xff]
    %v329 = vld [vmem:[%s1 + $0x9a0] sm:$0xff]
    %v330 = vld [vmem:[%s1 + $0x9a8] sm:$0xff]
    %v331 = vld [vmem:[%s1 + $0x9b0] sm:$0xff]
    %v332 = vld [vmem:[%s1 + $0x9b8] sm:$0xff]
    %v333 = vld [vmem:[%s1 + $0x9c0] sm:$0xff]
    %v334 = vld [vmem:[%s1 + $0x9c8] sm:$0xff]
    %v335 = vld [vmem:[%s1 + $0x9d0] sm:$0xff]
    %v336 = vld [vmem:[%s1 + $0x9d8] sm:$0xff]
    %v337 = vld [vmem:[%s1 + $0x9e0] sm:$0xff]
    %v338 = vld [vmem:[%s1 + $0x9e8] sm:$0xff]
    %v339 = vld [vmem:[%s1 + $0x9f0] sm:$0xff]
    %v340 = vld [vmem:[%s1 + $0x9f8] sm:$0xff]
    %v341 = vld [vmem:[%s1 + $0xa00] sm:$0xff]
    %v342 = vld [vmem:[%s1 + $0xa08] sm:$0xff]
    %v343 = vld [vmem:[%s1 + $0xa10] sm:$0xff]
    %v344 = vld [vmem:[%s1 + $0xa18] sm:$0xff]
    %v345 = vld [vmem:[%s1 + $0xa20] sm:$0xff]
    %v346 = vld [vmem:[%s1 + $0xa28] sm:$0xff]
    %v347 = vld [vmem:[%s1 + $0xa30] sm:$0xff]
    %v348 = vld [vmem:[%s1 + $0xa38] sm:$0xff]
    %v349 = vld [vmem:[%s1 + $0xa40] sm:$0xff]
    %v350 = vld [vmem:[%s1 + $0xa48] sm:$0xff]
    %v351 = vld [vmem:[%s1 + $0xa50] sm:$0xff]
    %v352 = vld [vmem:[%s1 + $0xa58] sm:$0xff]
    %v353 = vld [vmem:[%s1 + $0xa60] sm:$0xff]
    %v354 = vld [vmem:[%s1 + $0xa68] sm:$0xff]
    %v355 = vld [vmem:[%s1 + $0xa70] sm:$0xff]
    %v356 = vld [vmem:[%s1 + $0xa78] sm:$0xff]
    %v357 = vld [vmem:[%s1 + $0xa80] sm:$0xff]
    %v358 = vld [vmem:[%s1 + $0xa88] sm:$0xff]
    %v359 = vld [vmem:[%s1 + $0xa90] sm:$0xff]
    %v360 = vld [vmem:[%s1 + $0xa98] sm:$0xff]
    %v361 = vld [vmem:[%s1 + $0xaa0] sm:$0xff]
    %v362 = vld [vmem:[%s1 + $0xaa8] sm:$0xff]
    %v363 = vld [vmem:[%s1 + $0xab0] sm:$0xff]
    %v364 = vld [vmem:[%s1 + $0xab8] sm:$0xff]
    %v365 = vld [vmem:[%s1 + $0xac0] sm:$0xff]
    %v366 = vld [vmem:[%s1 + $0xac8] sm:$0xff]
    %v367 = vld [vmem:[%s1 + $0xad0] sm:$0xff]
    %v368 = vld [vmem:[%s1 + $0xad8] sm:$0xff]
    %v369 = vld [vmem:[%s1 + $0xae0] sm:$0xff]
    %v370 = vld [vmem:[%s1 + $0xae8] sm:$0xff]
    %v371 = vld [vmem:[%s1 + $0xaf0] sm:$0xff]
    %v372 = vld [vmem:[%s1 + $0xaf8] sm:$0xff]
    %v373 = vld [vmem:[%s1 + $0xb00] sm:$0xff]
    %v374 = vld [vmem:[%s1 + $0xb08] sm:$0xff]
    %v375 = vld [vmem:[%s1 + $0xb10] sm:$0xff]
    %v376 = vld [vmem:[%s1 + $0xb18] sm:$0xff]
    %v377 = vld [vmem:[%s1 + $0xb20] sm:$0xff]
    %v378 = vld [vmem:[%s1 + $0xb28] sm:$0xff]
    %v379 = vld [vmem:[%s1 + $0xb30] sm:$0xff]
    %v380 = vld [vmem:[%s1 + $0xb38] sm:$0xff]
    %v381 = vld [vmem:[%s1 + $0xb40] sm:$0xff]
    %v382 = vld [vmem:[%s1 + $0xb48] sm:$0xff]
    %v383 = vld [vmem:[%s1 + $0xb50] sm:$0xff]
    %v384 = vld [vmem:[%s1 + $0xb58] sm:$0xff]
    %v385 = vld [vmem:[%s1 + $0xb60] sm:$0xff]
    %v386 = vld [vmem:[%s1 + $0xb68] sm:$0xff]
    %v387 = vld [vmem:[%s1 + $0xb70] sm:$0xff]
    %v388 = vld [vmem:[%s1 + $0xb78] sm:$0xff]
    %v389 = vld [vmem:[%s1 + $0xb80] sm:$0xff]
    %v390 = vld [vmem:[%s1 + $0xb88] sm:$0xff]
    %v391 = vld [vmem:[%s1 + $0xb90] sm:$0xff]
    %v392 = vld [vmem:[%s1 + $0xb98] sm:$0xff]
    %v393 = vld [vmem:[%s1 + $0xba0] sm:$0xff]
    %v394 = vld [vmem:[%s1 + $0xba8] sm:$0xff]
    %v395 = vld [vmem:[%s1 + $0xbb0] sm:$0xff]
    %v396 = vld [vmem:[%s1 + $0xbb8] sm:$0xff]
    %v397 = vld [vmem:[%s1 + $0xbc0] sm:$0xff]
    %v398 = vld [vmem:[%s1 + $0xbc8] sm:$0xff]
    %v399 = vld [vmem:[%s1 + $0xbd0] sm:$0xff]
    %v400 = vld [vmem:[%s1 + $0xbd8] sm:$0xff]
    %v401 = vld [vmem:[%s1 + $0xbe0] sm:$0xff]
    %v402 = vld [vmem:[%s1 + $0xbe8] sm:$0xff]
    %v403 = vld [vmem:[%s1 + $0xbf0] sm:$0xff]
    %v404 = vld [vmem:[%s1 + $0xbf8] sm:$0xff]
    %v405 = vld [vmem:[%s1 + $0xc00] sm:$0xff]
    %v406 = vld [vmem:[%s1 + $0xc08] sm:$0xff]
    %v407 = vld [vmem:[%s1 + $0xc10] sm:$0xff]
    %v408 = vld [vmem:[%s1 + $0xc18] sm:$0xff]
    %v409 = vld [vmem:[%s1 + $0xc20] sm:$0xff]
    %v410 = vld [vmem:[%s1 + $0xc28] sm:$0xff]
    %v411 = vld [vmem:[%s1 + $0xc30] sm:$0xff]
    %v412 = vld [vmem:[%s1 + $0xc38] sm:$0xff]
    %v413 = vld [vmem:[%s1 + $0xc40] sm:$0xff]
    %v414 = vld [vmem:[%s1 + $0xc48] sm:$0xff]
    %v415 = vld [vmem:[%s1 + $0xc50] sm:$0xff]
    %v416 = vld [vmem:[%s1 + $0xc58] sm:$0xff]
    %v417 = vld [vmem:[%s1 + $0xc60] sm:$0xff]
    %v418 = vld [vmem:[%s1 + $0xc68] sm:$0xff]
    %v419 = vld [vmem:[%s1 + $0xc70] sm:$0xff]
    %v420 = vld [vmem:[%s1 + $0xc78] sm:$0xff]
    %v421 = vld [vmem:[%s1 + $0xc80] sm:$0xff]
    %v422 = vld [vmem:[%s1 + $0xc88] sm:$0xff]
    %v423 = vld [vmem:[%s1 + $0xc90] sm:$0xff]
    %v424 = vld [vmem:[%s1 + $0xc98] sm:$0xff]
    %v425 = vld [vmem:[%s1 + $0xca0] sm:$0xff]
    %v426 = vld [vmem:[%s1 + $0xca8] sm:$0xff]
    %v427 = vld [vmem:[%s1 + $0xcb0] sm:$0xff]
    %v428 = vld [vmem:[%s1 + $0xcb8] sm:$0xff]
    %v429 = vld [vmem:[%s1 + $0xcc0] sm:$0xff]
    %v430 = vld [vmem:[%s1 + $0xcc8] sm:$0xff]
    %v431 = vld [vmem:[%s1 + $0xcd0] sm:$0xff]
    %v432 = vld [vmem:[%s1 + $0xcd8] sm:$0xff]
    %v433 = vld [vmem:[%s1 + $0xce0] sm:$0xff]
    %v434 = vld [vmem:[%s1 + $0xce8] sm:$0xff]
    %v435 = vld [vmem:[%s1 + $0xcf0] sm:$0xff]
    %v436 = vld [vmem:[%s1 + $0xcf8] sm:$0xff]
    %v437 = vld [vmem:[%s1 + $0xd00] sm:$0xff]
    %v438 = vld [vmem:[%s1 + $0xd08] sm:$0xff]
    %v439 = vld [vmem:[%s1 + $0xd10] sm:$0xff]
    %v440 = vld [vmem:[%s1 + $0xd18] sm:$0xff]
    %v441 = vld [vmem:[%s1 + $0xd20] sm:$0xff]
    %v442 = vld [vmem:[%s1 + $0xd28] sm:$0xff]
    %v443 = vld [vmem:[%s1 + $0xd30] sm:$0xff]
    %v444 = vld [vmem:[%s1 + $0xd38] sm:$0xff]
    %v445 = vld [vmem:[%s1 + $0xd40] sm:$0xff]
    %v446 = vld [vmem:[%s1 + $0xd48] sm:$0xff]
    %v447 = vld [vmem:[%s1 + $0xd50] sm:$0xff]
    %v448 = vld [vmem:[%s1 + $0xd58] sm:$0xff]
    %v449 = vld [vmem:[%s1 + $0xd60] sm:$0xff]
    %v450 = vld [vmem:[%s1 + $0xd68] sm:$0xff]
    %v451 = vld [vmem:[%s1 + $0xd70] sm:$0xff]
    %v452 = vld [vmem:[%s1 + $0xd78] sm:$0xff]
    %v453 = vld [vmem:[%s1 + $0xd80] sm:$0xff]
    %v454 = vld [vmem:[%s1 + $0xd88] sm:$0xff]
    %v455 = vld [vmem:[%s1 + $0xd90] sm:$0xff]
    %v456 = vld [vmem:[%s1 + $0xd98] sm:$0xff]
    %v457 = vld [vmem:[%s1 + $0xda0] sm:$0xff]
    %v458 = vld [vmem:[%s1 + $0xda8] sm:$0xff]
    %v459 = vld [vmem:[%s1 + $0xdb0] sm:$0xff]
    %v460 = vld [vmem:[%s1 + $0xdb8] sm:$0xff]
    %v461 = vld [vmem:[%s1 + $0xdc0] sm:$0xff]
    %v462 = vld [vmem:[%s1 + $0xdc8] sm:$0xff]
    %v463 = vld [vmem:[%s1 + $0xdd0] sm:$0xff]
    %v464 = vld [vmem:[%s1 + $0xdd8] sm:$0xff]
    %v465 = vld [vmem:[%s1 + $0xde0] sm:$0xff]
    %v466 = vld [vmem:[%s1 + $0xde8] sm:$0xff]
    %v467 = vld [vmem:[%s1 + $0xdf0] sm:$0xff]
    %v468 = vld [vmem:[%s1 + $0xdf8] sm:$0xff]
    %v469 = vld [vmem:[%s1 + $0xe00] sm:$0xff]
    %v470 = vld [vmem:[%s1 + $0xe08] sm:$0xff]
    %v471 = vld [vmem:[%s1 + $0xe10] sm:$0xff]
    %v472 = vld [vmem:[%s1 + $0xe18] sm:$0xff]
    %v473 = vld [vmem:[%s1 + $0xe20] sm:$0xff]
    %v474 = vld [vmem:[%s1 + $0xe28] sm:$0xff]
    %v475 = vld [vmem:[%s1 + $0xe30] sm:$0xff]
    %v476 = vld [vmem:[%s1 + $0xe38] sm:$0xff]
    %v477 = vld [vmem:[%s1 + $0xe40] sm:$0xff]
    %v478 = vld [vmem:[%s1 + $0xe48] sm:$0xff]
    %v479 = vld [vmem:[%s1 + $0xe50] sm:$0xff]
    %v480 = vld [vmem:[%s1 + $0xe58] sm:$0xff]
    %v481 = vld [vmem:[%s1 + $0xe60] sm:$0xff]
    %v482 = vld [vmem:[%s1 + $0xe68] sm:$0xff]
    %v483 = vld [vmem:[%s1 + $0xe70] sm:$0xff]
    %v484 = vld [vmem:[%s1 + $0xe78] sm:$0xff]
    %v485 = vld [vmem:[%s1 + $0xe80] sm:$0xff]
    %v486 = vld [vmem:[%s1 + $0xe88] sm:$0xff]
    %v487 = vld [vmem:[%s1 + $0xe90] sm:$0xff]
    %v488 = vld [vmem:[%s1 + $0xe98] sm:$0xff]
    %v489 = vld [vmem:[%s1 + $0xea0] sm:$0xff]
    %v490 = vld [vmem:[%s1 + $0xea8] sm:$0xff]
    %v491 = vld [vmem:[%s1 + $0xeb0] sm:$0xff]
    %v492 = vld [vmem:[%s1 + $0xeb8] sm:$0xff]
    %v493 = vld [vmem:[%s1 + $0xec0] sm:$0xff]
    %v494 = vld [vmem:[%s1 + $0xec8] sm:$0xff]
    %v495 = vld [vmem:[%s1 + $0xed0] sm:$0xff]
    %v496 = vld [vmem:[%s1 + $0xed8] sm:$0xff]
    %v497 = vld [vmem:[%s1 + $0xee0] sm:$0xff]
    %v498 = vld [vmem:[%s1 + $0xee8] sm:$0xff]
    %v499 = vld [vmem:[%s1 + $0xef0] sm:$0xff]
    %v500 = vld [vmem:[%s1 + $0xef8] sm:$0xff]
    %v501 = vld [vmem:[%s1 + $0xf00] sm:$0xff]
    %v502 = vld [vmem:[%s1 + $0xf08] sm:$0xff]
    %v503 = vld [vmem:[%s1 + $0xf10] sm:$0xff]
    %v504 = vld [vmem:[%s1 + $0xf18] sm:$0xff]
    %v505 = vld [vmem:[%s1 + $0xf20] sm:$0xff]
    %v506 = vld [vmem:[%s1 + $0xf28] sm:$0xff]
    %v507 = vld [vmem:[%s1 + $0xf30] sm:$0xff]
    %v508 = vld [vmem:[%s1 + $0xf38] sm:$0xff]
    %v509 = vld [vmem:[%s1 + $0xf40] sm:$0xff]
    %v510 = vld [vmem:[%s1 + $0xf48] sm:$0xff]
    %v511 = vld [vmem:[%s1 + $0xf50] sm:$0xff]
    %v512 = vld [vmem:[%s1 + $0xf58] sm:$0xff]
    %v513 = vld [vmem:[%s1 + $0xf60] sm:$0xff]
    %v514 = vld [vmem:[%s1 + $0xf68] sm:$0xff]
    %v515 = vld [vmem:[%s1 + $0xf70] sm:$0xff]
    %v516 = vld [vmem:[%s1 + $0xf78] sm:$0xff]
    %v517 = vld [vmem:[%s1 + $0xf80] sm:$0xff]
    %v518 = vld [vmem:[%s1 + $0xf88] sm:$0xff]
    %v519 = vld [vmem:[%s1 + $0xf90] sm:$0xff]
    %v520 = vld [vmem:[%s1 + $0xf98] sm:$0xff]
    %v521 = vld [vmem:[%s1 + $0xfa0] sm:$0xff]
    %v522 = vld [vmem:[%s1 + $0xfa8] sm:$0xff]
    %v523 = vld [vmem:[%s1 + $0xfb0] sm:$0xff]
    %v524 = vld [vmem:[%s1 + $0xfb8] sm:$0xff]
    %v525 = vld [vmem:[%s1 + $0xfc0] sm:$0xff]
    %v526 = vld [vmem:[%s1 + $0xfc8] sm:$0xff]
    %v527 = vld [vmem:[%s1 + $0xfd0] sm:$0xff]
    %v528 = vld [vmem:[%s1 + $0xfd8] sm:$0xff]
    %v529 = vld [vmem:[%s1 + $0xfe0] sm:$0xff]
    %v530 = vld [vmem:[%s1 + $0xfe8] sm:$0xff]
    %v531 = vld [vmem:[%s1 + $0xff0] sm:$0xff]
    %v532 = vld [vmem:[%s1 + $0xff8] sm:$0xff]
    %v533 = vld [vmem:[%s1 + $0x1000] sm:$0xff]
    %v534 = vld [vmem:[%s1 + $0x1008] sm:$0xff]
    %v535 = vld [vmem:[%s1 + $0x1010] sm:$0xff]
    %v536 = vld [vmem:[%s1 + $0x1018] sm:$0xff]
    %v537 = vld [vmem:[%s1 + $0x1020] sm:$0xff]
    %v538 = vld [vmem:[%s1 + $0x1028] sm:$0xff]
    %v539 = vld [vmem:[%s1 + $0x1030] sm:$0xff]
    %v540 = vld [vmem:[%s1 + $0x1038] sm:$0xff]
    %v541 = vld [vmem:[%s1 + $0x1040] sm:$0xff]
    %v542 = vld [vmem:[%s1 + $0x1048] sm:$0xff]
    %v543 = vld [vmem:[%s1 + $0x1050] sm:$0xff]
    %v544 = vld [vmem:[%s1 + $0x1058] sm:$0xff]
    %v545 = vld [vmem:[%s1 + $0x1060] sm:$0xff]
    %v546 = vld [vmem:[%s1 + $0x1068] sm:$0xff]
    %v547 = vld [vmem:[%s1 + $0x1070] sm:$0xff]
    %v548 = vld [vmem:[%s1 + $0x1078] sm:$0xff]
    %v549 = vld [vmem:[%s1 + $0x1080] sm:$0xff]
    %v550 = vld [vmem:[%s1 + $0x1088] sm:$0xff]
    %v551 = vld [vmem:[%s1 + $0x1090] sm:$0xff]
    %v552 = vld [vmem:[%s1 + $0x1098] sm:$0xff]
    %v553 = vld [vmem:[%s1 + $0x10a0] sm:$0xff]
    %v554 = vld [vmem:[%s1 + $0x10a8] sm:$0xff]
    %v555 = vld [vmem:[%s1 + $0x10b0] sm:$0xff]
    %v556 = vld [vmem:[%s1 + $0x10b8] sm:$0xff]
    %v557 = vld [vmem:[%s1 + $0x10c0] sm:$0xff]
    %v558 = vld [vmem:[%s1 + $0x10c8] sm:$0xff]
    %v559 = vld [vmem:[%s1 + $0x10d0] sm:$0xff]
    %v560 = vld [vmem:[%s1 + $0x10d8] sm:$0xff]
    %v561 = vld [vmem:[%s1 + $0x10e0] sm:$0xff]
    %v562 = vld [vmem:[%s1 + $0x10e8] sm:$0xff]
    %v563 = vld [vmem:[%s1 + $0x10f0] sm:$0xff]
    %v564 = vld [vmem:[%s1 + $0x10f8] sm:$0xff]
    %v565 = vld [vmem:[%s1 + $0x1100] sm:$0xff]
    %v566 = vld [vmem:[%s1 + $0x1108] sm:$0xff]
    %v567 = vld [vmem:[%s1 + $0x1110] sm:$0xff]
    %v568 = vld [vmem:[%s1 + $0x1118] sm:$0xff]
    %v569 = vld [vmem:[%s1 + $0x1120] sm:$0xff]
    %v570 = vld [vmem:[%s1 + $0x1128] sm:$0xff]
    %v571 = vld [vmem:[%s1 + $0x1130] sm:$0xff]
    %v572 = vld [vmem:[%s1 + $0x1138] sm:$0xff]
    %v573 = vld [vmem:[%s1 + $0x1140] sm:$0xff]
    %v574 = vld [vmem:[%s1 + $0x1148] sm:$0xff]
    %v575 = vld [vmem:[%s1 + $0x1150] sm:$0xff]
    %v576 = vld [vmem:[%s1 + $0x1158] sm:$0xff]
    %v577 = vld [vmem:[%s1 + $0x1160] sm:$0xff]
    %v578 = vld [vmem:[%s1 + $0x1168] sm:$0xff]
    %v579 = vld [vmem:[%s1 + $0x1170] sm:$0xff]
    %v580 = vld [vmem:[%s1 + $0x1178] sm:$0xff]
    %v581 = vld [vmem:[%s1 + $0x1180] sm:$0xff]
    %v582 = vld [vmem:[%s1 + $0x1188] sm:$0xff]
    %v583 = vld [vmem:[%s1 + $0x1190] sm:$0xff]
    %v584 = vld [vmem:[%s1 + $0x1198] sm:$0xff]
    %v585 = vld [vmem:[%s1 + $0x11a0] sm:$0xff]
    %v586 = vld [vmem:[%s1 + $0x11a8] sm:$0xff]
    %v587 = vld [vmem:[%s1 + $0x11b0] sm:$0xff]
    %v588 = vld [vmem:[%s1 + $0x11b8] sm:$0xff]
    %v589 = vld [vmem:[%s1 + $0x11c0] sm:$0xff]
    %v590 = vld [vmem:[%s1 + $0x11c8] sm:$0xff]
    %v591 = vld [vmem:[%s1 + $0x11d0] sm:$0xff]
    %v592 = vld [vmem:[%s1 + $0x11d8] sm:$0xff]
    %v593 = vld [vmem:[%s1 + $0x11e0] sm:$0xff]
    %v594 = vld [vmem:[%s1 + $0x11e8] sm:$0xff]
    %v595 = vld [vmem:[%s1 + $0x11f0] sm:$0xff]
    %v596 = vld [vmem:[%s1 + $0x11f8] sm:$0xff]
    %v597 = vld [vmem:[%s1 + $0x1200] sm:$0xff]
    %v598 = vld [vmem:[%s1 + $0x1208] sm:$0xff]
    %v599 = vld [vmem:[%s1 + $0x1210] sm:$0xff]
    %v600 = vld [vmem:[%s1 + $0x1218] sm:$0xff]
    %v601 = vld [vmem:[%s1 + $0x1220] sm:$0xff]
    %v602 = vld [vmem:[%s1 + $0x1228] sm:$0xff]
    %v603 = vld [vmem:[%s1 + $0x1230] sm:$0xff]
    %v604 = vld [vmem:[%s1 + $0x1238] sm:$0xff]
    %v605 = vld [vmem:[%s1 + $0x1240] sm:$0xff]
    %v606 = vld [vmem:[%s1 + $0x1248] sm:$0xff]
    %v607 = vld [vmem:[%s1 + $0x1250] sm:$0xff]
    %v608 = vld [vmem:[%s1 + $0x1258] sm:$0xff]
    %v609 = vld [vmem:[%s1 + $0x1260] sm:$0xff]
    %v610 = vld [vmem:[%s1 + $0x1268] sm:$0xff]
    %v611 = vld [vmem:[%s1 + $0x1270] sm:$0xff]
    %v612 = vld [vmem:[%s1 + $0x1278] sm:$0xff]
    %v613 = vld [vmem:[%s1 + $0x1280] sm:$0xff]
    %v614 = vld [vmem:[%s1 + $0x1288] sm:$0xff]
    %v615 = vld [vmem:[%s1 + $0x1290] sm:$0xff]
    %v616 = vld [vmem:[%s1 + $0x1298] sm:$0xff]
    %v617 = vld [vmem:[%s1 + $0x12a0] sm:$0xff]
    %v618 = vld [vmem:[%s1 + $0x12a8] sm:$0xff]
    %v619 = vld [vmem:[%s1 + $0x12b0] sm:$0xff]
    %v620 = vld [vmem:[%s1 + $0x12b8] sm:$0xff]
    %v621 = vld [vmem:[%s1 + $0x12c0] sm:$0xff]
    %v622 = vld [vmem:[%s1 + $0x12c8] sm:$0xff]
    %v623 = vld [vmem:[%s1 + $0x12d0] sm:$0xff]
    %v624 = vld [vmem:[%s1 + $0x12d8] sm:$0xff]
    %v625 = vld [vmem:[%s1 + $0x12e0] sm:$0xff]
    %v626 = vld [vmem:[%s1 + $0x12e8] sm:$0xff]
    %v627 = vld [vmem:[%s1 + $0x12f0] sm:$0xff]
    %v628 = vld [vmem:[%s1 + $0x12f8] sm:$0xff]
    %v629 = vld [vmem:[%s1 + $0x1300] sm:$0xff]
    %v630 = vld [vmem:[%s1 + $0x1308] sm:$0xff]
    %v631 = vld [vmem:[%s1 + $0x1310] sm:$0xff]
    %v632 = vld [vmem:[%s1 + $0x1318] sm:$0xff]
    %v633 = vld [vmem:[%s1 + $0x1320] sm:$0xff]
    %v634 = vld [vmem:[%s1 + $0x1328] sm:$0xff]
    %v635 = vld [vmem:[%s1 + $0x1330] sm:$0xff]
    %v636 = vld [vmem:[%s1 + $0x1338] sm:$0xff]
    %v637 = vld [vmem:[%s1 + $0x1340] sm:$0xff]
    %v638 = vld [vmem:[%s1 + $0x1348] sm:$0xff]
    %v639 = vld [vmem:[%s1 + $0x1350] sm:$0xff]
    %v640 = vld [vmem:[%s1 + $0x1358] sm:$0xff]
    %v641 = vld [vmem:[%s1 + $0x1360] sm:$0xff]
    %v642 = vld [vmem:[%s1 + $0x1368] sm:$0xff]
    %v643 = vld [vmem:[%s1 + $0x1370] sm:$0xff]
    %v644 = vld [vmem:[%s1 + $0x1378] sm:$0xff]
    %v645 = vld [vmem:[%s1 + $0x1380] sm:$0xff]
    %v646 = vld [vmem:[%s1 + $0x1388] sm:$0xff]
    %v647 = vld [vmem:[%s1 + $0x1390] sm:$0xff]
    %v648 = vld [vmem:[%s1 + $0x1398] sm:$0xff]
    %v649 = vld [vmem:[%s1 + $0x13a0] sm:$0xff]
    %v650 = vld [vmem:[%s1 + $0x13a8] sm:$0xff]
    %v651 = vld [vmem:[%s1 + $0x13b0] sm:$0xff]
    %v652 = vld [vmem:[%s1 + $0x13b8] sm:$0xff]
    %v653 = vld [vmem:[%s1 + $0x13c0] sm:$0xff]
    %v654 = vld [vmem:[%s1 + $0x13c8] sm:$0xff]
    %v655 = vld [vmem:[%s1 + $0x13d0] sm:$0xff]
    %v656 = vld [vmem:[%s1 + $0x13d8] sm:$0xff]
    %v657 = vld [vmem:[%s1 + $0x13e0] sm:$0xff]
    %v658 = vld [vmem:[%s1 + $0x13e8] sm:$0xff]
    %v659 = vld [vmem:[%s1 + $0x13f0] sm:$0xff]
    %v660 = vld [vmem:[%s1 + $0x13f8] sm:$0xff]
    %v661 = vld [vmem:[%s1 + $0x1400] sm:$0xff]
    %v662 = vld [vmem:[%s1 + $0x1408] sm:$0xff]
    %v663 = vld [vmem:[%s1 + $0x1410] sm:$0xff]
    %v664 = vld [vmem:[%s1 + $0x1418] sm:$0xff]
    %v665 = vld [vmem:[%s1 + $0x1420] sm:$0xff]
    %v666 = vld [vmem:[%s1 + $0x1428] sm:$0xff]
    %v667 = vld [vmem:[%s1 + $0x1430] sm:$0xff]
    %v668 = vld [vmem:[%s1 + $0x1438] sm:$0xff]
    %v669 = vld [vmem:[%s1 + $0x1440] sm:$0xff]
    %v670 = vld [vmem:[%s1 + $0x1448] sm:$0xff]
    %v671 = vld [vmem:[%s1 + $0x1450] sm:$0xff]
    %v672 = vld [vmem:[%s1 + $0x1458] sm:$0xff]
    %v673 = vld [vmem:[%s1 + $0x1460] sm:$0xff]
    %v674 = vld [vmem:[%s1 + $0x1468] sm:$0xff]
    %v675 = vld [vmem:[%s1 + $0x1470] sm:$0xff]
    %v676 = vld [vmem:[%s1 + $0x1478] sm:$0xff]
    %v677 = vld [vmem:[%s1 + $0x1480] sm:$0xff]
    %v678 = vld [vmem:[%s1 + $0x1488] sm:$0xff]
    %v679 = vld [vmem:[%s1 + $0x1490] sm:$0xff]
    %v680 = vld [vmem:[%s1 + $0x1498] sm:$0xff]
    %v681 = vld [vmem:[%s1 + $0x14a0] sm:$0xff]
    %v682 = vld [vmem:[%s1 + $0x14a8] sm:$0xff]
    %v683 = vld [vmem:[%s1 + $0x14b0] sm:$0xff]
    %v684 = vld [vmem:[%s1 + $0x14b8] sm:$0xff]
    %v685 = vld [vmem:[%s1 + $0x14c0] sm:$0xff]
    %v686 = vld [vmem:[%s1 + $0x14c8] sm:$0xff]
    %v687 = vld [vmem:[%s1 + $0x14d0] sm:$0xff]
    %v688 = vld [vmem:[%s1 + $0x14d8] sm:$0xff]
    %v689 = vld [vmem:[%s1 + $0x14e0] sm:$0xff]
    %v690 = vld [vmem:[%s1 + $0x14e8] sm:$0xff]
    %v691 = vld [vmem:[%s1 + $0x14f0] sm:$0xff]
    %v692 = vld [vmem:[%s1 + $0x14f8] sm:$0xff]
    %v693 = vld [vmem:[%s1 + $0x1500] sm:$0xff]
    %v694 = vld [vmem:[%s1 + $0x1508] sm:$0xff]
    %v695 = vld [vmem:[%s1 + $0x1510] sm:$0xff]
    %v696 = vld [vmem:[%s1 + $0x1518] sm:$0xff]
    %v697 = vld [vmem:[%s1 + $0x1520] sm:$0xff]
    %v698 = vld [vmem:[%s1 + $0x1528] sm:$0xff]
    %v699 = vld [vmem:[%s1 + $0x1530] sm:$0xff]
    %v700 = vld [vmem:[%s1 + $0x1538] sm:$0xff]
    %v701 = vld [vmem:[%s1 + $0x1540] sm:$0xff]
    %v702 = vld [vmem:[%s1 + $0x1548] sm:$0xff]
    %v703 = vld [vmem:[%s1 + $0x1550] sm:$0xff]
    %v704 = vld [vmem:[%s1 + $0x1558] sm:$0xff]
    %v705 = vld [vmem:[%s1 + $0x1560] sm:$0xff]
    %v706 = vld [vmem:[%s1 + $0x1568] sm:$0xff]
    %v707 = vld [vmem:[%s1 + $0x1570] sm:$0xff]
    %v708 = vld [vmem:[%s1 + $0x1578] sm:$0xff]
    %v709 = vld [vmem:[%s1 + $0x1580] sm:$0xff]
    %v710 = vld [vmem:[%s1 + $0x1588] sm:$0xff]
    %v711 = vld [vmem:[%s1 + $0x1590] sm:$0xff]
    %v712 = vld [vmem:[%s1 + $0x1598] sm:$0xff]
    %v713 = vld [vmem:[%s1 + $0x15a0] sm:$0xff]
    %v714 = vld [vmem:[%s1 + $0x15a8] sm:$0xff]
    %v715 = vld [vmem:[%s1 + $0x15b0] sm:$0xff]
    %v716 = vld [vmem:[%s1 + $0x15b8] sm:$0xff]
    %v717 = vld [vmem:[%s1 + $0x15c0] sm:$0xff]
    %v718 = vld [vmem:[%s1 + $0x15c8] sm:$0xff]
    %v719 = vld [vmem:[%s1 + $0x15d0] sm:$0xff]
    %v720 = vld [vmem:[%s1 + $0x15d8] sm:$0xff]
    %v721 = vld [vmem:[%s1 + $0x15e0] sm:$0xff]
    %v722 = vld [vmem:[%s1 + $0x15e8] sm:$0xff]
    %v723 = vld [vmem:[%s1 + $0x15f0] sm:$0xff]
    %v724 = vld [vmem:[%s1 + $0x15f8] sm:$0xff]
    %v725 = vld [vmem:[%s1 + $0x1600] sm:$0xff]
    %v726 = vld [vmem:[%s1 + $0x1608] sm:$0xff]
    %v727 = vld [vmem:[%s1 + $0x1610] sm:$0xff]
    %v728 = vld [vmem:[%s1 + $0x1618] sm:$0xff]
    %v729 = vld [vmem:[%s1 + $0x1620] sm:$0xff]
    %v730 = vld [vmem:[%s1 + $0x1628] sm:$0xff]
    %v731 = vld [vmem:[%s1 + $0x1630] sm:$0xff]
    %v732 = vld [vmem:[%s1 + $0x1638] sm:$0xff]
    %v733 = vld [vmem:[%s1 + $0x1640] sm:$0xff]
    %v734 = vld [vmem:[%s1 + $0x1648] sm:$0xff]
    %v735 = vld [vmem:[%s1 + $0x1650] sm:$0xff]
    %v736 = vld [vmem:[%s1 + $0x1658] sm:$0xff]
    %v737 = vld [vmem:[%s1 + $0x1660] sm:$0xff]
    %v738 = vld [vmem:[%s1 + $0x1668] sm:$0xff]
    %v739 = vld [vmem:[%s1 + $0x1670] sm:$0xff]
    %v740 = vld [vmem:[%s1 + $0x1678] sm:$0xff]
    %v741 = vld [vmem:[%s1 + $0x1680] sm:$0xff]
    %v742 = vld [vmem:[%s1 + $0x1688] sm:$0xff]
    %v743 = vld [vmem:[%s1 + $0x1690] sm:$0xff]
    %v744 = vld [vmem:[%s1 + $0x1698] sm:$0xff]
    %v745 = vld [vmem:[%s1 + $0x16a0] sm:$0xff]
    %v746 = vld [vmem:[%s1 + $0x16a8] sm:$0xff]
    %v747 = vld [vmem:[%s1 + $0x16b0] sm:$0xff]
    %v748 = vld [vmem:[%s1 + $0x16b8] sm:$0xff]
    %v749 = vld [vmem:[%s1 + $0x16c0] sm:$0xff]
    %v750 = vld [vmem:[%s1 + $0x16c8] sm:$0xff]
    %v751 = vld [vmem:[%s1 + $0x16d0] sm:$0xff]
    %v752 = vld [vmem:[%s1 + $0x16d8] sm:$0xff]
    %v753 = vld [vmem:[%s1 + $0x16e0] sm:$0xff]
    %v754 = vld [vmem:[%s1 + $0x16e8] sm:$0xff]
    %v755 = vld [vmem:[%s1 + $0x16f0] sm:$0xff]
    %v756 = vld [vmem:[%s1 + $0x16f8] sm:$0xff]
    %v757 = vld [vmem:[%s1 + $0x1700] sm:$0xff]
    %v758 = vld [vmem:[%s1 + $0x1708] sm:$0xff]
    %v759 = vld [vmem:[%s1 + $0x1710] sm:$0xff]
    %v760 = vld [vmem:[%s1 + $0x1718] sm:$0xff]
    %v761 = vld [vmem:[%s1 + $0x1720] sm:$0xff]
    %v762 = vld [vmem:[%s1 + $0x1728] sm:$0xff]
    %v763 = vld [vmem:[%s1 + $0x1730] sm:$0xff]
    %v764 = vld [vmem:[%s1 + $0x1738] sm:$0xff]
    %v765 = vld [vmem:[%s1 + $0x1740] sm:$0xff]
    %v766 = vld [vmem:[%s1 + $0x1748] sm:$0xff]
    %v767 = vld [vmem:[%s1 + $0x1750] sm:$0xff]
    %v768 = vld [vmem:[%s1 + $0x1758] sm:$0xff]
    %v769 = vld [vmem:[%s1 + $0x1760] sm:$0xff]
    %v770 = vld [vmem:[%s1 + $0x1768] sm:$0xff]
    %v771 = vld [vmem:[%s1 + $0x1770] sm:$0xff]
    %v772 = vld [vmem:[%s1 + $0x1778] sm:$0xff]
    %v773 = vld [vmem:[%s1 + $0x1780] sm:$0xff]
    %v774 = vld [vmem:[%s1 + $0x1788] sm:$0xff]
    %v775 = vld [vmem:[%s1 + $0x1790] sm:$0xff]
    %v776 = vld [vmem:[%s1 + $0x1798] sm:$0xff]
    %v777 = vld [vmem:[%s1 + $0x17a0] sm:$0xff]
    %v778 = vld [vmem:[%s1 + $0x17a8] sm:$0xff]
    %v779 = vld [vmem:[%s1 + $0x17b0] sm:$0xff]
    %v780 = vld [vmem:[%s1 + $0x17b8] sm:$0xff]
    %v781 = vld [vmem:[%s1 + $0x17c0] sm:$0xff]
    %v782 = vld [vmem:[%s1 + $0x17c8] sm:$0xff]
    %v783 = vld [vmem:[%s1 + $0x17d0] sm:$0xff]
    %v784 = vld [vmem:[%s1 + $0x17d8] sm:$0xff]
    %v785 = vld [vmem:[%s1 + $0x17e0] sm:$0xff]
    %v786 = vld [vmem:[%s1 + $0x17e8] sm:$0xff]
    %v787 = vld [vmem:[%s1 + $0x17f0] sm:$0xff]
    %v788 = vld [vmem:[%s1 + $0x17f8] sm:$0xff]
    %v789 = vld [vmem:[%s1 + $0x1800] sm:$0xff]
    %v790 = vld [vmem:[%s1 + $0x1808] sm:$0xff]
    %v791 = vld [vmem:[%s1 + $0x1810] sm:$0xff]
    %v792 = vld [vmem:[%s1 + $0x1818] sm:$0xff]
    %v793 = vld [vmem:[%s1 + $0x1820] sm:$0xff]
    %v794 = vld [vmem:[%s1 + $0x1828] sm:$0xff]
    %v795 = vld [vmem:[%s1 + $0x1830] sm:$0xff]
    %v796 = vld [vmem:[%s1 + $0x1838] sm:$0xff]
    %v797 = vld [vmem:[%s1 + $0x1840] sm:$0xff]
    %v798 = vld [vmem:[%s1 + $0x1848] sm:$0xff]
    %v799 = vld [vmem:[%s1 + $0x1850] sm:$0xff]
    %v800 = vld [vmem:[%s1 + $0x1858] sm:$0xff]
    %v801 = vld [vmem:[%s1 + $0x1860] sm:$0xff]
    %v802 = vld [vmem:[%s1 + $0x1868] sm:$0xff]
    %v803 = vld [vmem:[%s1 + $0x1870] sm:$0xff]
    %v804 = vld [vmem:[%s1 + $0x1878] sm:$0xff]
    %v805 = vld [vmem:[%s1 + $0x1880] sm:$0xff]
    %v806 = vld [vmem:[%s1 + $0x1888] sm:$0xff]
    %v807 = vld [vmem:[%s1 + $0x1890] sm:$0xff]
    %v808 = vld [vmem:[%s1 + $0x1898] sm:$0xff]
    %v809 = vld [vmem:[%s1 + $0x18a0] sm:$0xff]
    %v810 = vld [vmem:[%s1 + $0x18a8] sm:$0xff]
    %v811 = vld [vmem:[%s1 + $0x18b0] sm:$0xff]
    %v812 = vld [vmem:[%s1 + $0x18b8] sm:$0xff]
    %v813 = vld [vmem:[%s1 + $0x18c0] sm:$0xff]
    %v814 = vld [vmem:[%s1 + $0x18c8] sm:$0xff]
    %v815 = vld [vmem:[%s1 + $0x18d0] sm:$0xff]
    %v816 = vld [vmem:[%s1 + $0x18d8] sm:$0xff]
    %v817 = vld [vmem:[%s1 + $0x18e0] sm:$0xff]
    %v818 = vld [vmem:[%s1 + $0x18e8] sm:$0xff]
    %v819 = vld [vmem:[%s1 + $0x18f0] sm:$0xff]
    %v820 = vld [vmem:[%s1 + $0x18f8] sm:$0xff]
    %v821 = vld [vmem:[%s1 + $0x1900] sm:$0xff]
    %v822 = vld [vmem:[%s1 + $0x1908] sm:$0xff]
    %v823 = vld [vmem:[%s1 + $0x1910] sm:$0xff]
    %v824 = vld [vmem:[%s1 + $0x1918] sm:$0xff]
    %v825 = vld [vmem:[%s1 + $0x1920] sm:$0xff]
    %v826 = vld [vmem:[%s1 + $0x1928] sm:$0xff]
    %v827 = vld [vmem:[%s1 + $0x1930] sm:$0xff]
    %v828 = vld [vmem:[%s1 + $0x1938] sm:$0xff]
    %v829 = vld [vmem:[%s1 + $0x1940] sm:$0xff]
    %v830 = vld [vmem:[%s1 + $0x1948] sm:$0xff]
    %v831 = vld [vmem:[%s1 + $0x1950] sm:$0xff]
    %v832 = vld [vmem:[%s1 + $0x1958] sm:$0xff]
    %v833 = vld [vmem:[%s1 + $0x1960] sm:$0xff]
    %v834 = vld [vmem:[%s1 + $0x1968] sm:$0xff]
    %v835 = vld [vmem:[%s1 + $0x1970] sm:$0xff]
    %v836 = vld [vmem:[%s1 + $0x1978] sm:$0xff]
    %v837 = vld [vmem:[%s1 + $0x1980] sm:$0xff]
    %v838 = vld [vmem:[%s1 + $0x1988] sm:$0xff]
    %v839 = vld [vmem:[%s1 + $0x1990] sm:$0xff]
    %v840 = vld [vmem:[%s1 + $0x1998] sm:$0xff]
    %v841 = vld [vmem:[%s1 + $0x19a0] sm:$0xff]
    %v842 = vld [vmem:[%s1 + $0x19a8] sm:$0xff]
    %v843 = vld [vmem:[%s1 + $0x19b0] sm:$0xff]
    %v844 = vld [vmem:[%s1 + $0x19b8] sm:$0xff]
    %v845 = vld [vmem:[%s1 + $0x19c0] sm:$0xff]
    %v846 = vld [vmem:[%s1 + $0x19c8] sm:$0xff]
    %v847 = vld [vmem:[%s1 + $0x19d0] sm:$0xff]
    %v848 = vld [vmem:[%s1 + $0x19d8] sm:$0xff]
    %v849 = vld [vmem:[%s1 + $0x19e0] sm:$0xff]
    %v850 = vld [vmem:[%s1 + $0x19e8] sm:$0xff]
    %v851 = vld [vmem:[%s1 + $0x19f0] sm:$0xff]
    %v852 = vld [vmem:[%s1 + $0x19f8] sm:$0xff]
    %v853 = vld [vmem:[%s1 + $0x1a00] sm:$0xff]
    %v854 = vld [vmem:[%s1 + $0x1a08] sm:$0xff]
    %v855 = vld [vmem:[%s1 + $0x1a10] sm:$0xff]
    %v856 = vld [vmem:[%s1 + $0x1a18] sm:$0xff]
    %v857 = vld [vmem:[%s1 + $0x1a20] sm:$0xff]
    %v858 = vld [vmem:[%s1 + $0x1a28] sm:$0xff]
    %v859 = vld [vmem:[%s1 + $0x1a30] sm:$0xff]
    %v860 = vld [vmem:[%s1 + $0x1a38] sm:$0xff]
    %v861 = vld [vmem:[%s1 + $0x1a40] sm:$0xff]
    %v862 = vld [vmem:[%s1 + $0x1a48] sm:$0xff]
    %v863 = vld [vmem:[%s1 + $0x1a50] sm:$0xff]
    %v864 = vld [vmem:[%s1 + $0x1a58] sm:$0xff]
    %v865 = vld [vmem:[%s1 + $0x1a60] sm:$0xff]
    %v866 = vld [vmem:[%s1 + $0x1a68] sm:$0xff]
    %v867 = vld [vmem:[%s1 + $0x1a70] sm:$0xff]
    %v868 = vld [vmem:[%s1 + $0x1a78] sm:$0xff]
    %v869 = vld [vmem:[%s1 + $0x1a80] sm:$0xff]
    %v870 = vld [vmem:[%s1 + $0x1a88] sm:$0xff]
    %v871 = vld [vmem:[%s1 + $0x1a90] sm:$0xff]
    %v872 = vld [vmem:[%s1 + $0x1a98] sm:$0xff]
    %v873 = vld [vmem:[%s1 + $0x1aa0] sm:$0xff]
    %v874 = vld [vmem:[%s1 + $0x1aa8] sm:$0xff]
    %v875 = vld [vmem:[%s1 + $0x1ab0] sm:$0xff]
    %v876 = vld [vmem:[%s1 + $0x1ab8] sm:$0xff]
    %v877 = vld [vmem:[%s1 + $0x1ac0] sm:$0xff]
    %v878 = vld [vmem:[%s1 + $0x1ac8] sm:$0xff]
    %v879 = vld [vmem:[%s1 + $0x1ad0] sm:$0xff]
    %v880 = vld [vmem:[%s1 + $0x1ad8] sm:$0xff]
    %v881 = vld [vmem:[%s1 + $0x1ae0] sm:$0xff]
    %v882 = vld [vmem:[%s1 + $0x1ae8] sm:$0xff]
    %v883 = vld [vmem:[%s1 + $0x1af0] sm:$0xff]
    %v884 = vld [vmem:[%s1 + $0x1af8] sm:$0xff]
    %v885 = vld [vmem:[%s1 + $0x1b00] sm:$0xff]
    %v886 = vld [vmem:[%s1 + $0x1b08] sm:$0xff]
    %v887 = vld [vmem:[%s1 + $0x1b10] sm:$0xff]
    %v888 = vld [vmem:[%s1 + $0x1b18] sm:$0xff]
    %v889 = vld [vmem:[%s1 + $0x1b20] sm:$0xff]
    %v890 = vld [vmem:[%s1 + $0x1b28] sm:$0xff]
    %v891 = vld [vmem:[%s1 + $0x1b30] sm:$0xff]
    %v892 = vld [vmem:[%s1 + $0x1b38] sm:$0xff]
    %v893 = vld [vmem:[%s1 + $0x1b40] sm:$0xff]
    %v894 = vld [vmem:[%s1 + $0x1b48] sm:$0xff]
    %v895 = vld [vmem:[%s1 + $0x1b50] sm:$0xff]
    %v896 = vld [vmem:[%s1 + $0x1b58] sm:$0xff]
    %v897 = vld [vmem:[%s1 + $0x1b60] sm:$0xff]
    %v898 = vld [vmem:[%s1 + $0x1b68] sm:$0xff]
    %v899 = vld [vmem:[%s1 + $0x1b70] sm:$0xff]
    %v900 = vld [vmem:[%s1 + $0x1b78] sm:$0xff]
    %v901 = vld [vmem:[%s1 + $0x1b80] sm:$0xff]
    %v902 = vld [vmem:[%s1 + $0x1b88] sm:$0xff]
    %v903 = vld [vmem:[%s1 + $0x1b90] sm:$0xff]
    %v904 = vld [vmem:[%s1 + $0x1b98] sm:$0xff]
    %v905 = vld [vmem:[%s1 + $0x1ba0] sm:$0xff]
    %v906 = vld [vmem:[%s1 + $0x1ba8] sm:$0xff]
    %v907 = vld [vmem:[%s1 + $0x1bb0] sm:$0xff]
    %v908 = vld [vmem:[%s1 + $0x1bb8] sm:$0xff]
    %v909 = vld [vmem:[%s1 + $0x1bc0] sm:$0xff]
    %v910 = vld [vmem:[%s1 + $0x1bc8] sm:$0xff]
    %v911 = vld [vmem:[%s1 + $0x1bd0] sm:$0xff]
    %v912 = vld [vmem:[%s1 + $0x1bd8] sm:$0xff]
    %v913 = vld [vmem:[%s1 + $0x1be0] sm:$0xff]
    %v914 = vld [vmem:[%s1 + $0x1be8] sm:$0xff]
    %v915 = vld [vmem:[%s1 + $0x1bf0] sm:$0xff]
    %v916 = vld [vmem:[%s1 + $0x1bf8] sm:$0xff]
    %v917 = vld [vmem:[%s1 + $0x1c00] sm:$0xff]
    %v918 = vld [vmem:[%s1 + $0x1c08] sm:$0xff]
    %v919 = vld [vmem:[%s1 + $0x1c10] sm:$0xff]
    %v920 = vld [vmem:[%s1 + $0x1c18] sm:$0xff]
    %v921 = vld [vmem:[%s1 + $0x1c20] sm:$0xff]
    %v922 = vld [vmem:[%s1 + $0x1c28] sm:$0xff]
    %v923 = vld [vmem:[%s1 + $0x1c30] sm:$0xff]
    %v924 = vld [vmem:[%s1 + $0x1c38] sm:$0xff]
    %v925 = vld [vmem:[%s1 + $0x1c40] sm:$0xff]
    %v926 = vld [vmem:[%s1 + $0x1c48] sm:$0xff]
    %v927 = vld [vmem:[%s1 + $0x1c50] sm:$0xff]
    %v928 = vld [vmem:[%s1 + $0x1c58] sm:$0xff]
    %v929 = vld [vmem:[%s1 + $0x1c60] sm:$0xff]
    %v930 = vld [vmem:[%s1 + $0x1c68] sm:$0xff]
    %v931 = vld [vmem:[%s1 + $0x1c70] sm:$0xff]
    %v932 = vld [vmem:[%s1 + $0x1c78] sm:$0xff]
    %v933 = vld [vmem:[%s1 + $0x1c80] sm:$0xff]
    %v934 = vld [vmem:[%s1 + $0x1c88] sm:$0xff]
    %v935 = vld [vmem:[%s1 + $0x1c90] sm:$0xff]
    %v936 = vld [vmem:[%s1 + $0x1c98] sm:$0xff]
    %v937 = vld [vmem:[%s1 + $0x1ca0] sm:$0xff]
    %v938 = vld [vmem:[%s1 + $0x1ca8] sm:$0xff]
    %v939 = vld [vmem:[%s1 + $0x1cb0] sm:$0xff]
    %v940 = vld [vmem:[%s1 + $0x1cb8] sm:$0xff]
    %v941 = vld [vmem:[%s1 + $0x1cc0] sm:$0xff]
    %v942 = vld [vmem:[%s1 + $0x1cc8] sm:$0xff]
    %v943 = vld [vmem:[%s1 + $0x1cd0] sm:$0xff]
    %v944 = vld [vmem:[%s1 + $0x1cd8] sm:$0xff]
    %v945 = vld [vmem:[%s1 + $0x1ce0] sm:$0xff]
    %v946 = vld [vmem:[%s1 + $0x1ce8] sm:$0xff]
    %v947 = vld [vmem:[%s1 + $0x1cf0] sm:$0xff]
    %v948 = vld [vmem:[%s1 + $0x1cf8] sm:$0xff]
    %v949 = vld [vmem:[%s1 + $0x1d00] sm:$0xff]
    %v950 = vld [vmem:[%s1 + $0x1d08] sm:$0xff]
    %v951 = vld [vmem:[%s1 + $0x1d10] sm:$0xff]
    %v952 = vld [vmem:[%s1 + $0x1d18] sm:$0xff]
    %v953 = vld [vmem:[%s1 + $0x1d20] sm:$0xff]
    %v954 = vld [vmem:[%s1 + $0x1d28] sm:$0xff]
    %v955 = vld [vmem:[%s1 + $0x1d30] sm:$0xff]
    %v956 = vld [vmem:[%s1 + $0x1d38] sm:$0xff]
    %v957 = vld [vmem:[%s1 + $0x1d40] sm:$0xff]
    %v958 = vld [vmem:[%s1 + $0x1d48] sm:$0xff]
    %v959 = vld [vmem:[%s1 + $0x1d50] sm:$0xff]
    %v960 = vld [vmem:[%s1 + $0x1d58] sm:$0xff]
    %v961 = vld [vmem:[%s1 + $0x1d60] sm:$0xff]
    %v962 = vld [vmem:[%s1 + $0x1d68] sm:$0xff]
    %v963 = vld [vmem:[%s1 + $0x1d70] sm:$0xff]
    %v964 = vld [vmem:[%s1 + $0x1d78] sm:$0xff]
    %v965 = vld [vmem:[%s1 + $0x1d80] sm:$0xff]
    %v966 = vld [vmem:[%s1 + $0x1d88] sm:$0xff]
    %v967 = vld [vmem:[%s1 + $0x1d90] sm:$0xff]
    %v968 = vld [vmem:[%s1 + $0x1d98] sm:$0xff]
    %v969 = vld [vmem:[%s1 + $0x1da0] sm:$0xff]
    %v970 = vld [vmem:[%s1 + $0x1da8] sm:$0xff]
    %v971 = vld [vmem:[%s1 + $0x1db0] sm:$0xff]
    %v972 = vld [vmem:[%s1 + $0x1db8] sm:$0xff]
    %v973 = vld [vmem:[%s1 + $0x1dc0] sm:$0xff]
    %v974 = vld [vmem:[%s1 + $0x1dc8] sm:$0xff]
    %v975 = vld [vmem:[%s1 + $0x1dd0] sm:$0xff]
    %v976 = vld [vmem:[%s1 + $0x1dd8] sm:$0xff]
    %v977 = vld [vmem:[%s1 + $0x1de0] sm:$0xff]
    %v978 = vld [vmem:[%s1 + $0x1de8] sm:$0xff]
    %v979 = vld [vmem:[%s1 + $0x1df0] sm:$0xff]
    %v980 = vld [vmem:[%s1 + $0x1df8] sm:$0xff]
    %v981 = vld [vmem:[%s1 + $0x1e00] sm:$0xff]
    %v982 = vld [vmem:[%s1 + $0x1e08] sm:$0xff]
    %v983 = vld [vmem:[%s1 + $0x1e10] sm:$0xff]
    %v984 = vld [vmem:[%s1 + $0x1e18] sm:$0xff]
    %v985 = vld [vmem:[%s1 + $0x1e20] sm:$0xff]
    %v986 = vld [vmem:[%s1 + $0x1e28] sm:$0xff]
    %v987 = vld [vmem:[%s1 + $0x1e30] sm:$0xff]
    %v988 = vld [vmem:[%s1 + $0x1e38] sm:$0xff]
    %v989 = vld [vmem:[%s1 + $0x1e40] sm:$0xff]
    %v990 = vld [vmem:[%s1 + $0x1e48] sm:$0xff]
    %v991 = vld [vmem:[%s1 + $0x1e50] sm:$0xff]
    %v992 = vld [vmem:[%s1 + $0x1e58] sm:$0xff]
    %v993 = vld [vmem:[%s1 + $0x1e60] sm:$0xff]
    %v994 = vld [vmem:[%s1 + $0x1e68] sm:$0xff]
    %v995 = vld [vmem:[%s1 + $0x1e70] sm:$0xff]
    %v996 = vld [vmem:[%s1 + $0x1e78] sm:$0xff]
    %v997 = vld [vmem:[%s1 + $0x1e80] sm:$0xff]
    %v998 = vld [vmem:[%s1 + $0x1e88] sm:$0xff]
    %v999 = vld [vmem:[%s1 + $0x1e90] sm:$0xff]
    %v1000 = vld [vmem:[%s1 + $0x1e98] sm:$0xff]
    %v1001 = vld [vmem:[%s1 + $0x1ea0] sm:$0xff]
    %v1002 = vld [vmem:[%s1 + $0x1ea8] sm:$0xff]
    %v1003 = vld [vmem:[%s1 + $0x1eb0] sm:$0xff]
    %v1004 = vld [vmem:[%s1 + $0x1eb8] sm:$0xff]
    %v1005 = vld [vmem:[%s1 + $0x1ec0] sm:$0xff]
    %v1006 = vld [vmem:[%s1 + $0x1ec8] sm:$0xff]
    %v1007 = vld [vmem:[%s1 + $0x1ed0] sm:$0xff]
    %v1008 = vld [vmem:[%s1 + $0x1ed8] sm:$0xff]
    %v1009 = vld [vmem:[%s1 + $0x1ee0] sm:$0xff]
    %v1010 = vld [vmem:[%s1 + $0x1ee8] sm:$0xff]
    %v1011 = vld [vmem:[%s1 + $0x1ef0] sm:$0xff]
    %v1012 = vld [vmem:[%s1 + $0x1ef8] sm:$0xff]
    %v1013 = vld [vmem:[%s1 + $0x1f00] sm:$0xff]
    %v1014 = vld [vmem:[%s1 + $0x1f08] sm:$0xff]
    %v1015 = vld [vmem:[%s1 + $0x1f10] sm:$0xff]
    %v1016 = vld [vmem:[%s1 + $0x1f18] sm:$0xff]
    %v1017 = vld [vmem:[%s1 + $0x1f20] sm:$0xff]
    %v1018 = vld [vmem:[%s1 + $0x1f28] sm:$0xff]
    %v1019 = vld [vmem:[%s1 + $0x1f30] sm:$0xff]
    %v1020 = vld [vmem:[%s1 + $0x1f38] sm:$0xff]
    %v1021 = vld [vmem:[%s1 + $0x1f40] sm:$0xff]
    %v1022 = vld [vmem:[%s1 + $0x1f48] sm:$0xff]
    %v1023 = vld [vmem:[%s1 + $0x1f50] sm:$0xff]
    %v1024 = vld [vmem:[%s1 + $0x1f58] sm:$0xff]
    %v1025 = vld [vmem:[%s1 + $0x1f60] sm:$0xff]
    %v1026 = vld [vmem:[%s1 + $0x1f68] sm:$0xff]
    %v1027 = vld [vmem:[%s1 + $0x1f70] sm:$0xff]
    %v1028 = vld [vmem:[%s1 + $0x1f78] sm:$0xff]
    %v1029 = vld [vmem:[%s1 + $0x1f80] sm:$0xff]
    %v1030 = vld [vmem:[%s1 + $0x1f88] sm:$0xff]
    %v1031 = vld [vmem:[%s1 + $0x1f90] sm:$0xff]
    %v1032 = vld [vmem:[%s1 + $0x1f98] sm:$0xff]
    %v1033 = vld [vmem:[%s1 + $0x1fa0] sm:$0xff]
    %v1034 = vld [vmem:[%s1 + $0x1fa8] sm:$0xff]
    %v1035 = vld [vmem:[%s1 + $0x1fb0] sm:$0xff]
    %v1036 = vld [vmem:[%s1 + $0x1fb8] sm:$0xff]
    %v1037 = vld [vmem:[%s1 + $0x1fc0] sm:$0xff]
    %v1038 = vld [vmem:[%s1 + $0x1fc8] sm:$0xff]
    %v1039 = vld [vmem:[%s1 + $0x1fd0] sm:$0xff]
    %v1040 = vld [vmem:[%s1 + $0x1fd8] sm:$0xff]
    %v1041 = vld [vmem:[%s1 + $0x1fe0] sm:$0xff]
    %v1042 = vld [vmem:[%s1 + $0x1fe8] sm:$0xff]
    %v1043 = vld [vmem:[%s1 + $0x1ff0] sm:$0xff]
    %v1044 = vld [vmem:[%s1 + $0x1ff8] sm:$0xff]
    %v1045 = vld [vmem:[%s1 + $0x2000] sm:$0xff]
    %v1046 = vld [vmem:[%s1 + $0x2008] sm:$0xff]
    %v1047 = vld [vmem:[%s1 + $0x2010] sm:$0xff]
    %v1048 = vld [vmem:[%s1 + $0x2018] sm:$0xff]
    %v1049 = vld [vmem:[%s1 + $0x2020] sm:$0xff]
    %v1050 = vld [vmem:[%s1 + $0x2028] sm:$0xff]
    %v1051 = vld [vmem:[%s1 + $0x2030] sm:$0xff]
    %v1052 = vld [vmem:[%s1 + $0x2038] sm:$0xff]
    %v1053 = vld [vmem:[%s1 + $0x2040] sm:$0xff]
    %v1054 = vld [vmem:[%s1 + $0x2048] sm:$0xff]
    %v1055 = vld [vmem:[%s1 + $0x2050] sm:$0xff]
    %v1056 = vld [vmem:[%s1 + $0x2058] sm:$0xff]
    %v1057 = vld [vmem:[%s1 + $0x2060] sm:$0xff]
    %v1058 = vld [vmem:[%s1 + $0x2068] sm:$0xff]
    %v1059 = vld [vmem:[%s1 + $0x2070] sm:$0xff]
    %v1060 = vld [vmem:[%s1 + $0x2078] sm:$0xff]
    %v1061 = vld [vmem:[%s1 + $0x2080] sm:$0xff]
    %v1062 = vld [vmem:[%s1 + $0x2088] sm:$0xff]
    %v1063 = vld [vmem:[%s1 + $0x2090] sm:$0xff]
    %v1064 = vld [vmem:[%s1 + $0x2098] sm:$0xff]
    %v1065 = vld [vmem:[%s1 + $0x20a0] sm:$0xff]
    %v1066 = vld [vmem:[%s1 + $0x20a8] sm:$0xff]
    %v1067 = vld [vmem:[%s1 + $0x20b0] sm:$0xff]
    %v1068 = vld [vmem:[%s1 + $0x20b8] sm:$0xff]
    %v1069 = vld [vmem:[%s1 + $0x20c0] sm:$0xff]
    %v1070 = vld [vmem:[%s1 + $0x20c8] sm:$0xff]
    %v1071 = vld [vmem:[%s1 + $0x20d0] sm:$0xff]
    %v1072 = vld [vmem:[%s1 + $0x20d8] sm:$0xff]
    %v1073 = vld [vmem:[%s1 + $0x20e0] sm:$0xff]
    %v1074 = vld [vmem:[%s1 + $0x20e8] sm:$0xff]
    %v1075 = vld [vmem:[%s1 + $0x20f0] sm:$0xff]
    %v1076 = vld [vmem:[%s1 + $0x20f8] sm:$0xff]
    %v1077 = vld [vmem:[%s1 + $0x2100] sm:$0xff]
    %v1078 = vld [vmem:[%s1 + $0x2108] sm:$0xff]
    %v1079 = vld [vmem:[%s1 + $0x2110] sm:$0xff]
    %v1080 = vld [vmem:[%s1 + $0x2118] sm:$0xff]
    %v1081 = vld [vmem:[%s1 + $0x2120] sm:$0xff]
    %v1082 = vld [vmem:[%s1 + $0x2128] sm:$0xff]
    %v1083 = vld [vmem:[%s1 + $0x2130] sm:$0xff]
    %v1084 = vld [vmem:[%s1 + $0x2138] sm:$0xff]
    %v1085 = vld [vmem:[%s1 + $0x2140] sm:$0xff]
    %v1086 = vld [vmem:[%s1 + $0x2148] sm:$0xff]
    %v1087 = vld [vmem:[%s1 + $0x2150] sm:$0xff]
    %v1088 = vld [vmem:[%s1 + $0x2158] sm:$0xff]
    %v1089 = vld [vmem:[%s1 + $0x2160] sm:$0xff]
    %v1090 = vld [vmem:[%s1 + $0x2168] sm:$0xff]
    %v1091 = vld [vmem:[%s1 + $0x2170] sm:$0xff]
    %v1092 = vld [vmem:[%s1 + $0x2178] sm:$0xff]
    %v1093 = vld [vmem:[%s1 + $0x2180] sm:$0xff]
    %v1094 = vld [vmem:[%s1 + $0x2188] sm:$0xff]
    %v1095 = vld [vmem:[%s1 + $0x2190] sm:$0xff]
    %v1096 = vld [vmem:[%s1 + $0x2198] sm:$0xff]
    %v1097 = vld [vmem:[%s1 + $0x21a0] sm:$0xff]
    %v1098 = vld [vmem:[%s1 + $0x21a8] sm:$0xff]
    %v1099 = vld [vmem:[%s1 + $0x21b0] sm:$0xff]
    %v1100 = vld [vmem:[%s1 + $0x21b8] sm:$0xff]
    %v1101 = vld [vmem:[%s1 + $0x21c0] sm:$0xff]
    %v1102 = vld [vmem:[%s1 + $0x21c8] sm:$0xff]
    %v1103 = vld [vmem:[%s1 + $0x21d0] sm:$0xff]
    %v1104 = vld [vmem:[%s1 + $0x21d8] sm:$0xff]
    %v1105 = vld [vmem:[%s1 + $0x21e0] sm:$0xff]
    %v1106 = vld [vmem:[%s1 + $0x21e8] sm:$0xff]
    %v1107 = vld [vmem:[%s1 + $0x21f0] sm:$0xff]
    %v1108 = vld [vmem:[%s1 + $0x21f8] sm:$0xff]
    %v1109 = vld [vmem:[%s1 + $0x2200] sm:$0xff]
    %v1110 = vld [vmem:[%s1 + $0x2208] sm:$0xff]
    %v1111 = vld [vmem:[%s1 + $0x2210] sm:$0xff]
    %v1112 = vld [vmem:[%s1 + $0x2218] sm:$0xff]
    %v1113 = vld [vmem:[%s1 + $0x2220] sm:$0xff]
    %v1114 = vld [vmem:[%s1 + $0x2228] sm:$0xff]
    %v1115 = vld [vmem:[%s1 + $0x2230] sm:$0xff]
    %v1116 = vld [vmem:[%s1 + $0x2238] sm:$0xff]
    %v1117 = vld [vmem:[%s1 + $0x2240] sm:$0xff]
    %v1118 = vld [vmem:[%s1 + $0x2248] sm:$0xff]
    %v1119 = vld [vmem:[%s1 + $0x2250] sm:$0xff]
    %v1120 = vld [vmem:[%s1 + $0x2258] sm:$0xff]
    %v1121 = vld [vmem:[%s1 + $0x2260] sm:$0xff]
    %v1122 = vld [vmem:[%s1 + $0x2268] sm:$0xff]
    %v1123 = vld [vmem:[%s1 + $0x2270] sm:$0xff]
    %v1124 = vld [vmem:[%s1 + $0x2278] sm:$0xff]
    %v1125 = vld [vmem:[%s1 + $0x2280] sm:$0xff]
    %v1126 = vld [vmem:[%s1 + $0x2288] sm:$0xff]
    %v1127 = vld [vmem:[%s1 + $0x2290] sm:$0xff]
    %v1128 = vld [vmem:[%s1 + $0x2298] sm:$0xff]
    %v1129 = vld [vmem:[%s1 + $0x22a0] sm:$0xff]
    %v1130 = vld [vmem:[%s1 + $0x22a8] sm:$0xff]
    %v1131 = vld [vmem:[%s1 + $0x22b0] sm:$0xff]
    %v1132 = vld [vmem:[%s1 + $0x22b8] sm:$0xff]
    %v1133 = vld [vmem:[%s1 + $0x22c0] sm:$0xff]
    %v1134 = vld [vmem:[%s1 + $0x22c8] sm:$0xff]
    %v1135 = vld [vmem:[%s1 + $0x22d0] sm:$0xff]
    %v1136 = vld [vmem:[%s1 + $0x22d8] sm:$0xff]
    %v1137 = vld [vmem:[%s1 + $0x22e0] sm:$0xff]
    %v1138 = vld [vmem:[%s1 + $0x22e8] sm:$0xff]
    %v1139 = vld [vmem:[%s1 + $0x22f0] sm:$0xff]
    %v1140 = vld [vmem:[%s1 + $0x22f8] sm:$0xff]
    %v1141 = vld [vmem:[%s1 + $0x2300] sm:$0xff]
    %v1142 = vld [vmem:[%s1 + $0x2308] sm:$0xff]
    %v1143 = vld [vmem:[%s1 + $0x2310] sm:$0xff]
    %v1144 = vld [vmem:[%s1 + $0x2318] sm:$0xff]
    %v1145 = vld [vmem:[%s1 + $0x2320] sm:$0xff]
    %v1146 = vld [vmem:[%s1 + $0x2328] sm:$0xff]
    %v1147 = vld [vmem:[%s1 + $0x2330] sm:$0xff]
    %v1148 = vld [vmem:[%s1 + $0x2338] sm:$0xff]
    %v1149 = vld [vmem:[%s1 + $0x2340] sm:$0xff]
    %v1150 = vld [vmem:[%s1 + $0x2348] sm:$0xff]
    %v1151 = vld [vmem:[%s1 + $0x2350] sm:$0xff]
    %v1152 = vld [vmem:[%s1 + $0x2358] sm:$0xff]
    %v1153 = vld [vmem:[%s1 + $0x2360] sm:$0xff]
    %v1154 = vld [vmem:[%s1 + $0x2368] sm:$0xff]
    %v1155 = vld [vmem:[%s1 + $0x2370] sm:$0xff]
    %v1156 = vld [vmem:[%s1 + $0x2378] sm:$0xff]
    %v1157 = vld [vmem:[%s1 + $0x2380] sm:$0xff]
    %v1158 = vld [vmem:[%s1 + $0x2388] sm:$0xff]
    %v1159 = vld [vmem:[%s1 + $0x2390] sm:$0xff]
    %v1160 = vld [vmem:[%s1 + $0x2398] sm:$0xff]
    %v1161 = vld [vmem:[%s1 + $0x23a0] sm:$0xff]
    %v1162 = vld [vmem:[%s1 + $0x23a8] sm:$0xff]
    %v1163 = vld [vmem:[%s1 + $0x23b0] sm:$0xff]
    %v1164 = vld [vmem:[%s1 + $0x23b8] sm:$0xff]
    %v1165 = vld [vmem:[%s1 + $0x23c0] sm:$0xff]
    %v1166 = vld [vmem:[%s1 + $0x23c8] sm:$0xff]
    %v1167 = vld [vmem:[%s1 + $0x23d0] sm:$0xff]
    %v1168 = vld [vmem:[%s1 + $0x23d8] sm:$0xff]
    %v1169 = vld [vmem:[%s1 + $0x23e0] sm:$0xff]
    %v1170 = vld [vmem:[%s1 + $0x23e8] sm:$0xff]
    %v1171 = vld [vmem:[%s1 + $0x23f0] sm:$0xff]
    %v1172 = vld [vmem:[%s1 + $0x23f8] sm:$0xff]
    %v1173 = vld [vmem:[%s2] sm:$0xff]
    %v1174 = vld [vmem:[%s2 + $0x8] sm:$0xff]
    %v1175 = vld [vmem:[%s2 + $0x10] sm:$0xff]
    %v1179 = vlaneseq
    %v1180 = vshrl.u32 %v1179, 7
    %v1181 = vsub.s32 0, %v1180
    %v1182 = vrot.slane %v1173, %v1181
    %v1183 = vlaneseq
    %v1184 = vshrl.u32 %v1183, 7
    %v1185 = vsub.s32 1, %v1184
    %v1186 = vrot.slane %v1173, %v1185
    %v1187 = vlaneseq
    %v1188 = vshrl.u32 %v1187, 7
    %v1189 = vsub.s32 2, %v1188
    %v1190 = vrot.slane %v1173, %v1189
    %v1191 = vlaneseq
    %v1192 = vshrl.u32 %v1191, 7
    %v1193 = vsub.s32 3, %v1192
    %v1194 = vrot.slane %v1173, %v1193
    %v1195 = vlaneseq
    %v1196 = vshrl.u32 %v1195, 7
    %v1197 = vsub.s32 4, %v1196
    %v1198 = vrot.slane %v1173, %v1197
    %v1199 = vlaneseq
    %v1200 = vshrl.u32 %v1199, 7
    %v1201 = vsub.s32 5, %v1200
    %v1202 = vrot.slane %v1173, %v1201
    %v1203 = vlaneseq
    %v1204 = vshrl.u32 %v1203, 7
    %v1205 = vsub.s32 6, %v1204
    %v1206 = vrot.slane %v1173, %v1205
    %v1207 = vlaneseq
    %v1208 = vshrl.u32 %v1207, 7
    %v1209 = vsub.s32 7, %v1208
    %v1210 = vrot.slane %v1173, %v1209
    %v1211 = vlaneseq
    %v1212 = vshrl.u32 %v1211, 7
    %v1213 = vsub.s32 0, %v1212
    %v1214 = vrot.slane %v1174, %v1213
    %v1215 = vlaneseq
    %v1216 = vshrl.u32 %v1215, 7
    %v1217 = vsub.s32 1, %v1216
    %v1218 = vrot.slane %v1174, %v1217
    %v1219 = vlaneseq
    %v1220 = vshrl.u32 %v1219, 7
    %v1221 = vsub.s32 2, %v1220
    %v1222 = vrot.slane %v1174, %v1221
    %v1223 = vlaneseq
    %v1224 = vshrl.u32 %v1223, 7
    %v1225 = vsub.s32 3, %v1224
    %v1226 = vrot.slane %v1174, %v1225
    %v1227 = vlaneseq
    %v1228 = vshrl.u32 %v1227, 7
    %v1229 = vsub.s32 4, %v1228
    %v1230 = vrot.slane %v1174, %v1229
    %v1231 = vlaneseq
    %v1232 = vshrl.u32 %v1231, 7
    %v1233 = vsub.s32 5, %v1232
    %v1234 = vrot.slane %v1174, %v1233
    %v1235 = vlaneseq
    %v1236 = vshrl.u32 %v1235, 7
    %v1237 = vsub.s32 6, %v1236
    %v1238 = vrot.slane %v1174, %v1237
    %v1239 = vlaneseq
    %v1240 = vshrl.u32 %v1239, 7
    %v1241 = vsub.s32 7, %v1240
    %v1242 = vrot.slane %v1174, %v1241
    %v1243 = vlaneseq
    %v1244 = vshrl.u32 %v1243, 7
    %v1245 = vsub.s32 0, %v1244
    %v1246 = vrot.slane %v1175, %v1245
    %v1247 = vlaneseq
    %v1248 = vshrl.u32 %v1247, 7
    %v1249 = vsub.s32 1, %v1248
    %v1250 = vrot.slane %v1175, %v1249
    %v1251 = vlaneseq
    %v1252 = vshrl.u32 %v1251, 7
    %v1253 = vsub.s32 2, %v1252
    %v1254 = vrot.slane %v1175, %v1253
    %v1255 = vlaneseq
    %v1256 = vshrl.u32 %v1255, 7
    %v1257 = vsub.s32 3, %v1256
    %v1258 = vrot.slane %v1175, %v1257
    %v1259 = vlaneseq
    %v1260 = vshrl.u32 %v1259, 7
    %v1261 = vsub.s32 4, %v1260
    %v1262 = vrot.slane %v1175, %v1261
    %v1263 = vlaneseq
    %v1264 = vshrl.u32 %v1263, 7
    %v1265 = vsub.s32 5, %v1264
    %v1266 = vrot.slane %v1175, %v1265
    %v1267 = vlaneseq
    %v1268 = vshrl.u32 %v1267, 7
    %v1269 = vsub.s32 6, %v1268
    %v1270 = vrot.slane %v1175, %v1269
    %v1271 = vlaneseq
    %v1272 = vshrl.u32 %v1271, 7
    %v1273 = vsub.s32 7, %v1272
    %v1274 = vrot.slane %v1175, %v1273
    %v1305 = vunpack.c.l.b16 %v15
    %v1306 = vunpack.c.h.b16 %v15
    %v1307 = vunpack.c.l.b16 %v16
    %v1308 = vunpack.c.h.b16 %v16
    %v1309 = vunpack.c.l.b16 %v17
    %v1310 = vunpack.c.h.b16 %v17
    %v1311 = vunpack.c.l.b16 %v18
    %v1312 = vunpack.c.h.b16 %v18
    %v1313 = vunpack.c.l.b16 %v19
    %v1314 = vunpack.c.h.b16 %v19
    %v1315 = vunpack.c.l.b16 %v20
    %v1316 = vunpack.c.h.b16 %v20
    %v1317 = vpack.c.b16 %v1311, %v1305
    %v1318 = vpack.c.b16 %v1312, %v1306
    %v1319 = vpack.c.b16 %v1313, %v1307
    %v1320 = vpack.c.b16 %v1314, %v1308
    %v1321 = vpack.c.b16 %v1315, %v1309
    %v1322 = vpack.c.b16 %v1316, %v1310
    %v2481 = vunpack.c.l.b16 %v21
    %v2482 = vunpack.c.h.b16 %v21
    %v2483 = vunpack.c.l.b16 %v22
    %v2484 = vunpack.c.h.b16 %v22
    %v2485 = vunpack.c.l.b16 %v23
    %v2486 = vunpack.c.h.b16 %v23
    %v2487 = vunpack.c.l.b16 %v24
    %v2488 = vunpack.c.h.b16 %v24
    %v2489 = vunpack.c.l.b16 %v25
    %v2490 = vunpack.c.h.b16 %v25
    %v2491 = vunpack.c.l.b16 %v26
    %v2492 = vunpack.c.h.b16 %v26
    %v2493 = vunpack.c.l.b16 %v27
    %v2494 = vunpack.c.h.b16 %v27
    %v2495 = vunpack.c.l.b16 %v28
    %v2496 = vunpack.c.h.b16 %v28
    %v2497 = vunpack.c.l.b16 %v29
    %v2498 = vunpack.c.h.b16 %v29
    %v2499 = vunpack.c.l.b16 %v30
    %v2500 = vunpack.c.h.b16 %v30
    %v2501 = vunpack.c.l.b16 %v31
    %v2502 = vunpack.c.h.b16 %v31
    %v2503 = vunpack.c.l.b16 %v32
    %v2504 = vunpack.c.h.b16 %v32
    %v2505 = vunpack.c.l.b16 %v33
    %v2506 = vunpack.c.h.b16 %v33
    %v2507 = vunpack.c.l.b16 %v34
    %v2508 = vunpack.c.h.b16 %v34
    %v2509 = vunpack.c.l.b16 %v35
    %v2510 = vunpack.c.h.b16 %v35
    %v2511 = vunpack.c.l.b16 %v36
    %v2512 = vunpack.c.h.b16 %v36
    %v2513 = vunpack.c.l.b16 %v37
    %v2514 = vunpack.c.h.b16 %v37
    %v2515 = vunpack.c.l.b16 %v38
    %v2516 = vunpack.c.h.b16 %v38
    %v2517 = vunpack.c.l.b16 %v39
    %v2518 = vunpack.c.h.b16 %v39
    %v2519 = vunpack.c.l.b16 %v40
    %v2520 = vunpack.c.h.b16 %v40
    %v2521 = vunpack.c.l.b16 %v41
    %v2522 = vunpack.c.h.b16 %v41
    %v2523 = vunpack.c.l.b16 %v42
    %v2524 = vunpack.c.h.b16 %v42
    %v2525 = vunpack.c.l.b16 %v43
    %v2526 = vunpack.c.h.b16 %v43
    %v2527 = vunpack.c.l.b16 %v44
    %v2528 = vunpack.c.h.b16 %v44
    %v2529 = vunpack.c.l.b16 %v45
    %v2530 = vunpack.c.h.b16 %v45
    %v2531 = vunpack.c.l.b16 %v46
    %v2532 = vunpack.c.h.b16 %v46
    %v2533 = vunpack.c.l.b16 %v47
    %v2534 = vunpack.c.h.b16 %v47
    %v2535 = vunpack.c.l.b16 %v48
    %v2536 = vunpack.c.h.b16 %v48
    %v2537 = vunpack.c.l.b16 %v49
    %v2538 = vunpack.c.h.b16 %v49
    %v2539 = vunpack.c.l.b16 %v50
    %v2540 = vunpack.c.h.b16 %v50
    %v2541 = vunpack.c.l.b16 %v51
    %v2542 = vunpack.c.h.b16 %v51
    %v2543 = vunpack.c.l.b16 %v52
    %v2544 = vunpack.c.h.b16 %v52
    %v2545 = vunpack.c.l.b16 %v53
    %v2546 = vunpack.c.h.b16 %v53
    %v2547 = vunpack.c.l.b16 %v54
    %v2548 = vunpack.c.h.b16 %v54
    %v2549 = vunpack.c.l.b16 %v55
    %v2550 = vunpack.c.h.b16 %v55
    %v2551 = vunpack.c.l.b16 %v56
    %v2552 = vunpack.c.h.b16 %v56
    %v2553 = vunpack.c.l.b16 %v57
    %v2554 = vunpack.c.h.b16 %v57
    %v2555 = vunpack.c.l.b16 %v58
    %v2556 = vunpack.c.h.b16 %v58
    %v2557 = vunpack.c.l.b16 %v59
    %v2558 = vunpack.c.h.b16 %v59
    %v2559 = vunpack.c.l.b16 %v60
    %v2560 = vunpack.c.h.b16 %v60
    %v2561 = vunpack.c.l.b16 %v61
    %v2562 = vunpack.c.h.b16 %v61
    %v2563 = vunpack.c.l.b16 %v62
    %v2564 = vunpack.c.h.b16 %v62
    %v2565 = vunpack.c.l.b16 %v63
    %v2566 = vunpack.c.h.b16 %v63
    %v2567 = vunpack.c.l.b16 %v64
    %v2568 = vunpack.c.h.b16 %v64
    %v2569 = vunpack.c.l.b16 %v65
    %v2570 = vunpack.c.h.b16 %v65
    %v2571 = vunpack.c.l.b16 %v66
    %v2572 = vunpack.c.h.b16 %v66
    %v2573 = vunpack.c.l.b16 %v67
    %v2574 = vunpack.c.h.b16 %v67
    %v2575 = vunpack.c.l.b16 %v68
    %v2576 = vunpack.c.h.b16 %v68
    %v2577 = vunpack.c.l.b16 %v69
    %v2578 = vunpack.c.h.b16 %v69
    %v2579 = vunpack.c.l.b16 %v70
    %v2580 = vunpack.c.h.b16 %v70
    %v2581 = vunpack.c.l.b16 %v71
    %v2582 = vunpack.c.h.b16 %v71
    %v2583 = vunpack.c.l.b16 %v72
    %v2584 = vunpack.c.h.b16 %v72
    %v2585 = vunpack.c.l.b16 %v73
    %v2586 = vunpack.c.h.b16 %v73
    %v2587 = vunpack.c.l.b16 %v74
    %v2588 = vunpack.c.h.b16 %v74
    %v2589 = vunpack.c.l.b16 %v75
    %v2590 = vunpack.c.h.b16 %v75
    %v2591 = vunpack.c.l.b16 %v76
    %v2592 = vunpack.c.h.b16 %v76
    %v2593 = vunpack.c.l.b16 %v77
    %v2594 = vunpack.c.h.b16 %v77
    %v2595 = vunpack.c.l.b16 %v78
    %v2596 = vunpack.c.h.b16 %v78
    %v2597 = vunpack.c.l.b16 %v79
    %v2598 = vunpack.c.h.b16 %v79
    %v2599 = vunpack.c.l.b16 %v80
    %v2600 = vunpack.c.h.b16 %v80
    %v2601 = vunpack.c.l.b16 %v81
    %v2602 = vunpack.c.h.b16 %v81
    %v2603 = vunpack.c.l.b16 %v82
    %v2604 = vunpack.c.h.b16 %v82
    %v2605 = vunpack.c.l.b16 %v83
    %v2606 = vunpack.c.h.b16 %v83
    %v2607 = vunpack.c.l.b16 %v84
    %v2608 = vunpack.c.h.b16 %v84
    %v2609 = vunpack.c.l.b16 %v85
    %v2610 = vunpack.c.h.b16 %v85
    %v2611 = vunpack.c.l.b16 %v86
    %v2612 = vunpack.c.h.b16 %v86
    %v2613 = vunpack.c.l.b16 %v87
    %v2614 = vunpack.c.h.b16 %v87
    %v2615 = vunpack.c.l.b16 %v88
    %v2616 = vunpack.c.h.b16 %v88
    %v2617 = vunpack.c.l.b16 %v89
    %v2618 = vunpack.c.h.b16 %v89
    %v2619 = vunpack.c.l.b16 %v90
    %v2620 = vunpack.c.h.b16 %v90
    %v2621 = vunpack.c.l.b16 %v91
    %v2622 = vunpack.c.h.b16 %v91
    %v2623 = vunpack.c.l.b16 %v92
    %v2624 = vunpack.c.h.b16 %v92
    %v2625 = vunpack.c.l.b16 %v93
    %v2626 = vunpack.c.h.b16 %v93
    %v2627 = vunpack.c.l.b16 %v94
    %v2628 = vunpack.c.h.b16 %v94
    %v2629 = vunpack.c.l.b16 %v95
    %v2630 = vunpack.c.h.b16 %v95
    %v2631 = vunpack.c.l.b16 %v96
    %v2632 = vunpack.c.h.b16 %v96
    %v2633 = vunpack.c.l.b16 %v97
    %v2634 = vunpack.c.h.b16 %v97
    %v2635 = vunpack.c.l.b16 %v98
    %v2636 = vunpack.c.h.b16 %v98
    %v2637 = vunpack.c.l.b16 %v99
    %v2638 = vunpack.c.h.b16 %v99
    %v2639 = vunpack.c.l.b16 %v100
    %v2640 = vunpack.c.h.b16 %v100
    %v2641 = vunpack.c.l.b16 %v101
    %v2642 = vunpack.c.h.b16 %v101
    %v2643 = vunpack.c.l.b16 %v102
    %v2644 = vunpack.c.h.b16 %v102
    %v2645 = vunpack.c.l.b16 %v103
    %v2646 = vunpack.c.h.b16 %v103
    %v2647 = vunpack.c.l.b16 %v104
    %v2648 = vunpack.c.h.b16 %v104
    %v2649 = vunpack.c.l.b16 %v105
    %v2650 = vunpack.c.h.b16 %v105
    %v2651 = vunpack.c.l.b16 %v106
    %v2652 = vunpack.c.h.b16 %v106
    %v2653 = vunpack.c.l.b16 %v107
    %v2654 = vunpack.c.h.b16 %v107
    %v2655 = vunpack.c.l.b16 %v108
    %v2656 = vunpack.c.h.b16 %v108
    %v2657 = vunpack.c.l.b16 %v109
    %v2658 = vunpack.c.h.b16 %v109
    %v2659 = vunpack.c.l.b16 %v110
    %v2660 = vunpack.c.h.b16 %v110
    %v2661 = vunpack.c.l.b16 %v111
    %v2662 = vunpack.c.h.b16 %v111
    %v2663 = vunpack.c.l.b16 %v112
    %v2664 = vunpack.c.h.b16 %v112
    %v2665 = vunpack.c.l.b16 %v113
    %v2666 = vunpack.c.h.b16 %v113
    %v2667 = vunpack.c.l.b16 %v114
    %v2668 = vunpack.c.h.b16 %v114
    %v2669 = vunpack.c.l.b16 %v115
    %v2670 = vunpack.c.h.b16 %v115
    %v2671 = vunpack.c.l.b16 %v116
    %v2672 = vunpack.c.h.b16 %v116
    %v2673 = vunpack.c.l.b16 %v117
    %v2674 = vunpack.c.h.b16 %v117
    %v2675 = vunpack.c.l.b16 %v118
    %v2676 = vunpack.c.h.b16 %v118
    %v2677 = vunpack.c.l.b16 %v119
    %v2678 = vunpack.c.h.b16 %v119
    %v2679 = vunpack.c.l.b16 %v120
    %v2680 = vunpack.c.h.b16 %v120
    %v2681 = vunpack.c.l.b16 %v121
    %v2682 = vunpack.c.h.b16 %v121
    %v2683 = vunpack.c.l.b16 %v122
    %v2684 = vunpack.c.h.b16 %v122
    %v2685 = vunpack.c.l.b16 %v123
    %v2686 = vunpack.c.h.b16 %v123
    %v2687 = vunpack.c.l.b16 %v124
    %v2688 = vunpack.c.h.b16 %v124
    %v2689 = vunpack.c.l.b16 %v125
    %v2690 = vunpack.c.h.b16 %v125
    %v2691 = vunpack.c.l.b16 %v126
    %v2692 = vunpack.c.h.b16 %v126
    %v2693 = vunpack.c.l.b16 %v127
    %v2694 = vunpack.c.h.b16 %v127
    %v2695 = vunpack.c.l.b16 %v128
    %v2696 = vunpack.c.h.b16 %v128
    %v2697 = vunpack.c.l.b16 %v129
    %v2698 = vunpack.c.h.b16 %v129
    %v2699 = vunpack.c.l.b16 %v130
    %v2700 = vunpack.c.h.b16 %v130
    %v2701 = vunpack.c.l.b16 %v131
    %v2702 = vunpack.c.h.b16 %v131
    %v2703 = vunpack.c.l.b16 %v132
    %v2704 = vunpack.c.h.b16 %v132
    %v2705 = vunpack.c.l.b16 %v133
    %v2706 = vunpack.c.h.b16 %v133
    %v2707 = vunpack.c.l.b16 %v134
    %v2708 = vunpack.c.h.b16 %v134
    %v2709 = vunpack.c.l.b16 %v135
    %v2710 = vunpack.c.h.b16 %v135
    %v2711 = vunpack.c.l.b16 %v136
    %v2712 = vunpack.c.h.b16 %v136
    %v2713 = vunpack.c.l.b16 %v137
    %v2714 = vunpack.c.h.b16 %v137
    %v2715 = vunpack.c.l.b16 %v138
    %v2716 = vunpack.c.h.b16 %v138
    %v2717 = vunpack.c.l.b16 %v139
    %v2718 = vunpack.c.h.b16 %v139
    %v2719 = vunpack.c.l.b16 %v140
    %v2720 = vunpack.c.h.b16 %v140
    %v2721 = vunpack.c.l.b16 %v141
    %v2722 = vunpack.c.h.b16 %v141
    %v2723 = vunpack.c.l.b16 %v142
    %v2724 = vunpack.c.h.b16 %v142
    %v2725 = vunpack.c.l.b16 %v143
    %v2726 = vunpack.c.h.b16 %v143
    %v2727 = vunpack.c.l.b16 %v144
    %v2728 = vunpack.c.h.b16 %v144
    %v2729 = vunpack.c.l.b16 %v145
    %v2730 = vunpack.c.h.b16 %v145
    %v2731 = vunpack.c.l.b16 %v146
    %v2732 = vunpack.c.h.b16 %v146
    %v2733 = vunpack.c.l.b16 %v147
    %v2734 = vunpack.c.h.b16 %v147
    %v2735 = vunpack.c.l.b16 %v148
    %v2736 = vunpack.c.h.b16 %v148
    %v2737 = vunpack.c.l.b16 %v149
    %v2738 = vunpack.c.h.b16 %v149
    %v2739 = vunpack.c.l.b16 %v150
    %v2740 = vunpack.c.h.b16 %v150
    %v2741 = vunpack.c.l.b16 %v151
    %v2742 = vunpack.c.h.b16 %v151
    %v2743 = vunpack.c.l.b16 %v152
    %v2744 = vunpack.c.h.b16 %v152
    %v2745 = vunpack.c.l.b16 %v153
    %v2746 = vunpack.c.h.b16 %v153
    %v2747 = vunpack.c.l.b16 %v154
    %v2748 = vunpack.c.h.b16 %v154
    %v2749 = vunpack.c.l.b16 %v155
    %v2750 = vunpack.c.h.b16 %v155
    %v2751 = vunpack.c.l.b16 %v156
    %v2752 = vunpack.c.h.b16 %v156
    %v2753 = vunpack.c.l.b16 %v157
    %v2754 = vunpack.c.h.b16 %v157
    %v2755 = vunpack.c.l.b16 %v158
    %v2756 = vunpack.c.h.b16 %v158
    %v2757 = vunpack.c.l.b16 %v159
    %v2758 = vunpack.c.h.b16 %v159
    %v2759 = vunpack.c.l.b16 %v160
    %v2760 = vunpack.c.h.b16 %v160
    %v2761 = vunpack.c.l.b16 %v161
    %v2762 = vunpack.c.h.b16 %v161
    %v2763 = vunpack.c.l.b16 %v162
    %v2764 = vunpack.c.h.b16 %v162
    %v2765 = vunpack.c.l.b16 %v163
    %v2766 = vunpack.c.h.b16 %v163
    %v2767 = vunpack.c.l.b16 %v164
    %v2768 = vunpack.c.h.b16 %v164
    %v2769 = vunpack.c.l.b16 %v165
    %v2770 = vunpack.c.h.b16 %v165
    %v2771 = vunpack.c.l.b16 %v166
    %v2772 = vunpack.c.h.b16 %v166
    %v2773 = vunpack.c.l.b16 %v167
    %v2774 = vunpack.c.h.b16 %v167
    %v2775 = vunpack.c.l.b16 %v168
    %v2776 = vunpack.c.h.b16 %v168
    %v2777 = vunpack.c.l.b16 %v169
    %v2778 = vunpack.c.h.b16 %v169
    %v2779 = vunpack.c.l.b16 %v170
    %v2780 = vunpack.c.h.b16 %v170
    %v2781 = vunpack.c.l.b16 %v171
    %v2782 = vunpack.c.h.b16 %v171
    %v2783 = vunpack.c.l.b16 %v172
    %v2784 = vunpack.c.h.b16 %v172
    %v2785 = vunpack.c.l.b16 %v173
    %v2786 = vunpack.c.h.b16 %v173
    %v2787 = vunpack.c.l.b16 %v174
    %v2788 = vunpack.c.h.b16 %v174
    %v2789 = vunpack.c.l.b16 %v175
    %v2790 = vunpack.c.h.b16 %v175
    %v2791 = vunpack.c.l.b16 %v176
    %v2792 = vunpack.c.h.b16 %v176
    %v2793 = vunpack.c.l.b16 %v177
    %v2794 = vunpack.c.h.b16 %v177
    %v2795 = vunpack.c.l.b16 %v178
    %v2796 = vunpack.c.h.b16 %v178
    %v2797 = vunpack.c.l.b16 %v179
    %v2798 = vunpack.c.h.b16 %v179
    %v2799 = vunpack.c.l.b16 %v180
    %v2800 = vunpack.c.h.b16 %v180
    %v2801 = vunpack.c.l.b16 %v181
    %v2802 = vunpack.c.h.b16 %v181
    %v2803 = vunpack.c.l.b16 %v182
    %v2804 = vunpack.c.h.b16 %v182
    %v2805 = vunpack.c.l.b16 %v183
    %v2806 = vunpack.c.h.b16 %v183
    %v2807 = vunpack.c.l.b16 %v184
    %v2808 = vunpack.c.h.b16 %v184
    %v2809 = vunpack.c.l.b16 %v185
    %v2810 = vunpack.c.h.b16 %v185
    %v2811 = vunpack.c.l.b16 %v186
    %v2812 = vunpack.c.h.b16 %v186
    %v2813 = vunpack.c.l.b16 %v187
    %v2814 = vunpack.c.h.b16 %v187
    %v2815 = vunpack.c.l.b16 %v188
    %v2816 = vunpack.c.h.b16 %v188
    %v2817 = vunpack.c.l.b16 %v189
    %v2818 = vunpack.c.h.b16 %v189
    %v2819 = vunpack.c.l.b16 %v190
    %v2820 = vunpack.c.h.b16 %v190
    %v2821 = vunpack.c.l.b16 %v191
    %v2822 = vunpack.c.h.b16 %v191
    %v2823 = vunpack.c.l.b16 %v192
    %v2824 = vunpack.c.h.b16 %v192
    %v2825 = vunpack.c.l.b16 %v193
    %v2826 = vunpack.c.h.b16 %v193
    %v2827 = vunpack.c.l.b16 %v194
    %v2828 = vunpack.c.h.b16 %v194
    %v2829 = vunpack.c.l.b16 %v195
    %v2830 = vunpack.c.h.b16 %v195
    %v2831 = vunpack.c.l.b16 %v196
    %v2832 = vunpack.c.h.b16 %v196
    %v2833 = vunpack.c.l.b16 %v197
    %v2834 = vunpack.c.h.b16 %v197
    %v2835 = vunpack.c.l.b16 %v198
    %v2836 = vunpack.c.h.b16 %v198
    %v2837 = vunpack.c.l.b16 %v199
    %v2838 = vunpack.c.h.b16 %v199
    %v2839 = vunpack.c.l.b16 %v200
    %v2840 = vunpack.c.h.b16 %v200
    %v2841 = vunpack.c.l.b16 %v201
    %v2842 = vunpack.c.h.b16 %v201
    %v2843 = vunpack.c.l.b16 %v202
    %v2844 = vunpack.c.h.b16 %v202
    %v2845 = vunpack.c.l.b16 %v203
    %v2846 = vunpack.c.h.b16 %v203
    %v2847 = vunpack.c.l.b16 %v204
    %v2848 = vunpack.c.h.b16 %v204
    %v2849 = vunpack.c.l.b16 %v205
    %v2850 = vunpack.c.h.b16 %v205
    %v2851 = vunpack.c.l.b16 %v206
    %v2852 = vunpack.c.h.b16 %v206
    %v2853 = vunpack.c.l.b16 %v207
    %v2854 = vunpack.c.h.b16 %v207
    %v2855 = vunpack.c.l.b16 %v208
    %v2856 = vunpack.c.h.b16 %v208
    %v2857 = vunpack.c.l.b16 %v209
    %v2858 = vunpack.c.h.b16 %v209
    %v2859 = vunpack.c.l.b16 %v210
    %v2860 = vunpack.c.h.b16 %v210
    %v2861 = vunpack.c.l.b16 %v211
    %v2862 = vunpack.c.h.b16 %v211
    %v2863 = vunpack.c.l.b16 %v212
    %v2864 = vunpack.c.h.b16 %v212
    %v2865 = vunpack.c.l.b16 %v213
    %v2866 = vunpack.c.h.b16 %v213
    %v2867 = vunpack.c.l.b16 %v214
    %v2868 = vunpack.c.h.b16 %v214
    %v2869 = vunpack.c.l.b16 %v215
    %v2870 = vunpack.c.h.b16 %v215
    %v2871 = vunpack.c.l.b16 %v216
    %v2872 = vunpack.c.h.b16 %v216
    %v2873 = vunpack.c.l.b16 %v217
    %v2874 = vunpack.c.h.b16 %v217
    %v2875 = vunpack.c.l.b16 %v218
    %v2876 = vunpack.c.h.b16 %v218
    %v2877 = vunpack.c.l.b16 %v219
    %v2878 = vunpack.c.h.b16 %v219
    %v2879 = vunpack.c.l.b16 %v220
    %v2880 = vunpack.c.h.b16 %v220
    %v2881 = vunpack.c.l.b16 %v221
    %v2882 = vunpack.c.h.b16 %v221
    %v2883 = vunpack.c.l.b16 %v222
    %v2884 = vunpack.c.h.b16 %v222
    %v2885 = vunpack.c.l.b16 %v223
    %v2886 = vunpack.c.h.b16 %v223
    %v2887 = vunpack.c.l.b16 %v224
    %v2888 = vunpack.c.h.b16 %v224
    %v2889 = vunpack.c.l.b16 %v225
    %v2890 = vunpack.c.h.b16 %v225
    %v2891 = vunpack.c.l.b16 %v226
    %v2892 = vunpack.c.h.b16 %v226
    %v2893 = vunpack.c.l.b16 %v227
    %v2894 = vunpack.c.h.b16 %v227
    %v2895 = vunpack.c.l.b16 %v228
    %v2896 = vunpack.c.h.b16 %v228
    %v2897 = vunpack.c.l.b16 %v229
    %v2898 = vunpack.c.h.b16 %v229
    %v2899 = vunpack.c.l.b16 %v230
    %v2900 = vunpack.c.h.b16 %v230
    %v2901 = vunpack.c.l.b16 %v231
    %v2902 = vunpack.c.h.b16 %v231
    %v2903 = vunpack.c.l.b16 %v232
    %v2904 = vunpack.c.h.b16 %v232
    %v2905 = vunpack.c.l.b16 %v233
    %v2906 = vunpack.c.h.b16 %v233
    %v2907 = vunpack.c.l.b16 %v234
    %v2908 = vunpack.c.h.b16 %v234
    %v2909 = vunpack.c.l.b16 %v235
    %v2910 = vunpack.c.h.b16 %v235
    %v2911 = vunpack.c.l.b16 %v236
    %v2912 = vunpack.c.h.b16 %v236
    %v2913 = vunpack.c.l.b16 %v237
    %v2914 = vunpack.c.h.b16 %v237
    %v2915 = vunpack.c.l.b16 %v238
    %v2916 = vunpack.c.h.b16 %v238
    %v2917 = vunpack.c.l.b16 %v239
    %v2918 = vunpack.c.h.b16 %v239
    %v2919 = vunpack.c.l.b16 %v240
    %v2920 = vunpack.c.h.b16 %v240
    %v2921 = vunpack.c.l.b16 %v241
    %v2922 = vunpack.c.h.b16 %v241
    %v2923 = vunpack.c.l.b16 %v242
    %v2924 = vunpack.c.h.b16 %v242
    %v2925 = vunpack.c.l.b16 %v243
    %v2926 = vunpack.c.h.b16 %v243
    %v2927 = vunpack.c.l.b16 %v244
    %v2928 = vunpack.c.h.b16 %v244
    %v2929 = vunpack.c.l.b16 %v245
    %v2930 = vunpack.c.h.b16 %v245
    %v2931 = vunpack.c.l.b16 %v246
    %v2932 = vunpack.c.h.b16 %v246
    %v2933 = vunpack.c.l.b16 %v247
    %v2934 = vunpack.c.h.b16 %v247
    %v2935 = vunpack.c.l.b16 %v248
    %v2936 = vunpack.c.h.b16 %v248
    %v2937 = vunpack.c.l.b16 %v249
    %v2938 = vunpack.c.h.b16 %v249
    %v2939 = vunpack.c.l.b16 %v250
    %v2940 = vunpack.c.h.b16 %v250
    %v2941 = vunpack.c.l.b16 %v251
    %v2942 = vunpack.c.h.b16 %v251
    %v2943 = vunpack.c.l.b16 %v252
    %v2944 = vunpack.c.h.b16 %v252
    %v2945 = vunpack.c.l.b16 %v253
    %v2946 = vunpack.c.h.b16 %v253
    %v2947 = vunpack.c.l.b16 %v254
    %v2948 = vunpack.c.h.b16 %v254
    %v2949 = vunpack.c.l.b16 %v255
    %v2950 = vunpack.c.h.b16 %v255
    %v2951 = vunpack.c.l.b16 %v256
    %v2952 = vunpack.c.h.b16 %v256
    %v2953 = vunpack.c.l.b16 %v257
    %v2954 = vunpack.c.h.b16 %v257
    %v2955 = vunpack.c.l.b16 %v258
    %v2956 = vunpack.c.h.b16 %v258
    %v2957 = vunpack.c.l.b16 %v259
    %v2958 = vunpack.c.h.b16 %v259
    %v2959 = vunpack.c.l.b16 %v260
    %v2960 = vunpack.c.h.b16 %v260
    %v2961 = vunpack.c.l.b16 %v261
    %v2962 = vunpack.c.h.b16 %v261
    %v2963 = vunpack.c.l.b16 %v262
    %v2964 = vunpack.c.h.b16 %v262
    %v2965 = vunpack.c.l.b16 %v263
    %v2966 = vunpack.c.h.b16 %v263
    %v2967 = vunpack.c.l.b16 %v264
    %v2968 = vunpack.c.h.b16 %v264
    %v2969 = vunpack.c.l.b16 %v265
    %v2970 = vunpack.c.h.b16 %v265
    %v2971 = vunpack.c.l.b16 %v266
    %v2972 = vunpack.c.h.b16 %v266
    %v2973 = vunpack.c.l.b16 %v267
    %v2974 = vunpack.c.h.b16 %v267
    %v2975 = vunpack.c.l.b16 %v268
    %v2976 = vunpack.c.h.b16 %v268
    %v2977 = vunpack.c.l.b16 %v269
    %v2978 = vunpack.c.h.b16 %v269
    %v2979 = vunpack.c.l.b16 %v270
    %v2980 = vunpack.c.h.b16 %v270
    %v2981 = vunpack.c.l.b16 %v271
    %v2982 = vunpack.c.h.b16 %v271
    %v2983 = vunpack.c.l.b16 %v272
    %v2984 = vunpack.c.h.b16 %v272
    %v2985 = vunpack.c.l.b16 %v273
    %v2986 = vunpack.c.h.b16 %v273
    %v2987 = vunpack.c.l.b16 %v274
    %v2988 = vunpack.c.h.b16 %v274
    %v2989 = vunpack.c.l.b16 %v275
    %v2990 = vunpack.c.h.b16 %v275
    %v2991 = vunpack.c.l.b16 %v276
    %v2992 = vunpack.c.h.b16 %v276
    %v2993 = vunpack.c.l.b16 %v277
    %v2994 = vunpack.c.h.b16 %v277
    %v2995 = vunpack.c.l.b16 %v278
    %v2996 = vunpack.c.h.b16 %v278
    %v2997 = vunpack.c.l.b16 %v279
    %v2998 = vunpack.c.h.b16 %v279
    %v2999 = vunpack.c.l.b16 %v280
    %v3000 = vunpack.c.h.b16 %v280
    %v3001 = vunpack.c.l.b16 %v281
    %v3002 = vunpack.c.h.b16 %v281
    %v3003 = vunpack.c.l.b16 %v282
    %v3004 = vunpack.c.h.b16 %v282
    %v3005 = vunpack.c.l.b16 %v283
    %v3006 = vunpack.c.h.b16 %v283
    %v3007 = vunpack.c.l.b16 %v284
    %v3008 = vunpack.c.h.b16 %v284
    %v3009 = vunpack.c.l.b16 %v285
    %v3010 = vunpack.c.h.b16 %v285
    %v3011 = vunpack.c.l.b16 %v286
    %v3012 = vunpack.c.h.b16 %v286
    %v3013 = vunpack.c.l.b16 %v287
    %v3014 = vunpack.c.h.b16 %v287
    %v3015 = vunpack.c.l.b16 %v288
    %v3016 = vunpack.c.h.b16 %v288
    %v3017 = vunpack.c.l.b16 %v289
    %v3018 = vunpack.c.h.b16 %v289
    %v3019 = vunpack.c.l.b16 %v290
    %v3020 = vunpack.c.h.b16 %v290
    %v3021 = vunpack.c.l.b16 %v291
    %v3022 = vunpack.c.h.b16 %v291
    %v3023 = vunpack.c.l.b16 %v292
    %v3024 = vunpack.c.h.b16 %v292
    %v3025 = vunpack.c.l.b16 %v293
    %v3026 = vunpack.c.h.b16 %v293
    %v3027 = vunpack.c.l.b16 %v294
    %v3028 = vunpack.c.h.b16 %v294
    %v3029 = vunpack.c.l.b16 %v295
    %v3030 = vunpack.c.h.b16 %v295
    %v3031 = vunpack.c.l.b16 %v296
    %v3032 = vunpack.c.h.b16 %v296
    %v3033 = vunpack.c.l.b16 %v297
    %v3034 = vunpack.c.h.b16 %v297
    %v3035 = vunpack.c.l.b16 %v298
    %v3036 = vunpack.c.h.b16 %v298
    %v3037 = vunpack.c.l.b16 %v299
    %v3038 = vunpack.c.h.b16 %v299
    %v3039 = vunpack.c.l.b16 %v300
    %v3040 = vunpack.c.h.b16 %v300
    %v3041 = vunpack.c.l.b16 %v301
    %v3042 = vunpack.c.h.b16 %v301
    %v3043 = vunpack.c.l.b16 %v302
    %v3044 = vunpack.c.h.b16 %v302
    %v3045 = vunpack.c.l.b16 %v303
    %v3046 = vunpack.c.h.b16 %v303
    %v3047 = vunpack.c.l.b16 %v304
    %v3048 = vunpack.c.h.b16 %v304
    %v3049 = vunpack.c.l.b16 %v305
    %v3050 = vunpack.c.h.b16 %v305
    %v3051 = vunpack.c.l.b16 %v306
    %v3052 = vunpack.c.h.b16 %v306
    %v3053 = vunpack.c.l.b16 %v307
    %v3054 = vunpack.c.h.b16 %v307
    %v3055 = vunpack.c.l.b16 %v308
    %v3056 = vunpack.c.h.b16 %v308
    %v3057 = vunpack.c.l.b16 %v309
    %v3058 = vunpack.c.h.b16 %v309
    %v3059 = vunpack.c.l.b16 %v310
    %v3060 = vunpack.c.h.b16 %v310
    %v3061 = vunpack.c.l.b16 %v311
    %v3062 = vunpack.c.h.b16 %v311
    %v3063 = vunpack.c.l.b16 %v312
    %v3064 = vunpack.c.h.b16 %v312
    %v3065 = vunpack.c.l.b16 %v313
    %v3066 = vunpack.c.h.b16 %v313
    %v3067 = vunpack.c.l.b16 %v314
    %v3068 = vunpack.c.h.b16 %v314
    %v3069 = vunpack.c.l.b16 %v315
    %v3070 = vunpack.c.h.b16 %v315
    %v3071 = vunpack.c.l.b16 %v316
    %v3072 = vunpack.c.h.b16 %v316
    %v3073 = vunpack.c.l.b16 %v317
    %v3074 = vunpack.c.h.b16 %v317
    %v3075 = vunpack.c.l.b16 %v318
    %v3076 = vunpack.c.h.b16 %v318
    %v3077 = vunpack.c.l.b16 %v319
    %v3078 = vunpack.c.h.b16 %v319
    %v3079 = vunpack.c.l.b16 %v320
    %v3080 = vunpack.c.h.b16 %v320
    %v3081 = vunpack.c.l.b16 %v321
    %v3082 = vunpack.c.h.b16 %v321
    %v3083 = vunpack.c.l.b16 %v322
    %v3084 = vunpack.c.h.b16 %v322
    %v3085 = vunpack.c.l.b16 %v323
    %v3086 = vunpack.c.h.b16 %v323
    %v3087 = vunpack.c.l.b16 %v324
    %v3088 = vunpack.c.h.b16 %v324
    %v3089 = vunpack.c.l.b16 %v325
    %v3090 = vunpack.c.h.b16 %v325
    %v3091 = vunpack.c.l.b16 %v326
    %v3092 = vunpack.c.h.b16 %v326
    %v3093 = vunpack.c.l.b16 %v327
    %v3094 = vunpack.c.h.b16 %v327
    %v3095 = vunpack.c.l.b16 %v328
    %v3096 = vunpack.c.h.b16 %v328
    %v3097 = vunpack.c.l.b16 %v329
    %v3098 = vunpack.c.h.b16 %v329
    %v3099 = vunpack.c.l.b16 %v330
    %v3100 = vunpack.c.h.b16 %v330
    %v3101 = vunpack.c.l.b16 %v331
    %v3102 = vunpack.c.h.b16 %v331
    %v3103 = vunpack.c.l.b16 %v332
    %v3104 = vunpack.c.h.b16 %v332
    %v3105 = vunpack.c.l.b16 %v333
    %v3106 = vunpack.c.h.b16 %v333
    %v3107 = vunpack.c.l.b16 %v334
    %v3108 = vunpack.c.h.b16 %v334
    %v3109 = vunpack.c.l.b16 %v335
    %v3110 = vunpack.c.h.b16 %v335
    %v3111 = vunpack.c.l.b16 %v336
    %v3112 = vunpack.c.h.b16 %v336
    %v3113 = vunpack.c.l.b16 %v337
    %v3114 = vunpack.c.h.b16 %v337
    %v3115 = vunpack.c.l.b16 %v338
    %v3116 = vunpack.c.h.b16 %v338
    %v3117 = vunpack.c.l.b16 %v339
    %v3118 = vunpack.c.h.b16 %v339
    %v3119 = vunpack.c.l.b16 %v340
    %v3120 = vunpack.c.h.b16 %v340
    %v3121 = vunpack.c.l.b16 %v341
    %v3122 = vunpack.c.h.b16 %v341
    %v3123 = vunpack.c.l.b16 %v342
    %v3124 = vunpack.c.h.b16 %v342
    %v3125 = vunpack.c.l.b16 %v343
    %v3126 = vunpack.c.h.b16 %v343
    %v3127 = vunpack.c.l.b16 %v344
    %v3128 = vunpack.c.h.b16 %v344
    %v3129 = vunpack.c.l.b16 %v345
    %v3130 = vunpack.c.h.b16 %v345
    %v3131 = vunpack.c.l.b16 %v346
    %v3132 = vunpack.c.h.b16 %v346
    %v3133 = vunpack.c.l.b16 %v347
    %v3134 = vunpack.c.h.b16 %v347
    %v3135 = vunpack.c.l.b16 %v348
    %v3136 = vunpack.c.h.b16 %v348
    %v3137 = vunpack.c.l.b16 %v349
    %v3138 = vunpack.c.h.b16 %v349
    %v3139 = vunpack.c.l.b16 %v350
    %v3140 = vunpack.c.h.b16 %v350
    %v3141 = vunpack.c.l.b16 %v351
    %v3142 = vunpack.c.h.b16 %v351
    %v3143 = vunpack.c.l.b16 %v352
    %v3144 = vunpack.c.h.b16 %v352
    %v3145 = vunpack.c.l.b16 %v353
    %v3146 = vunpack.c.h.b16 %v353
    %v3147 = vunpack.c.l.b16 %v354
    %v3148 = vunpack.c.h.b16 %v354
    %v3149 = vunpack.c.l.b16 %v355
    %v3150 = vunpack.c.h.b16 %v355
    %v3151 = vunpack.c.l.b16 %v356
    %v3152 = vunpack.c.h.b16 %v356
    %v3153 = vunpack.c.l.b16 %v357
    %v3154 = vunpack.c.h.b16 %v357
    %v3155 = vunpack.c.l.b16 %v358
    %v3156 = vunpack.c.h.b16 %v358
    %v3157 = vunpack.c.l.b16 %v359
    %v3158 = vunpack.c.h.b16 %v359
    %v3159 = vunpack.c.l.b16 %v360
    %v3160 = vunpack.c.h.b16 %v360
    %v3161 = vunpack.c.l.b16 %v361
    %v3162 = vunpack.c.h.b16 %v361
    %v3163 = vunpack.c.l.b16 %v362
    %v3164 = vunpack.c.h.b16 %v362
    %v3165 = vunpack.c.l.b16 %v363
    %v3166 = vunpack.c.h.b16 %v363
    %v3167 = vunpack.c.l.b16 %v364
    %v3168 = vunpack.c.h.b16 %v364
    %v3169 = vunpack.c.l.b16 %v365
    %v3170 = vunpack.c.h.b16 %v365
    %v3171 = vunpack.c.l.b16 %v366
    %v3172 = vunpack.c.h.b16 %v366
    %v3173 = vunpack.c.l.b16 %v367
    %v3174 = vunpack.c.h.b16 %v367
    %v3175 = vunpack.c.l.b16 %v368
    %v3176 = vunpack.c.h.b16 %v368
    %v3177 = vunpack.c.l.b16 %v369
    %v3178 = vunpack.c.h.b16 %v369
    %v3179 = vunpack.c.l.b16 %v370
    %v3180 = vunpack.c.h.b16 %v370
    %v3181 = vunpack.c.l.b16 %v371
    %v3182 = vunpack.c.h.b16 %v371
    %v3183 = vunpack.c.l.b16 %v372
    %v3184 = vunpack.c.h.b16 %v372
    %v3185 = vunpack.c.l.b16 %v373
    %v3186 = vunpack.c.h.b16 %v373
    %v3187 = vunpack.c.l.b16 %v374
    %v3188 = vunpack.c.h.b16 %v374
    %v3189 = vunpack.c.l.b16 %v375
    %v3190 = vunpack.c.h.b16 %v375
    %v3191 = vunpack.c.l.b16 %v376
    %v3192 = vunpack.c.h.b16 %v376
    %v3193 = vunpack.c.l.b16 %v377
    %v3194 = vunpack.c.h.b16 %v377
    %v3195 = vunpack.c.l.b16 %v378
    %v3196 = vunpack.c.h.b16 %v378
    %v3197 = vunpack.c.l.b16 %v379
    %v3198 = vunpack.c.h.b16 %v379
    %v3199 = vunpack.c.l.b16 %v380
    %v3200 = vunpack.c.h.b16 %v380
    %v3201 = vunpack.c.l.b16 %v381
    %v3202 = vunpack.c.h.b16 %v381
    %v3203 = vunpack.c.l.b16 %v382
    %v3204 = vunpack.c.h.b16 %v382
    %v3205 = vunpack.c.l.b16 %v383
    %v3206 = vunpack.c.h.b16 %v383
    %v3207 = vunpack.c.l.b16 %v384
    %v3208 = vunpack.c.h.b16 %v384
    %v3209 = vunpack.c.l.b16 %v385
    %v3210 = vunpack.c.h.b16 %v385
    %v3211 = vunpack.c.l.b16 %v386
    %v3212 = vunpack.c.h.b16 %v386
    %v3213 = vunpack.c.l.b16 %v387
    %v3214 = vunpack.c.h.b16 %v387
    %v3215 = vunpack.c.l.b16 %v388
    %v3216 = vunpack.c.h.b16 %v388
    %v3217 = vunpack.c.l.b16 %v389
    %v3218 = vunpack.c.h.b16 %v389
    %v3219 = vunpack.c.l.b16 %v390
    %v3220 = vunpack.c.h.b16 %v390
    %v3221 = vunpack.c.l.b16 %v391
    %v3222 = vunpack.c.h.b16 %v391
    %v3223 = vunpack.c.l.b16 %v392
    %v3224 = vunpack.c.h.b16 %v392
    %v3225 = vunpack.c.l.b16 %v393
    %v3226 = vunpack.c.h.b16 %v393
    %v3227 = vunpack.c.l.b16 %v394
    %v3228 = vunpack.c.h.b16 %v394
    %v3229 = vunpack.c.l.b16 %v395
    %v3230 = vunpack.c.h.b16 %v395
    %v3231 = vunpack.c.l.b16 %v396
    %v3232 = vunpack.c.h.b16 %v396
    %v3233 = vunpack.c.l.b16 %v397
    %v3234 = vunpack.c.h.b16 %v397
    %v3235 = vunpack.c.l.b16 %v398
    %v3236 = vunpack.c.h.b16 %v398
    %v3237 = vunpack.c.l.b16 %v399
    %v3238 = vunpack.c.h.b16 %v399
    %v3239 = vunpack.c.l.b16 %v400
    %v3240 = vunpack.c.h.b16 %v400
    %v3241 = vunpack.c.l.b16 %v401
    %v3242 = vunpack.c.h.b16 %v401
    %v3243 = vunpack.c.l.b16 %v402
    %v3244 = vunpack.c.h.b16 %v402
    %v3245 = vunpack.c.l.b16 %v403
    %v3246 = vunpack.c.h.b16 %v403
    %v3247 = vunpack.c.l.b16 %v404
    %v3248 = vunpack.c.h.b16 %v404
    %v3249 = vunpack.c.l.b16 %v405
    %v3250 = vunpack.c.h.b16 %v405
    %v3251 = vunpack.c.l.b16 %v406
    %v3252 = vunpack.c.h.b16 %v406
    %v3253 = vunpack.c.l.b16 %v407
    %v3254 = vunpack.c.h.b16 %v407
    %v3255 = vunpack.c.l.b16 %v408
    %v3256 = vunpack.c.h.b16 %v408
    %v3257 = vunpack.c.l.b16 %v409
    %v3258 = vunpack.c.h.b16 %v409
    %v3259 = vunpack.c.l.b16 %v410
    %v3260 = vunpack.c.h.b16 %v410
    %v3261 = vunpack.c.l.b16 %v411
    %v3262 = vunpack.c.h.b16 %v411
    %v3263 = vunpack.c.l.b16 %v412
    %v3264 = vunpack.c.h.b16 %v412
    %v3265 = vunpack.c.l.b16 %v413
    %v3266 = vunpack.c.h.b16 %v413
    %v3267 = vunpack.c.l.b16 %v414
    %v3268 = vunpack.c.h.b16 %v414
    %v3269 = vunpack.c.l.b16 %v415
    %v3270 = vunpack.c.h.b16 %v415
    %v3271 = vunpack.c.l.b16 %v416
    %v3272 = vunpack.c.h.b16 %v416
    %v3273 = vunpack.c.l.b16 %v417
    %v3274 = vunpack.c.h.b16 %v417
    %v3275 = vunpack.c.l.b16 %v418
    %v3276 = vunpack.c.h.b16 %v418
    %v3277 = vunpack.c.l.b16 %v419
    %v3278 = vunpack.c.h.b16 %v419
    %v3279 = vunpack.c.l.b16 %v420
    %v3280 = vunpack.c.h.b16 %v420
    %v3281 = vunpack.c.l.b16 %v421
    %v3282 = vunpack.c.h.b16 %v421
    %v3283 = vunpack.c.l.b16 %v422
    %v3284 = vunpack.c.h.b16 %v422
    %v3285 = vunpack.c.l.b16 %v423
    %v3286 = vunpack.c.h.b16 %v423
    %v3287 = vunpack.c.l.b16 %v424
    %v3288 = vunpack.c.h.b16 %v424
    %v3289 = vunpack.c.l.b16 %v425
    %v3290 = vunpack.c.h.b16 %v425
    %v3291 = vunpack.c.l.b16 %v426
    %v3292 = vunpack.c.h.b16 %v426
    %v3293 = vunpack.c.l.b16 %v427
    %v3294 = vunpack.c.h.b16 %v427
    %v3295 = vunpack.c.l.b16 %v428
    %v3296 = vunpack.c.h.b16 %v428
    %v3297 = vunpack.c.l.b16 %v429
    %v3298 = vunpack.c.h.b16 %v429
    %v3299 = vunpack.c.l.b16 %v430
    %v3300 = vunpack.c.h.b16 %v430
    %v3301 = vunpack.c.l.b16 %v431
    %v3302 = vunpack.c.h.b16 %v431
    %v3303 = vunpack.c.l.b16 %v432
    %v3304 = vunpack.c.h.b16 %v432
    %v3305 = vunpack.c.l.b16 %v433
    %v3306 = vunpack.c.h.b16 %v433
    %v3307 = vunpack.c.l.b16 %v434
    %v3308 = vunpack.c.h.b16 %v434
    %v3309 = vunpack.c.l.b16 %v435
    %v3310 = vunpack.c.h.b16 %v435
    %v3311 = vunpack.c.l.b16 %v436
    %v3312 = vunpack.c.h.b16 %v436
    %v3313 = vunpack.c.l.b16 %v437
    %v3314 = vunpack.c.h.b16 %v437
    %v3315 = vunpack.c.l.b16 %v438
    %v3316 = vunpack.c.h.b16 %v438
    %v3317 = vunpack.c.l.b16 %v439
    %v3318 = vunpack.c.h.b16 %v439
    %v3319 = vunpack.c.l.b16 %v440
    %v3320 = vunpack.c.h.b16 %v440
    %v3321 = vunpack.c.l.b16 %v441
    %v3322 = vunpack.c.h.b16 %v441
    %v3323 = vunpack.c.l.b16 %v442
    %v3324 = vunpack.c.h.b16 %v442
    %v3325 = vunpack.c.l.b16 %v443
    %v3326 = vunpack.c.h.b16 %v443
    %v3327 = vunpack.c.l.b16 %v444
    %v3328 = vunpack.c.h.b16 %v444
    %v3329 = vunpack.c.l.b16 %v445
    %v3330 = vunpack.c.h.b16 %v445
    %v3331 = vunpack.c.l.b16 %v446
    %v3332 = vunpack.c.h.b16 %v446
    %v3333 = vunpack.c.l.b16 %v447
    %v3334 = vunpack.c.h.b16 %v447
    %v3335 = vunpack.c.l.b16 %v448
    %v3336 = vunpack.c.h.b16 %v448
    %v3337 = vunpack.c.l.b16 %v449
    %v3338 = vunpack.c.h.b16 %v449
    %v3339 = vunpack.c.l.b16 %v450
    %v3340 = vunpack.c.h.b16 %v450
    %v3341 = vunpack.c.l.b16 %v451
    %v3342 = vunpack.c.h.b16 %v451
    %v3343 = vunpack.c.l.b16 %v452
    %v3344 = vunpack.c.h.b16 %v452
    %v3345 = vunpack.c.l.b16 %v453
    %v3346 = vunpack.c.h.b16 %v453
    %v3347 = vunpack.c.l.b16 %v454
    %v3348 = vunpack.c.h.b16 %v454
    %v3349 = vunpack.c.l.b16 %v455
    %v3350 = vunpack.c.h.b16 %v455
    %v3351 = vunpack.c.l.b16 %v456
    %v3352 = vunpack.c.h.b16 %v456
    %v3353 = vunpack.c.l.b16 %v457
    %v3354 = vunpack.c.h.b16 %v457
    %v3355 = vunpack.c.l.b16 %v458
    %v3356 = vunpack.c.h.b16 %v458
    %v3357 = vunpack.c.l.b16 %v459
    %v3358 = vunpack.c.h.b16 %v459
    %v3359 = vunpack.c.l.b16 %v460
    %v3360 = vunpack.c.h.b16 %v460
    %v3361 = vunpack.c.l.b16 %v461
    %v3362 = vunpack.c.h.b16 %v461
    %v3363 = vunpack.c.l.b16 %v462
    %v3364 = vunpack.c.h.b16 %v462
    %v3365 = vunpack.c.l.b16 %v463
    %v3366 = vunpack.c.h.b16 %v463
    %v3367 = vunpack.c.l.b16 %v464
    %v3368 = vunpack.c.h.b16 %v464
    %v3369 = vunpack.c.l.b16 %v465
    %v3370 = vunpack.c.h.b16 %v465
    %v3371 = vunpack.c.l.b16 %v466
    %v3372 = vunpack.c.h.b16 %v466
    %v3373 = vunpack.c.l.b16 %v467
    %v3374 = vunpack.c.h.b16 %v467
    %v3375 = vunpack.c.l.b16 %v468
    %v3376 = vunpack.c.h.b16 %v468
    %v3377 = vunpack.c.l.b16 %v469
    %v3378 = vunpack.c.h.b16 %v469
    %v3379 = vunpack.c.l.b16 %v470
    %v3380 = vunpack.c.h.b16 %v470
    %v3381 = vunpack.c.l.b16 %v471
    %v3382 = vunpack.c.h.b16 %v471
    %v3383 = vunpack.c.l.b16 %v472
    %v3384 = vunpack.c.h.b16 %v472
    %v3385 = vunpack.c.l.b16 %v473
    %v3386 = vunpack.c.h.b16 %v473
    %v3387 = vunpack.c.l.b16 %v474
    %v3388 = vunpack.c.h.b16 %v474
    %v3389 = vunpack.c.l.b16 %v475
    %v3390 = vunpack.c.h.b16 %v475
    %v3391 = vunpack.c.l.b16 %v476
    %v3392 = vunpack.c.h.b16 %v476
    %v3393 = vunpack.c.l.b16 %v477
    %v3394 = vunpack.c.h.b16 %v477
    %v3395 = vunpack.c.l.b16 %v478
    %v3396 = vunpack.c.h.b16 %v478
    %v3397 = vunpack.c.l.b16 %v479
    %v3398 = vunpack.c.h.b16 %v479
    %v3399 = vunpack.c.l.b16 %v480
    %v3400 = vunpack.c.h.b16 %v480
    %v3401 = vunpack.c.l.b16 %v481
    %v3402 = vunpack.c.h.b16 %v481
    %v3403 = vunpack.c.l.b16 %v482
    %v3404 = vunpack.c.h.b16 %v482
    %v3405 = vunpack.c.l.b16 %v483
    %v3406 = vunpack.c.h.b16 %v483
    %v3407 = vunpack.c.l.b16 %v484
    %v3408 = vunpack.c.h.b16 %v484
    %v3409 = vunpack.c.l.b16 %v485
    %v3410 = vunpack.c.h.b16 %v485
    %v3411 = vunpack.c.l.b16 %v486
    %v3412 = vunpack.c.h.b16 %v486
    %v3413 = vunpack.c.l.b16 %v487
    %v3414 = vunpack.c.h.b16 %v487
    %v3415 = vunpack.c.l.b16 %v488
    %v3416 = vunpack.c.h.b16 %v488
    %v3417 = vunpack.c.l.b16 %v489
    %v3418 = vunpack.c.h.b16 %v489
    %v3419 = vunpack.c.l.b16 %v490
    %v3420 = vunpack.c.h.b16 %v490
    %v3421 = vunpack.c.l.b16 %v491
    %v3422 = vunpack.c.h.b16 %v491
    %v3423 = vunpack.c.l.b16 %v492
    %v3424 = vunpack.c.h.b16 %v492
    %v3425 = vunpack.c.l.b16 %v493
    %v3426 = vunpack.c.h.b16 %v493
    %v3427 = vunpack.c.l.b16 %v494
    %v3428 = vunpack.c.h.b16 %v494
    %v3429 = vunpack.c.l.b16 %v495
    %v3430 = vunpack.c.h.b16 %v495
    %v3431 = vunpack.c.l.b16 %v496
    %v3432 = vunpack.c.h.b16 %v496
    %v3433 = vunpack.c.l.b16 %v497
    %v3434 = vunpack.c.h.b16 %v497
    %v3435 = vunpack.c.l.b16 %v498
    %v3436 = vunpack.c.h.b16 %v498
    %v3437 = vunpack.c.l.b16 %v499
    %v3438 = vunpack.c.h.b16 %v499
    %v3439 = vunpack.c.l.b16 %v500
    %v3440 = vunpack.c.h.b16 %v500
    %v3441 = vunpack.c.l.b16 %v501
    %v3442 = vunpack.c.h.b16 %v501
    %v3443 = vunpack.c.l.b16 %v502
    %v3444 = vunpack.c.h.b16 %v502
    %v3445 = vunpack.c.l.b16 %v503
    %v3446 = vunpack.c.h.b16 %v503
    %v3447 = vunpack.c.l.b16 %v504
    %v3448 = vunpack.c.h.b16 %v504
    %v3449 = vunpack.c.l.b16 %v505
    %v3450 = vunpack.c.h.b16 %v505
    %v3451 = vunpack.c.l.b16 %v506
    %v3452 = vunpack.c.h.b16 %v506
    %v3453 = vunpack.c.l.b16 %v507
    %v3454 = vunpack.c.h.b16 %v507
    %v3455 = vunpack.c.l.b16 %v508
    %v3456 = vunpack.c.h.b16 %v508
    %v3457 = vunpack.c.l.b16 %v509
    %v3458 = vunpack.c.h.b16 %v509
    %v3459 = vunpack.c.l.b16 %v510
    %v3460 = vunpack.c.h.b16 %v510
    %v3461 = vunpack.c.l.b16 %v511
    %v3462 = vunpack.c.h.b16 %v511
    %v3463 = vunpack.c.l.b16 %v512
    %v3464 = vunpack.c.h.b16 %v512
    %v3465 = vunpack.c.l.b16 %v513
    %v3466 = vunpack.c.h.b16 %v513
    %v3467 = vunpack.c.l.b16 %v514
    %v3468 = vunpack.c.h.b16 %v514
    %v3469 = vunpack.c.l.b16 %v515
    %v3470 = vunpack.c.h.b16 %v515
    %v3471 = vunpack.c.l.b16 %v516
    %v3472 = vunpack.c.h.b16 %v516
    %v3473 = vunpack.c.l.b16 %v517
    %v3474 = vunpack.c.h.b16 %v517
    %v3475 = vunpack.c.l.b16 %v518
    %v3476 = vunpack.c.h.b16 %v518
    %v3477 = vunpack.c.l.b16 %v519
    %v3478 = vunpack.c.h.b16 %v519
    %v3479 = vunpack.c.l.b16 %v520
    %v3480 = vunpack.c.h.b16 %v520
    %v3481 = vunpack.c.l.b16 %v521
    %v3482 = vunpack.c.h.b16 %v521
    %v3483 = vunpack.c.l.b16 %v522
    %v3484 = vunpack.c.h.b16 %v522
    %v3485 = vunpack.c.l.b16 %v523
    %v3486 = vunpack.c.h.b16 %v523
    %v3487 = vunpack.c.l.b16 %v524
    %v3488 = vunpack.c.h.b16 %v524
    %v3489 = vunpack.c.l.b16 %v525
    %v3490 = vunpack.c.h.b16 %v525
    %v3491 = vunpack.c.l.b16 %v526
    %v3492 = vunpack.c.h.b16 %v526
    %v3493 = vunpack.c.l.b16 %v527
    %v3494 = vunpack.c.h.b16 %v527
    %v3495 = vunpack.c.l.b16 %v528
    %v3496 = vunpack.c.h.b16 %v528
    %v3497 = vunpack.c.l.b16 %v529
    %v3498 = vunpack.c.h.b16 %v529
    %v3499 = vunpack.c.l.b16 %v530
    %v3500 = vunpack.c.h.b16 %v530
    %v3501 = vunpack.c.l.b16 %v531
    %v3502 = vunpack.c.h.b16 %v531
    %v3503 = vunpack.c.l.b16 %v532
    %v3504 = vunpack.c.h.b16 %v532
    %v3505 = vunpack.c.l.b16 %v533
    %v3506 = vunpack.c.h.b16 %v533
    %v3507 = vunpack.c.l.b16 %v534
    %v3508 = vunpack.c.h.b16 %v534
    %v3509 = vunpack.c.l.b16 %v535
    %v3510 = vunpack.c.h.b16 %v535
    %v3511 = vunpack.c.l.b16 %v536
    %v3512 = vunpack.c.h.b16 %v536
    %v3513 = vunpack.c.l.b16 %v537
    %v3514 = vunpack.c.h.b16 %v537
    %v3515 = vunpack.c.l.b16 %v538
    %v3516 = vunpack.c.h.b16 %v538
    %v3517 = vunpack.c.l.b16 %v539
    %v3518 = vunpack.c.h.b16 %v539
    %v3519 = vunpack.c.l.b16 %v540
    %v3520 = vunpack.c.h.b16 %v540
    %v3521 = vunpack.c.l.b16 %v541
    %v3522 = vunpack.c.h.b16 %v541
    %v3523 = vunpack.c.l.b16 %v542
    %v3524 = vunpack.c.h.b16 %v542
    %v3525 = vunpack.c.l.b16 %v543
    %v3526 = vunpack.c.h.b16 %v543
    %v3527 = vunpack.c.l.b16 %v544
    %v3528 = vunpack.c.h.b16 %v544
    %v3529 = vunpack.c.l.b16 %v545
    %v3530 = vunpack.c.h.b16 %v545
    %v3531 = vunpack.c.l.b16 %v546
    %v3532 = vunpack.c.h.b16 %v546
    %v3533 = vunpack.c.l.b16 %v547
    %v3534 = vunpack.c.h.b16 %v547
    %v3535 = vunpack.c.l.b16 %v548
    %v3536 = vunpack.c.h.b16 %v548
    %v3537 = vunpack.c.l.b16 %v549
    %v3538 = vunpack.c.h.b16 %v549
    %v3539 = vunpack.c.l.b16 %v550
    %v3540 = vunpack.c.h.b16 %v550
    %v3541 = vunpack.c.l.b16 %v551
    %v3542 = vunpack.c.h.b16 %v551
    %v3543 = vunpack.c.l.b16 %v552
    %v3544 = vunpack.c.h.b16 %v552
    %v3545 = vunpack.c.l.b16 %v553
    %v3546 = vunpack.c.h.b16 %v553
    %v3547 = vunpack.c.l.b16 %v554
    %v3548 = vunpack.c.h.b16 %v554
    %v3549 = vunpack.c.l.b16 %v555
    %v3550 = vunpack.c.h.b16 %v555
    %v3551 = vunpack.c.l.b16 %v556
    %v3552 = vunpack.c.h.b16 %v556
    %v3553 = vunpack.c.l.b16 %v557
    %v3554 = vunpack.c.h.b16 %v557
    %v3555 = vunpack.c.l.b16 %v558
    %v3556 = vunpack.c.h.b16 %v558
    %v3557 = vunpack.c.l.b16 %v559
    %v3558 = vunpack.c.h.b16 %v559
    %v3559 = vunpack.c.l.b16 %v560
    %v3560 = vunpack.c.h.b16 %v560
    %v3561 = vunpack.c.l.b16 %v561
    %v3562 = vunpack.c.h.b16 %v561
    %v3563 = vunpack.c.l.b16 %v562
    %v3564 = vunpack.c.h.b16 %v562
    %v3565 = vunpack.c.l.b16 %v563
    %v3566 = vunpack.c.h.b16 %v563
    %v3567 = vunpack.c.l.b16 %v564
    %v3568 = vunpack.c.h.b16 %v564
    %v3569 = vunpack.c.l.b16 %v565
    %v3570 = vunpack.c.h.b16 %v565
    %v3571 = vunpack.c.l.b16 %v566
    %v3572 = vunpack.c.h.b16 %v566
    %v3573 = vunpack.c.l.b16 %v567
    %v3574 = vunpack.c.h.b16 %v567
    %v3575 = vunpack.c.l.b16 %v568
    %v3576 = vunpack.c.h.b16 %v568
    %v3577 = vunpack.c.l.b16 %v569
    %v3578 = vunpack.c.h.b16 %v569
    %v3579 = vunpack.c.l.b16 %v570
    %v3580 = vunpack.c.h.b16 %v570
    %v3581 = vunpack.c.l.b16 %v571
    %v3582 = vunpack.c.h.b16 %v571
    %v3583 = vunpack.c.l.b16 %v572
    %v3584 = vunpack.c.h.b16 %v572
    %v3585 = vunpack.c.l.b16 %v573
    %v3586 = vunpack.c.h.b16 %v573
    %v3587 = vunpack.c.l.b16 %v574
    %v3588 = vunpack.c.h.b16 %v574
    %v3589 = vunpack.c.l.b16 %v575
    %v3590 = vunpack.c.h.b16 %v575
    %v3591 = vunpack.c.l.b16 %v576
    %v3592 = vunpack.c.h.b16 %v576
    %v3593 = vunpack.c.l.b16 %v577
    %v3594 = vunpack.c.h.b16 %v577
    %v3595 = vunpack.c.l.b16 %v578
    %v3596 = vunpack.c.h.b16 %v578
    %v3597 = vunpack.c.l.b16 %v579
    %v3598 = vunpack.c.h.b16 %v579
    %v3599 = vunpack.c.l.b16 %v580
    %v3600 = vunpack.c.h.b16 %v580
    %v3601 = vunpack.c.l.b16 %v581
    %v3602 = vunpack.c.h.b16 %v581
    %v3603 = vunpack.c.l.b16 %v582
    %v3604 = vunpack.c.h.b16 %v582
    %v3605 = vunpack.c.l.b16 %v583
    %v3606 = vunpack.c.h.b16 %v583
    %v3607 = vunpack.c.l.b16 %v584
    %v3608 = vunpack.c.h.b16 %v584
    %v3609 = vunpack.c.l.b16 %v585
    %v3610 = vunpack.c.h.b16 %v585
    %v3611 = vunpack.c.l.b16 %v586
    %v3612 = vunpack.c.h.b16 %v586
    %v3613 = vunpack.c.l.b16 %v587
    %v3614 = vunpack.c.h.b16 %v587
    %v3615 = vunpack.c.l.b16 %v588
    %v3616 = vunpack.c.h.b16 %v588
    %v3617 = vunpack.c.l.b16 %v589
    %v3618 = vunpack.c.h.b16 %v589
    %v3619 = vunpack.c.l.b16 %v590
    %v3620 = vunpack.c.h.b16 %v590
    %v3621 = vunpack.c.l.b16 %v591
    %v3622 = vunpack.c.h.b16 %v591
    %v3623 = vunpack.c.l.b16 %v592
    %v3624 = vunpack.c.h.b16 %v592
    %v3625 = vunpack.c.l.b16 %v593
    %v3626 = vunpack.c.h.b16 %v593
    %v3627 = vunpack.c.l.b16 %v594
    %v3628 = vunpack.c.h.b16 %v594
    %v3629 = vunpack.c.l.b16 %v595
    %v3630 = vunpack.c.h.b16 %v595
    %v3631 = vunpack.c.l.b16 %v596
    %v3632 = vunpack.c.h.b16 %v596
    %v3633 = vunpack.c.l.b16 %v597
    %v3634 = vunpack.c.h.b16 %v597
    %v3635 = vunpack.c.l.b16 %v598
    %v3636 = vunpack.c.h.b16 %v598
    %v3637 = vunpack.c.l.b16 %v599
    %v3638 = vunpack.c.h.b16 %v599
    %v3639 = vunpack.c.l.b16 %v600
    %v3640 = vunpack.c.h.b16 %v600
    %v3641 = vunpack.c.l.b16 %v601
    %v3642 = vunpack.c.h.b16 %v601
    %v3643 = vunpack.c.l.b16 %v602
    %v3644 = vunpack.c.h.b16 %v602
    %v3645 = vunpack.c.l.b16 %v603
    %v3646 = vunpack.c.h.b16 %v603
    %v3647 = vunpack.c.l.b16 %v604
    %v3648 = vunpack.c.h.b16 %v604
    %v3649 = vunpack.c.l.b16 %v605
    %v3650 = vunpack.c.h.b16 %v605
    %v3651 = vunpack.c.l.b16 %v606
    %v3652 = vunpack.c.h.b16 %v606
    %v3653 = vunpack.c.l.b16 %v607
    %v3654 = vunpack.c.h.b16 %v607
    %v3655 = vunpack.c.l.b16 %v608
    %v3656 = vunpack.c.h.b16 %v608
    %v3657 = vunpack.c.l.b16 %v609
    %v3658 = vunpack.c.h.b16 %v609
    %v3659 = vunpack.c.l.b16 %v610
    %v3660 = vunpack.c.h.b16 %v610
    %v3661 = vunpack.c.l.b16 %v611
    %v3662 = vunpack.c.h.b16 %v611
    %v3663 = vunpack.c.l.b16 %v612
    %v3664 = vunpack.c.h.b16 %v612
    %v3665 = vunpack.c.l.b16 %v613
    %v3666 = vunpack.c.h.b16 %v613
    %v3667 = vunpack.c.l.b16 %v614
    %v3668 = vunpack.c.h.b16 %v614
    %v3669 = vunpack.c.l.b16 %v615
    %v3670 = vunpack.c.h.b16 %v615
    %v3671 = vunpack.c.l.b16 %v616
    %v3672 = vunpack.c.h.b16 %v616
    %v3673 = vunpack.c.l.b16 %v617
    %v3674 = vunpack.c.h.b16 %v617
    %v3675 = vunpack.c.l.b16 %v618
    %v3676 = vunpack.c.h.b16 %v618
    %v3677 = vunpack.c.l.b16 %v619
    %v3678 = vunpack.c.h.b16 %v619
    %v3679 = vunpack.c.l.b16 %v620
    %v3680 = vunpack.c.h.b16 %v620
    %v3681 = vunpack.c.l.b16 %v621
    %v3682 = vunpack.c.h.b16 %v621
    %v3683 = vunpack.c.l.b16 %v622
    %v3684 = vunpack.c.h.b16 %v622
    %v3685 = vunpack.c.l.b16 %v623
    %v3686 = vunpack.c.h.b16 %v623
    %v3687 = vunpack.c.l.b16 %v624
    %v3688 = vunpack.c.h.b16 %v624
    %v3689 = vunpack.c.l.b16 %v625
    %v3690 = vunpack.c.h.b16 %v625
    %v3691 = vunpack.c.l.b16 %v626
    %v3692 = vunpack.c.h.b16 %v626
    %v3693 = vunpack.c.l.b16 %v627
    %v3694 = vunpack.c.h.b16 %v627
    %v3695 = vunpack.c.l.b16 %v628
    %v3696 = vunpack.c.h.b16 %v628
    %v3697 = vunpack.c.l.b16 %v629
    %v3698 = vunpack.c.h.b16 %v629
    %v3699 = vunpack.c.l.b16 %v630
    %v3700 = vunpack.c.h.b16 %v630
    %v3701 = vunpack.c.l.b16 %v631
    %v3702 = vunpack.c.h.b16 %v631
    %v3703 = vunpack.c.l.b16 %v632
    %v3704 = vunpack.c.h.b16 %v632
    %v3705 = vunpack.c.l.b16 %v633
    %v3706 = vunpack.c.h.b16 %v633
    %v3707 = vunpack.c.l.b16 %v634
    %v3708 = vunpack.c.h.b16 %v634
    %v3709 = vunpack.c.l.b16 %v635
    %v3710 = vunpack.c.h.b16 %v635
    %v3711 = vunpack.c.l.b16 %v636
    %v3712 = vunpack.c.h.b16 %v636
    %v3713 = vunpack.c.l.b16 %v637
    %v3714 = vunpack.c.h.b16 %v637
    %v3715 = vunpack.c.l.b16 %v638
    %v3716 = vunpack.c.h.b16 %v638
    %v3717 = vunpack.c.l.b16 %v639
    %v3718 = vunpack.c.h.b16 %v639
    %v3719 = vunpack.c.l.b16 %v640
    %v3720 = vunpack.c.h.b16 %v640
    %v3721 = vunpack.c.l.b16 %v641
    %v3722 = vunpack.c.h.b16 %v641
    %v3723 = vunpack.c.l.b16 %v642
    %v3724 = vunpack.c.h.b16 %v642
    %v3725 = vunpack.c.l.b16 %v643
    %v3726 = vunpack.c.h.b16 %v643
    %v3727 = vunpack.c.l.b16 %v644
    %v3728 = vunpack.c.h.b16 %v644
    %v3729 = vunpack.c.l.b16 %v645
    %v3730 = vunpack.c.h.b16 %v645
    %v3731 = vunpack.c.l.b16 %v646
    %v3732 = vunpack.c.h.b16 %v646
    %v3733 = vunpack.c.l.b16 %v647
    %v3734 = vunpack.c.h.b16 %v647
    %v3735 = vunpack.c.l.b16 %v648
    %v3736 = vunpack.c.h.b16 %v648
    %v3737 = vunpack.c.l.b16 %v649
    %v3738 = vunpack.c.h.b16 %v649
    %v3739 = vunpack.c.l.b16 %v650
    %v3740 = vunpack.c.h.b16 %v650
    %v3741 = vunpack.c.l.b16 %v651
    %v3742 = vunpack.c.h.b16 %v651
    %v3743 = vunpack.c.l.b16 %v652
    %v3744 = vunpack.c.h.b16 %v652
    %v3745 = vunpack.c.l.b16 %v653
    %v3746 = vunpack.c.h.b16 %v653
    %v3747 = vunpack.c.l.b16 %v654
    %v3748 = vunpack.c.h.b16 %v654
    %v3749 = vunpack.c.l.b16 %v655
    %v3750 = vunpack.c.h.b16 %v655
    %v3751 = vunpack.c.l.b16 %v656
    %v3752 = vunpack.c.h.b16 %v656
    %v3753 = vunpack.c.l.b16 %v657
    %v3754 = vunpack.c.h.b16 %v657
    %v3755 = vunpack.c.l.b16 %v658
    %v3756 = vunpack.c.h.b16 %v658
    %v3757 = vunpack.c.l.b16 %v659
    %v3758 = vunpack.c.h.b16 %v659
    %v3759 = vunpack.c.l.b16 %v660
    %v3760 = vunpack.c.h.b16 %v660
    %v3761 = vunpack.c.l.b16 %v661
    %v3762 = vunpack.c.h.b16 %v661
    %v3763 = vunpack.c.l.b16 %v662
    %v3764 = vunpack.c.h.b16 %v662
    %v3765 = vunpack.c.l.b16 %v663
    %v3766 = vunpack.c.h.b16 %v663
    %v3767 = vunpack.c.l.b16 %v664
    %v3768 = vunpack.c.h.b16 %v664
    %v3769 = vunpack.c.l.b16 %v665
    %v3770 = vunpack.c.h.b16 %v665
    %v3771 = vunpack.c.l.b16 %v666
    %v3772 = vunpack.c.h.b16 %v666
    %v3773 = vunpack.c.l.b16 %v667
    %v3774 = vunpack.c.h.b16 %v667
    %v3775 = vunpack.c.l.b16 %v668
    %v3776 = vunpack.c.h.b16 %v668
    %v3777 = vunpack.c.l.b16 %v669
    %v3778 = vunpack.c.h.b16 %v669
    %v3779 = vunpack.c.l.b16 %v670
    %v3780 = vunpack.c.h.b16 %v670
    %v3781 = vunpack.c.l.b16 %v671
    %v3782 = vunpack.c.h.b16 %v671
    %v3783 = vunpack.c.l.b16 %v672
    %v3784 = vunpack.c.h.b16 %v672
    %v3785 = vunpack.c.l.b16 %v673
    %v3786 = vunpack.c.h.b16 %v673
    %v3787 = vunpack.c.l.b16 %v674
    %v3788 = vunpack.c.h.b16 %v674
    %v3789 = vunpack.c.l.b16 %v675
    %v3790 = vunpack.c.h.b16 %v675
    %v3791 = vunpack.c.l.b16 %v676
    %v3792 = vunpack.c.h.b16 %v676
    %v3793 = vunpack.c.l.b16 %v677
    %v3794 = vunpack.c.h.b16 %v677
    %v3795 = vunpack.c.l.b16 %v678
    %v3796 = vunpack.c.h.b16 %v678
    %v3797 = vunpack.c.l.b16 %v679
    %v3798 = vunpack.c.h.b16 %v679
    %v3799 = vunpack.c.l.b16 %v680
    %v3800 = vunpack.c.h.b16 %v680
    %v3801 = vunpack.c.l.b16 %v681
    %v3802 = vunpack.c.h.b16 %v681
    %v3803 = vunpack.c.l.b16 %v682
    %v3804 = vunpack.c.h.b16 %v682
    %v3805 = vunpack.c.l.b16 %v683
    %v3806 = vunpack.c.h.b16 %v683
    %v3807 = vunpack.c.l.b16 %v684
    %v3808 = vunpack.c.h.b16 %v684
    %v3809 = vunpack.c.l.b16 %v685
    %v3810 = vunpack.c.h.b16 %v685
    %v3811 = vunpack.c.l.b16 %v686
    %v3812 = vunpack.c.h.b16 %v686
    %v3813 = vunpack.c.l.b16 %v687
    %v3814 = vunpack.c.h.b16 %v687
    %v3815 = vunpack.c.l.b16 %v688
    %v3816 = vunpack.c.h.b16 %v688
    %v3817 = vunpack.c.l.b16 %v689
    %v3818 = vunpack.c.h.b16 %v689
    %v3819 = vunpack.c.l.b16 %v690
    %v3820 = vunpack.c.h.b16 %v690
    %v3821 = vunpack.c.l.b16 %v691
    %v3822 = vunpack.c.h.b16 %v691
    %v3823 = vunpack.c.l.b16 %v692
    %v3824 = vunpack.c.h.b16 %v692
    %v3825 = vunpack.c.l.b16 %v693
    %v3826 = vunpack.c.h.b16 %v693
    %v3827 = vunpack.c.l.b16 %v694
    %v3828 = vunpack.c.h.b16 %v694
    %v3829 = vunpack.c.l.b16 %v695
    %v3830 = vunpack.c.h.b16 %v695
    %v3831 = vunpack.c.l.b16 %v696
    %v3832 = vunpack.c.h.b16 %v696
    %v3833 = vunpack.c.l.b16 %v697
    %v3834 = vunpack.c.h.b16 %v697
    %v3835 = vunpack.c.l.b16 %v698
    %v3836 = vunpack.c.h.b16 %v698
    %v3837 = vunpack.c.l.b16 %v699
    %v3838 = vunpack.c.h.b16 %v699
    %v3839 = vunpack.c.l.b16 %v700
    %v3840 = vunpack.c.h.b16 %v700
    %v3841 = vunpack.c.l.b16 %v701
    %v3842 = vunpack.c.h.b16 %v701
    %v3843 = vunpack.c.l.b16 %v702
    %v3844 = vunpack.c.h.b16 %v702
    %v3845 = vunpack.c.l.b16 %v703
    %v3846 = vunpack.c.h.b16 %v703
    %v3847 = vunpack.c.l.b16 %v704
    %v3848 = vunpack.c.h.b16 %v704
    %v3849 = vunpack.c.l.b16 %v705
    %v3850 = vunpack.c.h.b16 %v705
    %v3851 = vunpack.c.l.b16 %v706
    %v3852 = vunpack.c.h.b16 %v706
    %v3853 = vunpack.c.l.b16 %v707
    %v3854 = vunpack.c.h.b16 %v707
    %v3855 = vunpack.c.l.b16 %v708
    %v3856 = vunpack.c.h.b16 %v708
    %v3857 = vunpack.c.l.b16 %v709
    %v3858 = vunpack.c.h.b16 %v709
    %v3859 = vunpack.c.l.b16 %v710
    %v3860 = vunpack.c.h.b16 %v710
    %v3861 = vunpack.c.l.b16 %v711
    %v3862 = vunpack.c.h.b16 %v711
    %v3863 = vunpack.c.l.b16 %v712
    %v3864 = vunpack.c.h.b16 %v712
    %v3865 = vunpack.c.l.b16 %v713
    %v3866 = vunpack.c.h.b16 %v713
    %v3867 = vunpack.c.l.b16 %v714
    %v3868 = vunpack.c.h.b16 %v714
    %v3869 = vunpack.c.l.b16 %v715
    %v3870 = vunpack.c.h.b16 %v715
    %v3871 = vunpack.c.l.b16 %v716
    %v3872 = vunpack.c.h.b16 %v716
    %v3873 = vunpack.c.l.b16 %v717
    %v3874 = vunpack.c.h.b16 %v717
    %v3875 = vunpack.c.l.b16 %v718
    %v3876 = vunpack.c.h.b16 %v718
    %v3877 = vunpack.c.l.b16 %v719
    %v3878 = vunpack.c.h.b16 %v719
    %v3879 = vunpack.c.l.b16 %v720
    %v3880 = vunpack.c.h.b16 %v720
    %v3881 = vunpack.c.l.b16 %v721
    %v3882 = vunpack.c.h.b16 %v721
    %v3883 = vunpack.c.l.b16 %v722
    %v3884 = vunpack.c.h.b16 %v722
    %v3885 = vunpack.c.l.b16 %v723
    %v3886 = vunpack.c.h.b16 %v723
    %v3887 = vunpack.c.l.b16 %v724
    %v3888 = vunpack.c.h.b16 %v724
    %v3889 = vunpack.c.l.b16 %v725
    %v3890 = vunpack.c.h.b16 %v725
    %v3891 = vunpack.c.l.b16 %v726
    %v3892 = vunpack.c.h.b16 %v726
    %v3893 = vunpack.c.l.b16 %v727
    %v3894 = vunpack.c.h.b16 %v727
    %v3895 = vunpack.c.l.b16 %v728
    %v3896 = vunpack.c.h.b16 %v728
    %v3897 = vunpack.c.l.b16 %v729
    %v3898 = vunpack.c.h.b16 %v729
    %v3899 = vunpack.c.l.b16 %v730
    %v3900 = vunpack.c.h.b16 %v730
    %v3901 = vunpack.c.l.b16 %v731
    %v3902 = vunpack.c.h.b16 %v731
    %v3903 = vunpack.c.l.b16 %v732
    %v3904 = vunpack.c.h.b16 %v732
    %v3905 = vunpack.c.l.b16 %v733
    %v3906 = vunpack.c.h.b16 %v733
    %v3907 = vunpack.c.l.b16 %v734
    %v3908 = vunpack.c.h.b16 %v734
    %v3909 = vunpack.c.l.b16 %v735
    %v3910 = vunpack.c.h.b16 %v735
    %v3911 = vunpack.c.l.b16 %v736
    %v3912 = vunpack.c.h.b16 %v736
    %v3913 = vunpack.c.l.b16 %v737
    %v3914 = vunpack.c.h.b16 %v737
    %v3915 = vunpack.c.l.b16 %v738
    %v3916 = vunpack.c.h.b16 %v738
    %v3917 = vunpack.c.l.b16 %v739
    %v3918 = vunpack.c.h.b16 %v739
    %v3919 = vunpack.c.l.b16 %v740
    %v3920 = vunpack.c.h.b16 %v740
    %v3921 = vunpack.c.l.b16 %v741
    %v3922 = vunpack.c.h.b16 %v741
    %v3923 = vunpack.c.l.b16 %v742
    %v3924 = vunpack.c.h.b16 %v742
    %v3925 = vunpack.c.l.b16 %v743
    %v3926 = vunpack.c.h.b16 %v743
    %v3927 = vunpack.c.l.b16 %v744
    %v3928 = vunpack.c.h.b16 %v744
    %v3929 = vunpack.c.l.b16 %v745
    %v3930 = vunpack.c.h.b16 %v745
    %v3931 = vunpack.c.l.b16 %v746
    %v3932 = vunpack.c.h.b16 %v746
    %v3933 = vunpack.c.l.b16 %v747
    %v3934 = vunpack.c.h.b16 %v747
    %v3935 = vunpack.c.l.b16 %v748
    %v3936 = vunpack.c.h.b16 %v748
    %v3937 = vunpack.c.l.b16 %v749
    %v3938 = vunpack.c.h.b16 %v749
    %v3939 = vunpack.c.l.b16 %v750
    %v3940 = vunpack.c.h.b16 %v750
    %v3941 = vunpack.c.l.b16 %v751
    %v3942 = vunpack.c.h.b16 %v751
    %v3943 = vunpack.c.l.b16 %v752
    %v3944 = vunpack.c.h.b16 %v752
    %v3945 = vunpack.c.l.b16 %v753
    %v3946 = vunpack.c.h.b16 %v753
    %v3947 = vunpack.c.l.b16 %v754
    %v3948 = vunpack.c.h.b16 %v754
    %v3949 = vunpack.c.l.b16 %v755
    %v3950 = vunpack.c.h.b16 %v755
    %v3951 = vunpack.c.l.b16 %v756
    %v3952 = vunpack.c.h.b16 %v756
    %v3953 = vunpack.c.l.b16 %v757
    %v3954 = vunpack.c.h.b16 %v757
    %v3955 = vunpack.c.l.b16 %v758
    %v3956 = vunpack.c.h.b16 %v758
    %v3957 = vunpack.c.l.b16 %v759
    %v3958 = vunpack.c.h.b16 %v759
    %v3959 = vunpack.c.l.b16 %v760
    %v3960 = vunpack.c.h.b16 %v760
    %v3961 = vunpack.c.l.b16 %v761
    %v3962 = vunpack.c.h.b16 %v761
    %v3963 = vunpack.c.l.b16 %v762
    %v3964 = vunpack.c.h.b16 %v762
    %v3965 = vunpack.c.l.b16 %v763
    %v3966 = vunpack.c.h.b16 %v763
    %v3967 = vunpack.c.l.b16 %v764
    %v3968 = vunpack.c.h.b16 %v764
    %v3969 = vunpack.c.l.b16 %v765
    %v3970 = vunpack.c.h.b16 %v765
    %v3971 = vunpack.c.l.b16 %v766
    %v3972 = vunpack.c.h.b16 %v766
    %v3973 = vunpack.c.l.b16 %v767
    %v3974 = vunpack.c.h.b16 %v767
    %v3975 = vunpack.c.l.b16 %v768
    %v3976 = vunpack.c.h.b16 %v768
    %v3977 = vunpack.c.l.b16 %v769
    %v3978 = vunpack.c.h.b16 %v769
    %v3979 = vunpack.c.l.b16 %v770
    %v3980 = vunpack.c.h.b16 %v770
    %v3981 = vunpack.c.l.b16 %v771
    %v3982 = vunpack.c.h.b16 %v771
    %v3983 = vunpack.c.l.b16 %v772
    %v3984 = vunpack.c.h.b16 %v772
    %v3985 = vunpack.c.l.b16 %v773
    %v3986 = vunpack.c.h.b16 %v773
    %v3987 = vunpack.c.l.b16 %v774
    %v3988 = vunpack.c.h.b16 %v774
    %v3989 = vunpack.c.l.b16 %v775
    %v3990 = vunpack.c.h.b16 %v775
    %v3991 = vunpack.c.l.b16 %v776
    %v3992 = vunpack.c.h.b16 %v776
    %v3993 = vunpack.c.l.b16 %v777
    %v3994 = vunpack.c.h.b16 %v777
    %v3995 = vunpack.c.l.b16 %v778
    %v3996 = vunpack.c.h.b16 %v778
    %v3997 = vunpack.c.l.b16 %v779
    %v3998 = vunpack.c.h.b16 %v779
    %v3999 = vunpack.c.l.b16 %v780
    %v4000 = vunpack.c.h.b16 %v780
    %v4001 = vunpack.c.l.b16 %v781
    %v4002 = vunpack.c.h.b16 %v781
    %v4003 = vunpack.c.l.b16 %v782
    %v4004 = vunpack.c.h.b16 %v782
    %v4005 = vunpack.c.l.b16 %v783
    %v4006 = vunpack.c.h.b16 %v783
    %v4007 = vunpack.c.l.b16 %v784
    %v4008 = vunpack.c.h.b16 %v784
    %v4009 = vunpack.c.l.b16 %v785
    %v4010 = vunpack.c.h.b16 %v785
    %v4011 = vunpack.c.l.b16 %v786
    %v4012 = vunpack.c.h.b16 %v786
    %v4013 = vunpack.c.l.b16 %v787
    %v4014 = vunpack.c.h.b16 %v787
    %v4015 = vunpack.c.l.b16 %v788
    %v4016 = vunpack.c.h.b16 %v788
    %v4017 = vunpack.c.l.b16 %v789
    %v4018 = vunpack.c.h.b16 %v789
    %v4019 = vunpack.c.l.b16 %v790
    %v4020 = vunpack.c.h.b16 %v790
    %v4021 = vunpack.c.l.b16 %v791
    %v4022 = vunpack.c.h.b16 %v791
    %v4023 = vunpack.c.l.b16 %v792
    %v4024 = vunpack.c.h.b16 %v792
    %v4025 = vunpack.c.l.b16 %v793
    %v4026 = vunpack.c.h.b16 %v793
    %v4027 = vunpack.c.l.b16 %v794
    %v4028 = vunpack.c.h.b16 %v794
    %v4029 = vunpack.c.l.b16 %v795
    %v4030 = vunpack.c.h.b16 %v795
    %v4031 = vunpack.c.l.b16 %v796
    %v4032 = vunpack.c.h.b16 %v796
    %v4033 = vunpack.c.l.b16 %v797
    %v4034 = vunpack.c.h.b16 %v797
    %v4035 = vunpack.c.l.b16 %v798
    %v4036 = vunpack.c.h.b16 %v798
    %v4037 = vunpack.c.l.b16 %v799
    %v4038 = vunpack.c.h.b16 %v799
    %v4039 = vunpack.c.l.b16 %v800
    %v4040 = vunpack.c.h.b16 %v800
    %v4041 = vunpack.c.l.b16 %v801
    %v4042 = vunpack.c.h.b16 %v801
    %v4043 = vunpack.c.l.b16 %v802
    %v4044 = vunpack.c.h.b16 %v802
    %v4045 = vunpack.c.l.b16 %v803
    %v4046 = vunpack.c.h.b16 %v803
    %v4047 = vunpack.c.l.b16 %v804
    %v4048 = vunpack.c.h.b16 %v804
    %v4049 = vunpack.c.l.b16 %v805
    %v4050 = vunpack.c.h.b16 %v805
    %v4051 = vunpack.c.l.b16 %v806
    %v4052 = vunpack.c.h.b16 %v806
    %v4053 = vunpack.c.l.b16 %v807
    %v4054 = vunpack.c.h.b16 %v807
    %v4055 = vunpack.c.l.b16 %v808
    %v4056 = vunpack.c.h.b16 %v808
    %v4057 = vunpack.c.l.b16 %v809
    %v4058 = vunpack.c.h.b16 %v809
    %v4059 = vunpack.c.l.b16 %v810
    %v4060 = vunpack.c.h.b16 %v810
    %v4061 = vunpack.c.l.b16 %v811
    %v4062 = vunpack.c.h.b16 %v811
    %v4063 = vunpack.c.l.b16 %v812
    %v4064 = vunpack.c.h.b16 %v812
    %v4065 = vunpack.c.l.b16 %v813
    %v4066 = vunpack.c.h.b16 %v813
    %v4067 = vunpack.c.l.b16 %v814
    %v4068 = vunpack.c.h.b16 %v814
    %v4069 = vunpack.c.l.b16 %v815
    %v4070 = vunpack.c.h.b16 %v815
    %v4071 = vunpack.c.l.b16 %v816
    %v4072 = vunpack.c.h.b16 %v816
    %v4073 = vunpack.c.l.b16 %v817
    %v4074 = vunpack.c.h.b16 %v817
    %v4075 = vunpack.c.l.b16 %v818
    %v4076 = vunpack.c.h.b16 %v818
    %v4077 = vunpack.c.l.b16 %v819
    %v4078 = vunpack.c.h.b16 %v819
    %v4079 = vunpack.c.l.b16 %v820
    %v4080 = vunpack.c.h.b16 %v820
    %v4081 = vunpack.c.l.b16 %v821
    %v4082 = vunpack.c.h.b16 %v821
    %v4083 = vunpack.c.l.b16 %v822
    %v4084 = vunpack.c.h.b16 %v822
    %v4085 = vunpack.c.l.b16 %v823
    %v4086 = vunpack.c.h.b16 %v823
    %v4087 = vunpack.c.l.b16 %v824
    %v4088 = vunpack.c.h.b16 %v824
    %v4089 = vunpack.c.l.b16 %v825
    %v4090 = vunpack.c.h.b16 %v825
    %v4091 = vunpack.c.l.b16 %v826
    %v4092 = vunpack.c.h.b16 %v826
    %v4093 = vunpack.c.l.b16 %v827
    %v4094 = vunpack.c.h.b16 %v827
    %v4095 = vunpack.c.l.b16 %v828
    %v4096 = vunpack.c.h.b16 %v828
    %v4097 = vunpack.c.l.b16 %v829
    %v4098 = vunpack.c.h.b16 %v829
    %v4099 = vunpack.c.l.b16 %v830
    %v4100 = vunpack.c.h.b16 %v830
    %v4101 = vunpack.c.l.b16 %v831
    %v4102 = vunpack.c.h.b16 %v831
    %v4103 = vunpack.c.l.b16 %v832
    %v4104 = vunpack.c.h.b16 %v832
    %v4105 = vunpack.c.l.b16 %v833
    %v4106 = vunpack.c.h.b16 %v833
    %v4107 = vunpack.c.l.b16 %v834
    %v4108 = vunpack.c.h.b16 %v834
    %v4109 = vunpack.c.l.b16 %v835
    %v4110 = vunpack.c.h.b16 %v835
    %v4111 = vunpack.c.l.b16 %v836
    %v4112 = vunpack.c.h.b16 %v836
    %v4113 = vunpack.c.l.b16 %v837
    %v4114 = vunpack.c.h.b16 %v837
    %v4115 = vunpack.c.l.b16 %v838
    %v4116 = vunpack.c.h.b16 %v838
    %v4117 = vunpack.c.l.b16 %v839
    %v4118 = vunpack.c.h.b16 %v839
    %v4119 = vunpack.c.l.b16 %v840
    %v4120 = vunpack.c.h.b16 %v840
    %v4121 = vunpack.c.l.b16 %v841
    %v4122 = vunpack.c.h.b16 %v841
    %v4123 = vunpack.c.l.b16 %v842
    %v4124 = vunpack.c.h.b16 %v842
    %v4125 = vunpack.c.l.b16 %v843
    %v4126 = vunpack.c.h.b16 %v843
    %v4127 = vunpack.c.l.b16 %v844
    %v4128 = vunpack.c.h.b16 %v844
    %v4129 = vunpack.c.l.b16 %v845
    %v4130 = vunpack.c.h.b16 %v845
    %v4131 = vunpack.c.l.b16 %v846
    %v4132 = vunpack.c.h.b16 %v846
    %v4133 = vunpack.c.l.b16 %v847
    %v4134 = vunpack.c.h.b16 %v847
    %v4135 = vunpack.c.l.b16 %v848
    %v4136 = vunpack.c.h.b16 %v848
    %v4137 = vunpack.c.l.b16 %v849
    %v4138 = vunpack.c.h.b16 %v849
    %v4139 = vunpack.c.l.b16 %v850
    %v4140 = vunpack.c.h.b16 %v850
    %v4141 = vunpack.c.l.b16 %v851
    %v4142 = vunpack.c.h.b16 %v851
    %v4143 = vunpack.c.l.b16 %v852
    %v4144 = vunpack.c.h.b16 %v852
    %v4145 = vunpack.c.l.b16 %v853
    %v4146 = vunpack.c.h.b16 %v853
    %v4147 = vunpack.c.l.b16 %v854
    %v4148 = vunpack.c.h.b16 %v854
    %v4149 = vunpack.c.l.b16 %v855
    %v4150 = vunpack.c.h.b16 %v855
    %v4151 = vunpack.c.l.b16 %v856
    %v4152 = vunpack.c.h.b16 %v856
    %v4153 = vunpack.c.l.b16 %v857
    %v4154 = vunpack.c.h.b16 %v857
    %v4155 = vunpack.c.l.b16 %v858
    %v4156 = vunpack.c.h.b16 %v858
    %v4157 = vunpack.c.l.b16 %v859
    %v4158 = vunpack.c.h.b16 %v859
    %v4159 = vunpack.c.l.b16 %v860
    %v4160 = vunpack.c.h.b16 %v860
    %v4161 = vunpack.c.l.b16 %v861
    %v4162 = vunpack.c.h.b16 %v861
    %v4163 = vunpack.c.l.b16 %v862
    %v4164 = vunpack.c.h.b16 %v862
    %v4165 = vunpack.c.l.b16 %v863
    %v4166 = vunpack.c.h.b16 %v863
    %v4167 = vunpack.c.l.b16 %v864
    %v4168 = vunpack.c.h.b16 %v864
    %v4169 = vunpack.c.l.b16 %v865
    %v4170 = vunpack.c.h.b16 %v865
    %v4171 = vunpack.c.l.b16 %v866
    %v4172 = vunpack.c.h.b16 %v866
    %v4173 = vunpack.c.l.b16 %v867
    %v4174 = vunpack.c.h.b16 %v867
    %v4175 = vunpack.c.l.b16 %v868
    %v4176 = vunpack.c.h.b16 %v868
    %v4177 = vunpack.c.l.b16 %v869
    %v4178 = vunpack.c.h.b16 %v869
    %v4179 = vunpack.c.l.b16 %v870
    %v4180 = vunpack.c.h.b16 %v870
    %v4181 = vunpack.c.l.b16 %v871
    %v4182 = vunpack.c.h.b16 %v871
    %v4183 = vunpack.c.l.b16 %v872
    %v4184 = vunpack.c.h.b16 %v872
    %v4185 = vunpack.c.l.b16 %v873
    %v4186 = vunpack.c.h.b16 %v873
    %v4187 = vunpack.c.l.b16 %v874
    %v4188 = vunpack.c.h.b16 %v874
    %v4189 = vunpack.c.l.b16 %v875
    %v4190 = vunpack.c.h.b16 %v875
    %v4191 = vunpack.c.l.b16 %v876
    %v4192 = vunpack.c.h.b16 %v876
    %v4193 = vunpack.c.l.b16 %v877
    %v4194 = vunpack.c.h.b16 %v877
    %v4195 = vunpack.c.l.b16 %v878
    %v4196 = vunpack.c.h.b16 %v878
    %v4197 = vunpack.c.l.b16 %v879
    %v4198 = vunpack.c.h.b16 %v879
    %v4199 = vunpack.c.l.b16 %v880
    %v4200 = vunpack.c.h.b16 %v880
    %v4201 = vunpack.c.l.b16 %v881
    %v4202 = vunpack.c.h.b16 %v881
    %v4203 = vunpack.c.l.b16 %v882
    %v4204 = vunpack.c.h.b16 %v882
    %v4205 = vunpack.c.l.b16 %v883
    %v4206 = vunpack.c.h.b16 %v883
    %v4207 = vunpack.c.l.b16 %v884
    %v4208 = vunpack.c.h.b16 %v884
    %v4209 = vunpack.c.l.b16 %v885
    %v4210 = vunpack.c.h.b16 %v885
    %v4211 = vunpack.c.l.b16 %v886
    %v4212 = vunpack.c.h.b16 %v886
    %v4213 = vunpack.c.l.b16 %v887
    %v4214 = vunpack.c.h.b16 %v887
    %v4215 = vunpack.c.l.b16 %v888
    %v4216 = vunpack.c.h.b16 %v888
    %v4217 = vunpack.c.l.b16 %v889
    %v4218 = vunpack.c.h.b16 %v889
    %v4219 = vunpack.c.l.b16 %v890
    %v4220 = vunpack.c.h.b16 %v890
    %v4221 = vunpack.c.l.b16 %v891
    %v4222 = vunpack.c.h.b16 %v891
    %v4223 = vunpack.c.l.b16 %v892
    %v4224 = vunpack.c.h.b16 %v892
    %v4225 = vunpack.c.l.b16 %v893
    %v4226 = vunpack.c.h.b16 %v893
    %v4227 = vunpack.c.l.b16 %v894
    %v4228 = vunpack.c.h.b16 %v894
    %v4229 = vunpack.c.l.b16 %v895
    %v4230 = vunpack.c.h.b16 %v895
    %v4231 = vunpack.c.l.b16 %v896
    %v4232 = vunpack.c.h.b16 %v896
    %v4233 = vunpack.c.l.b16 %v897
    %v4234 = vunpack.c.h.b16 %v897
    %v4235 = vunpack.c.l.b16 %v898
    %v4236 = vunpack.c.h.b16 %v898
    %v4237 = vunpack.c.l.b16 %v899
    %v4238 = vunpack.c.h.b16 %v899
    %v4239 = vunpack.c.l.b16 %v900
    %v4240 = vunpack.c.h.b16 %v900
    %v4241 = vunpack.c.l.b16 %v901
    %v4242 = vunpack.c.h.b16 %v901
    %v4243 = vunpack.c.l.b16 %v902
    %v4244 = vunpack.c.h.b16 %v902
    %v4245 = vunpack.c.l.b16 %v903
    %v4246 = vunpack.c.h.b16 %v903
    %v4247 = vunpack.c.l.b16 %v904
    %v4248 = vunpack.c.h.b16 %v904
    %v4249 = vunpack.c.l.b16 %v905
    %v4250 = vunpack.c.h.b16 %v905
    %v4251 = vunpack.c.l.b16 %v906
    %v4252 = vunpack.c.h.b16 %v906
    %v4253 = vunpack.c.l.b16 %v907
    %v4254 = vunpack.c.h.b16 %v907
    %v4255 = vunpack.c.l.b16 %v908
    %v4256 = vunpack.c.h.b16 %v908
    %v4257 = vunpack.c.l.b16 %v909
    %v4258 = vunpack.c.h.b16 %v909
    %v4259 = vunpack.c.l.b16 %v910
    %v4260 = vunpack.c.h.b16 %v910
    %v4261 = vunpack.c.l.b16 %v911
    %v4262 = vunpack.c.h.b16 %v911
    %v4263 = vunpack.c.l.b16 %v912
    %v4264 = vunpack.c.h.b16 %v912
    %v4265 = vunpack.c.l.b16 %v913
    %v4266 = vunpack.c.h.b16 %v913
    %v4267 = vunpack.c.l.b16 %v914
    %v4268 = vunpack.c.h.b16 %v914
    %v4269 = vunpack.c.l.b16 %v915
    %v4270 = vunpack.c.h.b16 %v915
    %v4271 = vunpack.c.l.b16 %v916
    %v4272 = vunpack.c.h.b16 %v916
    %v4273 = vunpack.c.l.b16 %v917
    %v4274 = vunpack.c.h.b16 %v917
    %v4275 = vunpack.c.l.b16 %v918
    %v4276 = vunpack.c.h.b16 %v918
    %v4277 = vunpack.c.l.b16 %v919
    %v4278 = vunpack.c.h.b16 %v919
    %v4279 = vunpack.c.l.b16 %v920
    %v4280 = vunpack.c.h.b16 %v920
    %v4281 = vunpack.c.l.b16 %v921
    %v4282 = vunpack.c.h.b16 %v921
    %v4283 = vunpack.c.l.b16 %v922
    %v4284 = vunpack.c.h.b16 %v922
    %v4285 = vunpack.c.l.b16 %v923
    %v4286 = vunpack.c.h.b16 %v923
    %v4287 = vunpack.c.l.b16 %v924
    %v4288 = vunpack.c.h.b16 %v924
    %v4289 = vunpack.c.l.b16 %v925
    %v4290 = vunpack.c.h.b16 %v925
    %v4291 = vunpack.c.l.b16 %v926
    %v4292 = vunpack.c.h.b16 %v926
    %v4293 = vunpack.c.l.b16 %v927
    %v4294 = vunpack.c.h.b16 %v927
    %v4295 = vunpack.c.l.b16 %v928
    %v4296 = vunpack.c.h.b16 %v928
    %v4297 = vunpack.c.l.b16 %v929
    %v4298 = vunpack.c.h.b16 %v929
    %v4299 = vunpack.c.l.b16 %v930
    %v4300 = vunpack.c.h.b16 %v930
    %v4301 = vunpack.c.l.b16 %v931
    %v4302 = vunpack.c.h.b16 %v931
    %v4303 = vunpack.c.l.b16 %v932
    %v4304 = vunpack.c.h.b16 %v932
    %v4305 = vunpack.c.l.b16 %v933
    %v4306 = vunpack.c.h.b16 %v933
    %v4307 = vunpack.c.l.b16 %v934
    %v4308 = vunpack.c.h.b16 %v934
    %v4309 = vunpack.c.l.b16 %v935
    %v4310 = vunpack.c.h.b16 %v935
    %v4311 = vunpack.c.l.b16 %v936
    %v4312 = vunpack.c.h.b16 %v936
    %v4313 = vunpack.c.l.b16 %v937
    %v4314 = vunpack.c.h.b16 %v937
    %v4315 = vunpack.c.l.b16 %v938
    %v4316 = vunpack.c.h.b16 %v938
    %v4317 = vunpack.c.l.b16 %v939
    %v4318 = vunpack.c.h.b16 %v939
    %v4319 = vunpack.c.l.b16 %v940
    %v4320 = vunpack.c.h.b16 %v940
    %v4321 = vunpack.c.l.b16 %v941
    %v4322 = vunpack.c.h.b16 %v941
    %v4323 = vunpack.c.l.b16 %v942
    %v4324 = vunpack.c.h.b16 %v942
    %v4325 = vunpack.c.l.b16 %v943
    %v4326 = vunpack.c.h.b16 %v943
    %v4327 = vunpack.c.l.b16 %v944
    %v4328 = vunpack.c.h.b16 %v944
    %v4329 = vunpack.c.l.b16 %v945
    %v4330 = vunpack.c.h.b16 %v945
    %v4331 = vunpack.c.l.b16 %v946
    %v4332 = vunpack.c.h.b16 %v946
    %v4333 = vunpack.c.l.b16 %v947
    %v4334 = vunpack.c.h.b16 %v947
    %v4335 = vunpack.c.l.b16 %v948
    %v4336 = vunpack.c.h.b16 %v948
    %v4337 = vunpack.c.l.b16 %v949
    %v4338 = vunpack.c.h.b16 %v949
    %v4339 = vunpack.c.l.b16 %v950
    %v4340 = vunpack.c.h.b16 %v950
    %v4341 = vunpack.c.l.b16 %v951
    %v4342 = vunpack.c.h.b16 %v951
    %v4343 = vunpack.c.l.b16 %v952
    %v4344 = vunpack.c.h.b16 %v952
    %v4345 = vunpack.c.l.b16 %v953
    %v4346 = vunpack.c.h.b16 %v953
    %v4347 = vunpack.c.l.b16 %v954
    %v4348 = vunpack.c.h.b16 %v954
    %v4349 = vunpack.c.l.b16 %v955
    %v4350 = vunpack.c.h.b16 %v955
    %v4351 = vunpack.c.l.b16 %v956
    %v4352 = vunpack.c.h.b16 %v956
    %v4353 = vunpack.c.l.b16 %v957
    %v4354 = vunpack.c.h.b16 %v957
    %v4355 = vunpack.c.l.b16 %v958
    %v4356 = vunpack.c.h.b16 %v958
    %v4357 = vunpack.c.l.b16 %v959
    %v4358 = vunpack.c.h.b16 %v959
    %v4359 = vunpack.c.l.b16 %v960
    %v4360 = vunpack.c.h.b16 %v960
    %v4361 = vunpack.c.l.b16 %v961
    %v4362 = vunpack.c.h.b16 %v961
    %v4363 = vunpack.c.l.b16 %v962
    %v4364 = vunpack.c.h.b16 %v962
    %v4365 = vunpack.c.l.b16 %v963
    %v4366 = vunpack.c.h.b16 %v963
    %v4367 = vunpack.c.l.b16 %v964
    %v4368 = vunpack.c.h.b16 %v964
    %v4369 = vunpack.c.l.b16 %v965
    %v4370 = vunpack.c.h.b16 %v965
    %v4371 = vunpack.c.l.b16 %v966
    %v4372 = vunpack.c.h.b16 %v966
    %v4373 = vunpack.c.l.b16 %v967
    %v4374 = vunpack.c.h.b16 %v967
    %v4375 = vunpack.c.l.b16 %v968
    %v4376 = vunpack.c.h.b16 %v968
    %v4377 = vunpack.c.l.b16 %v969
    %v4378 = vunpack.c.h.b16 %v969
    %v4379 = vunpack.c.l.b16 %v970
    %v4380 = vunpack.c.h.b16 %v970
    %v4381 = vunpack.c.l.b16 %v971
    %v4382 = vunpack.c.h.b16 %v971
    %v4383 = vunpack.c.l.b16 %v972
    %v4384 = vunpack.c.h.b16 %v972
    %v4385 = vunpack.c.l.b16 %v973
    %v4386 = vunpack.c.h.b16 %v973
    %v4387 = vunpack.c.l.b16 %v974
    %v4388 = vunpack.c.h.b16 %v974
    %v4389 = vunpack.c.l.b16 %v975
    %v4390 = vunpack.c.h.b16 %v975
    %v4391 = vunpack.c.l.b16 %v976
    %v4392 = vunpack.c.h.b16 %v976
    %v4393 = vunpack.c.l.b16 %v977
    %v4394 = vunpack.c.h.b16 %v977
    %v4395 = vunpack.c.l.b16 %v978
    %v4396 = vunpack.c.h.b16 %v978
    %v4397 = vunpack.c.l.b16 %v979
    %v4398 = vunpack.c.h.b16 %v979
    %v4399 = vunpack.c.l.b16 %v980
    %v4400 = vunpack.c.h.b16 %v980
    %v4401 = vunpack.c.l.b16 %v981
    %v4402 = vunpack.c.h.b16 %v981
    %v4403 = vunpack.c.l.b16 %v982
    %v4404 = vunpack.c.h.b16 %v982
    %v4405 = vunpack.c.l.b16 %v983
    %v4406 = vunpack.c.h.b16 %v983
    %v4407 = vunpack.c.l.b16 %v984
    %v4408 = vunpack.c.h.b16 %v984
    %v4409 = vunpack.c.l.b16 %v985
    %v4410 = vunpack.c.h.b16 %v985
    %v4411 = vunpack.c.l.b16 %v986
    %v4412 = vunpack.c.h.b16 %v986
    %v4413 = vunpack.c.l.b16 %v987
    %v4414 = vunpack.c.h.b16 %v987
    %v4415 = vunpack.c.l.b16 %v988
    %v4416 = vunpack.c.h.b16 %v988
    %v4417 = vunpack.c.l.b16 %v989
    %v4418 = vunpack.c.h.b16 %v989
    %v4419 = vunpack.c.l.b16 %v990
    %v4420 = vunpack.c.h.b16 %v990
    %v4421 = vunpack.c.l.b16 %v991
    %v4422 = vunpack.c.h.b16 %v991
    %v4423 = vunpack.c.l.b16 %v992
    %v4424 = vunpack.c.h.b16 %v992
    %v4425 = vunpack.c.l.b16 %v993
    %v4426 = vunpack.c.h.b16 %v993
    %v4427 = vunpack.c.l.b16 %v994
    %v4428 = vunpack.c.h.b16 %v994
    %v4429 = vunpack.c.l.b16 %v995
    %v4430 = vunpack.c.h.b16 %v995
    %v4431 = vunpack.c.l.b16 %v996
    %v4432 = vunpack.c.h.b16 %v996
    %v4433 = vunpack.c.l.b16 %v997
    %v4434 = vunpack.c.h.b16 %v997
    %v4435 = vunpack.c.l.b16 %v998
    %v4436 = vunpack.c.h.b16 %v998
    %v4437 = vunpack.c.l.b16 %v999
    %v4438 = vunpack.c.h.b16 %v999
    %v4439 = vunpack.c.l.b16 %v1000
    %v4440 = vunpack.c.h.b16 %v1000
    %v4441 = vunpack.c.l.b16 %v1001
    %v4442 = vunpack.c.h.b16 %v1001
    %v4443 = vunpack.c.l.b16 %v1002
    %v4444 = vunpack.c.h.b16 %v1002
    %v4445 = vunpack.c.l.b16 %v1003
    %v4446 = vunpack.c.h.b16 %v1003
    %v4447 = vunpack.c.l.b16 %v1004
    %v4448 = vunpack.c.h.b16 %v1004
    %v4449 = vunpack.c.l.b16 %v1005
    %v4450 = vunpack.c.h.b16 %v1005
    %v4451 = vunpack.c.l.b16 %v1006
    %v4452 = vunpack.c.h.b16 %v1006
    %v4453 = vunpack.c.l.b16 %v1007
    %v4454 = vunpack.c.h.b16 %v1007
    %v4455 = vunpack.c.l.b16 %v1008
    %v4456 = vunpack.c.h.b16 %v1008
    %v4457 = vunpack.c.l.b16 %v1009
    %v4458 = vunpack.c.h.b16 %v1009
    %v4459 = vunpack.c.l.b16 %v1010
    %v4460 = vunpack.c.h.b16 %v1010
    %v4461 = vunpack.c.l.b16 %v1011
    %v4462 = vunpack.c.h.b16 %v1011
    %v4463 = vunpack.c.l.b16 %v1012
    %v4464 = vunpack.c.h.b16 %v1012
    %v4465 = vunpack.c.l.b16 %v1013
    %v4466 = vunpack.c.h.b16 %v1013
    %v4467 = vunpack.c.l.b16 %v1014
    %v4468 = vunpack.c.h.b16 %v1014
    %v4469 = vunpack.c.l.b16 %v1015
    %v4470 = vunpack.c.h.b16 %v1015
    %v4471 = vunpack.c.l.b16 %v1016
    %v4472 = vunpack.c.h.b16 %v1016
    %v4473 = vunpack.c.l.b16 %v1017
    %v4474 = vunpack.c.h.b16 %v1017
    %v4475 = vunpack.c.l.b16 %v1018
    %v4476 = vunpack.c.h.b16 %v1018
    %v4477 = vunpack.c.l.b16 %v1019
    %v4478 = vunpack.c.h.b16 %v1019
    %v4479 = vunpack.c.l.b16 %v1020
    %v4480 = vunpack.c.h.b16 %v1020
    %v4481 = vunpack.c.l.b16 %v1021
    %v4482 = vunpack.c.h.b16 %v1021
    %v4483 = vunpack.c.l.b16 %v1022
    %v4484 = vunpack.c.h.b16 %v1022
    %v4485 = vunpack.c.l.b16 %v1023
    %v4486 = vunpack.c.h.b16 %v1023
    %v4487 = vunpack.c.l.b16 %v1024
    %v4488 = vunpack.c.h.b16 %v1024
    %v4489 = vunpack.c.l.b16 %v1025
    %v4490 = vunpack.c.h.b16 %v1025
    %v4491 = vunpack.c.l.b16 %v1026
    %v4492 = vunpack.c.h.b16 %v1026
    %v4493 = vunpack.c.l.b16 %v1027
    %v4494 = vunpack.c.h.b16 %v1027
    %v4495 = vunpack.c.l.b16 %v1028
    %v4496 = vunpack.c.h.b16 %v1028
    %v4497 = vunpack.c.l.b16 %v1029
    %v4498 = vunpack.c.h.b16 %v1029
    %v4499 = vunpack.c.l.b16 %v1030
    %v4500 = vunpack.c.h.b16 %v1030
    %v4501 = vunpack.c.l.b16 %v1031
    %v4502 = vunpack.c.h.b16 %v1031
    %v4503 = vunpack.c.l.b16 %v1032
    %v4504 = vunpack.c.h.b16 %v1032
    %v4505 = vunpack.c.l.b16 %v1033
    %v4506 = vunpack.c.h.b16 %v1033
    %v4507 = vunpack.c.l.b16 %v1034
    %v4508 = vunpack.c.h.b16 %v1034
    %v4509 = vunpack.c.l.b16 %v1035
    %v4510 = vunpack.c.h.b16 %v1035
    %v4511 = vunpack.c.l.b16 %v1036
    %v4512 = vunpack.c.h.b16 %v1036
    %v4513 = vunpack.c.l.b16 %v1037
    %v4514 = vunpack.c.h.b16 %v1037
    %v4515 = vunpack.c.l.b16 %v1038
    %v4516 = vunpack.c.h.b16 %v1038
    %v4517 = vunpack.c.l.b16 %v1039
    %v4518 = vunpack.c.h.b16 %v1039
    %v4519 = vunpack.c.l.b16 %v1040
    %v4520 = vunpack.c.h.b16 %v1040
    %v4521 = vunpack.c.l.b16 %v1041
    %v4522 = vunpack.c.h.b16 %v1041
    %v4523 = vunpack.c.l.b16 %v1042
    %v4524 = vunpack.c.h.b16 %v1042
    %v4525 = vunpack.c.l.b16 %v1043
    %v4526 = vunpack.c.h.b16 %v1043
    %v4527 = vunpack.c.l.b16 %v1044
    %v4528 = vunpack.c.h.b16 %v1044
    %v4529 = vunpack.c.l.b16 %v1045
    %v4530 = vunpack.c.h.b16 %v1045
    %v4531 = vunpack.c.l.b16 %v1046
    %v4532 = vunpack.c.h.b16 %v1046
    %v4533 = vunpack.c.l.b16 %v1047
    %v4534 = vunpack.c.h.b16 %v1047
    %v4535 = vunpack.c.l.b16 %v1048
    %v4536 = vunpack.c.h.b16 %v1048
    %v4537 = vunpack.c.l.b16 %v1049
    %v4538 = vunpack.c.h.b16 %v1049
    %v4539 = vunpack.c.l.b16 %v1050
    %v4540 = vunpack.c.h.b16 %v1050
    %v4541 = vunpack.c.l.b16 %v1051
    %v4542 = vunpack.c.h.b16 %v1051
    %v4543 = vunpack.c.l.b16 %v1052
    %v4544 = vunpack.c.h.b16 %v1052
    %v4545 = vunpack.c.l.b16 %v1053
    %v4546 = vunpack.c.h.b16 %v1053
    %v4547 = vunpack.c.l.b16 %v1054
    %v4548 = vunpack.c.h.b16 %v1054
    %v4549 = vunpack.c.l.b16 %v1055
    %v4550 = vunpack.c.h.b16 %v1055
    %v4551 = vunpack.c.l.b16 %v1056
    %v4552 = vunpack.c.h.b16 %v1056
    %v4553 = vunpack.c.l.b16 %v1057
    %v4554 = vunpack.c.h.b16 %v1057
    %v4555 = vunpack.c.l.b16 %v1058
    %v4556 = vunpack.c.h.b16 %v1058
    %v4557 = vunpack.c.l.b16 %v1059
    %v4558 = vunpack.c.h.b16 %v1059
    %v4559 = vunpack.c.l.b16 %v1060
    %v4560 = vunpack.c.h.b16 %v1060
    %v4561 = vunpack.c.l.b16 %v1061
    %v4562 = vunpack.c.h.b16 %v1061
    %v4563 = vunpack.c.l.b16 %v1062
    %v4564 = vunpack.c.h.b16 %v1062
    %v4565 = vunpack.c.l.b16 %v1063
    %v4566 = vunpack.c.h.b16 %v1063
    %v4567 = vunpack.c.l.b16 %v1064
    %v4568 = vunpack.c.h.b16 %v1064
    %v4569 = vunpack.c.l.b16 %v1065
    %v4570 = vunpack.c.h.b16 %v1065
    %v4571 = vunpack.c.l.b16 %v1066
    %v4572 = vunpack.c.h.b16 %v1066
    %v4573 = vunpack.c.l.b16 %v1067
    %v4574 = vunpack.c.h.b16 %v1067
    %v4575 = vunpack.c.l.b16 %v1068
    %v4576 = vunpack.c.h.b16 %v1068
    %v4577 = vunpack.c.l.b16 %v1069
    %v4578 = vunpack.c.h.b16 %v1069
    %v4579 = vunpack.c.l.b16 %v1070
    %v4580 = vunpack.c.h.b16 %v1070
    %v4581 = vunpack.c.l.b16 %v1071
    %v4582 = vunpack.c.h.b16 %v1071
    %v4583 = vunpack.c.l.b16 %v1072
    %v4584 = vunpack.c.h.b16 %v1072
    %v4585 = vunpack.c.l.b16 %v1073
    %v4586 = vunpack.c.h.b16 %v1073
    %v4587 = vunpack.c.l.b16 %v1074
    %v4588 = vunpack.c.h.b16 %v1074
    %v4589 = vunpack.c.l.b16 %v1075
    %v4590 = vunpack.c.h.b16 %v1075
    %v4591 = vunpack.c.l.b16 %v1076
    %v4592 = vunpack.c.h.b16 %v1076
    %v4593 = vunpack.c.l.b16 %v1077
    %v4594 = vunpack.c.h.b16 %v1077
    %v4595 = vunpack.c.l.b16 %v1078
    %v4596 = vunpack.c.h.b16 %v1078
    %v4597 = vunpack.c.l.b16 %v1079
    %v4598 = vunpack.c.h.b16 %v1079
    %v4599 = vunpack.c.l.b16 %v1080
    %v4600 = vunpack.c.h.b16 %v1080
    %v4601 = vunpack.c.l.b16 %v1081
    %v4602 = vunpack.c.h.b16 %v1081
    %v4603 = vunpack.c.l.b16 %v1082
    %v4604 = vunpack.c.h.b16 %v1082
    %v4605 = vunpack.c.l.b16 %v1083
    %v4606 = vunpack.c.h.b16 %v1083
    %v4607 = vunpack.c.l.b16 %v1084
    %v4608 = vunpack.c.h.b16 %v1084
    %v4609 = vunpack.c.l.b16 %v1085
    %v4610 = vunpack.c.h.b16 %v1085
    %v4611 = vunpack.c.l.b16 %v1086
    %v4612 = vunpack.c.h.b16 %v1086
    %v4613 = vunpack.c.l.b16 %v1087
    %v4614 = vunpack.c.h.b16 %v1087
    %v4615 = vunpack.c.l.b16 %v1088
    %v4616 = vunpack.c.h.b16 %v1088
    %v4617 = vunpack.c.l.b16 %v1089
    %v4618 = vunpack.c.h.b16 %v1089
    %v4619 = vunpack.c.l.b16 %v1090
    %v4620 = vunpack.c.h.b16 %v1090
    %v4621 = vunpack.c.l.b16 %v1091
    %v4622 = vunpack.c.h.b16 %v1091
    %v4623 = vunpack.c.l.b16 %v1092
    %v4624 = vunpack.c.h.b16 %v1092
    %v4625 = vunpack.c.l.b16 %v1093
    %v4626 = vunpack.c.h.b16 %v1093
    %v4627 = vunpack.c.l.b16 %v1094
    %v4628 = vunpack.c.h.b16 %v1094
    %v4629 = vunpack.c.l.b16 %v1095
    %v4630 = vunpack.c.h.b16 %v1095
    %v4631 = vunpack.c.l.b16 %v1096
    %v4632 = vunpack.c.h.b16 %v1096
    %v4633 = vunpack.c.l.b16 %v1097
    %v4634 = vunpack.c.h.b16 %v1097
    %v4635 = vunpack.c.l.b16 %v1098
    %v4636 = vunpack.c.h.b16 %v1098
    %v4637 = vunpack.c.l.b16 %v1099
    %v4638 = vunpack.c.h.b16 %v1099
    %v4639 = vunpack.c.l.b16 %v1100
    %v4640 = vunpack.c.h.b16 %v1100
    %v4641 = vunpack.c.l.b16 %v1101
    %v4642 = vunpack.c.h.b16 %v1101
    %v4643 = vunpack.c.l.b16 %v1102
    %v4644 = vunpack.c.h.b16 %v1102
    %v4645 = vunpack.c.l.b16 %v1103
    %v4646 = vunpack.c.h.b16 %v1103
    %v4647 = vunpack.c.l.b16 %v1104
    %v4648 = vunpack.c.h.b16 %v1104
    %v4649 = vunpack.c.l.b16 %v1105
    %v4650 = vunpack.c.h.b16 %v1105
    %v4651 = vunpack.c.l.b16 %v1106
    %v4652 = vunpack.c.h.b16 %v1106
    %v4653 = vunpack.c.l.b16 %v1107
    %v4654 = vunpack.c.h.b16 %v1107
    %v4655 = vunpack.c.l.b16 %v1108
    %v4656 = vunpack.c.h.b16 %v1108
    %v4657 = vunpack.c.l.b16 %v1109
    %v4658 = vunpack.c.h.b16 %v1109
    %v4659 = vunpack.c.l.b16 %v1110
    %v4660 = vunpack.c.h.b16 %v1110
    %v4661 = vunpack.c.l.b16 %v1111
    %v4662 = vunpack.c.h.b16 %v1111
    %v4663 = vunpack.c.l.b16 %v1112
    %v4664 = vunpack.c.h.b16 %v1112
    %v4665 = vunpack.c.l.b16 %v1113
    %v4666 = vunpack.c.h.b16 %v1113
    %v4667 = vunpack.c.l.b16 %v1114
    %v4668 = vunpack.c.h.b16 %v1114
    %v4669 = vunpack.c.l.b16 %v1115
    %v4670 = vunpack.c.h.b16 %v1115
    %v4671 = vunpack.c.l.b16 %v1116
    %v4672 = vunpack.c.h.b16 %v1116
    %v4673 = vunpack.c.l.b16 %v1117
    %v4674 = vunpack.c.h.b16 %v1117
    %v4675 = vunpack.c.l.b16 %v1118
    %v4676 = vunpack.c.h.b16 %v1118
    %v4677 = vunpack.c.l.b16 %v1119
    %v4678 = vunpack.c.h.b16 %v1119
    %v4679 = vunpack.c.l.b16 %v1120
    %v4680 = vunpack.c.h.b16 %v1120
    %v4681 = vunpack.c.l.b16 %v1121
    %v4682 = vunpack.c.h.b16 %v1121
    %v4683 = vunpack.c.l.b16 %v1122
    %v4684 = vunpack.c.h.b16 %v1122
    %v4685 = vunpack.c.l.b16 %v1123
    %v4686 = vunpack.c.h.b16 %v1123
    %v4687 = vunpack.c.l.b16 %v1124
    %v4688 = vunpack.c.h.b16 %v1124
    %v4689 = vunpack.c.l.b16 %v1125
    %v4690 = vunpack.c.h.b16 %v1125
    %v4691 = vunpack.c.l.b16 %v1126
    %v4692 = vunpack.c.h.b16 %v1126
    %v4693 = vunpack.c.l.b16 %v1127
    %v4694 = vunpack.c.h.b16 %v1127
    %v4695 = vunpack.c.l.b16 %v1128
    %v4696 = vunpack.c.h.b16 %v1128
    %v4697 = vunpack.c.l.b16 %v1129
    %v4698 = vunpack.c.h.b16 %v1129
    %v4699 = vunpack.c.l.b16 %v1130
    %v4700 = vunpack.c.h.b16 %v1130
    %v4701 = vunpack.c.l.b16 %v1131
    %v4702 = vunpack.c.h.b16 %v1131
    %v4703 = vunpack.c.l.b16 %v1132
    %v4704 = vunpack.c.h.b16 %v1132
    %v4705 = vunpack.c.l.b16 %v1133
    %v4706 = vunpack.c.h.b16 %v1133
    %v4707 = vunpack.c.l.b16 %v1134
    %v4708 = vunpack.c.h.b16 %v1134
    %v4709 = vunpack.c.l.b16 %v1135
    %v4710 = vunpack.c.h.b16 %v1135
    %v4711 = vunpack.c.l.b16 %v1136
    %v4712 = vunpack.c.h.b16 %v1136
    %v4713 = vunpack.c.l.b16 %v1137
    %v4714 = vunpack.c.h.b16 %v1137
    %v4715 = vunpack.c.l.b16 %v1138
    %v4716 = vunpack.c.h.b16 %v1138
    %v4717 = vunpack.c.l.b16 %v1139
    %v4718 = vunpack.c.h.b16 %v1139
    %v4719 = vunpack.c.l.b16 %v1140
    %v4720 = vunpack.c.h.b16 %v1140
    %v4721 = vunpack.c.l.b16 %v1141
    %v4722 = vunpack.c.h.b16 %v1141
    %v4723 = vunpack.c.l.b16 %v1142
    %v4724 = vunpack.c.h.b16 %v1142
    %v4725 = vunpack.c.l.b16 %v1143
    %v4726 = vunpack.c.h.b16 %v1143
    %v4727 = vunpack.c.l.b16 %v1144
    %v4728 = vunpack.c.h.b16 %v1144
    %v4729 = vunpack.c.l.b16 %v1145
    %v4730 = vunpack.c.h.b16 %v1145
    %v4731 = vunpack.c.l.b16 %v1146
    %v4732 = vunpack.c.h.b16 %v1146
    %v4733 = vunpack.c.l.b16 %v1147
    %v4734 = vunpack.c.h.b16 %v1147
    %v4735 = vunpack.c.l.b16 %v1148
    %v4736 = vunpack.c.h.b16 %v1148
    %v4737 = vunpack.c.l.b16 %v1149
    %v4738 = vunpack.c.h.b16 %v1149
    %v4739 = vunpack.c.l.b16 %v1150
    %v4740 = vunpack.c.h.b16 %v1150
    %v4741 = vunpack.c.l.b16 %v1151
    %v4742 = vunpack.c.h.b16 %v1151
    %v4743 = vunpack.c.l.b16 %v1152
    %v4744 = vunpack.c.h.b16 %v1152
    %v4745 = vunpack.c.l.b16 %v1153
    %v4746 = vunpack.c.h.b16 %v1153
    %v4747 = vunpack.c.l.b16 %v1154
    %v4748 = vunpack.c.h.b16 %v1154
    %v4749 = vunpack.c.l.b16 %v1155
    %v4750 = vunpack.c.h.b16 %v1155
    %v4751 = vunpack.c.l.b16 %v1156
    %v4752 = vunpack.c.h.b16 %v1156
    %v4753 = vunpack.c.l.b16 %v1157
    %v4754 = vunpack.c.h.b16 %v1157
    %v4755 = vunpack.c.l.b16 %v1158
    %v4756 = vunpack.c.h.b16 %v1158
    %v4757 = vunpack.c.l.b16 %v1159
    %v4758 = vunpack.c.h.b16 %v1159
    %v4759 = vunpack.c.l.b16 %v1160
    %v4760 = vunpack.c.h.b16 %v1160
    %v4761 = vunpack.c.l.b16 %v1161
    %v4762 = vunpack.c.h.b16 %v1161
    %v4763 = vunpack.c.l.b16 %v1162
    %v4764 = vunpack.c.h.b16 %v1162
    %v4765 = vunpack.c.l.b16 %v1163
    %v4766 = vunpack.c.h.b16 %v1163
    %v4767 = vunpack.c.l.b16 %v1164
    %v4768 = vunpack.c.h.b16 %v1164
    %v4769 = vunpack.c.l.b16 %v1165
    %v4770 = vunpack.c.h.b16 %v1165
    %v4771 = vunpack.c.l.b16 %v1166
    %v4772 = vunpack.c.h.b16 %v1166
    %v4773 = vunpack.c.l.b16 %v1167
    %v4774 = vunpack.c.h.b16 %v1167
    %v4775 = vunpack.c.l.b16 %v1168
    %v4776 = vunpack.c.h.b16 %v1168
    %v4777 = vunpack.c.l.b16 %v1169
    %v4778 = vunpack.c.h.b16 %v1169
    %v4779 = vunpack.c.l.b16 %v1170
    %v4780 = vunpack.c.h.b16 %v1170
    %v4781 = vunpack.c.l.b16 %v1171
    %v4782 = vunpack.c.h.b16 %v1171
    %v4783 = vunpack.c.l.b16 %v1172
    %v4784 = vunpack.c.h.b16 %v1172
    %v4785 = vpack.c.b16 %v2505, %v2481
    %v4786 = vpack.c.b16 %v2506, %v2482
    %v4787 = vpack.c.b16 %v2507, %v2483
    %v4788 = vpack.c.b16 %v2508, %v2484
    %v4789 = vpack.c.b16 %v2509, %v2485
    %v4790 = vpack.c.b16 %v2510, %v2486
    %v4791 = vpack.c.b16 %v2511, %v2487
    %v4792 = vpack.c.b16 %v2512, %v2488
    %v4793 = vpack.c.b16 %v2513, %v2489
    %v4794 = vpack.c.b16 %v2514, %v2490
    %v4795 = vpack.c.b16 %v2515, %v2491
    %v4796 = vpack.c.b16 %v2516, %v2492
    %v4797 = vpack.c.b16 %v2517, %v2493
    %v4798 = vpack.c.b16 %v2518, %v2494
    %v4799 = vpack.c.b16 %v2519, %v2495
    %v4800 = vpack.c.b16 %v2520, %v2496
    %v4801 = vpack.c.b16 %v2521, %v2497
    %v4802 = vpack.c.b16 %v2522, %v2498
    %v4803 = vpack.c.b16 %v2523, %v2499
    %v4804 = vpack.c.b16 %v2524, %v2500
    %v4805 = vpack.c.b16 %v2525, %v2501
    %v4806 = vpack.c.b16 %v2526, %v2502
    %v4807 = vpack.c.b16 %v2527, %v2503
    %v4808 = vpack.c.b16 %v2528, %v2504
    %v4809 = vpack.c.b16 %v2553, %v2529
    %v4810 = vpack.c.b16 %v2554, %v2530
    %v4811 = vpack.c.b16 %v2555, %v2531
    %v4812 = vpack.c.b16 %v2556, %v2532
    %v4813 = vpack.c.b16 %v2557, %v2533
    %v4814 = vpack.c.b16 %v2558, %v2534
    %v4815 = vpack.c.b16 %v2559, %v2535
    %v4816 = vpack.c.b16 %v2560, %v2536
    %v4817 = vpack.c.b16 %v2561, %v2537
    %v4818 = vpack.c.b16 %v2562, %v2538
    %v4819 = vpack.c.b16 %v2563, %v2539
    %v4820 = vpack.c.b16 %v2564, %v2540
    %v4821 = vpack.c.b16 %v2565, %v2541
    %v4822 = vpack.c.b16 %v2566, %v2542
    %v4823 = vpack.c.b16 %v2567, %v2543
    %v4824 = vpack.c.b16 %v2568, %v2544
    %v4825 = vpack.c.b16 %v2569, %v2545
    %v4826 = vpack.c.b16 %v2570, %v2546
    %v4827 = vpack.c.b16 %v2571, %v2547
    %v4828 = vpack.c.b16 %v2572, %v2548
    %v4829 = vpack.c.b16 %v2573, %v2549
    %v4830 = vpack.c.b16 %v2574, %v2550
    %v4831 = vpack.c.b16 %v2575, %v2551
    %v4832 = vpack.c.b16 %v2576, %v2552
    %v4833 = vpack.c.b16 %v2601, %v2577
    %v4834 = vpack.c.b16 %v2602, %v2578
    %v4835 = vpack.c.b16 %v2603, %v2579
    %v4836 = vpack.c.b16 %v2604, %v2580
    %v4837 = vpack.c.b16 %v2605, %v2581
    %v4838 = vpack.c.b16 %v2606, %v2582
    %v4839 = vpack.c.b16 %v2607, %v2583
    %v4840 = vpack.c.b16 %v2608, %v2584
    %v4841 = vpack.c.b16 %v2609, %v2585
    %v4842 = vpack.c.b16 %v2610, %v2586
    %v4843 = vpack.c.b16 %v2611, %v2587
    %v4844 = vpack.c.b16 %v2612, %v2588
    %v4845 = vpack.c.b16 %v2613, %v2589
    %v4846 = vpack.c.b16 %v2614, %v2590
    %v4847 = vpack.c.b16 %v2615, %v2591
    %v4848 = vpack.c.b16 %v2616, %v2592
    %v4849 = vpack.c.b16 %v2617, %v2593
    %v4850 = vpack.c.b16 %v2618, %v2594
    %v4851 = vpack.c.b16 %v2619, %v2595
    %v4852 = vpack.c.b16 %v2620, %v2596
    %v4853 = vpack.c.b16 %v2621, %v2597
    %v4854 = vpack.c.b16 %v2622, %v2598
    %v4855 = vpack.c.b16 %v2623, %v2599
    %v4856 = vpack.c.b16 %v2624, %v2600
    %v4857 = vpack.c.b16 %v2649, %v2625
    %v4858 = vpack.c.b16 %v2650, %v2626
    %v4859 = vpack.c.b16 %v2651, %v2627
    %v4860 = vpack.c.b16 %v2652, %v2628
    %v4861 = vpack.c.b16 %v2653, %v2629
    %v4862 = vpack.c.b16 %v2654, %v2630
    %v4863 = vpack.c.b16 %v2655, %v2631
    %v4864 = vpack.c.b16 %v2656, %v2632
    %v4865 = vpack.c.b16 %v2657, %v2633
    %v4866 = vpack.c.b16 %v2658, %v2634
    %v4867 = vpack.c.b16 %v2659, %v2635
    %v4868 = vpack.c.b16 %v2660, %v2636
    %v4869 = vpack.c.b16 %v2661, %v2637
    %v4870 = vpack.c.b16 %v2662, %v2638
    %v4871 = vpack.c.b16 %v2663, %v2639
    %v4872 = vpack.c.b16 %v2664, %v2640
    %v4873 = vpack.c.b16 %v2665, %v2641
    %v4874 = vpack.c.b16 %v2666, %v2642
    %v4875 = vpack.c.b16 %v2667, %v2643
    %v4876 = vpack.c.b16 %v2668, %v2644
    %v4877 = vpack.c.b16 %v2669, %v2645
    %v4878 = vpack.c.b16 %v2670, %v2646
    %v4879 = vpack.c.b16 %v2671, %v2647
    %v4880 = vpack.c.b16 %v2672, %v2648
    %v4881 = vpack.c.b16 %v2697, %v2673
    %v4882 = vpack.c.b16 %v2698, %v2674
    %v4883 = vpack.c.b16 %v2699, %v2675
    %v4884 = vpack.c.b16 %v2700, %v2676
    %v4885 = vpack.c.b16 %v2701, %v2677
    %v4886 = vpack.c.b16 %v2702, %v2678
    %v4887 = vpack.c.b16 %v2703, %v2679
    %v4888 = vpack.c.b16 %v2704, %v2680
    %v4889 = vpack.c.b16 %v2705, %v2681
    %v4890 = vpack.c.b16 %v2706, %v2682
    %v4891 = vpack.c.b16 %v2707, %v2683
    %v4892 = vpack.c.b16 %v2708, %v2684
    %v4893 = vpack.c.b16 %v2709, %v2685
    %v4894 = vpack.c.b16 %v2710, %v2686
    %v4895 = vpack.c.b16 %v2711, %v2687
    %v4896 = vpack.c.b16 %v2712, %v2688
    %v4897 = vpack.c.b16 %v2713, %v2689
    %v4898 = vpack.c.b16 %v2714, %v2690
    %v4899 = vpack.c.b16 %v2715, %v2691
    %v4900 = vpack.c.b16 %v2716, %v2692
    %v4901 = vpack.c.b16 %v2717, %v2693
    %v4902 = vpack.c.b16 %v2718, %v2694
    %v4903 = vpack.c.b16 %v2719, %v2695
    %v4904 = vpack.c.b16 %v2720, %v2696
    %v4905 = vpack.c.b16 %v2745, %v2721
    %v4906 = vpack.c.b16 %v2746, %v2722
    %v4907 = vpack.c.b16 %v2747, %v2723
    %v4908 = vpack.c.b16 %v2748, %v2724
    %v4909 = vpack.c.b16 %v2749, %v2725
    %v4910 = vpack.c.b16 %v2750, %v2726
    %v4911 = vpack.c.b16 %v2751, %v2727
    %v4912 = vpack.c.b16 %v2752, %v2728
    %v4913 = vpack.c.b16 %v2753, %v2729
    %v4914 = vpack.c.b16 %v2754, %v2730
    %v4915 = vpack.c.b16 %v2755, %v2731
    %v4916 = vpack.c.b16 %v2756, %v2732
    %v4917 = vpack.c.b16 %v2757, %v2733
    %v4918 = vpack.c.b16 %v2758, %v2734
    %v4919 = vpack.c.b16 %v2759, %v2735
    %v4920 = vpack.c.b16 %v2760, %v2736
    %v4921 = vpack.c.b16 %v2761, %v2737
    %v4922 = vpack.c.b16 %v2762, %v2738
    %v4923 = vpack.c.b16 %v2763, %v2739
    %v4924 = vpack.c.b16 %v2764, %v2740
    %v4925 = vpack.c.b16 %v2765, %v2741
    %v4926 = vpack.c.b16 %v2766, %v2742
    %v4927 = vpack.c.b16 %v2767, %v2743
    %v4928 = vpack.c.b16 %v2768, %v2744
    %v4929 = vpack.c.b16 %v2793, %v2769
    %v4930 = vpack.c.b16 %v2794, %v2770
    %v4931 = vpack.c.b16 %v2795, %v2771
    %v4932 = vpack.c.b16 %v2796, %v2772
    %v4933 = vpack.c.b16 %v2797, %v2773
    %v4934 = vpack.c.b16 %v2798, %v2774
    %v4935 = vpack.c.b16 %v2799, %v2775
    %v4936 = vpack.c.b16 %v2800, %v2776
    %v4937 = vpack.c.b16 %v2801, %v2777
    %v4938 = vpack.c.b16 %v2802, %v2778
    %v4939 = vpack.c.b16 %v2803, %v2779
    %v4940 = vpack.c.b16 %v2804, %v2780
    %v4941 = vpack.c.b16 %v2805, %v2781
    %v4942 = vpack.c.b16 %v2806, %v2782
    %v4943 = vpack.c.b16 %v2807, %v2783
    %v4944 = vpack.c.b16 %v2808, %v2784
    %v4945 = vpack.c.b16 %v2809, %v2785
    %v4946 = vpack.c.b16 %v2810, %v2786
    %v4947 = vpack.c.b16 %v2811, %v2787
    %v4948 = vpack.c.b16 %v2812, %v2788
    %v4949 = vpack.c.b16 %v2813, %v2789
    %v4950 = vpack.c.b16 %v2814, %v2790
    %v4951 = vpack.c.b16 %v2815, %v2791
    %v4952 = vpack.c.b16 %v2816, %v2792
    %v4953 = vpack.c.b16 %v2841, %v2817
    %v4954 = vpack.c.b16 %v2842, %v2818
    %v4955 = vpack.c.b16 %v2843, %v2819
    %v4956 = vpack.c.b16 %v2844, %v2820
    %v4957 = vpack.c.b16 %v2845, %v2821
    %v4958 = vpack.c.b16 %v2846, %v2822
    %v4959 = vpack.c.b16 %v2847, %v2823
    %v4960 = vpack.c.b16 %v2848, %v2824
    %v4961 = vpack.c.b16 %v2849, %v2825
    %v4962 = vpack.c.b16 %v2850, %v2826
    %v4963 = vpack.c.b16 %v2851, %v2827
    %v4964 = vpack.c.b16 %v2852, %v2828
    %v4965 = vpack.c.b16 %v2853, %v2829
    %v4966 = vpack.c.b16 %v2854, %v2830
    %v4967 = vpack.c.b16 %v2855, %v2831
    %v4968 = vpack.c.b16 %v2856, %v2832
    %v4969 = vpack.c.b16 %v2857, %v2833
    %v4970 = vpack.c.b16 %v2858, %v2834
    %v4971 = vpack.c.b16 %v2859, %v2835
    %v4972 = vpack.c.b16 %v2860, %v2836
    %v4973 = vpack.c.b16 %v2861, %v2837
    %v4974 = vpack.c.b16 %v2862, %v2838
    %v4975 = vpack.c.b16 %v2863, %v2839
    %v4976 = vpack.c.b16 %v2864, %v2840
    %v4977 = vpack.c.b16 %v2889, %v2865
    %v4978 = vpack.c.b16 %v2890, %v2866
    %v4979 = vpack.c.b16 %v2891, %v2867
    %v4980 = vpack.c.b16 %v2892, %v2868
    %v4981 = vpack.c.b16 %v2893, %v2869
    %v4982 = vpack.c.b16 %v2894, %v2870
    %v4983 = vpack.c.b16 %v2895, %v2871
    %v4984 = vpack.c.b16 %v2896, %v2872
    %v4985 = vpack.c.b16 %v2897, %v2873
    %v4986 = vpack.c.b16 %v2898, %v2874
    %v4987 = vpack.c.b16 %v2899, %v2875
    %v4988 = vpack.c.b16 %v2900, %v2876
    %v4989 = vpack.c.b16 %v2901, %v2877
    %v4990 = vpack.c.b16 %v2902, %v2878
    %v4991 = vpack.c.b16 %v2903, %v2879
    %v4992 = vpack.c.b16 %v2904, %v2880
    %v4993 = vpack.c.b16 %v2905, %v2881
    %v4994 = vpack.c.b16 %v2906, %v2882
    %v4995 = vpack.c.b16 %v2907, %v2883
    %v4996 = vpack.c.b16 %v2908, %v2884
    %v4997 = vpack.c.b16 %v2909, %v2885
    %v4998 = vpack.c.b16 %v2910, %v2886
    %v4999 = vpack.c.b16 %v2911, %v2887
    %v5000 = vpack.c.b16 %v2912, %v2888
    %v5001 = vpack.c.b16 %v2937, %v2913
    %v5002 = vpack.c.b16 %v2938, %v2914
    %v5003 = vpack.c.b16 %v2939, %v2915
    %v5004 = vpack.c.b16 %v2940, %v2916
    %v5005 = vpack.c.b16 %v2941, %v2917
    %v5006 = vpack.c.b16 %v2942, %v2918
    %v5007 = vpack.c.b16 %v2943, %v2919
    %v5008 = vpack.c.b16 %v2944, %v2920
    %v5009 = vpack.c.b16 %v2945, %v2921
    %v5010 = vpack.c.b16 %v2946, %v2922
    %v5011 = vpack.c.b16 %v2947, %v2923
    %v5012 = vpack.c.b16 %v2948, %v2924
    %v5013 = vpack.c.b16 %v2949, %v2925
    %v5014 = vpack.c.b16 %v2950, %v2926
    %v5015 = vpack.c.b16 %v2951, %v2927
    %v5016 = vpack.c.b16 %v2952, %v2928
    %v5017 = vpack.c.b16 %v2953, %v2929
    %v5018 = vpack.c.b16 %v2954, %v2930
    %v5019 = vpack.c.b16 %v2955, %v2931
    %v5020 = vpack.c.b16 %v2956, %v2932
    %v5021 = vpack.c.b16 %v2957, %v2933
    %v5022 = vpack.c.b16 %v2958, %v2934
    %v5023 = vpack.c.b16 %v2959, %v2935
    %v5024 = vpack.c.b16 %v2960, %v2936
    %v5025 = vpack.c.b16 %v2985, %v2961
    %v5026 = vpack.c.b16 %v2986, %v2962
    %v5027 = vpack.c.b16 %v2987, %v2963
    %v5028 = vpack.c.b16 %v2988, %v2964
    %v5029 = vpack.c.b16 %v2989, %v2965
    %v5030 = vpack.c.b16 %v2990, %v2966
    %v5031 = vpack.c.b16 %v2991, %v2967
    %v5032 = vpack.c.b16 %v2992, %v2968
    %v5033 = vpack.c.b16 %v2993, %v2969
    %v5034 = vpack.c.b16 %v2994, %v2970
    %v5035 = vpack.c.b16 %v2995, %v2971
    %v5036 = vpack.c.b16 %v2996, %v2972
    %v5037 = vpack.c.b16 %v2997, %v2973
    %v5038 = vpack.c.b16 %v2998, %v2974
    %v5039 = vpack.c.b16 %v2999, %v2975
    %v5040 = vpack.c.b16 %v3000, %v2976
    %v5041 = vpack.c.b16 %v3001, %v2977
    %v5042 = vpack.c.b16 %v3002, %v2978
    %v5043 = vpack.c.b16 %v3003, %v2979
    %v5044 = vpack.c.b16 %v3004, %v2980
    %v5045 = vpack.c.b16 %v3005, %v2981
    %v5046 = vpack.c.b16 %v3006, %v2982
    %v5047 = vpack.c.b16 %v3007, %v2983
    %v5048 = vpack.c.b16 %v3008, %v2984
    %v5049 = vpack.c.b16 %v3033, %v3009
    %v5050 = vpack.c.b16 %v3034, %v3010
    %v5051 = vpack.c.b16 %v3035, %v3011
    %v5052 = vpack.c.b16 %v3036, %v3012
    %v5053 = vpack.c.b16 %v3037, %v3013
    %v5054 = vpack.c.b16 %v3038, %v3014
    %v5055 = vpack.c.b16 %v3039, %v3015
    %v5056 = vpack.c.b16 %v3040, %v3016
    %v5057 = vpack.c.b16 %v3041, %v3017
    %v5058 = vpack.c.b16 %v3042, %v3018
    %v5059 = vpack.c.b16 %v3043, %v3019
    %v5060 = vpack.c.b16 %v3044, %v3020
    %v5061 = vpack.c.b16 %v3045, %v3021
    %v5062 = vpack.c.b16 %v3046, %v3022
    %v5063 = vpack.c.b16 %v3047, %v3023
    %v5064 = vpack.c.b16 %v3048, %v3024
    %v5065 = vpack.c.b16 %v3049, %v3025
    %v5066 = vpack.c.b16 %v3050, %v3026
    %v5067 = vpack.c.b16 %v3051, %v3027
    %v5068 = vpack.c.b16 %v3052, %v3028
    %v5069 = vpack.c.b16 %v3053, %v3029
    %v5070 = vpack.c.b16 %v3054, %v3030
    %v5071 = vpack.c.b16 %v3055, %v3031
    %v5072 = vpack.c.b16 %v3056, %v3032
    %v5073 = vpack.c.b16 %v3081, %v3057
    %v5074 = vpack.c.b16 %v3082, %v3058
    %v5075 = vpack.c.b16 %v3083, %v3059
    %v5076 = vpack.c.b16 %v3084, %v3060
    %v5077 = vpack.c.b16 %v3085, %v3061
    %v5078 = vpack.c.b16 %v3086, %v3062
    %v5079 = vpack.c.b16 %v3087, %v3063
    %v5080 = vpack.c.b16 %v3088, %v3064
    %v5081 = vpack.c.b16 %v3089, %v3065
    %v5082 = vpack.c.b16 %v3090, %v3066
    %v5083 = vpack.c.b16 %v3091, %v3067
    %v5084 = vpack.c.b16 %v3092, %v3068
    %v5085 = vpack.c.b16 %v3093, %v3069
    %v5086 = vpack.c.b16 %v3094, %v3070
    %v5087 = vpack.c.b16 %v3095, %v3071
    %v5088 = vpack.c.b16 %v3096, %v3072
    %v5089 = vpack.c.b16 %v3097, %v3073
    %v5090 = vpack.c.b16 %v3098, %v3074
    %v5091 = vpack.c.b16 %v3099, %v3075
    %v5092 = vpack.c.b16 %v3100, %v3076
    %v5093 = vpack.c.b16 %v3101, %v3077
    %v5094 = vpack.c.b16 %v3102, %v3078
    %v5095 = vpack.c.b16 %v3103, %v3079
    %v5096 = vpack.c.b16 %v3104, %v3080
    %v5097 = vpack.c.b16 %v3129, %v3105
    %v5098 = vpack.c.b16 %v3130, %v3106
    %v5099 = vpack.c.b16 %v3131, %v3107
    %v5100 = vpack.c.b16 %v3132, %v3108
    %v5101 = vpack.c.b16 %v3133, %v3109
    %v5102 = vpack.c.b16 %v3134, %v3110
    %v5103 = vpack.c.b16 %v3135, %v3111
    %v5104 = vpack.c.b16 %v3136, %v3112
    %v5105 = vpack.c.b16 %v3137, %v3113
    %v5106 = vpack.c.b16 %v3138, %v3114
    %v5107 = vpack.c.b16 %v3139, %v3115
    %v5108 = vpack.c.b16 %v3140, %v3116
    %v5109 = vpack.c.b16 %v3141, %v3117
    %v5110 = vpack.c.b16 %v3142, %v3118
    %v5111 = vpack.c.b16 %v3143, %v3119
    %v5112 = vpack.c.b16 %v3144, %v3120
    %v5113 = vpack.c.b16 %v3145, %v3121
    %v5114 = vpack.c.b16 %v3146, %v3122
    %v5115 = vpack.c.b16 %v3147, %v3123
    %v5116 = vpack.c.b16 %v3148, %v3124
    %v5117 = vpack.c.b16 %v3149, %v3125
    %v5118 = vpack.c.b16 %v3150, %v3126
    %v5119 = vpack.c.b16 %v3151, %v3127
    %v5120 = vpack.c.b16 %v3152, %v3128
    %v5121 = vpack.c.b16 %v3177, %v3153
    %v5122 = vpack.c.b16 %v3178, %v3154
    %v5123 = vpack.c.b16 %v3179, %v3155
    %v5124 = vpack.c.b16 %v3180, %v3156
    %v5125 = vpack.c.b16 %v3181, %v3157
    %v5126 = vpack.c.b16 %v3182, %v3158
    %v5127 = vpack.c.b16 %v3183, %v3159
    %v5128 = vpack.c.b16 %v3184, %v3160
    %v5129 = vpack.c.b16 %v3185, %v3161
    %v5130 = vpack.c.b16 %v3186, %v3162
    %v5131 = vpack.c.b16 %v3187, %v3163
    %v5132 = vpack.c.b16 %v3188, %v3164
    %v5133 = vpack.c.b16 %v3189, %v3165
    %v5134 = vpack.c.b16 %v3190, %v3166
    %v5135 = vpack.c.b16 %v3191, %v3167
    %v5136 = vpack.c.b16 %v3192, %v3168
    %v5137 = vpack.c.b16 %v3193, %v3169
    %v5138 = vpack.c.b16 %v3194, %v3170
    %v5139 = vpack.c.b16 %v3195, %v3171
    %v5140 = vpack.c.b16 %v3196, %v3172
    %v5141 = vpack.c.b16 %v3197, %v3173
    %v5142 = vpack.c.b16 %v3198, %v3174
    %v5143 = vpack.c.b16 %v3199, %v3175
    %v5144 = vpack.c.b16 %v3200, %v3176
    %v5145 = vpack.c.b16 %v3225, %v3201
    %v5146 = vpack.c.b16 %v3226, %v3202
    %v5147 = vpack.c.b16 %v3227, %v3203
    %v5148 = vpack.c.b16 %v3228, %v3204
    %v5149 = vpack.c.b16 %v3229, %v3205
    %v5150 = vpack.c.b16 %v3230, %v3206
    %v5151 = vpack.c.b16 %v3231, %v3207
    %v5152 = vpack.c.b16 %v3232, %v3208
    %v5153 = vpack.c.b16 %v3233, %v3209
    %v5154 = vpack.c.b16 %v3234, %v3210
    %v5155 = vpack.c.b16 %v3235, %v3211
    %v5156 = vpack.c.b16 %v3236, %v3212
    %v5157 = vpack.c.b16 %v3237, %v3213
    %v5158 = vpack.c.b16 %v3238, %v3214
    %v5159 = vpack.c.b16 %v3239, %v3215
    %v5160 = vpack.c.b16 %v3240, %v3216
    %v5161 = vpack.c.b16 %v3241, %v3217
    %v5162 = vpack.c.b16 %v3242, %v3218
    %v5163 = vpack.c.b16 %v3243, %v3219
    %v5164 = vpack.c.b16 %v3244, %v3220
    %v5165 = vpack.c.b16 %v3245, %v3221
    %v5166 = vpack.c.b16 %v3246, %v3222
    %v5167 = vpack.c.b16 %v3247, %v3223
    %v5168 = vpack.c.b16 %v3248, %v3224
    %v5169 = vpack.c.b16 %v3273, %v3249
    %v5170 = vpack.c.b16 %v3274, %v3250
    %v5171 = vpack.c.b16 %v3275, %v3251
    %v5172 = vpack.c.b16 %v3276, %v3252
    %v5173 = vpack.c.b16 %v3277, %v3253
    %v5174 = vpack.c.b16 %v3278, %v3254
    %v5175 = vpack.c.b16 %v3279, %v3255
    %v5176 = vpack.c.b16 %v3280, %v3256
    %v5177 = vpack.c.b16 %v3281, %v3257
    %v5178 = vpack.c.b16 %v3282, %v3258
    %v5179 = vpack.c.b16 %v3283, %v3259
    %v5180 = vpack.c.b16 %v3284, %v3260
    %v5181 = vpack.c.b16 %v3285, %v3261
    %v5182 = vpack.c.b16 %v3286, %v3262
    %v5183 = vpack.c.b16 %v3287, %v3263
    %v5184 = vpack.c.b16 %v3288, %v3264
    %v5185 = vpack.c.b16 %v3289, %v3265
    %v5186 = vpack.c.b16 %v3290, %v3266
    %v5187 = vpack.c.b16 %v3291, %v3267
    %v5188 = vpack.c.b16 %v3292, %v3268
    %v5189 = vpack.c.b16 %v3293, %v3269
    %v5190 = vpack.c.b16 %v3294, %v3270
    %v5191 = vpack.c.b16 %v3295, %v3271
    %v5192 = vpack.c.b16 %v3296, %v3272
    %v5193 = vpack.c.b16 %v3321, %v3297
    %v5194 = vpack.c.b16 %v3322, %v3298
    %v5195 = vpack.c.b16 %v3323, %v3299
    %v5196 = vpack.c.b16 %v3324, %v3300
    %v5197 = vpack.c.b16 %v3325, %v3301
    %v5198 = vpack.c.b16 %v3326, %v3302
    %v5199 = vpack.c.b16 %v3327, %v3303
    %v5200 = vpack.c.b16 %v3328, %v3304
    %v5201 = vpack.c.b16 %v3329, %v3305
    %v5202 = vpack.c.b16 %v3330, %v3306
    %v5203 = vpack.c.b16 %v3331, %v3307
    %v5204 = vpack.c.b16 %v3332, %v3308
    %v5205 = vpack.c.b16 %v3333, %v3309
    %v5206 = vpack.c.b16 %v3334, %v3310
    %v5207 = vpack.c.b16 %v3335, %v3311
    %v5208 = vpack.c.b16 %v3336, %v3312
    %v5209 = vpack.c.b16 %v3337, %v3313
    %v5210 = vpack.c.b16 %v3338, %v3314
    %v5211 = vpack.c.b16 %v3339, %v3315
    %v5212 = vpack.c.b16 %v3340, %v3316
    %v5213 = vpack.c.b16 %v3341, %v3317
    %v5214 = vpack.c.b16 %v3342, %v3318
    %v5215 = vpack.c.b16 %v3343, %v3319
    %v5216 = vpack.c.b16 %v3344, %v3320
    %v5217 = vpack.c.b16 %v3369, %v3345
    %v5218 = vpack.c.b16 %v3370, %v3346
    %v5219 = vpack.c.b16 %v3371, %v3347
    %v5220 = vpack.c.b16 %v3372, %v3348
    %v5221 = vpack.c.b16 %v3373, %v3349
    %v5222 = vpack.c.b16 %v3374, %v3350
    %v5223 = vpack.c.b16 %v3375, %v3351
    %v5224 = vpack.c.b16 %v3376, %v3352
    %v5225 = vpack.c.b16 %v3377, %v3353
    %v5226 = vpack.c.b16 %v3378, %v3354
    %v5227 = vpack.c.b16 %v3379, %v3355
    %v5228 = vpack.c.b16 %v3380, %v3356
    %v5229 = vpack.c.b16 %v3381, %v3357
    %v5230 = vpack.c.b16 %v3382, %v3358
    %v5231 = vpack.c.b16 %v3383, %v3359
    %v5232 = vpack.c.b16 %v3384, %v3360
    %v5233 = vpack.c.b16 %v3385, %v3361
    %v5234 = vpack.c.b16 %v3386, %v3362
    %v5235 = vpack.c.b16 %v3387, %v3363
    %v5236 = vpack.c.b16 %v3388, %v3364
    %v5237 = vpack.c.b16 %v3389, %v3365
    %v5238 = vpack.c.b16 %v3390, %v3366
    %v5239 = vpack.c.b16 %v3391, %v3367
    %v5240 = vpack.c.b16 %v3392, %v3368
    %v5241 = vpack.c.b16 %v3417, %v3393
    %v5242 = vpack.c.b16 %v3418, %v3394
    %v5243 = vpack.c.b16 %v3419, %v3395
    %v5244 = vpack.c.b16 %v3420, %v3396
    %v5245 = vpack.c.b16 %v3421, %v3397
    %v5246 = vpack.c.b16 %v3422, %v3398
    %v5247 = vpack.c.b16 %v3423, %v3399
    %v5248 = vpack.c.b16 %v3424, %v3400
    %v5249 = vpack.c.b16 %v3425, %v3401
    %v5250 = vpack.c.b16 %v3426, %v3402
    %v5251 = vpack.c.b16 %v3427, %v3403
    %v5252 = vpack.c.b16 %v3428, %v3404
    %v5253 = vpack.c.b16 %v3429, %v3405
    %v5254 = vpack.c.b16 %v3430, %v3406
    %v5255 = vpack.c.b16 %v3431, %v3407
    %v5256 = vpack.c.b16 %v3432, %v3408
    %v5257 = vpack.c.b16 %v3433, %v3409
    %v5258 = vpack.c.b16 %v3434, %v3410
    %v5259 = vpack.c.b16 %v3435, %v3411
    %v5260 = vpack.c.b16 %v3436, %v3412
    %v5261 = vpack.c.b16 %v3437, %v3413
    %v5262 = vpack.c.b16 %v3438, %v3414
    %v5263 = vpack.c.b16 %v3439, %v3415
    %v5264 = vpack.c.b16 %v3440, %v3416
    %v5265 = vpack.c.b16 %v3465, %v3441
    %v5266 = vpack.c.b16 %v3466, %v3442
    %v5267 = vpack.c.b16 %v3467, %v3443
    %v5268 = vpack.c.b16 %v3468, %v3444
    %v5269 = vpack.c.b16 %v3469, %v3445
    %v5270 = vpack.c.b16 %v3470, %v3446
    %v5271 = vpack.c.b16 %v3471, %v3447
    %v5272 = vpack.c.b16 %v3472, %v3448
    %v5273 = vpack.c.b16 %v3473, %v3449
    %v5274 = vpack.c.b16 %v3474, %v3450
    %v5275 = vpack.c.b16 %v3475, %v3451
    %v5276 = vpack.c.b16 %v3476, %v3452
    %v5277 = vpack.c.b16 %v3477, %v3453
    %v5278 = vpack.c.b16 %v3478, %v3454
    %v5279 = vpack.c.b16 %v3479, %v3455
    %v5280 = vpack.c.b16 %v3480, %v3456
    %v5281 = vpack.c.b16 %v3481, %v3457
    %v5282 = vpack.c.b16 %v3482, %v3458
    %v5283 = vpack.c.b16 %v3483, %v3459
    %v5284 = vpack.c.b16 %v3484, %v3460
    %v5285 = vpack.c.b16 %v3485, %v3461
    %v5286 = vpack.c.b16 %v3486, %v3462
    %v5287 = vpack.c.b16 %v3487, %v3463
    %v5288 = vpack.c.b16 %v3488, %v3464
    %v5289 = vpack.c.b16 %v3513, %v3489
    %v5290 = vpack.c.b16 %v3514, %v3490
    %v5291 = vpack.c.b16 %v3515, %v3491
    %v5292 = vpack.c.b16 %v3516, %v3492
    %v5293 = vpack.c.b16 %v3517, %v3493
    %v5294 = vpack.c.b16 %v3518, %v3494
    %v5295 = vpack.c.b16 %v3519, %v3495
    %v5296 = vpack.c.b16 %v3520, %v3496
    %v5297 = vpack.c.b16 %v3521, %v3497
    %v5298 = vpack.c.b16 %v3522, %v3498
    %v5299 = vpack.c.b16 %v3523, %v3499
    %v5300 = vpack.c.b16 %v3524, %v3500
    %v5301 = vpack.c.b16 %v3525, %v3501
    %v5302 = vpack.c.b16 %v3526, %v3502
    %v5303 = vpack.c.b16 %v3527, %v3503
    %v5304 = vpack.c.b16 %v3528, %v3504
    %v5305 = vpack.c.b16 %v3529, %v3505
    %v5306 = vpack.c.b16 %v3530, %v3506
    %v5307 = vpack.c.b16 %v3531, %v3507
    %v5308 = vpack.c.b16 %v3532, %v3508
    %v5309 = vpack.c.b16 %v3533, %v3509
    %v5310 = vpack.c.b16 %v3534, %v3510
    %v5311 = vpack.c.b16 %v3535, %v3511
    %v5312 = vpack.c.b16 %v3536, %v3512
    %v5313 = vpack.c.b16 %v3561, %v3537
    %v5314 = vpack.c.b16 %v3562, %v3538
    %v5315 = vpack.c.b16 %v3563, %v3539
    %v5316 = vpack.c.b16 %v3564, %v3540
    %v5317 = vpack.c.b16 %v3565, %v3541
    %v5318 = vpack.c.b16 %v3566, %v3542
    %v5319 = vpack.c.b16 %v3567, %v3543
    %v5320 = vpack.c.b16 %v3568, %v3544
    %v5321 = vpack.c.b16 %v3569, %v3545
    %v5322 = vpack.c.b16 %v3570, %v3546
    %v5323 = vpack.c.b16 %v3571, %v3547
    %v5324 = vpack.c.b16 %v3572, %v3548
    %v5325 = vpack.c.b16 %v3573, %v3549
    %v5326 = vpack.c.b16 %v3574, %v3550
    %v5327 = vpack.c.b16 %v3575, %v3551
    %v5328 = vpack.c.b16 %v3576, %v3552
    %v5329 = vpack.c.b16 %v3577, %v3553
    %v5330 = vpack.c.b16 %v3578, %v3554
    %v5331 = vpack.c.b16 %v3579, %v3555
    %v5332 = vpack.c.b16 %v3580, %v3556
    %v5333 = vpack.c.b16 %v3581, %v3557
    %v5334 = vpack.c.b16 %v3582, %v3558
    %v5335 = vpack.c.b16 %v3583, %v3559
    %v5336 = vpack.c.b16 %v3584, %v3560
    %v5337 = vpack.c.b16 %v3609, %v3585
    %v5338 = vpack.c.b16 %v3610, %v3586
    %v5339 = vpack.c.b16 %v3611, %v3587
    %v5340 = vpack.c.b16 %v3612, %v3588
    %v5341 = vpack.c.b16 %v3613, %v3589
    %v5342 = vpack.c.b16 %v3614, %v3590
    %v5343 = vpack.c.b16 %v3615, %v3591
    %v5344 = vpack.c.b16 %v3616, %v3592
    %v5345 = vpack.c.b16 %v3617, %v3593
    %v5346 = vpack.c.b16 %v3618, %v3594
    %v5347 = vpack.c.b16 %v3619, %v3595
    %v5348 = vpack.c.b16 %v3620, %v3596
    %v5349 = vpack.c.b16 %v3621, %v3597
    %v5350 = vpack.c.b16 %v3622, %v3598
    %v5351 = vpack.c.b16 %v3623, %v3599
    %v5352 = vpack.c.b16 %v3624, %v3600
    %v5353 = vpack.c.b16 %v3625, %v3601
    %v5354 = vpack.c.b16 %v3626, %v3602
    %v5355 = vpack.c.b16 %v3627, %v3603
    %v5356 = vpack.c.b16 %v3628, %v3604
    %v5357 = vpack.c.b16 %v3629, %v3605
    %v5358 = vpack.c.b16 %v3630, %v3606
    %v5359 = vpack.c.b16 %v3631, %v3607
    %v5360 = vpack.c.b16 %v3632, %v3608
    %v5361 = vpack.c.b16 %v3657, %v3633
    %v5362 = vpack.c.b16 %v3658, %v3634
    %v5363 = vpack.c.b16 %v3659, %v3635
    %v5364 = vpack.c.b16 %v3660, %v3636
    %v5365 = vpack.c.b16 %v3661, %v3637
    %v5366 = vpack.c.b16 %v3662, %v3638
    %v5367 = vpack.c.b16 %v3663, %v3639
    %v5368 = vpack.c.b16 %v3664, %v3640
    %v5369 = vpack.c.b16 %v3665, %v3641
    %v5370 = vpack.c.b16 %v3666, %v3642
    %v5371 = vpack.c.b16 %v3667, %v3643
    %v5372 = vpack.c.b16 %v3668, %v3644
    %v5373 = vpack.c.b16 %v3669, %v3645
    %v5374 = vpack.c.b16 %v3670, %v3646
    %v5375 = vpack.c.b16 %v3671, %v3647
    %v5376 = vpack.c.b16 %v3672, %v3648
    %v5377 = vpack.c.b16 %v3673, %v3649
    %v5378 = vpack.c.b16 %v3674, %v3650
    %v5379 = vpack.c.b16 %v3675, %v3651
    %v5380 = vpack.c.b16 %v3676, %v3652
    %v5381 = vpack.c.b16 %v3677, %v3653
    %v5382 = vpack.c.b16 %v3678, %v3654
    %v5383 = vpack.c.b16 %v3679, %v3655
    %v5384 = vpack.c.b16 %v3680, %v3656
    %v5385 = vpack.c.b16 %v3705, %v3681
    %v5386 = vpack.c.b16 %v3706, %v3682
    %v5387 = vpack.c.b16 %v3707, %v3683
    %v5388 = vpack.c.b16 %v3708, %v3684
    %v5389 = vpack.c.b16 %v3709, %v3685
    %v5390 = vpack.c.b16 %v3710, %v3686
    %v5391 = vpack.c.b16 %v3711, %v3687
    %v5392 = vpack.c.b16 %v3712, %v3688
    %v5393 = vpack.c.b16 %v3713, %v3689
    %v5394 = vpack.c.b16 %v3714, %v3690
    %v5395 = vpack.c.b16 %v3715, %v3691
    %v5396 = vpack.c.b16 %v3716, %v3692
    %v5397 = vpack.c.b16 %v3717, %v3693
    %v5398 = vpack.c.b16 %v3718, %v3694
    %v5399 = vpack.c.b16 %v3719, %v3695
    %v5400 = vpack.c.b16 %v3720, %v3696
    %v5401 = vpack.c.b16 %v3721, %v3697
    %v5402 = vpack.c.b16 %v3722, %v3698
    %v5403 = vpack.c.b16 %v3723, %v3699
    %v5404 = vpack.c.b16 %v3724, %v3700
    %v5405 = vpack.c.b16 %v3725, %v3701
    %v5406 = vpack.c.b16 %v3726, %v3702
    %v5407 = vpack.c.b16 %v3727, %v3703
    %v5408 = vpack.c.b16 %v3728, %v3704
    %v5409 = vpack.c.b16 %v3753, %v3729
    %v5410 = vpack.c.b16 %v3754, %v3730
    %v5411 = vpack.c.b16 %v3755, %v3731
    %v5412 = vpack.c.b16 %v3756, %v3732
    %v5413 = vpack.c.b16 %v3757, %v3733
    %v5414 = vpack.c.b16 %v3758, %v3734
    %v5415 = vpack.c.b16 %v3759, %v3735
    %v5416 = vpack.c.b16 %v3760, %v3736
    %v5417 = vpack.c.b16 %v3761, %v3737
    %v5418 = vpack.c.b16 %v3762, %v3738
    %v5419 = vpack.c.b16 %v3763, %v3739
    %v5420 = vpack.c.b16 %v3764, %v3740
    %v5421 = vpack.c.b16 %v3765, %v3741
    %v5422 = vpack.c.b16 %v3766, %v3742
    %v5423 = vpack.c.b16 %v3767, %v3743
    %v5424 = vpack.c.b16 %v3768, %v3744
    %v5425 = vpack.c.b16 %v3769, %v3745
    %v5426 = vpack.c.b16 %v3770, %v3746
    %v5427 = vpack.c.b16 %v3771, %v3747
    %v5428 = vpack.c.b16 %v3772, %v3748
    %v5429 = vpack.c.b16 %v3773, %v3749
    %v5430 = vpack.c.b16 %v3774, %v3750
    %v5431 = vpack.c.b16 %v3775, %v3751
    %v5432 = vpack.c.b16 %v3776, %v3752
    %v5433 = vpack.c.b16 %v3801, %v3777
    %v5434 = vpack.c.b16 %v3802, %v3778
    %v5435 = vpack.c.b16 %v3803, %v3779
    %v5436 = vpack.c.b16 %v3804, %v3780
    %v5437 = vpack.c.b16 %v3805, %v3781
    %v5438 = vpack.c.b16 %v3806, %v3782
    %v5439 = vpack.c.b16 %v3807, %v3783
    %v5440 = vpack.c.b16 %v3808, %v3784
    %v5441 = vpack.c.b16 %v3809, %v3785
    %v5442 = vpack.c.b16 %v3810, %v3786
    %v5443 = vpack.c.b16 %v3811, %v3787
    %v5444 = vpack.c.b16 %v3812, %v3788
    %v5445 = vpack.c.b16 %v3813, %v3789
    %v5446 = vpack.c.b16 %v3814, %v3790
    %v5447 = vpack.c.b16 %v3815, %v3791
    %v5448 = vpack.c.b16 %v3816, %v3792
    %v5449 = vpack.c.b16 %v3817, %v3793
    %v5450 = vpack.c.b16 %v3818, %v3794
    %v5451 = vpack.c.b16 %v3819, %v3795
    %v5452 = vpack.c.b16 %v3820, %v3796
    %v5453 = vpack.c.b16 %v3821, %v3797
    %v5454 = vpack.c.b16 %v3822, %v3798
    %v5455 = vpack.c.b16 %v3823, %v3799
    %v5456 = vpack.c.b16 %v3824, %v3800
    %v5457 = vpack.c.b16 %v3849, %v3825
    %v5458 = vpack.c.b16 %v3850, %v3826
    %v5459 = vpack.c.b16 %v3851, %v3827
    %v5460 = vpack.c.b16 %v3852, %v3828
    %v5461 = vpack.c.b16 %v3853, %v3829
    %v5462 = vpack.c.b16 %v3854, %v3830
    %v5463 = vpack.c.b16 %v3855, %v3831
    %v5464 = vpack.c.b16 %v3856, %v3832
    %v5465 = vpack.c.b16 %v3857, %v3833
    %v5466 = vpack.c.b16 %v3858, %v3834
    %v5467 = vpack.c.b16 %v3859, %v3835
    %v5468 = vpack.c.b16 %v3860, %v3836
    %v5469 = vpack.c.b16 %v3861, %v3837
    %v5470 = vpack.c.b16 %v3862, %v3838
    %v5471 = vpack.c.b16 %v3863, %v3839
    %v5472 = vpack.c.b16 %v3864, %v3840
    %v5473 = vpack.c.b16 %v3865, %v3841
    %v5474 = vpack.c.b16 %v3866, %v3842
    %v5475 = vpack.c.b16 %v3867, %v3843
    %v5476 = vpack.c.b16 %v3868, %v3844
    %v5477 = vpack.c.b16 %v3869, %v3845
    %v5478 = vpack.c.b16 %v3870, %v3846
    %v5479 = vpack.c.b16 %v3871, %v3847
    %v5480 = vpack.c.b16 %v3872, %v3848
    %v5481 = vpack.c.b16 %v3897, %v3873
    %v5482 = vpack.c.b16 %v3898, %v3874
    %v5483 = vpack.c.b16 %v3899, %v3875
    %v5484 = vpack.c.b16 %v3900, %v3876
    %v5485 = vpack.c.b16 %v3901, %v3877
    %v5486 = vpack.c.b16 %v3902, %v3878
    %v5487 = vpack.c.b16 %v3903, %v3879
    %v5488 = vpack.c.b16 %v3904, %v3880
    %v5489 = vpack.c.b16 %v3905, %v3881
    %v5490 = vpack.c.b16 %v3906, %v3882
    %v5491 = vpack.c.b16 %v3907, %v3883
    %v5492 = vpack.c.b16 %v3908, %v3884
    %v5493 = vpack.c.b16 %v3909, %v3885
    %v5494 = vpack.c.b16 %v3910, %v3886
    %v5495 = vpack.c.b16 %v3911, %v3887
    %v5496 = vpack.c.b16 %v3912, %v3888
    %v5497 = vpack.c.b16 %v3913, %v3889
    %v5498 = vpack.c.b16 %v3914, %v3890
    %v5499 = vpack.c.b16 %v3915, %v3891
    %v5500 = vpack.c.b16 %v3916, %v3892
    %v5501 = vpack.c.b16 %v3917, %v3893
    %v5502 = vpack.c.b16 %v3918, %v3894
    %v5503 = vpack.c.b16 %v3919, %v3895
    %v5504 = vpack.c.b16 %v3920, %v3896
    %v5505 = vpack.c.b16 %v3945, %v3921
    %v5506 = vpack.c.b16 %v3946, %v3922
    %v5507 = vpack.c.b16 %v3947, %v3923
    %v5508 = vpack.c.b16 %v3948, %v3924
    %v5509 = vpack.c.b16 %v3949, %v3925
    %v5510 = vpack.c.b16 %v3950, %v3926
    %v5511 = vpack.c.b16 %v3951, %v3927
    %v5512 = vpack.c.b16 %v3952, %v3928
    %v5513 = vpack.c.b16 %v3953, %v3929
    %v5514 = vpack.c.b16 %v3954, %v3930
    %v5515 = vpack.c.b16 %v3955, %v3931
    %v5516 = vpack.c.b16 %v3956, %v3932
    %v5517 = vpack.c.b16 %v3957, %v3933
    %v5518 = vpack.c.b16 %v3958, %v3934
    %v5519 = vpack.c.b16 %v3959, %v3935
    %v5520 = vpack.c.b16 %v3960, %v3936
    %v5521 = vpack.c.b16 %v3961, %v3937
    %v5522 = vpack.c.b16 %v3962, %v3938
    %v5523 = vpack.c.b16 %v3963, %v3939
    %v5524 = vpack.c.b16 %v3964, %v3940
    %v5525 = vpack.c.b16 %v3965, %v3941
    %v5526 = vpack.c.b16 %v3966, %v3942
    %v5527 = vpack.c.b16 %v3967, %v3943
    %v5528 = vpack.c.b16 %v3968, %v3944
    %v5529 = vpack.c.b16 %v3993, %v3969
    %v5530 = vpack.c.b16 %v3994, %v3970
    %v5531 = vpack.c.b16 %v3995, %v3971
    %v5532 = vpack.c.b16 %v3996, %v3972
    %v5533 = vpack.c.b16 %v3997, %v3973
    %v5534 = vpack.c.b16 %v3998, %v3974
    %v5535 = vpack.c.b16 %v3999, %v3975
    %v5536 = vpack.c.b16 %v4000, %v3976
    %v5537 = vpack.c.b16 %v4001, %v3977
    %v5538 = vpack.c.b16 %v4002, %v3978
    %v5539 = vpack.c.b16 %v4003, %v3979
    %v5540 = vpack.c.b16 %v4004, %v3980
    %v5541 = vpack.c.b16 %v4005, %v3981
    %v5542 = vpack.c.b16 %v4006, %v3982
    %v5543 = vpack.c.b16 %v4007, %v3983
    %v5544 = vpack.c.b16 %v4008, %v3984
    %v5545 = vpack.c.b16 %v4009, %v3985
    %v5546 = vpack.c.b16 %v4010, %v3986
    %v5547 = vpack.c.b16 %v4011, %v3987
    %v5548 = vpack.c.b16 %v4012, %v3988
    %v5549 = vpack.c.b16 %v4013, %v3989
    %v5550 = vpack.c.b16 %v4014, %v3990
    %v5551 = vpack.c.b16 %v4015, %v3991
    %v5552 = vpack.c.b16 %v4016, %v3992
    %v5553 = vpack.c.b16 %v4041, %v4017
    %v5554 = vpack.c.b16 %v4042, %v4018
    %v5555 = vpack.c.b16 %v4043, %v4019
    %v5556 = vpack.c.b16 %v4044, %v4020
    %v5557 = vpack.c.b16 %v4045, %v4021
    %v5558 = vpack.c.b16 %v4046, %v4022
    %v5559 = vpack.c.b16 %v4047, %v4023
    %v5560 = vpack.c.b16 %v4048, %v4024
    %v5561 = vpack.c.b16 %v4049, %v4025
    %v5562 = vpack.c.b16 %v4050, %v4026
    %v5563 = vpack.c.b16 %v4051, %v4027
    %v5564 = vpack.c.b16 %v4052, %v4028
    %v5565 = vpack.c.b16 %v4053, %v4029
    %v5566 = vpack.c.b16 %v4054, %v4030
    %v5567 = vpack.c.b16 %v4055, %v4031
    %v5568 = vpack.c.b16 %v4056, %v4032
    %v5569 = vpack.c.b16 %v4057, %v4033
    %v5570 = vpack.c.b16 %v4058, %v4034
    %v5571 = vpack.c.b16 %v4059, %v4035
    %v5572 = vpack.c.b16 %v4060, %v4036
    %v5573 = vpack.c.b16 %v4061, %v4037
    %v5574 = vpack.c.b16 %v4062, %v4038
    %v5575 = vpack.c.b16 %v4063, %v4039
    %v5576 = vpack.c.b16 %v4064, %v4040
    %v5577 = vpack.c.b16 %v4089, %v4065
    %v5578 = vpack.c.b16 %v4090, %v4066
    %v5579 = vpack.c.b16 %v4091, %v4067
    %v5580 = vpack.c.b16 %v4092, %v4068
    %v5581 = vpack.c.b16 %v4093, %v4069
    %v5582 = vpack.c.b16 %v4094, %v4070
    %v5583 = vpack.c.b16 %v4095, %v4071
    %v5584 = vpack.c.b16 %v4096, %v4072
    %v5585 = vpack.c.b16 %v4097, %v4073
    %v5586 = vpack.c.b16 %v4098, %v4074
    %v5587 = vpack.c.b16 %v4099, %v4075
    %v5588 = vpack.c.b16 %v4100, %v4076
    %v5589 = vpack.c.b16 %v4101, %v4077
    %v5590 = vpack.c.b16 %v4102, %v4078
    %v5591 = vpack.c.b16 %v4103, %v4079
    %v5592 = vpack.c.b16 %v4104, %v4080
    %v5593 = vpack.c.b16 %v4105, %v4081
    %v5594 = vpack.c.b16 %v4106, %v4082
    %v5595 = vpack.c.b16 %v4107, %v4083
    %v5596 = vpack.c.b16 %v4108, %v4084
    %v5597 = vpack.c.b16 %v4109, %v4085
    %v5598 = vpack.c.b16 %v4110, %v4086
    %v5599 = vpack.c.b16 %v4111, %v4087
    %v5600 = vpack.c.b16 %v4112, %v4088
    %v5601 = vpack.c.b16 %v4137, %v4113
    %v5602 = vpack.c.b16 %v4138, %v4114
    %v5603 = vpack.c.b16 %v4139, %v4115
    %v5604 = vpack.c.b16 %v4140, %v4116
    %v5605 = vpack.c.b16 %v4141, %v4117
    %v5606 = vpack.c.b16 %v4142, %v4118
    %v5607 = vpack.c.b16 %v4143, %v4119
    %v5608 = vpack.c.b16 %v4144, %v4120
    %v5609 = vpack.c.b16 %v4145, %v4121
    %v5610 = vpack.c.b16 %v4146, %v4122
    %v5611 = vpack.c.b16 %v4147, %v4123
    %v5612 = vpack.c.b16 %v4148, %v4124
    %v5613 = vpack.c.b16 %v4149, %v4125
    %v5614 = vpack.c.b16 %v4150, %v4126
    %v5615 = vpack.c.b16 %v4151, %v4127
    %v5616 = vpack.c.b16 %v4152, %v4128
    %v5617 = vpack.c.b16 %v4153, %v4129
    %v5618 = vpack.c.b16 %v4154, %v4130
    %v5619 = vpack.c.b16 %v4155, %v4131
    %v5620 = vpack.c.b16 %v4156, %v4132
    %v5621 = vpack.c.b16 %v4157, %v4133
    %v5622 = vpack.c.b16 %v4158, %v4134
    %v5623 = vpack.c.b16 %v4159, %v4135
    %v5624 = vpack.c.b16 %v4160, %v4136
    %v5625 = vpack.c.b16 %v4185, %v4161
    %v5626 = vpack.c.b16 %v4186, %v4162
    %v5627 = vpack.c.b16 %v4187, %v4163
    %v5628 = vpack.c.b16 %v4188, %v4164
    %v5629 = vpack.c.b16 %v4189, %v4165
    %v5630 = vpack.c.b16 %v4190, %v4166
    %v5631 = vpack.c.b16 %v4191, %v4167
    %v5632 = vpack.c.b16 %v4192, %v4168
    %v5633 = vpack.c.b16 %v4193, %v4169
    %v5634 = vpack.c.b16 %v4194, %v4170
    %v5635 = vpack.c.b16 %v4195, %v4171
    %v5636 = vpack.c.b16 %v4196, %v4172
    %v5637 = vpack.c.b16 %v4197, %v4173
    %v5638 = vpack.c.b16 %v4198, %v4174
    %v5639 = vpack.c.b16 %v4199, %v4175
    %v5640 = vpack.c.b16 %v4200, %v4176
    %v5641 = vpack.c.b16 %v4201, %v4177
    %v5642 = vpack.c.b16 %v4202, %v4178
    %v5643 = vpack.c.b16 %v4203, %v4179
    %v5644 = vpack.c.b16 %v4204, %v4180
    %v5645 = vpack.c.b16 %v4205, %v4181
    %v5646 = vpack.c.b16 %v4206, %v4182
    %v5647 = vpack.c.b16 %v4207, %v4183
    %v5648 = vpack.c.b16 %v4208, %v4184
    %v5649 = vpack.c.b16 %v4233, %v4209
    %v5650 = vpack.c.b16 %v4234, %v4210
    %v5651 = vpack.c.b16 %v4235, %v4211
    %v5652 = vpack.c.b16 %v4236, %v4212
    %v5653 = vpack.c.b16 %v4237, %v4213
    %v5654 = vpack.c.b16 %v4238, %v4214
    %v5655 = vpack.c.b16 %v4239, %v4215
    %v5656 = vpack.c.b16 %v4240, %v4216
    %v5657 = vpack.c.b16 %v4241, %v4217
    %v5658 = vpack.c.b16 %v4242, %v4218
    %v5659 = vpack.c.b16 %v4243, %v4219
    %v5660 = vpack.c.b16 %v4244, %v4220
    %v5661 = vpack.c.b16 %v4245, %v4221
    %v5662 = vpack.c.b16 %v4246, %v4222
    %v5663 = vpack.c.b16 %v4247, %v4223
    %v5664 = vpack.c.b16 %v4248, %v4224
    %v5665 = vpack.c.b16 %v4249, %v4225
    %v5666 = vpack.c.b16 %v4250, %v4226
    %v5667 = vpack.c.b16 %v4251, %v4227
    %v5668 = vpack.c.b16 %v4252, %v4228
    %v5669 = vpack.c.b16 %v4253, %v4229
    %v5670 = vpack.c.b16 %v4254, %v4230
    %v5671 = vpack.c.b16 %v4255, %v4231
    %v5672 = vpack.c.b16 %v4256, %v4232
    %v5673 = vpack.c.b16 %v4281, %v4257
    %v5674 = vpack.c.b16 %v4282, %v4258
    %v5675 = vpack.c.b16 %v4283, %v4259
    %v5676 = vpack.c.b16 %v4284, %v4260
    %v5677 = vpack.c.b16 %v4285, %v4261
    %v5678 = vpack.c.b16 %v4286, %v4262
    %v5679 = vpack.c.b16 %v4287, %v4263
    %v5680 = vpack.c.b16 %v4288, %v4264
    %v5681 = vpack.c.b16 %v4289, %v4265
    %v5682 = vpack.c.b16 %v4290, %v4266
    %v5683 = vpack.c.b16 %v4291, %v4267
    %v5684 = vpack.c.b16 %v4292, %v4268
    %v5685 = vpack.c.b16 %v4293, %v4269
    %v5686 = vpack.c.b16 %v4294, %v4270
    %v5687 = vpack.c.b16 %v4295, %v4271
    %v5688 = vpack.c.b16 %v4296, %v4272
    %v5689 = vpack.c.b16 %v4297, %v4273
    %v5690 = vpack.c.b16 %v4298, %v4274
    %v5691 = vpack.c.b16 %v4299, %v4275
    %v5692 = vpack.c.b16 %v4300, %v4276
    %v5693 = vpack.c.b16 %v4301, %v4277
    %v5694 = vpack.c.b16 %v4302, %v4278
    %v5695 = vpack.c.b16 %v4303, %v4279
    %v5696 = vpack.c.b16 %v4304, %v4280
    %v5697 = vpack.c.b16 %v4329, %v4305
    %v5698 = vpack.c.b16 %v4330, %v4306
    %v5699 = vpack.c.b16 %v4331, %v4307
    %v5700 = vpack.c.b16 %v4332, %v4308
    %v5701 = vpack.c.b16 %v4333, %v4309
    %v5702 = vpack.c.b16 %v4334, %v4310
    %v5703 = vpack.c.b16 %v4335, %v4311
    %v5704 = vpack.c.b16 %v4336, %v4312
    %v5705 = vpack.c.b16 %v4337, %v4313
    %v5706 = vpack.c.b16 %v4338, %v4314
    %v5707 = vpack.c.b16 %v4339, %v4315
    %v5708 = vpack.c.b16 %v4340, %v4316
    %v5709 = vpack.c.b16 %v4341, %v4317
    %v5710 = vpack.c.b16 %v4342, %v4318
    %v5711 = vpack.c.b16 %v4343, %v4319
    %v5712 = vpack.c.b16 %v4344, %v4320
    %v5713 = vpack.c.b16 %v4345, %v4321
    %v5714 = vpack.c.b16 %v4346, %v4322
    %v5715 = vpack.c.b16 %v4347, %v4323
    %v5716 = vpack.c.b16 %v4348, %v4324
    %v5717 = vpack.c.b16 %v4349, %v4325
    %v5718 = vpack.c.b16 %v4350, %v4326
    %v5719 = vpack.c.b16 %v4351, %v4327
    %v5720 = vpack.c.b16 %v4352, %v4328
    %v5721 = vpack.c.b16 %v4377, %v4353
    %v5722 = vpack.c.b16 %v4378, %v4354
    %v5723 = vpack.c.b16 %v4379, %v4355
    %v5724 = vpack.c.b16 %v4380, %v4356
    %v5725 = vpack.c.b16 %v4381, %v4357
    %v5726 = vpack.c.b16 %v4382, %v4358
    %v5727 = vpack.c.b16 %v4383, %v4359
    %v5728 = vpack.c.b16 %v4384, %v4360
    %v5729 = vpack.c.b16 %v4385, %v4361
    %v5730 = vpack.c.b16 %v4386, %v4362
    %v5731 = vpack.c.b16 %v4387, %v4363
    %v5732 = vpack.c.b16 %v4388, %v4364
    %v5733 = vpack.c.b16 %v4389, %v4365
    %v5734 = vpack.c.b16 %v4390, %v4366
    %v5735 = vpack.c.b16 %v4391, %v4367
    %v5736 = vpack.c.b16 %v4392, %v4368
    %v5737 = vpack.c.b16 %v4393, %v4369
    %v5738 = vpack.c.b16 %v4394, %v4370
    %v5739 = vpack.c.b16 %v4395, %v4371
    %v5740 = vpack.c.b16 %v4396, %v4372
    %v5741 = vpack.c.b16 %v4397, %v4373
    %v5742 = vpack.c.b16 %v4398, %v4374
    %v5743 = vpack.c.b16 %v4399, %v4375
    %v5744 = vpack.c.b16 %v4400, %v4376
    %v5745 = vpack.c.b16 %v4425, %v4401
    %v5746 = vpack.c.b16 %v4426, %v4402
    %v5747 = vpack.c.b16 %v4427, %v4403
    %v5748 = vpack.c.b16 %v4428, %v4404
    %v5749 = vpack.c.b16 %v4429, %v4405
    %v5750 = vpack.c.b16 %v4430, %v4406
    %v5751 = vpack.c.b16 %v4431, %v4407
    %v5752 = vpack.c.b16 %v4432, %v4408
    %v5753 = vpack.c.b16 %v4433, %v4409
    %v5754 = vpack.c.b16 %v4434, %v4410
    %v5755 = vpack.c.b16 %v4435, %v4411
    %v5756 = vpack.c.b16 %v4436, %v4412
    %v5757 = vpack.c.b16 %v4437, %v4413
    %v5758 = vpack.c.b16 %v4438, %v4414
    %v5759 = vpack.c.b16 %v4439, %v4415
    %v5760 = vpack.c.b16 %v4440, %v4416
    %v5761 = vpack.c.b16 %v4441, %v4417
    %v5762 = vpack.c.b16 %v4442, %v4418
    %v5763 = vpack.c.b16 %v4443, %v4419
    %v5764 = vpack.c.b16 %v4444, %v4420
    %v5765 = vpack.c.b16 %v4445, %v4421
    %v5766 = vpack.c.b16 %v4446, %v4422
    %v5767 = vpack.c.b16 %v4447, %v4423
    %v5768 = vpack.c.b16 %v4448, %v4424
    %v5769 = vpack.c.b16 %v4473, %v4449
    %v5770 = vpack.c.b16 %v4474, %v4450
    %v5771 = vpack.c.b16 %v4475, %v4451
    %v5772 = vpack.c.b16 %v4476, %v4452
    %v5773 = vpack.c.b16 %v4477, %v4453
    %v5774 = vpack.c.b16 %v4478, %v4454
    %v5775 = vpack.c.b16 %v4479, %v4455
    %v5776 = vpack.c.b16 %v4480, %v4456
    %v5777 = vpack.c.b16 %v4481, %v4457
    %v5778 = vpack.c.b16 %v4482, %v4458
    %v5779 = vpack.c.b16 %v4483, %v4459
    %v5780 = vpack.c.b16 %v4484, %v4460
    %v5781 = vpack.c.b16 %v4485, %v4461
    %v5782 = vpack.c.b16 %v4486, %v4462
    %v5783 = vpack.c.b16 %v4487, %v4463
    %v5784 = vpack.c.b16 %v4488, %v4464
    %v5785 = vpack.c.b16 %v4489, %v4465
    %v5786 = vpack.c.b16 %v4490, %v4466
    %v5787 = vpack.c.b16 %v4491, %v4467
    %v5788 = vpack.c.b16 %v4492, %v4468
    %v5789 = vpack.c.b16 %v4493, %v4469
    %v5790 = vpack.c.b16 %v4494, %v4470
    %v5791 = vpack.c.b16 %v4495, %v4471
    %v5792 = vpack.c.b16 %v4496, %v4472
    %v5793 = vpack.c.b16 %v4521, %v4497
    %v5794 = vpack.c.b16 %v4522, %v4498
    %v5795 = vpack.c.b16 %v4523, %v4499
    %v5796 = vpack.c.b16 %v4524, %v4500
    %v5797 = vpack.c.b16 %v4525, %v4501
    %v5798 = vpack.c.b16 %v4526, %v4502
    %v5799 = vpack.c.b16 %v4527, %v4503
    %v5800 = vpack.c.b16 %v4528, %v4504
    %v5801 = vpack.c.b16 %v4529, %v4505
    %v5802 = vpack.c.b16 %v4530, %v4506
    %v5803 = vpack.c.b16 %v4531, %v4507
    %v5804 = vpack.c.b16 %v4532, %v4508
    %v5805 = vpack.c.b16 %v4533, %v4509
    %v5806 = vpack.c.b16 %v4534, %v4510
    %v5807 = vpack.c.b16 %v4535, %v4511
    %v5808 = vpack.c.b16 %v4536, %v4512
    %v5809 = vpack.c.b16 %v4537, %v4513
    %v5810 = vpack.c.b16 %v4538, %v4514
    %v5811 = vpack.c.b16 %v4539, %v4515
    %v5812 = vpack.c.b16 %v4540, %v4516
    %v5813 = vpack.c.b16 %v4541, %v4517
    %v5814 = vpack.c.b16 %v4542, %v4518
    %v5815 = vpack.c.b16 %v4543, %v4519
    %v5816 = vpack.c.b16 %v4544, %v4520
    %v5817 = vpack.c.b16 %v4569, %v4545
    %v5818 = vpack.c.b16 %v4570, %v4546
    %v5819 = vpack.c.b16 %v4571, %v4547
    %v5820 = vpack.c.b16 %v4572, %v4548
    %v5821 = vpack.c.b16 %v4573, %v4549
    %v5822 = vpack.c.b16 %v4574, %v4550
    %v5823 = vpack.c.b16 %v4575, %v4551
    %v5824 = vpack.c.b16 %v4576, %v4552
    %v5825 = vpack.c.b16 %v4577, %v4553
    %v5826 = vpack.c.b16 %v4578, %v4554
    %v5827 = vpack.c.b16 %v4579, %v4555
    %v5828 = vpack.c.b16 %v4580, %v4556
    %v5829 = vpack.c.b16 %v4581, %v4557
    %v5830 = vpack.c.b16 %v4582, %v4558
    %v5831 = vpack.c.b16 %v4583, %v4559
    %v5832 = vpack.c.b16 %v4584, %v4560
    %v5833 = vpack.c.b16 %v4585, %v4561
    %v5834 = vpack.c.b16 %v4586, %v4562
    %v5835 = vpack.c.b16 %v4587, %v4563
    %v5836 = vpack.c.b16 %v4588, %v4564
    %v5837 = vpack.c.b16 %v4589, %v4565
    %v5838 = vpack.c.b16 %v4590, %v4566
    %v5839 = vpack.c.b16 %v4591, %v4567
    %v5840 = vpack.c.b16 %v4592, %v4568
    %v5841 = vpack.c.b16 %v4617, %v4593
    %v5842 = vpack.c.b16 %v4618, %v4594
    %v5843 = vpack.c.b16 %v4619, %v4595
    %v5844 = vpack.c.b16 %v4620, %v4596
    %v5845 = vpack.c.b16 %v4621, %v4597
    %v5846 = vpack.c.b16 %v4622, %v4598
    %v5847 = vpack.c.b16 %v4623, %v4599
    %v5848 = vpack.c.b16 %v4624, %v4600
    %v5849 = vpack.c.b16 %v4625, %v4601
    %v5850 = vpack.c.b16 %v4626, %v4602
    %v5851 = vpack.c.b16 %v4627, %v4603
    %v5852 = vpack.c.b16 %v4628, %v4604
    %v5853 = vpack.c.b16 %v4629, %v4605
    %v5854 = vpack.c.b16 %v4630, %v4606
    %v5855 = vpack.c.b16 %v4631, %v4607
    %v5856 = vpack.c.b16 %v4632, %v4608
    %v5857 = vpack.c.b16 %v4633, %v4609
    %v5858 = vpack.c.b16 %v4634, %v4610
    %v5859 = vpack.c.b16 %v4635, %v4611
    %v5860 = vpack.c.b16 %v4636, %v4612
    %v5861 = vpack.c.b16 %v4637, %v4613
    %v5862 = vpack.c.b16 %v4638, %v4614
    %v5863 = vpack.c.b16 %v4639, %v4615
    %v5864 = vpack.c.b16 %v4640, %v4616
    %v5865 = vpack.c.b16 %v4665, %v4641
    %v5866 = vpack.c.b16 %v4666, %v4642
    %v5867 = vpack.c.b16 %v4667, %v4643
    %v5868 = vpack.c.b16 %v4668, %v4644
    %v5869 = vpack.c.b16 %v4669, %v4645
    %v5870 = vpack.c.b16 %v4670, %v4646
    %v5871 = vpack.c.b16 %v4671, %v4647
    %v5872 = vpack.c.b16 %v4672, %v4648
    %v5873 = vpack.c.b16 %v4673, %v4649
    %v5874 = vpack.c.b16 %v4674, %v4650
    %v5875 = vpack.c.b16 %v4675, %v4651
    %v5876 = vpack.c.b16 %v4676, %v4652
    %v5877 = vpack.c.b16 %v4677, %v4653
    %v5878 = vpack.c.b16 %v4678, %v4654
    %v5879 = vpack.c.b16 %v4679, %v4655
    %v5880 = vpack.c.b16 %v4680, %v4656
    %v5881 = vpack.c.b16 %v4681, %v4657
    %v5882 = vpack.c.b16 %v4682, %v4658
    %v5883 = vpack.c.b16 %v4683, %v4659
    %v5884 = vpack.c.b16 %v4684, %v4660
    %v5885 = vpack.c.b16 %v4685, %v4661
    %v5886 = vpack.c.b16 %v4686, %v4662
    %v5887 = vpack.c.b16 %v4687, %v4663
    %v5888 = vpack.c.b16 %v4688, %v4664
    %v5889 = vpack.c.b16 %v4713, %v4689
    %v5890 = vpack.c.b16 %v4714, %v4690
    %v5891 = vpack.c.b16 %v4715, %v4691
    %v5892 = vpack.c.b16 %v4716, %v4692
    %v5893 = vpack.c.b16 %v4717, %v4693
    %v5894 = vpack.c.b16 %v4718, %v4694
    %v5895 = vpack.c.b16 %v4719, %v4695
    %v5896 = vpack.c.b16 %v4720, %v4696
    %v5897 = vpack.c.b16 %v4721, %v4697
    %v5898 = vpack.c.b16 %v4722, %v4698
    %v5899 = vpack.c.b16 %v4723, %v4699
    %v5900 = vpack.c.b16 %v4724, %v4700
    %v5901 = vpack.c.b16 %v4725, %v4701
    %v5902 = vpack.c.b16 %v4726, %v4702
    %v5903 = vpack.c.b16 %v4727, %v4703
    %v5904 = vpack.c.b16 %v4728, %v4704
    %v5905 = vpack.c.b16 %v4729, %v4705
    %v5906 = vpack.c.b16 %v4730, %v4706
    %v5907 = vpack.c.b16 %v4731, %v4707
    %v5908 = vpack.c.b16 %v4732, %v4708
    %v5909 = vpack.c.b16 %v4733, %v4709
    %v5910 = vpack.c.b16 %v4734, %v4710
    %v5911 = vpack.c.b16 %v4735, %v4711
    %v5912 = vpack.c.b16 %v4736, %v4712
    %v5913 = vpack.c.b16 %v4761, %v4737
    %v5914 = vpack.c.b16 %v4762, %v4738
    %v5915 = vpack.c.b16 %v4763, %v4739
    %v5916 = vpack.c.b16 %v4764, %v4740
    %v5917 = vpack.c.b16 %v4765, %v4741
    %v5918 = vpack.c.b16 %v4766, %v4742
    %v5919 = vpack.c.b16 %v4767, %v4743
    %v5920 = vpack.c.b16 %v4768, %v4744
    %v5921 = vpack.c.b16 %v4769, %v4745
    %v5922 = vpack.c.b16 %v4770, %v4746
    %v5923 = vpack.c.b16 %v4771, %v4747
    %v5924 = vpack.c.b16 %v4772, %v4748
    %v5925 = vpack.c.b16 %v4773, %v4749
    %v5926 = vpack.c.b16 %v4774, %v4750
    %v5927 = vpack.c.b16 %v4775, %v4751
    %v5928 = vpack.c.b16 %v4776, %v4752
    %v5929 = vpack.c.b16 %v4777, %v4753
    %v5930 = vpack.c.b16 %v4778, %v4754
    %v5931 = vpack.c.b16 %v4779, %v4755
    %v5932 = vpack.c.b16 %v4780, %v4756
    %v5933 = vpack.c.b16 %v4781, %v4757
    %v5934 = vpack.c.b16 %v4782, %v4758
    %v5935 = vpack.c.b16 %v4783, %v4759
    %v5936 = vpack.c.b16 %v4784, %v4760
    %7089 = vmatprep.subr.bf16.mxu0 %v4786
    %7090 = vmatpush1.bf16.msra.mxu0 %v4785
    %7091 = vmatprep.subr.bf16.mxu0 %v4810
    %7092 = vmatpush1.bf16.msra.mxu0 %v4809
    %7093 = vmatprep.subr.bf16.mxu0 %v4834
    %7094 = vmatpush1.bf16.msra.mxu0 %v4833
    %7095 = vmatprep.subr.bf16.mxu0 %v4858
    %7096 = vmatpush1.bf16.msra.mxu0 %v4857
    %7097 = vmatprep.subr.bf16.mxu0 %v4882
    %7098 = vmatpush1.bf16.msra.mxu0 %v4881
    %7099 = vmatprep.subr.bf16.mxu0 %v4906
    %7100 = vmatpush1.bf16.msra.mxu0 %v4905
    %7101 = vmatprep.subr.bf16.mxu0 %v4930
    %7102 = vmatpush1.bf16.msra.mxu0 %v4929
    %7103 = vmatprep.subr.bf16.mxu0 %v4954
    %7104 = vmatpush1.bf16.msra.mxu0 %v4953
    %7105 = vmatprep.subr.bf16.mxu0 %v4978
    %7106 = vmatpush1.bf16.msra.mxu0 %v4977
    %7107 = vmatprep.subr.bf16.mxu0 %v5002
    %7108 = vmatpush1.bf16.msra.mxu0 %v5001
    %7109 = vmatprep.subr.bf16.mxu0 %v5026
    %7110 = vmatpush1.bf16.msra.mxu0 %v5025
    %7111 = vmatprep.subr.bf16.mxu0 %v5050
    %7112 = vmatpush1.bf16.msra.mxu0 %v5049
    %7113 = vmatprep.subr.bf16.mxu0 %v5074
    %7114 = vmatpush1.bf16.msra.mxu0 %v5073
    %7115 = vmatprep.subr.bf16.mxu0 %v5098
    %7116 = vmatpush1.bf16.msra.mxu0 %v5097
    %7117 = vmatprep.subr.bf16.mxu0 %v5122
    %7118 = vmatpush1.bf16.msra.mxu0 %v5121
    %7119 = vmatprep.subr.bf16.mxu0 %v5146
    %7120 = vmatpush1.bf16.msra.mxu0 %v5145
    %7121 = vmatprep.mubr.bf16.mxu0 %v1318
    %7122 = vmatmul.mubr.bf16.gmra.mrb[0].mxu0 %v1317
    %v7123 = vpop.f32.mrb[0].mxu0
    %v7124 = vadd.f32 %v1182, %v7123
    %v7125 = vpop.f32.mrb[0].mxu0
    %v7126 = vadd.f32 %v1186, %v7125
    %v7127 = vpop.f32.mrb[0].mxu0
    %v7128 = vadd.f32 %v1182, %v7127
    %v7129 = vpop.f32.mrb[0].mxu0
    %v7130 = vadd.f32 %v1186, %v7129
    %7131 = vdwg.mxu0
    %7132 = vmatprep.subr.bf16.mxu0 %v5170
    %7133 = vmatpush1.bf16.msra.mxu0 %v5169
    %7134 = vmatprep.subr.bf16.mxu0 %v5194
    %7135 = vmatpush1.bf16.msra.mxu0 %v5193
    %7136 = vmatprep.subr.bf16.mxu0 %v5218
    %7137 = vmatpush1.bf16.msra.mxu0 %v5217
    %7138 = vmatprep.subr.bf16.mxu0 %v5242
    %7139 = vmatpush1.bf16.msra.mxu0 %v5241
    %7140 = vmatprep.subr.bf16.mxu0 %v5266
    %7141 = vmatpush1.bf16.msra.mxu0 %v5265
    %7142 = vmatprep.subr.bf16.mxu0 %v5290
    %7143 = vmatpush1.bf16.msra.mxu0 %v5289
    %7144 = vmatprep.subr.bf16.mxu0 %v5314
    %7145 = vmatpush1.bf16.msra.mxu0 %v5313
    %7146 = vmatprep.subr.bf16.mxu0 %v5338
    %7147 = vmatpush1.bf16.msra.mxu0 %v5337
    %7148 = vmatprep.subr.bf16.mxu0 %v5362
    %7149 = vmatpush1.bf16.msra.mxu0 %v5361
    %7150 = vmatprep.subr.bf16.mxu0 %v5386
    %7151 = vmatpush1.bf16.msra.mxu0 %v5385
    %7152 = vmatprep.subr.bf16.mxu0 %v5410
    %7153 = vmatpush1.bf16.msra.mxu0 %v5409
    %7154 = vmatprep.subr.bf16.mxu0 %v5434
    %7155 = vmatpush1.bf16.msra.mxu0 %v5433
    %7156 = vmatprep.subr.bf16.mxu0 %v5458
    %7157 = vmatpush1.bf16.msra.mxu0 %v5457
    %7158 = vmatprep.subr.bf16.mxu0 %v5482
    %7159 = vmatpush1.bf16.msra.mxu0 %v5481
    %7160 = vmatprep.subr.bf16.mxu0 %v5506
    %7161 = vmatpush1.bf16.msra.mxu0 %v5505
    %7162 = vmatprep.subr.bf16.mxu0 %v5530
    %7163 = vmatpush1.bf16.msra.mxu0 %v5529
    %7164 = vmatprep.mubr.bf16.mxu0 %v1320
    %7165 = vmatmul.mubr.bf16.gmra.mrb[0].mxu0 %v1319
    %v7166 = vpop.f32.mrb[0].mxu0
    %v7167 = vadd.f32 %v7124, %v7166
    %v7168 = vpop.f32.mrb[0].mxu0
    %v7169 = vadd.f32 %v7126, %v7168
    %v7170 = vpop.f32.mrb[0].mxu0
    %v7171 = vadd.f32 %v7128, %v7170
    %v7172 = vpop.f32.mrb[0].mxu0
    %v7173 = vadd.f32 %v7130, %v7172
    %7174 = vdwg.mxu0
    %7175 = vmatprep.subr.bf16.mxu0 %v5554
    %7176 = vmatpush1.bf16.msra.mxu0 %v5553
    %7177 = vmatprep.subr.bf16.mxu0 %v5578
    %7178 = vmatpush1.bf16.msra.mxu0 %v5577
    %7179 = vmatprep.subr.bf16.mxu0 %v5602
    %7180 = vmatpush1.bf16.msra.mxu0 %v5601
    %7181 = vmatprep.subr.bf16.mxu0 %v5626
    %7182 = vmatpush1.bf16.msra.mxu0 %v5625
    %7183 = vmatprep.subr.bf16.mxu0 %v5650
    %7184 = vmatpush1.bf16.msra.mxu0 %v5649
    %7185 = vmatprep.subr.bf16.mxu0 %v5674
    %7186 = vmatpush1.bf16.msra.mxu0 %v5673
    %7187 = vmatprep.subr.bf16.mxu0 %v5698
    %7188 = vmatpush1.bf16.msra.mxu0 %v5697
    %7189 = vmatprep.subr.bf16.mxu0 %v5722
    %7190 = vmatpush1.bf16.msra.mxu0 %v5721
    %7191 = vmatprep.subr.bf16.mxu0 %v5746
    %7192 = vmatpush1.bf16.msra.mxu0 %v5745
    %7193 = vmatprep.subr.bf16.mxu0 %v5770
    %7194 = vmatpush1.bf16.msra.mxu0 %v5769
    %7195 = vmatprep.subr.bf16.mxu0 %v5794
    %7196 = vmatpush1.bf16.msra.mxu0 %v5793
    %7197 = vmatprep.subr.bf16.mxu0 %v5818
    %7198 = vmatpush1.bf16.msra.mxu0 %v5817
    %7199 = vmatprep.subr.bf16.mxu0 %v5842
    %7200 = vmatpush1.bf16.msra.mxu0 %v5841
    %7201 = vmatprep.subr.bf16.mxu0 %v5866
    %7202 = vmatpush1.bf16.msra.mxu0 %v5865
    %7203 = vmatprep.subr.bf16.mxu0 %v5890
    %7204 = vmatpush1.bf16.msra.mxu0 %v5889
    %7205 = vmatprep.subr.bf16.mxu0 %v5914
    %7206 = vmatpush1.bf16.msra.mxu0 %v5913
    %7207 = vmatprep.mubr.bf16.mxu0 %v1322
    %7208 = vmatmul.mubr.bf16.gmra.mrb[0].mxu0 %v1321
    %v7209 = vpop.f32.mrb[0].mxu0
    %v7210 = vadd.f32 %v7167, %v7209
    %v7211 = vpop.f32.mrb[0].mxu0
    %v7212 = vadd.f32 %v7169, %v7211
    %v7213 = vpop.f32.mrb[0].mxu0
    %v7214 = vadd.f32 %v7171, %v7213
    %v7215 = vpop.f32.mrb[0].mxu0
    %v7216 = vadd.f32 %v7173, %v7215
    %7217 = vdwg.mxu0
    %7218 = vmatprep.subr.bf16.mxu0 %v4788
    %7219 = vmatpush1.bf16.msra.mxu0 %v4787
    %7220 = vmatprep.subr.bf16.mxu0 %v4812
    %7221 = vmatpush1.bf16.msra.mxu0 %v4811
    %7222 = vmatprep.subr.bf16.mxu0 %v4836
    %7223 = vmatpush1.bf16.msra.mxu0 %v4835
    %7224 = vmatprep.subr.bf16.mxu0 %v4860
    %7225 = vmatpush1.bf16.msra.mxu0 %v4859
    %7226 = vmatprep.subr.bf16.mxu0 %v4884
    %7227 = vmatpush1.bf16.msra.mxu0 %v4883
    %7228 = vmatprep.subr.bf16.mxu0 %v4908
    %7229 = vmatpush1.bf16.msra.mxu0 %v4907
    %7230 = vmatprep.subr.bf16.mxu0 %v4932
    %7231 = vmatpush1.bf16.msra.mxu0 %v4931
    %7232 = vmatprep.subr.bf16.mxu0 %v4956
    %7233 = vmatpush1.bf16.msra.mxu0 %v4955
    %7234 = vmatprep.subr.bf16.mxu0 %v4980
    %7235 = vmatpush1.bf16.msra.mxu0 %v4979
    %7236 = vmatprep.subr.bf16.mxu0 %v5004
    %7237 = vmatpush1.bf16.msra.mxu0 %v5003
    %7238 = vmatprep.subr.bf16.mxu0 %v5028
    %7239 = vmatpush1.bf16.msra.mxu0 %v5027
    %7240 = vmatprep.subr.bf16.mxu0 %v5052
    %7241 = vmatpush1.bf16.msra.mxu0 %v5051
    %7242 = vmatprep.subr.bf16.mxu0 %v5076
    %7243 = vmatpush1.bf16.msra.mxu0 %v5075
    %7244 = vmatprep.subr.bf16.mxu0 %v5100
    %7245 = vmatpush1.bf16.msra.mxu0 %v5099
    %7246 = vmatprep.subr.bf16.mxu0 %v5124
    %7247 = vmatpush1.bf16.msra.mxu0 %v5123
    %7248 = vmatprep.subr.bf16.mxu0 %v5148
    %7249 = vmatpush1.bf16.msra.mxu0 %v5147
    %7250 = vmatprep.mubr.bf16.mxu0 %v1318
    %7251 = vmatmul.mubr.bf16.gmra.mrb[0].mxu0 %v1317
    %v7252 = vpop.f32.mrb[0].mxu0
    %v7253 = vadd.f32 %v1190, %v7252
    %v7254 = vpop.f32.mrb[0].mxu0
    %v7255 = vadd.f32 %v1194, %v7254
    %v7256 = vpop.f32.mrb[0].mxu0
    %v7257 = vadd.f32 %v1190, %v7256
    %v7258 = vpop.f32.mrb[0].mxu0
    %v7259 = vadd.f32 %v1194, %v7258
    %7260 = vdwg.mxu0
    %7261 = vmatprep.subr.bf16.mxu0 %v5172
    %7262 = vmatpush1.bf16.msra.mxu0 %v5171
    %7263 = vmatprep.subr.bf16.mxu0 %v5196
    %7264 = vmatpush1.bf16.msra.mxu0 %v5195
    %7265 = vmatprep.subr.bf16.mxu0 %v5220
    %7266 = vmatpush1.bf16.msra.mxu0 %v5219
    %7267 = vmatprep.subr.bf16.mxu0 %v5244
    %7268 = vmatpush1.bf16.msra.mxu0 %v5243
    %7269 = vmatprep.subr.bf16.mxu0 %v5268
    %7270 = vmatpush1.bf16.msra.mxu0 %v5267
    %7271 = vmatprep.subr.bf16.mxu0 %v5292
    %7272 = vmatpush1.bf16.msra.mxu0 %v5291
    %7273 = vmatprep.subr.bf16.mxu0 %v5316
    %7274 = vmatpush1.bf16.msra.mxu0 %v5315
    %7275 = vmatprep.subr.bf16.mxu0 %v5340
    %7276 = vmatpush1.bf16.msra.mxu0 %v5339
    %7277 = vmatprep.subr.bf16.mxu0 %v5364
    %7278 = vmatpush1.bf16.msra.mxu0 %v5363
    %7279 = vmatprep.subr.bf16.mxu0 %v5388
    %7280 = vmatpush1.bf16.msra.mxu0 %v5387
    %7281 = vmatprep.subr.bf16.mxu0 %v5412
    %7282 = vmatpush1.bf16.msra.mxu0 %v5411
    %7283 = vmatprep.subr.bf16.mxu0 %v5436
    %7284 = vmatpush1.bf16.msra.mxu0 %v5435
    %7285 = vmatprep.subr.bf16.mxu0 %v5460
    %7286 = vmatpush1.bf16.msra.mxu0 %v5459
    %7287 = vmatprep.subr.bf16.mxu0 %v5484
    %7288 = vmatpush1.bf16.msra.mxu0 %v5483
    %7289 = vmatprep.subr.bf16.mxu0 %v5508
    %7290 = vmatpush1.bf16.msra.mxu0 %v5507
    %7291 = vmatprep.subr.bf16.mxu0 %v5532
    %7292 = vmatpush1.bf16.msra.mxu0 %v5531
    %7293 = vmatprep.mubr.bf16.mxu0 %v1320
    %7294 = vmatmul.mubr.bf16.gmra.mrb[0].mxu0 %v1319
    %v7295 = vpop.f32.mrb[0].mxu0
    %v7296 = vadd.f32 %v7253, %v7295
    %v7297 = vpop.f32.mrb[0].mxu0
    %v7298 = vadd.f32 %v7255, %v7297
    %v7299 = vpop.f32.mrb[0].mxu0
    %v7300 = vadd.f32 %v7257, %v7299
    %v7301 = vpop.f32.mrb[0].mxu0
    %v7302 = vadd.f32 %v7259, %v7301
    %7303 = vdwg.mxu0
    %7304 = vmatprep.subr.bf16.mxu0 %v5556
    %7305 = vmatpush1.bf16.msra.mxu0 %v5555
    %7306 = vmatprep.subr.bf16.mxu0 %v5580
    %7307 = vmatpush1.bf16.msra.mxu0 %v5579
    %7308 = vmatprep.subr.bf16.mxu0 %v5604
    %7309 = vmatpush1.bf16.msra.mxu0 %v5603
    %7310 = vmatprep.subr.bf16.mxu0 %v5628
    %7311 = vmatpush1.bf16.msra.mxu0 %v5627
    %7312 = vmatprep.subr.bf16.mxu0 %v5652
    %7313 = vmatpush1.bf16.msra.mxu0 %v5651
    %7314 = vmatprep.subr.bf16.mxu0 %v5676
    %7315 = vmatpush1.bf16.msra.mxu0 %v5675
    %7316 = vmatprep.subr.bf16.mxu0 %v5700
    %7317 = vmatpush1.bf16.msra.mxu0 %v5699
    %7318 = vmatprep.subr.bf16.mxu0 %v5724
    %7319 = vmatpush1.bf16.msra.mxu0 %v5723
    %7320 = vmatprep.subr.bf16.mxu0 %v5748
    %7321 = vmatpush1.bf16.msra.mxu0 %v5747
    %7322 = vmatprep.subr.bf16.mxu0 %v5772
    %7323 = vmatpush1.bf16.msra.mxu0 %v5771
    %7324 = vmatprep.subr.bf16.mxu0 %v5796
    %7325 = vmatpush1.bf16.msra.mxu0 %v5795
    %7326 = vmatprep.subr.bf16.mxu0 %v5820
    %7327 = vmatpush1.bf16.msra.mxu0 %v5819
    %7328 = vmatprep.subr.bf16.mxu0 %v5844
    %7329 = vmatpush1.bf16.msra.mxu0 %v5843
    %7330 = vmatprep.subr.bf16.mxu0 %v5868
    %7331 = vmatpush1.bf16.msra.mxu0 %v5867
    %7332 = vmatprep.subr.bf16.mxu0 %v5892
    %7333 = vmatpush1.bf16.msra.mxu0 %v5891
    %7334 = vmatprep.subr.bf16.mxu0 %v5916
    %7335 = vmatpush1.bf16.msra.mxu0 %v5915
    %7336 = vmatprep.mubr.bf16.mxu0 %v1322
    %7337 = vmatmul.mubr.bf16.gmra.mrb[0].mxu0 %v1321
    %v7338 = vpop.f32.mrb[0].mxu0
    %v7339 = vadd.f32 %v7296, %v7338
    %v7340 = vpop.f32.mrb[0].mxu0
    %v7341 = vadd.f32 %v7298, %v7340
    %v7342 = vpop.f32.mrb[0].mxu0
    %v7343 = vadd.f32 %v7300, %v7342
    %v7344 = vpop.f32.mrb[0].mxu0
    %v7345 = vadd.f32 %v7302, %v7344
    %7346 = vdwg.mxu0
    %7347 = vmatprep.subr.bf16.mxu0 %v4790
    %7348 = vmatpush1.bf16.msra.mxu0 %v4789
    %7349 = vmatprep.subr.bf16.mxu0 %v4814
    %7350 = vmatpush1.bf16.msra.mxu0 %v4813
    %7351 = vmatprep.subr.bf16.mxu0 %v4838
    %7352 = vmatpush1.bf16.msra.mxu0 %v4837
    %7353 = vmatprep.subr.bf16.mxu0 %v4862
    %7354 = vmatpush1.bf16.msra.mxu0 %v4861
    %7355 = vmatprep.subr.bf16.mxu0 %v4886
    %7356 = vmatpush1.bf16.msra.mxu0 %v4885
    %7357 = vmatprep.subr.bf16.mxu0 %v4910
    %7358 = vmatpush1.bf16.msra.mxu0 %v4909
    %7359 = vmatprep.subr.bf16.mxu0 %v4934
    %7360 = vmatpush1.bf16.msra.mxu0 %v4933
    %7361 = vmatprep.subr.bf16.mxu0 %v4958
    %7362 = vmatpush1.bf16.msra.mxu0 %v4957
    %7363 = vmatprep.subr.bf16.mxu0 %v4982
    %7364 = vmatpush1.bf16.msra.mxu0 %v4981
    %7365 = vmatprep.subr.bf16.mxu0 %v5006
    %7366 = vmatpush1.bf16.msra.mxu0 %v5005
    %7367 = vmatprep.subr.bf16.mxu0 %v5030
    %7368 = vmatpush1.bf16.msra.mxu0 %v5029
    %7369 = vmatprep.subr.bf16.mxu0 %v5054
    %7370 = vmatpush1.bf16.msra.mxu0 %v5053
    %7371 = vmatprep.subr.bf16.mxu0 %v5078
    %7372 = vmatpush1.bf16.msra.mxu0 %v5077
    %7373 = vmatprep.subr.bf16.mxu0 %v5102
    %7374 = vmatpush1.bf16.msra.mxu0 %v5101
    %7375 = vmatprep.subr.bf16.mxu0 %v5126
    %7376 = vmatpush1.bf16.msra.mxu0 %v5125
    %7377 = vmatprep.subr.bf16.mxu0 %v5150
    %7378 = vmatpush1.bf16.msra.mxu0 %v5149
    %7379 = vmatprep.mubr.bf16.mxu0 %v1318
    %7380 = vmatmul.mubr.bf16.gmra.mrb[0].mxu0 %v1317
    %v7381 = vpop.f32.mrb[0].mxu0
    %v7382 = vadd.f32 %v1198, %v7381
    %v7383 = vpop.f32.mrb[0].mxu0
    %v7384 = vadd.f32 %v1202, %v7383
    %v7385 = vpop.f32.mrb[0].mxu0
    %v7386 = vadd.f32 %v1198, %v7385
    %v7387 = vpop.f32.mrb[0].mxu0
    %v7388 = vadd.f32 %v1202, %v7387
    %7389 = vdwg.mxu0
    %7390 = vmatprep.subr.bf16.mxu0 %v5174
    %7391 = vmatpush1.bf16.msra.mxu0 %v5173
    %7392 = vmatprep.subr.bf16.mxu0 %v5198
    %7393 = vmatpush1.bf16.msra.mxu0 %v5197
    %7394 = vmatprep.subr.bf16.mxu0 %v5222
    %7395 = vmatpush1.bf16.msra.mxu0 %v5221
    %7396 = vmatprep.subr.bf16.mxu0 %v5246
    %7397 = vmatpush1.bf16.msra.mxu0 %v5245
    %7398 = vmatprep.subr.bf16.mxu0 %v5270
    %7399 = vmatpush1.bf16.msra.mxu0 %v5269
    %7400 = vmatprep.subr.bf16.mxu0 %v5294
    %7401 = vmatpush1.bf16.msra.mxu0 %v5293
    %7402 = vmatprep.subr.bf16.mxu0 %v5318
    %7403 = vmatpush1.bf16.msra.mxu0 %v5317
    %7404 = vmatprep.subr.bf16.mxu0 %v5342
    %7405 = vmatpush1.bf16.msra.mxu0 %v5341
    %7406 = vmatprep.subr.bf16.mxu0 %v5366
    %7407 = vmatpush1.bf16.msra.mxu0 %v5365
    %7408 = vmatprep.subr.bf16.mxu0 %v5390
    %7409 = vmatpush1.bf16.msra.mxu0 %v5389
    %7410 = vmatprep.subr.bf16.mxu0 %v5414
    %7411 = vmatpush1.bf16.msra.mxu0 %v5413
    %7412 = vmatprep.subr.bf16.mxu0 %v5438
    %7413 = vmatpush1.bf16.msra.mxu0 %v5437
    %7414 = vmatprep.subr.bf16.mxu0 %v5462
    %7415 = vmatpush1.bf16.msra.mxu0 %v5461
    %7416 = vmatprep.subr.bf16.mxu0 %v5486
    %7417 = vmatpush1.bf16.msra.mxu0 %v5485
    %7418 = vmatprep.subr.bf16.mxu0 %v5510
    %7419 = vmatpush1.bf16.msra.mxu0 %v5509
    %7420 = vmatprep.subr.bf16.mxu0 %v5534
    %7421 = vmatpush1.bf16.msra.mxu0 %v5533
    %7422 = vmatprep.mubr.bf16.mxu0 %v1320
    %7423 = vmatmul.mubr.bf16.gmra.mrb[0].mxu0 %v1319
    %v7424 = vpop.f32.mrb[0].mxu0
    %v7425 = vadd.f32 %v7382, %v7424
    %v7426 = vpop.f32.mrb[0].mxu0
    %v7427 = vadd.f32 %v7384, %v7426
    %v7428 = vpop.f32.mrb[0].mxu0
    %v7429 = vadd.f32 %v7386, %v7428
    %v7430 = vpop.f32.mrb[0].mxu0
    %v7431 = vadd.f32 %v7388, %v7430
    %7432 = vdwg.mxu0
    %7433 = vmatprep.subr.bf16.mxu0 %v5558
    %7434 = vmatpush1.bf16.msra.mxu0 %v5557
    %7435 = vmatprep.subr.bf16.mxu0 %v5582
    %7436 = vmatpush1.bf16.msra.mxu0 %v5581
    %7437 = vmatprep.subr.bf16.mxu0 %v5606
    %7438 = vmatpush1.bf16.msra.mxu0 %v5605
    %7439 = vmatprep.subr.bf16.mxu0 %v5630
    %7440 = vmatpush1.bf16.msra.mxu0 %v5629
    %7441 = vmatprep.subr.bf16.mxu0 %v5654
    %7442 = vmatpush1.bf16.msra.mxu0 %v5653
    %7443 = vmatprep.subr.bf16.mxu0 %v5678
    %7444 = vmatpush1.bf16.msra.mxu0 %v5677
    %7445 = vmatprep.subr.bf16.mxu0 %v5702
    %7446 = vmatpush1.bf16.msra.mxu0 %v5701
    %7447 = vmatprep.subr.bf16.mxu0 %v5726
    %7448 = vmatpush1.bf16.msra.mxu0 %v5725
    %7449 = vmatprep.subr.bf16.mxu0 %v5750
    %7450 = vmatpush1.bf16.msra.mxu0 %v5749
    %7451 = vmatprep.subr.bf16.mxu0 %v5774
    %7452 = vmatpush1.bf16.msra.mxu0 %v5773
    %7453 = vmatprep.subr.bf16.mxu0 %v5798
    %7454 = vmatpush1.bf16.msra.mxu0 %v5797
    %7455 = vmatprep.subr.bf16.mxu0 %v5822
    %7456 = vmatpush1.bf16.msra.mxu0 %v5821
    %7457 = vmatprep.subr.bf16.mxu0 %v5846
    %7458 = vmatpush1.bf16.msra.mxu0 %v5845
    %7459 = vmatprep.subr.bf16.mxu0 %v5870
    %7460 = vmatpush1.bf16.msra.mxu0 %v5869
    %7461 = vmatprep.subr.bf16.mxu0 %v5894
    %7462 = vmatpush1.bf16.msra.mxu0 %v5893
    %7463 = vmatprep.subr.bf16.mxu0 %v5918
    %7464 = vmatpush1.bf16.msra.mxu0 %v5917
    %7465 = vmatprep.mubr.bf16.mxu0 %v1322
    %7466 = vmatmul.mubr.bf16.gmra.mrb[0].mxu0 %v1321
    %v7467 = vpop.f32.mrb[0].mxu0
    %v7468 = vadd.f32 %v7425, %v7467
    %v7469 = vpop.f32.mrb[0].mxu0
    %v7470 = vadd.f32 %v7427, %v7469
    %v7471 = vpop.f32.mrb[0].mxu0
    %v7472 = vadd.f32 %v7429, %v7471
    %v7473 = vpop.f32.mrb[0].mxu0
    %v7474 = vadd.f32 %v7431, %v7473
    %7475 = vdwg.mxu0
    %7476 = vmatprep.subr.bf16.mxu0 %v4792
    %7477 = vmatpush1.bf16.msra.mxu0 %v4791
    %7478 = vmatprep.subr.bf16.mxu0 %v4816
    %7479 = vmatpush1.bf16.msra.mxu0 %v4815
    %7480 = vmatprep.subr.bf16.mxu0 %v4840
    %7481 = vmatpush1.bf16.msra.mxu0 %v4839
    %7482 = vmatprep.subr.bf16.mxu0 %v4864
    %7483 = vmatpush1.bf16.msra.mxu0 %v4863
    %7484 = vmatprep.subr.bf16.mxu0 %v4888
    %7485 = vmatpush1.bf16.msra.mxu0 %v4887
    %7486 = vmatprep.subr.bf16.mxu0 %v4912
    %7487 = vmatpush1.bf16.msra.mxu0 %v4911
    %7488 = vmatprep.subr.bf16.mxu0 %v4936
    %7489 = vmatpush1.bf16.msra.mxu0 %v4935
    %7490 = vmatprep.subr.bf16.mxu0 %v4960
    %7491 = vmatpush1.bf16.msra.mxu0 %v4959
    %7492 = vmatprep.subr.bf16.mxu0 %v4984
    %7493 = vmatpush1.bf16.msra.mxu0 %v4983
    %7494 = vmatprep.subr.bf16.mxu0 %v5008
    %7495 = vmatpush1.bf16.msra.mxu0 %v5007
    %7496 = vmatprep.subr.bf16.mxu0 %v5032
    %7497 = vmatpush1.bf16.msra.mxu0 %v5031
    %7498 = vmatprep.subr.bf16.mxu0 %v5056
    %7499 = vmatpush1.bf16.msra.mxu0 %v5055
    %7500 = vmatprep.subr.bf16.mxu0 %v5080
    %7501 = vmatpush1.bf16.msra.mxu0 %v5079
    %7502 = vmatprep.subr.bf16.mxu0 %v5104
    %7503 = vmatpush1.bf16.msra.mxu0 %v5103
    %7504 = vmatprep.subr.bf16.mxu0 %v5128
    %7505 = vmatpush1.bf16.msra.mxu0 %v5127
    %7506 = vmatprep.subr.bf16.mxu0 %v5152
    %7507 = vmatpush1.bf16.msra.mxu0 %v5151
    %7508 = vmatprep.mubr.bf16.mxu0 %v1318
    %7509 = vmatmul.mubr.bf16.gmra.mrb[0].mxu0 %v1317
    %v7510 = vpop.f32.mrb[0].mxu0
    %v7511 = vadd.f32 %v1206, %v7510
    %v7512 = vpop.f32.mrb[0].mxu0
    %v7513 = vadd.f32 %v1210, %v7512
    %v7514 = vpop.f32.mrb[0].mxu0
    %v7515 = vadd.f32 %v1206, %v7514
    %v7516 = vpop.f32.mrb[0].mxu0
    %v7517 = vadd.f32 %v1210, %v7516
    %7518 = vdwg.mxu0
    %7519 = vmatprep.subr.bf16.mxu0 %v5176
    %7520 = vmatpush1.bf16.msra.mxu0 %v5175
    %7521 = vmatprep.subr.bf16.mxu0 %v5200
    %7522 = vmatpush1.bf16.msra.mxu0 %v5199
    %7523 = vmatprep.subr.bf16.mxu0 %v5224
    %7524 = vmatpush1.bf16.msra.mxu0 %v5223
    %7525 = vmatprep.subr.bf16.mxu0 %v5248
    %7526 = vmatpush1.bf16.msra.mxu0 %v5247
    %7527 = vmatprep.subr.bf16.mxu0 %v5272
    %7528 = vmatpush1.bf16.msra.mxu0 %v5271
    %7529 = vmatprep.subr.bf16.mxu0 %v5296
    %7530 = vmatpush1.bf16.msra.mxu0 %v5295
    %7531 = vmatprep.subr.bf16.mxu0 %v5320
    %7532 = vmatpush1.bf16.msra.mxu0 %v5319
    %7533 = vmatprep.subr.bf16.mxu0 %v5344
    %7534 = vmatpush1.bf16.msra.mxu0 %v5343
    %7535 = vmatprep.subr.bf16.mxu0 %v5368
    %7536 = vmatpush1.bf16.msra.mxu0 %v5367
    %7537 = vmatprep.subr.bf16.mxu0 %v5392
    %7538 = vmatpush1.bf16.msra.mxu0 %v5391
    %7539 = vmatprep.subr.bf16.mxu0 %v5416
    %7540 = vmatpush1.bf16.msra.mxu0 %v5415
    %7541 = vmatprep.subr.bf16.mxu0 %v5440
    %7542 = vmatpush1.bf16.msra.mxu0 %v5439
    %7543 = vmatprep.subr.bf16.mxu0 %v5464
    %7544 = vmatpush1.bf16.msra.mxu0 %v5463
    %7545 = vmatprep.subr.bf16.mxu0 %v5488
    %7546 = vmatpush1.bf16.msra.mxu0 %v5487
    %7547 = vmatprep.subr.bf16.mxu0 %v5512
    %7548 = vmatpush1.bf16.msra.mxu0 %v5511
    %7549 = vmatprep.subr.bf16.mxu0 %v5536
    %7550 = vmatpush1.bf16.msra.mxu0 %v5535
    %7551 = vmatprep.mubr.bf16.mxu0 %v1320
    %7552 = vmatmul.mubr.bf16.gmra.mrb[0].mxu0 %v1319
    %v7553 = vpop.f32.mrb[0].mxu0
    %v7554 = vadd.f32 %v7511, %v7553
    %v7555 = vpop.f32.mrb[0].mxu0
    %v7556 = vadd.f32 %v7513, %v7555
    %v7557 = vpop.f32.mrb[0].mxu0
    %v7558 = vadd.f32 %v7515, %v7557
    %v7559 = vpop.f32.mrb[0].mxu0
    %v7560 = vadd.f32 %v7517, %v7559
    %7561 = vdwg.mxu0
    %7562 = vmatprep.subr.bf16.mxu0 %v5560
    %7563 = vmatpush1.bf16.msra.mxu0 %v5559
    %7564 = vmatprep.subr.bf16.mxu0 %v5584
    %7565 = vmatpush1.bf16.msra.mxu0 %v5583
    %7566 = vmatprep.subr.bf16.mxu0 %v5608
    %7567 = vmatpush1.bf16.msra.mxu0 %v5607
    %7568 = vmatprep.subr.bf16.mxu0 %v5632
    %7569 = vmatpush1.bf16.msra.mxu0 %v5631
    %7570 = vmatprep.subr.bf16.mxu0 %v5656
    %7571 = vmatpush1.bf16.msra.mxu0 %v5655
    %7572 = vmatprep.subr.bf16.mxu0 %v5680
    %7573 = vmatpush1.bf16.msra.mxu0 %v5679
    %7574 = vmatprep.subr.bf16.mxu0 %v5704
    %7575 = vmatpush1.bf16.msra.mxu0 %v5703
    %7576 = vmatprep.subr.bf16.mxu0 %v5728
    %7577 = vmatpush1.bf16.msra.mxu0 %v5727
    %7578 = vmatprep.subr.bf16.mxu0 %v5752
    %7579 = vmatpush1.bf16.msra.mxu0 %v5751
    %7580 = vmatprep.subr.bf16.mxu0 %v5776
    %7581 = vmatpush1.bf16.msra.mxu0 %v5775
    %7582 = vmatprep.subr.bf16.mxu0 %v5800
    %7583 = vmatpush1.bf16.msra.mxu0 %v5799
    %7584 = vmatprep.subr.bf16.mxu0 %v5824
    %7585 = vmatpush1.bf16.msra.mxu0 %v5823
    %7586 = vmatprep.subr.bf16.mxu0 %v5848
    %7587 = vmatpush1.bf16.msra.mxu0 %v5847
    %7588 = vmatprep.subr.bf16.mxu0 %v5872
    %7589 = vmatpush1.bf16.msra.mxu0 %v5871
    %7590 = vmatprep.subr.bf16.mxu0 %v5896
    %7591 = vmatpush1.bf16.msra.mxu0 %v5895
    %7592 = vmatprep.subr.bf16.mxu0 %v5920
    %7593 = vmatpush1.bf16.msra.mxu0 %v5919
    %7594 = vmatprep.mubr.bf16.mxu0 %v1322
    %7595 = vmatmul.mubr.bf16.gmra.mrb[0].mxu0 %v1321
    %v7596 = vpop.f32.mrb[0].mxu0
    %v7597 = vadd.f32 %v7554, %v7596
    %v7598 = vpop.f32.mrb[0].mxu0
    %v7599 = vadd.f32 %v7556, %v7598
    %v7600 = vpop.f32.mrb[0].mxu0
    %v7601 = vadd.f32 %v7558, %v7600
    %v7602 = vpop.f32.mrb[0].mxu0
    %v7603 = vadd.f32 %v7560, %v7602
    %7604 = vdwg.mxu0
    %7605 = vmatprep.subr.bf16.mxu0 %v4794
    %7606 = vmatpush1.bf16.msra.mxu0 %v4793
    %7607 = vmatprep.subr.bf16.mxu0 %v4818
    %7608 = vmatpush1.bf16.msra.mxu0 %v4817
    %7609 = vmatprep.subr.bf16.mxu0 %v4842
    %7610 = vmatpush1.bf16.msra.mxu0 %v4841
    %7611 = vmatprep.subr.bf16.mxu0 %v4866
    %7612 = vmatpush1.bf16.msra.mxu0 %v4865
    %7613 = vmatprep.subr.bf16.mxu0 %v4890
    %7614 = vmatpush1.bf16.msra.mxu0 %v4889
    %7615 = vmatprep.subr.bf16.mxu0 %v4914
    %7616 = vmatpush1.bf16.msra.mxu0 %v4913
    %7617 = vmatprep.subr.bf16.mxu0 %v4938
    %7618 = vmatpush1.bf16.msra.mxu0 %v4937
    %7619 = vmatprep.subr.bf16.mxu0 %v4962
    %7620 = vmatpush1.bf16.msra.mxu0 %v4961
    %7621 = vmatprep.subr.bf16.mxu0 %v4986
    %7622 = vmatpush1.bf16.msra.mxu0 %v4985
    %7623 = vmatprep.subr.bf16.mxu0 %v5010
    %7624 = vmatpush1.bf16.msra.mxu0 %v5009
    %7625 = vmatprep.subr.bf16.mxu0 %v5034
    %7626 = vmatpush1.bf16.msra.mxu0 %v5033
    %7627 = vmatprep.subr.bf16.mxu0 %v5058
    %7628 = vmatpush1.bf16.msra.mxu0 %v5057
    %7629 = vmatprep.subr.bf16.mxu0 %v5082
    %7630 = vmatpush1.bf16.msra.mxu0 %v5081
    %7631 = vmatprep.subr.bf16.mxu0 %v5106
    %7632 = vmatpush1.bf16.msra.mxu0 %v5105
    %7633 = vmatprep.subr.bf16.mxu0 %v5130
    %7634 = vmatpush1.bf16.msra.mxu0 %v5129
    %7635 = vmatprep.subr.bf16.mxu0 %v5154
    %7636 = vmatpush1.bf16.msra.mxu0 %v5153
    %7637 = vmatprep.mubr.bf16.mxu0 %v1318
    %7638 = vmatmul.mubr.bf16.gmra.mrb[0].mxu0 %v1317
    %v7639 = vpop.f32.mrb[0].mxu0
    %v7640 = vadd.f32 %v1214, %v7639
    %v7641 = vpop.f32.mrb[0].mxu0
    %v7642 = vadd.f32 %v1218, %v7641
    %v7643 = vpop.f32.mrb[0].mxu0
    %v7644 = vadd.f32 %v1214, %v7643
    %v7645 = vpop.f32.mrb[0].mxu0
    %v7646 = vadd.f32 %v1218, %v7645
    %7647 = vdwg.mxu0
    %7648 = vmatprep.subr.bf16.mxu0 %v5178
    %7649 = vmatpush1.bf16.msra.mxu0 %v5177
    %7650 = vmatprep.subr.bf16.mxu0 %v5202
    %7651 = vmatpush1.bf16.msra.mxu0 %v5201
    %7652 = vmatprep.subr.bf16.mxu0 %v5226
    %7653 = vmatpush1.bf16.msra.mxu0 %v5225
    %7654 = vmatprep.subr.bf16.mxu0 %v5250
    %7655 = vmatpush1.bf16.msra.mxu0 %v5249
    %7656 = vmatprep.subr.bf16.mxu0 %v5274
    %7657 = vmatpush1.bf16.msra.mxu0 %v5273
    %7658 = vmatprep.subr.bf16.mxu0 %v5298
    %7659 = vmatpush1.bf16.msra.mxu0 %v5297
    %7660 = vmatprep.subr.bf16.mxu0 %v5322
    %7661 = vmatpush1.bf16.msra.mxu0 %v5321
    %7662 = vmatprep.subr.bf16.mxu0 %v5346
    %7663 = vmatpush1.bf16.msra.mxu0 %v5345
    %7664 = vmatprep.subr.bf16.mxu0 %v5370
    %7665 = vmatpush1.bf16.msra.mxu0 %v5369
    %7666 = vmatprep.subr.bf16.mxu0 %v5394
    %7667 = vmatpush1.bf16.msra.mxu0 %v5393
    %7668 = vmatprep.subr.bf16.mxu0 %v5418
    %7669 = vmatpush1.bf16.msra.mxu0 %v5417
    %7670 = vmatprep.subr.bf16.mxu0 %v5442
    %7671 = vmatpush1.bf16.msra.mxu0 %v5441
    %7672 = vmatprep.subr.bf16.mxu0 %v5466
    %7673 = vmatpush1.bf16.msra.mxu0 %v5465
    %7674 = vmatprep.subr.bf16.mxu0 %v5490
    %7675 = vmatpush1.bf16.msra.mxu0 %v5489
    %7676 = vmatprep.subr.bf16.mxu0 %v5514
    %7677 = vmatpush1.bf16.msra.mxu0 %v5513
    %7678 = vmatprep.subr.bf16.mxu0 %v5538
    %7679 = vmatpush1.bf16.msra.mxu0 %v5537
    %7680 = vmatprep.mubr.bf16.mxu0 %v1320
    %7681 = vmatmul.mubr.bf16.gmra.mrb[0].mxu0 %v1319
    %v7682 = vpop.f32.mrb[0].mxu0
    %v7683 = vadd.f32 %v7640, %v7682
    %v7684 = vpop.f32.mrb[0].mxu0
    %v7685 = vadd.f32 %v7642, %v7684
    %v7686 = vpop.f32.mrb[0].mxu0
    %v7687 = vadd.f32 %v7644, %v7686
    %v7688 = vpop.f32.mrb[0].mxu0
    %v7689 = vadd.f32 %v7646, %v7688
    %7690 = vdwg.mxu0
    %7691 = vmatprep.subr.bf16.mxu0 %v5562
    %7692 = vmatpush1.bf16.msra.mxu0 %v5561
    %7693 = vmatprep.subr.bf16.mxu0 %v5586
    %7694 = vmatpush1.bf16.msra.mxu0 %v5585
    %7695 = vmatprep.subr.bf16.mxu0 %v5610
    %7696 = vmatpush1.bf16.msra.mxu0 %v5609
    %7697 = vmatprep.subr.bf16.mxu0 %v5634
    %7698 = vmatpush1.bf16.msra.mxu0 %v5633
    %7699 = vmatprep.subr.bf16.mxu0 %v5658
    %7700 = vmatpush1.bf16.msra.mxu0 %v5657
    %7701 = vmatprep.subr.bf16.mxu0 %v5682
    %7702 = vmatpush1.bf16.msra.mxu0 %v5681
    %7703 = vmatprep.subr.bf16.mxu0 %v5706
    %7704 = vmatpush1.bf16.msra.mxu0 %v5705
    %7705 = vmatprep.subr.bf16.mxu0 %v5730
    %7706 = vmatpush1.bf16.msra.mxu0 %v5729
    %7707 = vmatprep.subr.bf16.mxu0 %v5754
    %7708 = vmatpush1.bf16.msra.mxu0 %v5753
    %7709 = vmatprep.subr.bf16.mxu0 %v5778
    %7710 = vmatpush1.bf16.msra.mxu0 %v5777
    %7711 = vmatprep.subr.bf16.mxu0 %v5802
    %7712 = vmatpush1.bf16.msra.mxu0 %v5801
    %7713 = vmatprep.subr.bf16.mxu0 %v5826
    %7714 = vmatpush1.bf16.msra.mxu0 %v5825
    %7715 = vmatprep.subr.bf16.mxu0 %v5850
    %7716 = vmatpush1.bf16.msra.mxu0 %v5849
    %7717 = vmatprep.subr.bf16.mxu0 %v5874
    %7718 = vmatpush1.bf16.msra.mxu0 %v5873
    %7719 = vmatprep.subr.bf16.mxu0 %v5898
    %7720 = vmatpush1.bf16.msra.mxu0 %v5897
    %7721 = vmatprep.subr.bf16.mxu0 %v5922
    %7722 = vmatpush1.bf16.msra.mxu0 %v5921
    %7723 = vmatprep.mubr.bf16.mxu0 %v1322
    %7724 = vmatmul.mubr.bf16.gmra.mrb[0].mxu0 %v1321
    %v7725 = vpop.f32.mrb[0].mxu0
    %v7726 = vadd.f32 %v7683, %v7725
    %v7727 = vpop.f32.mrb[0].mxu0
    %v7728 = vadd.f32 %v7685, %v7727
    %v7729 = vpop.f32.mrb[0].mxu0
    %v7730 = vadd.f32 %v7687, %v7729
    %v7731 = vpop.f32.mrb[0].mxu0
    %v7732 = vadd.f32 %v7689, %v7731
    %7733 = vdwg.mxu0
    %7734 = vmatprep.subr.bf16.mxu0 %v4796
    %7735 = vmatpush1.bf16.msra.mxu0 %v4795
    %7736 = vmatprep.subr.bf16.mxu0 %v4820
    %7737 = vmatpush1.bf16.msra.mxu0 %v4819
    %7738 = vmatprep.subr.bf16.mxu0 %v4844
    %7739 = vmatpush1.bf16.msra.mxu0 %v4843
    %7740 = vmatprep.subr.bf16.mxu0 %v4868
    %7741 = vmatpush1.bf16.msra.mxu0 %v4867
    %7742 = vmatprep.subr.bf16.mxu0 %v4892
    %7743 = vmatpush1.bf16.msra.mxu0 %v4891
    %7744 = vmatprep.subr.bf16.mxu0 %v4916
    %7745 = vmatpush1.bf16.msra.mxu0 %v4915
    %7746 = vmatprep.subr.bf16.mxu0 %v4940
    %7747 = vmatpush1.bf16.msra.mxu0 %v4939
    %7748 = vmatprep.subr.bf16.mxu0 %v4964
    %7749 = vmatpush1.bf16.msra.mxu0 %v4963
    %7750 = vmatprep.subr.bf16.mxu0 %v4988
    %7751 = vmatpush1.bf16.msra.mxu0 %v4987
    %7752 = vmatprep.subr.bf16.mxu0 %v5012
    %7753 = vmatpush1.bf16.msra.mxu0 %v5011
    %7754 = vmatprep.subr.bf16.mxu0 %v5036
    %7755 = vmatpush1.bf16.msra.mxu0 %v5035
    %7756 = vmatprep.subr.bf16.mxu0 %v5060
    %7757 = vmatpush1.bf16.msra.mxu0 %v5059
    %7758 = vmatprep.subr.bf16.mxu0 %v5084
    %7759 = vmatpush1.bf16.msra.mxu0 %v5083
    %7760 = vmatprep.subr.bf16.mxu0 %v5108
    %7761 = vmatpush1.bf16.msra.mxu0 %v5107
    %7762 = vmatprep.subr.bf16.mxu0 %v5132
    %7763 = vmatpush1.bf16.msra.mxu0 %v5131
    %7764 = vmatprep.subr.bf16.mxu0 %v5156
    %7765 = vmatpush1.bf16.msra.mxu0 %v5155
    %7766 = vmatprep.mubr.bf16.mxu0 %v1318
    %7767 = vmatmul.mubr.bf16.gmra.mrb[0].mxu0 %v1317
    %v7768 = vpop.f32.mrb[0].mxu0
    %v7769 = vadd.f32 %v1222, %v7768
    %v7770 = vpop.f32.mrb[0].mxu0
    %v7771 = vadd.f32 %v1226, %v7770
    %v7772 = vpop.f32.mrb[0].mxu0
    %v7773 = vadd.f32 %v1222, %v7772
    %v7774 = vpop.f32.mrb[0].mxu0
    %v7775 = vadd.f32 %v1226, %v7774
    %7776 = vdwg.mxu0
    %7777 = vmatprep.subr.bf16.mxu0 %v5180
    %7778 = vmatpush1.bf16.msra.mxu0 %v5179
    %7779 = vmatprep.subr.bf16.mxu0 %v5204
    %7780 = vmatpush1.bf16.msra.mxu0 %v5203
    %7781 = vmatprep.subr.bf16.mxu0 %v5228
    %7782 = vmatpush1.bf16.msra.mxu0 %v5227
    %7783 = vmatprep.subr.bf16.mxu0 %v5252
    %7784 = vmatpush1.bf16.msra.mxu0 %v5251
    %7785 = vmatprep.subr.bf16.mxu0 %v5276
    %7786 = vmatpush1.bf16.msra.mxu0 %v5275
    %7787 = vmatprep.subr.bf16.mxu0 %v5300
    %7788 = vmatpush1.bf16.msra.mxu0 %v5299
    %7789 = vmatprep.subr.bf16.mxu0 %v5324
    %7790 = vmatpush1.bf16.msra.mxu0 %v5323
    %7791 = vmatprep.subr.bf16.mxu0 %v5348
    %7792 = vmatpush1.bf16.msra.mxu0 %v5347
    %7793 = vmatprep.subr.bf16.mxu0 %v5372
    %7794 = vmatpush1.bf16.msra.mxu0 %v5371
    %7795 = vmatprep.subr.bf16.mxu0 %v5396
    %7796 = vmatpush1.bf16.msra.mxu0 %v5395
    %7797 = vmatprep.subr.bf16.mxu0 %v5420
    %7798 = vmatpush1.bf16.msra.mxu0 %v5419
    %7799 = vmatprep.subr.bf16.mxu0 %v5444
    %7800 = vmatpush1.bf16.msra.mxu0 %v5443
    %7801 = vmatprep.subr.bf16.mxu0 %v5468
    %7802 = vmatpush1.bf16.msra.mxu0 %v5467
    %7803 = vmatprep.subr.bf16.mxu0 %v5492
    %7804 = vmatpush1.bf16.msra.mxu0 %v5491
    %7805 = vmatprep.subr.bf16.mxu0 %v5516
    %7806 = vmatpush1.bf16.msra.mxu0 %v5515
    %7807 = vmatprep.subr.bf16.mxu0 %v5540
    %7808 = vmatpush1.bf16.msra.mxu0 %v5539
    %7809 = vmatprep.mubr.bf16.mxu0 %v1320
    %7810 = vmatmul.mubr.bf16.gmra.mrb[0].mxu0 %v1319
    %v7811 = vpop.f32.mrb[0].mxu0
    %v7812 = vadd.f32 %v7769, %v7811
    %v7813 = vpop.f32.mrb[0].mxu0
    %v7814 = vadd.f32 %v7771, %v7813
    %v7815 = vpop.f32.mrb[0].mxu0
    %v7816 = vadd.f32 %v7773, %v7815
    %v7817 = vpop.f32.mrb[0].mxu0
    %v7818 = vadd.f32 %v7775, %v7817
    %7819 = vdwg.mxu0
    %7820 = vmatprep.subr.bf16.mxu0 %v5564
    %7821 = vmatpush1.bf16.msra.mxu0 %v5563
    %7822 = vmatprep.subr.bf16.mxu0 %v5588
    %7823 = vmatpush1.bf16.msra.mxu0 %v5587
    %7824 = vmatprep.subr.bf16.mxu0 %v5612
    %7825 = vmatpush1.bf16.msra.mxu0 %v5611
    %7826 = vmatprep.subr.bf16.mxu0 %v5636
    %7827 = vmatpush1.bf16.msra.mxu0 %v5635
    %7828 = vmatprep.subr.bf16.mxu0 %v5660
    %7829 = vmatpush1.bf16.msra.mxu0 %v5659
    %7830 = vmatprep.subr.bf16.mxu0 %v5684
    %7831 = vmatpush1.bf16.msra.mxu0 %v5683
    %7832 = vmatprep.subr.bf16.mxu0 %v5708
    %7833 = vmatpush1.bf16.msra.mxu0 %v5707
    %7834 = vmatprep.subr.bf16.mxu0 %v5732
    %7835 = vmatpush1.bf16.msra.mxu0 %v5731
    %7836 = vmatprep.subr.bf16.mxu0 %v5756
    %7837 = vmatpush1.bf16.msra.mxu0 %v5755
    %7838 = vmatprep.subr.bf16.mxu0 %v5780
    %7839 = vmatpush1.bf16.msra.mxu0 %v5779
    %7840 = vmatprep.subr.bf16.mxu0 %v5804
    %7841 = vmatpush1.bf16.msra.mxu0 %v5803
    %7842 = vmatprep.subr.bf16.mxu0 %v5828
    %7843 = vmatpush1.bf16.msra.mxu0 %v5827
    %7844 = vmatprep.subr.bf16.mxu0 %v5852
    %7845 = vmatpush1.bf16.msra.mxu0 %v5851
    %7846 = vmatprep.subr.bf16.mxu0 %v5876
    %7847 = vmatpush1.bf16.msra.mxu0 %v5875
    %7848 = vmatprep.subr.bf16.mxu0 %v5900
    %7849 = vmatpush1.bf16.msra.mxu0 %v5899
    %7850 = vmatprep.subr.bf16.mxu0 %v5924
    %7851 = vmatpush1.bf16.msra.mxu0 %v5923
    %7852 = vmatprep.mubr.bf16.mxu0 %v1322
    %7853 = vmatmul.mubr.bf16.gmra.mrb[0].mxu0 %v1321
    %v7854 = vpop.f32.mrb[0].mxu0
    %v7855 = vadd.f32 %v7812, %v7854
    %v7856 = vpop.f32.mrb[0].mxu0
    %v7857 = vadd.f32 %v7814, %v7856
    %v7858 = vpop.f32.mrb[0].mxu0
    %v7859 = vadd.f32 %v7816, %v7858
    %v7860 = vpop.f32.mrb[0].mxu0
    %v7861 = vadd.f32 %v7818, %v7860
    %7862 = vdwg.mxu0
    %7863 = vmatprep.subr.bf16.mxu0 %v4798
    %7864 = vmatpush1.bf16.msra.mxu0 %v4797
    %7865 = vmatprep.subr.bf16.mxu0 %v4822
    %7866 = vmatpush1.bf16.msra.mxu0 %v4821
    %7867 = vmatprep.subr.bf16.mxu0 %v4846
    %7868 = vmatpush1.bf16.msra.mxu0 %v4845
    %7869 = vmatprep.subr.bf16.mxu0 %v4870
    %7870 = vmatpush1.bf16.msra.mxu0 %v4869
    %7871 = vmatprep.subr.bf16.mxu0 %v4894
    %7872 = vmatpush1.bf16.msra.mxu0 %v4893
    %7873 = vmatprep.subr.bf16.mxu0 %v4918
    %7874 = vmatpush1.bf16.msra.mxu0 %v4917
    %7875 = vmatprep.subr.bf16.mxu0 %v4942
    %7876 = vmatpush1.bf16.msra.mxu0 %v4941
    %7877 = vmatprep.subr.bf16.mxu0 %v4966
    %7878 = vmatpush1.bf16.msra.mxu0 %v4965
    %7879 = vmatprep.subr.bf16.mxu0 %v4990
    %7880 = vmatpush1.bf16.msra.mxu0 %v4989
    %7881 = vmatprep.subr.bf16.mxu0 %v5014
    %7882 = vmatpush1.bf16.msra.mxu0 %v5013
    %7883 = vmatprep.subr.bf16.mxu0 %v5038
    %7884 = vmatpush1.bf16.msra.mxu0 %v5037
    %7885 = vmatprep.subr.bf16.mxu0 %v5062
    %7886 = vmatpush1.bf16.msra.mxu0 %v5061
    %7887 = vmatprep.subr.bf16.mxu0 %v5086
    %7888 = vmatpush1.bf16.msra.mxu0 %v5085
    %7889 = vmatprep.subr.bf16.mxu0 %v5110
    %7890 = vmatpush1.bf16.msra.mxu0 %v5109
    %7891 = vmatprep.subr.bf16.mxu0 %v5134
    %7892 = vmatpush1.bf16.msra.mxu0 %v5133
    %7893 = vmatprep.subr.bf16.mxu0 %v5158
    %7894 = vmatpush1.bf16.msra.mxu0 %v5157
    %7895 = vmatprep.mubr.bf16.mxu0 %v1318
    %7896 = vmatmul.mubr.bf16.gmra.mrb[0].mxu0 %v1317
    %v7897 = vpop.f32.mrb[0].mxu0
    %v7898 = vadd.f32 %v1230, %v7897
    %v7899 = vpop.f32.mrb[0].mxu0
    %v7900 = vadd.f32 %v1234, %v7899
    %v7901 = vpop.f32.mrb[0].mxu0
    %v7902 = vadd.f32 %v1230, %v7901
    %v7903 = vpop.f32.mrb[0].mxu0
    %v7904 = vadd.f32 %v1234, %v7903
    %7905 = vdwg.mxu0
    %7906 = vmatprep.subr.bf16.mxu0 %v5182
    %7907 = vmatpush1.bf16.msra.mxu0 %v5181
    %7908 = vmatprep.subr.bf16.mxu0 %v5206
    %7909 = vmatpush1.bf16.msra.mxu0 %v5205
    %7910 = vmatprep.subr.bf16.mxu0 %v5230
    %7911 = vmatpush1.bf16.msra.mxu0 %v5229
    %7912 = vmatprep.subr.bf16.mxu0 %v5254
    %7913 = vmatpush1.bf16.msra.mxu0 %v5253
    %7914 = vmatprep.subr.bf16.mxu0 %v5278
    %7915 = vmatpush1.bf16.msra.mxu0 %v5277
    %7916 = vmatprep.subr.bf16.mxu0 %v5302
    %7917 = vmatpush1.bf16.msra.mxu0 %v5301
    %7918 = vmatprep.subr.bf16.mxu0 %v5326
    %7919 = vmatpush1.bf16.msra.mxu0 %v5325
    %7920 = vmatprep.subr.bf16.mxu0 %v5350
    %7921 = vmatpush1.bf16.msra.mxu0 %v5349
    %7922 = vmatprep.subr.bf16.mxu0 %v5374
    %7923 = vmatpush1.bf16.msra.mxu0 %v5373
    %7924 = vmatprep.subr.bf16.mxu0 %v5398
    %7925 = vmatpush1.bf16.msra.mxu0 %v5397
    %7926 = vmatprep.subr.bf16.mxu0 %v5422
    %7927 = vmatpush1.bf16.msra.mxu0 %v5421
    %7928 = vmatprep.subr.bf16.mxu0 %v5446
    %7929 = vmatpush1.bf16.msra.mxu0 %v5445
    %7930 = vmatprep.subr.bf16.mxu0 %v5470
    %7931 = vmatpush1.bf16.msra.mxu0 %v5469
    %7932 = vmatprep.subr.bf16.mxu0 %v5494
    %7933 = vmatpush1.bf16.msra.mxu0 %v5493
    %7934 = vmatprep.subr.bf16.mxu0 %v5518
    %7935 = vmatpush1.bf16.msra.mxu0 %v5517
    %7936 = vmatprep.subr.bf16.mxu0 %v5542
    %7937 = vmatpush1.bf16.msra.mxu0 %v5541
    %7938 = vmatprep.mubr.bf16.mxu0 %v1320
    %7939 = vmatmul.mubr.bf16.gmra.mrb[0].mxu0 %v1319
    %v7940 = vpop.f32.mrb[0].mxu0
    %v7941 = vadd.f32 %v7898, %v7940
    %v7942 = vpop.f32.mrb[0].mxu0
    %v7943 = vadd.f32 %v7900, %v7942
    %v7944 = vpop.f32.mrb[0].mxu0
    %v7945 = vadd.f32 %v7902, %v7944
    %v7946 = vpop.f32.mrb[0].mxu0
    %v7947 = vadd.f32 %v7904, %v7946
    %7948 = vdwg.mxu0
    %7949 = vmatprep.subr.bf16.mxu0 %v5566
    %7950 = vmatpush1.bf16.msra.mxu0 %v5565
    %7951 = vmatprep.subr.bf16.mxu0 %v5590
    %7952 = vmatpush1.bf16.msra.mxu0 %v5589
    %7953 = vmatprep.subr.bf16.mxu0 %v5614
    %7954 = vmatpush1.bf16.msra.mxu0 %v5613
    %7955 = vmatprep.subr.bf16.mxu0 %v5638
    %7956 = vmatpush1.bf16.msra.mxu0 %v5637
    %7957 = vmatprep.subr.bf16.mxu0 %v5662
    %7958 = vmatpush1.bf16.msra.mxu0 %v5661
    %7959 = vmatprep.subr.bf16.mxu0 %v5686
    %7960 = vmatpush1.bf16.msra.mxu0 %v5685
    %7961 = vmatprep.subr.bf16.mxu0 %v5710
    %7962 = vmatpush1.bf16.msra.mxu0 %v5709
    %7963 = vmatprep.subr.bf16.mxu0 %v5734
    %7964 = vmatpush1.bf16.msra.mxu0 %v5733
    %7965 = vmatprep.subr.bf16.mxu0 %v5758
    %7966 = vmatpush1.bf16.msra.mxu0 %v5757
    %7967 = vmatprep.subr.bf16.mxu0 %v5782
    %7968 = vmatpush1.bf16.msra.mxu0 %v5781
    %7969 = vmatprep.subr.bf16.mxu0 %v5806
    %7970 = vmatpush1.bf16.msra.mxu0 %v5805
    %7971 = vmatprep.subr.bf16.mxu0 %v5830
    %7972 = vmatpush1.bf16.msra.mxu0 %v5829
    %7973 = vmatprep.subr.bf16.mxu0 %v5854
    %7974 = vmatpush1.bf16.msra.mxu0 %v5853
    %7975 = vmatprep.subr.bf16.mxu0 %v5878
    %7976 = vmatpush1.bf16.msra.mxu0 %v5877
    %7977 = vmatprep.subr.bf16.mxu0 %v5902
    %7978 = vmatpush1.bf16.msra.mxu0 %v5901
    %7979 = vmatprep.subr.bf16.mxu0 %v5926
    %7980 = vmatpush1.bf16.msra.mxu0 %v5925
    %7981 = vmatprep.mubr.bf16.mxu0 %v1322
    %7982 = vmatmul.mubr.bf16.gmra.mrb[0].mxu0 %v1321
    %v7983 = vpop.f32.mrb[0].mxu0
    %v7984 = vadd.f32 %v7941, %v7983
    %v7985 = vpop.f32.mrb[0].mxu0
    %v7986 = vadd.f32 %v7943, %v7985
    %v7987 = vpop.f32.mrb[0].mxu0
    %v7988 = vadd.f32 %v7945, %v7987
    %v7989 = vpop.f32.mrb[0].mxu0
    %v7990 = vadd.f32 %v7947, %v7989
    %7991 = vdwg.mxu0
    %7992 = vmatprep.subr.bf16.mxu0 %v4800
    %7993 = vmatpush1.bf16.msra.mxu0 %v4799
    %7994 = vmatprep.subr.bf16.mxu0 %v4824
    %7995 = vmatpush1.bf16.msra.mxu0 %v4823
    %7996 = vmatprep.subr.bf16.mxu0 %v4848
    %7997 = vmatpush1.bf16.msra.mxu0 %v4847
    %7998 = vmatprep.subr.bf16.mxu0 %v4872
    %7999 = vmatpush1.bf16.msra.mxu0 %v4871
    %8000 = vmatprep.subr.bf16.mxu0 %v4896
    %8001 = vmatpush1.bf16.msra.mxu0 %v4895
    %8002 = vmatprep.subr.bf16.mxu0 %v4920
    %8003 = vmatpush1.bf16.msra.mxu0 %v4919
    %8004 = vmatprep.subr.bf16.mxu0 %v4944
    %8005 = vmatpush1.bf16.msra.mxu0 %v4943
    %8006 = vmatprep.subr.bf16.mxu0 %v4968
    %8007 = vmatpush1.bf16.msra.mxu0 %v4967
    %8008 = vmatprep.subr.bf16.mxu0 %v4992
    %8009 = vmatpush1.bf16.msra.mxu0 %v4991
    %8010 = vmatprep.subr.bf16.mxu0 %v5016
    %8011 = vmatpush1.bf16.msra.mxu0 %v5015
    %8012 = vmatprep.subr.bf16.mxu0 %v5040
    %8013 = vmatpush1.bf16.msra.mxu0 %v5039
    %8014 = vmatprep.subr.bf16.mxu0 %v5064
    %8015 = vmatpush1.bf16.msra.mxu0 %v5063
    %8016 = vmatprep.subr.bf16.mxu0 %v5088
    %8017 = vmatpush1.bf16.msra.mxu0 %v5087
    %8018 = vmatprep.subr.bf16.mxu0 %v5112
    %8019 = vmatpush1.bf16.msra.mxu0 %v5111
    %8020 = vmatprep.subr.bf16.mxu0 %v5136
    %8021 = vmatpush1.bf16.msra.mxu0 %v5135
    %8022 = vmatprep.subr.bf16.mxu0 %v5160
    %8023 = vmatpush1.bf16.msra.mxu0 %v5159
    %8024 = vmatprep.mubr.bf16.mxu0 %v1318
    %8025 = vmatmul.mubr.bf16.gmra.mrb[0].mxu0 %v1317
    %v8026 = vpop.f32.mrb[0].mxu0
    %v8027 = vadd.f32 %v1238, %v8026
    %v8028 = vpop.f32.mrb[0].mxu0
    %v8029 = vadd.f32 %v1242, %v8028
    %v8030 = vpop.f32.mrb[0].mxu0
    %v8031 = vadd.f32 %v1238, %v8030
    %v8032 = vpop.f32.mrb[0].mxu0
    %v8033 = vadd.f32 %v1242, %v8032
    %8034 = vdwg.mxu0
    %8035 = vmatprep.subr.bf16.mxu0 %v5184
    %8036 = vmatpush1.bf16.msra.mxu0 %v5183
    %8037 = vmatprep.subr.bf16.mxu0 %v5208
    %8038 = vmatpush1.bf16.msra.mxu0 %v5207
    %8039 = vmatprep.subr.bf16.mxu0 %v5232
    %8040 = vmatpush1.bf16.msra.mxu0 %v5231
    %8041 = vmatprep.subr.bf16.mxu0 %v5256
    %8042 = vmatpush1.bf16.msra.mxu0 %v5255
    %8043 = vmatprep.subr.bf16.mxu0 %v5280
    %8044 = vmatpush1.bf16.msra.mxu0 %v5279
    %8045 = vmatprep.subr.bf16.mxu0 %v5304
    %8046 = vmatpush1.bf16.msra.mxu0 %v5303
    %8047 = vmatprep.subr.bf16.mxu0 %v5328
    %8048 = vmatpush1.bf16.msra.mxu0 %v5327
    %8049 = vmatprep.subr.bf16.mxu0 %v5352
    %8050 = vmatpush1.bf16.msra.mxu0 %v5351
    %8051 = vmatprep.subr.bf16.mxu0 %v5376
    %8052 = vmatpush1.bf16.msra.mxu0 %v5375
    %8053 = vmatprep.subr.bf16.mxu0 %v5400
    %8054 = vmatpush1.bf16.msra.mxu0 %v5399
    %8055 = vmatprep.subr.bf16.mxu0 %v5424
    %8056 = vmatpush1.bf16.msra.mxu0 %v5423
    %8057 = vmatprep.subr.bf16.mxu0 %v5448
    %8058 = vmatpush1.bf16.msra.mxu0 %v5447
    %8059 = vmatprep.subr.bf16.mxu0 %v5472
    %8060 = vmatpush1.bf16.msra.mxu0 %v5471
    %8061 = vmatprep.subr.bf16.mxu0 %v5496
    %8062 = vmatpush1.bf16.msra.mxu0 %v5495
    %8063 = vmatprep.subr.bf16.mxu0 %v5520
    %8064 = vmatpush1.bf16.msra.mxu0 %v5519
    %8065 = vmatprep.subr.bf16.mxu0 %v5544
    %8066 = vmatpush1.bf16.msra.mxu0 %v5543
    %8067 = vmatprep.mubr.bf16.mxu0 %v1320
    %8068 = vmatmul.mubr.bf16.gmra.mrb[0].mxu0 %v1319
    %v8069 = vpop.f32.mrb[0].mxu0
    %v8070 = vadd.f32 %v8027, %v8069
    %v8071 = vpop.f32.mrb[0].mxu0
    %v8072 = vadd.f32 %v8029, %v8071
    %v8073 = vpop.f32.mrb[0].mxu0
    %v8074 = vadd.f32 %v8031, %v8073
    %v8075 = vpop.f32.mrb[0].mxu0
    %v8076 = vadd.f32 %v8033, %v8075
    %8077 = vdwg.mxu0
    %8078 = vmatprep.subr.bf16.mxu0 %v5568
    %8079 = vmatpush1.bf16.msra.mxu0 %v5567
    %8080 = vmatprep.subr.bf16.mxu0 %v5592
    %8081 = vmatpush1.bf16.msra.mxu0 %v5591
    %8082 = vmatprep.subr.bf16.mxu0 %v5616
    %8083 = vmatpush1.bf16.msra.mxu0 %v5615
    %8084 = vmatprep.subr.bf16.mxu0 %v5640
    %8085 = vmatpush1.bf16.msra.mxu0 %v5639
    %8086 = vmatprep.subr.bf16.mxu0 %v5664
    %8087 = vmatpush1.bf16.msra.mxu0 %v5663
    %8088 = vmatprep.subr.bf16.mxu0 %v5688
    %8089 = vmatpush1.bf16.msra.mxu0 %v5687
    %8090 = vmatprep.subr.bf16.mxu0 %v5712
    %8091 = vmatpush1.bf16.msra.mxu0 %v5711
    %8092 = vmatprep.subr.bf16.mxu0 %v5736
    %8093 = vmatpush1.bf16.msra.mxu0 %v5735
    %8094 = vmatprep.subr.bf16.mxu0 %v5760
    %8095 = vmatpush1.bf16.msra.mxu0 %v5759
    %8096 = vmatprep.subr.bf16.mxu0 %v5784
    %8097 = vmatpush1.bf16.msra.mxu0 %v5783
    %8098 = vmatprep.subr.bf16.mxu0 %v5808
    %8099 = vmatpush1.bf16.msra.mxu0 %v5807
    %8100 = vmatprep.subr.bf16.mxu0 %v5832
    %8101 = vmatpush1.bf16.msra.mxu0 %v5831
    %8102 = vmatprep.subr.bf16.mxu0 %v5856
    %8103 = vmatpush1.bf16.msra.mxu0 %v5855
    %8104 = vmatprep.subr.bf16.mxu0 %v5880
    %8105 = vmatpush1.bf16.msra.mxu0 %v5879
    %8106 = vmatprep.subr.bf16.mxu0 %v5904
    %8107 = vmatpush1.bf16.msra.mxu0 %v5903
    %8108 = vmatprep.subr.bf16.mxu0 %v5928
    %8109 = vmatpush1.bf16.msra.mxu0 %v5927
    %8110 = vmatprep.mubr.bf16.mxu0 %v1322
    %8111 = vmatmul.mubr.bf16.gmra.mrb[0].mxu0 %v1321
    %v8112 = vpop.f32.mrb[0].mxu0
    %v8113 = vadd.f32 %v8070, %v8112
    %v8114 = vpop.f32.mrb[0].mxu0
    %v8115 = vadd.f32 %v8072, %v8114
    %v8116 = vpop.f32.mrb[0].mxu0
    %v8117 = vadd.f32 %v8074, %v8116
    %v8118 = vpop.f32.mrb[0].mxu0
    %v8119 = vadd.f32 %v8076, %v8118
    %8120 = vdwg.mxu0
    %8121 = vmatprep.subr.bf16.mxu0 %v4802
    %8122 = vmatpush1.bf16.msra.mxu0 %v4801
    %8123 = vmatprep.subr.bf16.mxu0 %v4826
    %8124 = vmatpush1.bf16.msra.mxu0 %v4825
    %8125 = vmatprep.subr.bf16.mxu0 %v4850
    %8126 = vmatpush1.bf16.msra.mxu0 %v4849
    %8127 = vmatprep.subr.bf16.mxu0 %v4874
    %8128 = vmatpush1.bf16.msra.mxu0 %v4873
    %8129 = vmatprep.subr.bf16.mxu0 %v4898
    %8130 = vmatpush1.bf16.msra.mxu0 %v4897
    %8131 = vmatprep.subr.bf16.mxu0 %v4922
    %8132 = vmatpush1.bf16.msra.mxu0 %v4921
    %8133 = vmatprep.subr.bf16.mxu0 %v4946
    %8134 = vmatpush1.bf16.msra.mxu0 %v4945
    %8135 = vmatprep.subr.bf16.mxu0 %v4970
    %8136 = vmatpush1.bf16.msra.mxu0 %v4969
    %8137 = vmatprep.subr.bf16.mxu0 %v4994
    %8138 = vmatpush1.bf16.msra.mxu0 %v4993
    %8139 = vmatprep.subr.bf16.mxu0 %v5018
    %8140 = vmatpush1.bf16.msra.mxu0 %v5017
    %8141 = vmatprep.subr.bf16.mxu0 %v5042
    %8142 = vmatpush1.bf16.msra.mxu0 %v5041
    %8143 = vmatprep.subr.bf16.mxu0 %v5066
    %8144 = vmatpush1.bf16.msra.mxu0 %v5065
    %8145 = vmatprep.subr.bf16.mxu0 %v5090
    %8146 = vmatpush1.bf16.msra.mxu0 %v5089
    %8147 = vmatprep.subr.bf16.mxu0 %v5114
    %8148 = vmatpush1.bf16.msra.mxu0 %v5113
    %8149 = vmatprep.subr.bf16.mxu0 %v5138
    %8150 = vmatpush1.bf16.msra.mxu0 %v5137
    %8151 = vmatprep.subr.bf16.mxu0 %v5162
    %8152 = vmatpush1.bf16.msra.mxu0 %v5161
    %8153 = vmatprep.mubr.bf16.mxu0 %v1318
    %8154 = vmatmul.mubr.bf16.gmra.mrb[0].mxu0 %v1317
    %v8155 = vpop.f32.mrb[0].mxu0
    %v8156 = vadd.f32 %v1246, %v8155
    %v8157 = vpop.f32.mrb[0].mxu0
    %v8158 = vadd.f32 %v1250, %v8157
    %v8159 = vpop.f32.mrb[0].mxu0
    %v8160 = vadd.f32 %v1246, %v8159
    %v8161 = vpop.f32.mrb[0].mxu0
    %v8162 = vadd.f32 %v1250, %v8161
    %8163 = vdwg.mxu0
    %8164 = vmatprep.subr.bf16.mxu0 %v5186
    %8165 = vmatpush1.bf16.msra.mxu0 %v5185
    %8166 = vmatprep.subr.bf16.mxu0 %v5210
    %8167 = vmatpush1.bf16.msra.mxu0 %v5209
    %8168 = vmatprep.subr.bf16.mxu0 %v5234
    %8169 = vmatpush1.bf16.msra.mxu0 %v5233
    %8170 = vmatprep.subr.bf16.mxu0 %v5258
    %8171 = vmatpush1.bf16.msra.mxu0 %v5257
    %8172 = vmatprep.subr.bf16.mxu0 %v5282
    %8173 = vmatpush1.bf16.msra.mxu0 %v5281
    %8174 = vmatprep.subr.bf16.mxu0 %v5306
    %8175 = vmatpush1.bf16.msra.mxu0 %v5305
    %8176 = vmatprep.subr.bf16.mxu0 %v5330
    %8177 = vmatpush1.bf16.msra.mxu0 %v5329
    %8178 = vmatprep.subr.bf16.mxu0 %v5354
    %8179 = vmatpush1.bf16.msra.mxu0 %v5353
    %8180 = vmatprep.subr.bf16.mxu0 %v5378
    %8181 = vmatpush1.bf16.msra.mxu0 %v5377
    %8182 = vmatprep.subr.bf16.mxu0 %v5402
    %8183 = vmatpush1.bf16.msra.mxu0 %v5401
    %8184 = vmatprep.subr.bf16.mxu0 %v5426
    %8185 = vmatpush1.bf16.msra.mxu0 %v5425
    %8186 = vmatprep.subr.bf16.mxu0 %v5450
    %8187 = vmatpush1.bf16.msra.mxu0 %v5449
    %8188 = vmatprep.subr.bf16.mxu0 %v5474
    %8189 = vmatpush1.bf16.msra.mxu0 %v5473
    %8190 = vmatprep.subr.bf16.mxu0 %v5498
    %8191 = vmatpush1.bf16.msra.mxu0 %v5497
    %8192 = vmatprep.subr.bf16.mxu0 %v5522
    %8193 = vmatpush1.bf16.msra.mxu0 %v5521
    %8194 = vmatprep.subr.bf16.mxu0 %v5546
    %8195 = vmatpush1.bf16.msra.mxu0 %v5545
    %8196 = vmatprep.mubr.bf16.mxu0 %v1320
    %8197 = vmatmul.mubr.bf16.gmra.mrb[0].mxu0 %v1319
    %v8198 = vpop.f32.mrb[0].mxu0
    %v8199 = vadd.f32 %v8156, %v8198
    %v8200 = vpop.f32.mrb[0].mxu0
    %v8201 = vadd.f32 %v8158, %v8200
    %v8202 = vpop.f32.mrb[0].mxu0
    %v8203 = vadd.f32 %v8160, %v8202
    %v8204 = vpop.f32.mrb[0].mxu0
    %v8205 = vadd.f32 %v8162, %v8204
    %8206 = vdwg.mxu0
    %8207 = vmatprep.subr.bf16.mxu0 %v5570
    %8208 = vmatpush1.bf16.msra.mxu0 %v5569
    %8209 = vmatprep.subr.bf16.mxu0 %v5594
    %8210 = vmatpush1.bf16.msra.mxu0 %v5593
    %8211 = vmatprep.subr.bf16.mxu0 %v5618
    %8212 = vmatpush1.bf16.msra.mxu0 %v5617
    %8213 = vmatprep.subr.bf16.mxu0 %v5642
    %8214 = vmatpush1.bf16.msra.mxu0 %v5641
    %8215 = vmatprep.subr.bf16.mxu0 %v5666
    %8216 = vmatpush1.bf16.msra.mxu0 %v5665
    %8217 = vmatprep.subr.bf16.mxu0 %v5690
    %8218 = vmatpush1.bf16.msra.mxu0 %v5689
    %8219 = vmatprep.subr.bf16.mxu0 %v5714
    %8220 = vmatpush1.bf16.msra.mxu0 %v5713
    %8221 = vmatprep.subr.bf16.mxu0 %v5738
    %8222 = vmatpush1.bf16.msra.mxu0 %v5737
    %8223 = vmatprep.subr.bf16.mxu0 %v5762
    %8224 = vmatpush1.bf16.msra.mxu0 %v5761
    %8225 = vmatprep.subr.bf16.mxu0 %v5786
    %8226 = vmatpush1.bf16.msra.mxu0 %v5785
    %8227 = vmatprep.subr.bf16.mxu0 %v5810
    %8228 = vmatpush1.bf16.msra.mxu0 %v5809
    %8229 = vmatprep.subr.bf16.mxu0 %v5834
    %8230 = vmatpush1.bf16.msra.mxu0 %v5833
    %8231 = vmatprep.subr.bf16.mxu0 %v5858
    %8232 = vmatpush1.bf16.msra.mxu0 %v5857
    %8233 = vmatprep.subr.bf16.mxu0 %v5882
    %8234 = vmatpush1.bf16.msra.mxu0 %v5881
    %8235 = vmatprep.subr.bf16.mxu0 %v5906
    %8236 = vmatpush1.bf16.msra.mxu0 %v5905
    %8237 = vmatprep.subr.bf16.mxu0 %v5930
    %8238 = vmatpush1.bf16.msra.mxu0 %v5929
    %8239 = vmatprep.mubr.bf16.mxu0 %v1322
    %8240 = vmatmul.mubr.bf16.gmra.mrb[0].mxu0 %v1321
    %v8241 = vpop.f32.mrb[0].mxu0
    %v8242 = vadd.f32 %v8199, %v8241
    %v8243 = vpop.f32.mrb[0].mxu0
    %v8244 = vadd.f32 %v8201, %v8243
    %v8245 = vpop.f32.mrb[0].mxu0
    %v8246 = vadd.f32 %v8203, %v8245
    %v8247 = vpop.f32.mrb[0].mxu0
    %v8248 = vadd.f32 %v8205, %v8247
    %8249 = vdwg.mxu0
    %8250 = vmatprep.subr.bf16.mxu0 %v4804
    %8251 = vmatpush1.bf16.msra.mxu0 %v4803
    %8252 = vmatprep.subr.bf16.mxu0 %v4828
    %8253 = vmatpush1.bf16.msra.mxu0 %v4827
    %8254 = vmatprep.subr.bf16.mxu0 %v4852
    %8255 = vmatpush1.bf16.msra.mxu0 %v4851
    %8256 = vmatprep.subr.bf16.mxu0 %v4876
    %8257 = vmatpush1.bf16.msra.mxu0 %v4875
    %8258 = vmatprep.subr.bf16.mxu0 %v4900
    %8259 = vmatpush1.bf16.msra.mxu0 %v4899
    %8260 = vmatprep.subr.bf16.mxu0 %v4924
    %8261 = vmatpush1.bf16.msra.mxu0 %v4923
    %8262 = vmatprep.subr.bf16.mxu0 %v4948
    %8263 = vmatpush1.bf16.msra.mxu0 %v4947
    %8264 = vmatprep.subr.bf16.mxu0 %v4972
    %8265 = vmatpush1.bf16.msra.mxu0 %v4971
    %8266 = vmatprep.subr.bf16.mxu0 %v4996
    %8267 = vmatpush1.bf16.msra.mxu0 %v4995
    %8268 = vmatprep.subr.bf16.mxu0 %v5020
    %8269 = vmatpush1.bf16.msra.mxu0 %v5019
    %8270 = vmatprep.subr.bf16.mxu0 %v5044
    %8271 = vmatpush1.bf16.msra.mxu0 %v5043
    %8272 = vmatprep.subr.bf16.mxu0 %v5068
    %8273 = vmatpush1.bf16.msra.mxu0 %v5067
    %8274 = vmatprep.subr.bf16.mxu0 %v5092
    %8275 = vmatpush1.bf16.msra.mxu0 %v5091
    %8276 = vmatprep.subr.bf16.mxu0 %v5116
    %8277 = vmatpush1.bf16.msra.mxu0 %v5115
    %8278 = vmatprep.subr.bf16.mxu0 %v5140
    %8279 = vmatpush1.bf16.msra.mxu0 %v5139
    %8280 = vmatprep.subr.bf16.mxu0 %v5164
    %8281 = vmatpush1.bf16.msra.mxu0 %v5163
    %8282 = vmatprep.mubr.bf16.mxu0 %v1318
    %8283 = vmatmul.mubr.bf16.gmra.mrb[0].mxu0 %v1317
    %v8284 = vpop.f32.mrb[0].mxu0
    %v8285 = vadd.f32 %v1254, %v8284
    %v8286 = vpop.f32.mrb[0].mxu0
    %v8287 = vadd.f32 %v1258, %v8286
    %v8288 = vpop.f32.mrb[0].mxu0
    %v8289 = vadd.f32 %v1254, %v8288
    %v8290 = vpop.f32.mrb[0].mxu0
    %v8291 = vadd.f32 %v1258, %v8290
    %8292 = vdwg.mxu0
    %8293 = vmatprep.subr.bf16.mxu0 %v5188
    %8294 = vmatpush1.bf16.msra.mxu0 %v5187
    %8295 = vmatprep.subr.bf16.mxu0 %v5212
    %8296 = vmatpush1.bf16.msra.mxu0 %v5211
    %8297 = vmatprep.subr.bf16.mxu0 %v5236
    %8298 = vmatpush1.bf16.msra.mxu0 %v5235
    %8299 = vmatprep.subr.bf16.mxu0 %v5260
    %8300 = vmatpush1.bf16.msra.mxu0 %v5259
    %8301 = vmatprep.subr.bf16.mxu0 %v5284
    %8302 = vmatpush1.bf16.msra.mxu0 %v5283
    %8303 = vmatprep.subr.bf16.mxu0 %v5308
    %8304 = vmatpush1.bf16.msra.mxu0 %v5307
    %8305 = vmatprep.subr.bf16.mxu0 %v5332
    %8306 = vmatpush1.bf16.msra.mxu0 %v5331
    %8307 = vmatprep.subr.bf16.mxu0 %v5356
    %8308 = vmatpush1.bf16.msra.mxu0 %v5355
    %8309 = vmatprep.subr.bf16.mxu0 %v5380
    %8310 = vmatpush1.bf16.msra.mxu0 %v5379
    %8311 = vmatprep.subr.bf16.mxu0 %v5404
    %8312 = vmatpush1.bf16.msra.mxu0 %v5403
    %8313 = vmatprep.subr.bf16.mxu0 %v5428
    %8314 = vmatpush1.bf16.msra.mxu0 %v5427
    %8315 = vmatprep.subr.bf16.mxu0 %v5452
    %8316 = vmatpush1.bf16.msra.mxu0 %v5451
    %8317 = vmatprep.subr.bf16.mxu0 %v5476
    %8318 = vmatpush1.bf16.msra.mxu0 %v5475
    %8319 = vmatprep.subr.bf16.mxu0 %v5500
    %8320 = vmatpush1.bf16.msra.mxu0 %v5499
    %8321 = vmatprep.subr.bf16.mxu0 %v5524
    %8322 = vmatpush1.bf16.msra.mxu0 %v5523
    %8323 = vmatprep.subr.bf16.mxu0 %v5548
    %8324 = vmatpush1.bf16.msra.mxu0 %v5547
    %8325 = vmatprep.mubr.bf16.mxu0 %v1320
    %8326 = vmatmul.mubr.bf16.gmra.mrb[0].mxu0 %v1319
    %v8327 = vpop.f32.mrb[0].mxu0
    %v8328 = vadd.f32 %v8285, %v8327
    %v8329 = vpop.f32.mrb[0].mxu0
    %v8330 = vadd.f32 %v8287, %v8329
    %v8331 = vpop.f32.mrb[0].mxu0
    %v8332 = vadd.f32 %v8289, %v8331
    %v8333 = vpop.f32.mrb[0].mxu0
    %v8334 = vadd.f32 %v8291, %v8333
    %8335 = vdwg.mxu0
    %8336 = vmatprep.subr.bf16.mxu0 %v5572
    %8337 = vmatpush1.bf16.msra.mxu0 %v5571
    %8338 = vmatprep.subr.bf16.mxu0 %v5596
    %8339 = vmatpush1.bf16.msra.mxu0 %v5595
    %8340 = vmatprep.subr.bf16.mxu0 %v5620
    %8341 = vmatpush1.bf16.msra.mxu0 %v5619
    %8342 = vmatprep.subr.bf16.mxu0 %v5644
    %8343 = vmatpush1.bf16.msra.mxu0 %v5643
    %8344 = vmatprep.subr.bf16.mxu0 %v5668
    %8345 = vmatpush1.bf16.msra.mxu0 %v5667
    %8346 = vmatprep.subr.bf16.mxu0 %v5692
    %8347 = vmatpush1.bf16.msra.mxu0 %v5691
    %8348 = vmatprep.subr.bf16.mxu0 %v5716
    %8349 = vmatpush1.bf16.msra.mxu0 %v5715
    %8350 = vmatprep.subr.bf16.mxu0 %v5740
    %8351 = vmatpush1.bf16.msra.mxu0 %v5739
    %8352 = vmatprep.subr.bf16.mxu0 %v5764
    %8353 = vmatpush1.bf16.msra.mxu0 %v5763
    %8354 = vmatprep.subr.bf16.mxu0 %v5788
    %8355 = vmatpush1.bf16.msra.mxu0 %v5787
    %8356 = vmatprep.subr.bf16.mxu0 %v5812
    %8357 = vmatpush1.bf16.msra.mxu0 %v5811
    %8358 = vmatprep.subr.bf16.mxu0 %v5836
    %8359 = vmatpush1.bf16.msra.mxu0 %v5835
    %8360 = vmatprep.subr.bf16.mxu0 %v5860
    %8361 = vmatpush1.bf16.msra.mxu0 %v5859
    %8362 = vmatprep.subr.bf16.mxu0 %v5884
    %8363 = vmatpush1.bf16.msra.mxu0 %v5883
    %8364 = vmatprep.subr.bf16.mxu0 %v5908
    %8365 = vmatpush1.bf16.msra.mxu0 %v5907
    %8366 = vmatprep.subr.bf16.mxu0 %v5932
    %8367 = vmatpush1.bf16.msra.mxu0 %v5931
    %8368 = vmatprep.mubr.bf16.mxu0 %v1322
    %8369 = vmatmul.mubr.bf16.gmra.mrb[0].mxu0 %v1321
    %v8370 = vpop.f32.mrb[0].mxu0
    %v8371 = vadd.f32 %v8328, %v8370
    %v8372 = vpop.f32.mrb[0].mxu0
    %v8373 = vadd.f32 %v8330, %v8372
    %v8374 = vpop.f32.mrb[0].mxu0
    %v8375 = vadd.f32 %v8332, %v8374
    %v8376 = vpop.f32.mrb[0].mxu0
    %v8377 = vadd.f32 %v8334, %v8376
    %8378 = vdwg.mxu0
    %8379 = vmatprep.subr.bf16.mxu0 %v4806
    %8380 = vmatpush1.bf16.msra.mxu0 %v4805
    %8381 = vmatprep.subr.bf16.mxu0 %v4830
    %8382 = vmatpush1.bf16.msra.mxu0 %v4829
    %8383 = vmatprep.subr.bf16.mxu0 %v4854
    %8384 = vmatpush1.bf16.msra.mxu0 %v4853
    %8385 = vmatprep.subr.bf16.mxu0 %v4878
    %8386 = vmatpush1.bf16.msra.mxu0 %v4877
    %8387 = vmatprep.subr.bf16.mxu0 %v4902
    %8388 = vmatpush1.bf16.msra.mxu0 %v4901
    %8389 = vmatprep.subr.bf16.mxu0 %v4926
    %8390 = vmatpush1.bf16.msra.mxu0 %v4925
    %8391 = vmatprep.subr.bf16.mxu0 %v4950
    %8392 = vmatpush1.bf16.msra.mxu0 %v4949
    %8393 = vmatprep.subr.bf16.mxu0 %v4974
    %8394 = vmatpush1.bf16.msra.mxu0 %v4973
    %8395 = vmatprep.subr.bf16.mxu0 %v4998
    %8396 = vmatpush1.bf16.msra.mxu0 %v4997
    %8397 = vmatprep.subr.bf16.mxu0 %v5022
    %8398 = vmatpush1.bf16.msra.mxu0 %v5021
    %8399 = vmatprep.subr.bf16.mxu0 %v5046
    %8400 = vmatpush1.bf16.msra.mxu0 %v5045
    %8401 = vmatprep.subr.bf16.mxu0 %v5070
    %8402 = vmatpush1.bf16.msra.mxu0 %v5069
    %8403 = vmatprep.subr.bf16.mxu0 %v5094
    %8404 = vmatpush1.bf16.msra.mxu0 %v5093
    %8405 = vmatprep.subr.bf16.mxu0 %v5118
    %8406 = vmatpush1.bf16.msra.mxu0 %v5117
    %8407 = vmatprep.subr.bf16.mxu0 %v5142
    %8408 = vmatpush1.bf16.msra.mxu0 %v5141
    %8409 = vmatprep.subr.bf16.mxu0 %v5166
    %8410 = vmatpush1.bf16.msra.mxu0 %v5165
    %8411 = vmatprep.mubr.bf16.mxu0 %v1318
    %8412 = vmatmul.mubr.bf16.gmra.mrb[0].mxu0 %v1317
    %v8413 = vpop.f32.mrb[0].mxu0
    %v8414 = vadd.f32 %v1262, %v8413
    %v8415 = vpop.f32.mrb[0].mxu0
    %v8416 = vadd.f32 %v1266, %v8415
    %v8417 = vpop.f32.mrb[0].mxu0
    %v8418 = vadd.f32 %v1262, %v8417
    %v8419 = vpop.f32.mrb[0].mxu0
    %v8420 = vadd.f32 %v1266, %v8419
    %8421 = vdwg.mxu0
    %8422 = vmatprep.subr.bf16.mxu0 %v5190
    %8423 = vmatpush1.bf16.msra.mxu0 %v5189
    %8424 = vmatprep.subr.bf16.mxu0 %v5214
    %8425 = vmatpush1.bf16.msra.mxu0 %v5213
    %8426 = vmatprep.subr.bf16.mxu0 %v5238
    %8427 = vmatpush1.bf16.msra.mxu0 %v5237
    %8428 = vmatprep.subr.bf16.mxu0 %v5262
    %8429 = vmatpush1.bf16.msra.mxu0 %v5261
    %8430 = vmatprep.subr.bf16.mxu0 %v5286
    %8431 = vmatpush1.bf16.msra.mxu0 %v5285
    %8432 = vmatprep.subr.bf16.mxu0 %v5310
    %8433 = vmatpush1.bf16.msra.mxu0 %v5309
    %8434 = vmatprep.subr.bf16.mxu0 %v5334
    %8435 = vmatpush1.bf16.msra.mxu0 %v5333
    %8436 = vmatprep.subr.bf16.mxu0 %v5358
    %8437 = vmatpush1.bf16.msra.mxu0 %v5357
    %8438 = vmatprep.subr.bf16.mxu0 %v5382
    %8439 = vmatpush1.bf16.msra.mxu0 %v5381
    %8440 = vmatprep.subr.bf16.mxu0 %v5406
    %8441 = vmatpush1.bf16.msra.mxu0 %v5405
    %8442 = vmatprep.subr.bf16.mxu0 %v5430
    %8443 = vmatpush1.bf16.msra.mxu0 %v5429
    %8444 = vmatprep.subr.bf16.mxu0 %v5454
    %8445 = vmatpush1.bf16.msra.mxu0 %v5453
    %8446 = vmatprep.subr.bf16.mxu0 %v5478
    %8447 = vmatpush1.bf16.msra.mxu0 %v5477
    %8448 = vmatprep.subr.bf16.mxu0 %v5502
    %8449 = vmatpush1.bf16.msra.mxu0 %v5501
    %8450 = vmatprep.subr.bf16.mxu0 %v5526
    %8451 = vmatpush1.bf16.msra.mxu0 %v5525
    %8452 = vmatprep.subr.bf16.mxu0 %v5550
    %8453 = vmatpush1.bf16.msra.mxu0 %v5549
    %8454 = vmatprep.mubr.bf16.mxu0 %v1320
    %8455 = vmatmul.mubr.bf16.gmra.mrb[0].mxu0 %v1319
    %v8456 = vpop.f32.mrb[0].mxu0
    %v8457 = vadd.f32 %v8414, %v8456
    %v8458 = vpop.f32.mrb[0].mxu0
    %v8459 = vadd.f32 %v8416, %v8458
    %v8460 = vpop.f32.mrb[0].mxu0
    %v8461 = vadd.f32 %v8418, %v8460
    %v8462 = vpop.f32.mrb[0].mxu0
    %v8463 = vadd.f32 %v8420, %v8462
    %8464 = vdwg.mxu0
    %8465 = vmatprep.subr.bf16.mxu0 %v5574
    %8466 = vmatpush1.bf16.msra.mxu0 %v5573
    %8467 = vmatprep.subr.bf16.mxu0 %v5598
    %8468 = vmatpush1.bf16.msra.mxu0 %v5597
    %8469 = vmatprep.subr.bf16.mxu0 %v5622
    %8470 = vmatpush1.bf16.msra.mxu0 %v5621
    %8471 = vmatprep.subr.bf16.mxu0 %v5646
    %8472 = vmatpush1.bf16.msra.mxu0 %v5645
    %8473 = vmatprep.subr.bf16.mxu0 %v5670
    %8474 = vmatpush1.bf16.msra.mxu0 %v5669
    %8475 = vmatprep.subr.bf16.mxu0 %v5694
    %8476 = vmatpush1.bf16.msra.mxu0 %v5693
    %8477 = vmatprep.subr.bf16.mxu0 %v5718
    %8478 = vmatpush1.bf16.msra.mxu0 %v5717
    %8479 = vmatprep.subr.bf16.mxu0 %v5742
    %8480 = vmatpush1.bf16.msra.mxu0 %v5741
    %8481 = vmatprep.subr.bf16.mxu0 %v5766
    %8482 = vmatpush1.bf16.msra.mxu0 %v5765
    %8483 = vmatprep.subr.bf16.mxu0 %v5790
    %8484 = vmatpush1.bf16.msra.mxu0 %v5789
    %8485 = vmatprep.subr.bf16.mxu0 %v5814
    %8486 = vmatpush1.bf16.msra.mxu0 %v5813
    %8487 = vmatprep.subr.bf16.mxu0 %v5838
    %8488 = vmatpush1.bf16.msra.mxu0 %v5837
    %8489 = vmatprep.subr.bf16.mxu0 %v5862
    %8490 = vmatpush1.bf16.msra.mxu0 %v5861
    %8491 = vmatprep.subr.bf16.mxu0 %v5886
    %8492 = vmatpush1.bf16.msra.mxu0 %v5885
    %8493 = vmatprep.subr.bf16.mxu0 %v5910
    %8494 = vmatpush1.bf16.msra.mxu0 %v5909
    %8495 = vmatprep.subr.bf16.mxu0 %v5934
    %8496 = vmatpush1.bf16.msra.mxu0 %v5933
    %8497 = vmatprep.mubr.bf16.mxu0 %v1322
    %8498 = vmatmul.mubr.bf16.gmra.mrb[0].mxu0 %v1321
    %v8499 = vpop.f32.mrb[0].mxu0
    %v8500 = vadd.f32 %v8457, %v8499
    %v8501 = vpop.f32.mrb[0].mxu0
    %v8502 = vadd.f32 %v8459, %v8501
    %v8503 = vpop.f32.mrb[0].mxu0
    %v8504 = vadd.f32 %v8461, %v8503
    %v8505 = vpop.f32.mrb[0].mxu0
    %v8506 = vadd.f32 %v8463, %v8505
    %8507 = vdwg.mxu0
    %8508 = vmatprep.subr.bf16.mxu0 %v4808
    %8509 = vmatpush1.bf16.msra.mxu0 %v4807
    %8510 = vmatprep.subr.bf16.mxu0 %v4832
    %8511 = vmatpush1.bf16.msra.mxu0 %v4831
    %8512 = vmatprep.subr.bf16.mxu0 %v4856
    %8513 = vmatpush1.bf16.msra.mxu0 %v4855
    %8514 = vmatprep.subr.bf16.mxu0 %v4880
    %8515 = vmatpush1.bf16.msra.mxu0 %v4879
    %8516 = vmatprep.subr.bf16.mxu0 %v4904
    %8517 = vmatpush1.bf16.msra.mxu0 %v4903
    %8518 = vmatprep.subr.bf16.mxu0 %v4928
    %8519 = vmatpush1.bf16.msra.mxu0 %v4927
    %8520 = vmatprep.subr.bf16.mxu0 %v4952
    %8521 = vmatpush1.bf16.msra.mxu0 %v4951
    %8522 = vmatprep.subr.bf16.mxu0 %v4976
    %8523 = vmatpush1.bf16.msra.mxu0 %v4975
    %8524 = vmatprep.subr.bf16.mxu0 %v5000
    %8525 = vmatpush1.bf16.msra.mxu0 %v4999
    %8526 = vmatprep.subr.bf16.mxu0 %v5024
    %8527 = vmatpush1.bf16.msra.mxu0 %v5023
    %8528 = vmatprep.subr.bf16.mxu0 %v5048
    %8529 = vmatpush1.bf16.msra.mxu0 %v5047
    %8530 = vmatprep.subr.bf16.mxu0 %v5072
    %8531 = vmatpush1.bf16.msra.mxu0 %v5071
    %8532 = vmatprep.subr.bf16.mxu0 %v5096
    %8533 = vmatpush1.bf16.msra.mxu0 %v5095
    %8534 = vmatprep.subr.bf16.mxu0 %v5120
    %8535 = vmatpush1.bf16.msra.mxu0 %v5119
    %8536 = vmatprep.subr.bf16.mxu0 %v5144
    %8537 = vmatpush1.bf16.msra.mxu0 %v5143
    %8538 = vmatprep.subr.bf16.mxu0 %v5168
    %8539 = vmatpush1.bf16.msra.mxu0 %v5167
    %8540 = vmatprep.mubr.bf16.mxu0 %v1318
    %8541 = vmatmul.mubr.bf16.gmra.mrb[0].mxu0 %v1317
    %v8542 = vpop.f32.mrb[0].mxu0
    %v8543 = vadd.f32 %v1270, %v8542
    %v8544 = vpop.f32.mrb[0].mxu0
    %v8545 = vadd.f32 %v1274, %v8544
    %v8546 = vpop.f32.mrb[0].mxu0
    %v8547 = vadd.f32 %v1270, %v8546
    %v8548 = vpop.f32.mrb[0].mxu0
    %v8549 = vadd.f32 %v1274, %v8548
    %8550 = vdwg.mxu0
    %8551 = vmatprep.subr.bf16.mxu0 %v5192
    %8552 = vmatpush1.bf16.msra.mxu0 %v5191
    %8553 = vmatprep.subr.bf16.mxu0 %v5216
    %8554 = vmatpush1.bf16.msra.mxu0 %v5215
    %8555 = vmatprep.subr.bf16.mxu0 %v5240
    %8556 = vmatpush1.bf16.msra.mxu0 %v5239
    %8557 = vmatprep.subr.bf16.mxu0 %v5264
    %8558 = vmatpush1.bf16.msra.mxu0 %v5263
    %8559 = vmatprep.subr.bf16.mxu0 %v5288
    %8560 = vmatpush1.bf16.msra.mxu0 %v5287
    %8561 = vmatprep.subr.bf16.mxu0 %v5312
    %8562 = vmatpush1.bf16.msra.mxu0 %v5311
    %8563 = vmatprep.subr.bf16.mxu0 %v5336
    %8564 = vmatpush1.bf16.msra.mxu0 %v5335
    %8565 = vmatprep.subr.bf16.mxu0 %v5360
    %8566 = vmatpush1.bf16.msra.mxu0 %v5359
    %8567 = vmatprep.subr.bf16.mxu0 %v5384
    %8568 = vmatpush1.bf16.msra.mxu0 %v5383
    %8569 = vmatprep.subr.bf16.mxu0 %v5408
    %8570 = vmatpush1.bf16.msra.mxu0 %v5407
    %8571 = vmatprep.subr.bf16.mxu0 %v5432
    %8572 = vmatpush1.bf16.msra.mxu0 %v5431
    %8573 = vmatprep.subr.bf16.mxu0 %v5456
    %8574 = vmatpush1.bf16.msra.mxu0 %v5455
    %8575 = vmatprep.subr.bf16.mxu0 %v5480
    %8576 = vmatpush1.bf16.msra.mxu0 %v5479
    %8577 = vmatprep.subr.bf16.mxu0 %v5504
    %8578 = vmatpush1.bf16.msra.mxu0 %v5503
    %8579 = vmatprep.subr.bf16.mxu0 %v5528
    %8580 = vmatpush1.bf16.msra.mxu0 %v5527
    %8581 = vmatprep.subr.bf16.mxu0 %v5552
    %8582 = vmatpush1.bf16.msra.mxu0 %v5551
    %8583 = vmatprep.mubr.bf16.mxu0 %v1320
    %8584 = vmatmul.mubr.bf16.gmra.mrb[0].mxu0 %v1319
    %v8585 = vpop.f32.mrb[0].mxu0
    %v8586 = vadd.f32 %v8543, %v8585
    %v8587 = vpop.f32.mrb[0].mxu0
    %v8588 = vadd.f32 %v8545, %v8587
    %v8589 = vpop.f32.mrb[0].mxu0
    %v8590 = vadd.f32 %v8547, %v8589
    %v8591 = vpop.f32.mrb[0].mxu0
    %v8592 = vadd.f32 %v8549, %v8591
    %8593 = vdwg.mxu0
    %8594 = vmatprep.subr.bf16.mxu0 %v5576
    %8595 = vmatpush1.bf16.msra.mxu0 %v5575
    %8596 = vmatprep.subr.bf16.mxu0 %v5600
    %8597 = vmatpush1.bf16.msra.mxu0 %v5599
    %8598 = vmatprep.subr.bf16.mxu0 %v5624
    %8599 = vmatpush1.bf16.msra.mxu0 %v5623
    %8600 = vmatprep.subr.bf16.mxu0 %v5648
    %8601 = vmatpush1.bf16.msra.mxu0 %v5647
    %8602 = vmatprep.subr.bf16.mxu0 %v5672
    %8603 = vmatpush1.bf16.msra.mxu0 %v5671
    %8604 = vmatprep.subr.bf16.mxu0 %v5696
    %8605 = vmatpush1.bf16.msra.mxu0 %v5695
    %8606 = vmatprep.subr.bf16.mxu0 %v5720
    %8607 = vmatpush1.bf16.msra.mxu0 %v5719
    %8608 = vmatprep.subr.bf16.mxu0 %v5744
    %8609 = vmatpush1.bf16.msra.mxu0 %v5743
    %8610 = vmatprep.subr.bf16.mxu0 %v5768
    %8611 = vmatpush1.bf16.msra.mxu0 %v5767
    %8612 = vmatprep.subr.bf16.mxu0 %v5792
    %8613 = vmatpush1.bf16.msra.mxu0 %v5791
    %8614 = vmatprep.subr.bf16.mxu0 %v5816
    %8615 = vmatpush1.bf16.msra.mxu0 %v5815
    %8616 = vmatprep.subr.bf16.mxu0 %v5840
    %8617 = vmatpush1.bf16.msra.mxu0 %v5839
    %8618 = vmatprep.subr.bf16.mxu0 %v5864
    %8619 = vmatpush1.bf16.msra.mxu0 %v5863
    %8620 = vmatprep.subr.bf16.mxu0 %v5888
    %8621 = vmatpush1.bf16.msra.mxu0 %v5887
    %8622 = vmatprep.subr.bf16.mxu0 %v5912
    %8623 = vmatpush1.bf16.msra.mxu0 %v5911
    %8624 = vmatprep.subr.bf16.mxu0 %v5936
    %8625 = vmatpush1.bf16.msra.mxu0 %v5935
    %8626 = vmatprep.mubr.bf16.mxu0 %v1322
    %8627 = vmatmul.mubr.bf16.gmra.mrb[0].mxu0 %v1321
    %v8628 = vpop.f32.mrb[0].mxu0
    %v8629 = vadd.f32 %v8586, %v8628
    %v8630 = vpop.f32.mrb[0].mxu0
    %v8631 = vadd.f32 %v8588, %v8630
    %v8632 = vpop.f32.mrb[0].mxu0
    %v8633 = vadd.f32 %v8590, %v8632
    %v8634 = vpop.f32.mrb[0].mxu0
    %v8635 = vadd.f32 %v8592, %v8634
    %8636 = vdwg.mxu0
    %v8637 = vmul.f32 %v7210, 0.5
    %v8638 = vmul.f32 %v7212, 0.5
    %v8639 = vmul.f32 %v7339, 0.5
    %v8640 = vmul.f32 %v7341, 0.5
    %v8641 = vmul.f32 %v7468, 0.5
    %v8642 = vmul.f32 %v7470, 0.5
    %v8643 = vmul.f32 %v7597, 0.5
    %v8644 = vmul.f32 %v7599, 0.5
    %v8645 = vmul.f32 %v7726, 0.5
    %v8646 = vmul.f32 %v7728, 0.5
    %v8647 = vmul.f32 %v7855, 0.5
    %v8648 = vmul.f32 %v7857, 0.5
    %v8649 = vmul.f32 %v7984, 0.5
    %v8650 = vmul.f32 %v7986, 0.5
    %v8651 = vmul.f32 %v8113, 0.5
    %v8652 = vmul.f32 %v8115, 0.5
    %v8653 = vmul.f32 %v8242, 0.5
    %v8654 = vmul.f32 %v8244, 0.5
    %v8655 = vmul.f32 %v8371, 0.5
    %v8656 = vmul.f32 %v8373, 0.5
    %v8657 = vmul.f32 %v8500, 0.5
    %v8658 = vmul.f32 %v8502, 0.5
    %v8659 = vmul.f32 %v8629, 0.5
    %v8660 = vmul.f32 %v8631, 0.5
    %v8661 = vmul.f32 %v7214, 0.5
    %v8662 = vmul.f32 %v7216, 0.5
    %v8663 = vmul.f32 %v7343, 0.5
    %v8664 = vmul.f32 %v7345, 0.5
    %v8665 = vmul.f32 %v7472, 0.5
    %v8666 = vmul.f32 %v7474, 0.5
    %v8667 = vmul.f32 %v7601, 0.5
    %v8668 = vmul.f32 %v7603, 0.5
    %v8669 = vmul.f32 %v7730, 0.5
    %v8670 = vmul.f32 %v7732, 0.5
    %v8671 = vmul.f32 %v7859, 0.5
    %v8672 = vmul.f32 %v7861, 0.5
    %v8673 = vmul.f32 %v7988, 0.5
    %v8674 = vmul.f32 %v7990, 0.5
    %v8675 = vmul.f32 %v8117, 0.5
    %v8676 = vmul.f32 %v8119, 0.5
    %v8677 = vmul.f32 %v8246, 0.5
    %v8678 = vmul.f32 %v8248, 0.5
    %v8679 = vmul.f32 %v8375, 0.5
    %v8680 = vmul.f32 %v8377, 0.5
    %v8681 = vmul.f32 %v8504, 0.5
    %v8682 = vmul.f32 %v8506, 0.5
    %v8683 = vmul.f32 %v8633, 0.5
    %v8684 = vmul.f32 %v8635, 0.5
    %v8685 = vmul.f32 %v7210, 0.70710677
    %v8686 = vmul.f32 %v7212, 0.70710677
    %v8687 = vmul.f32 %v7339, 0.70710677
    %v8688 = vmul.f32 %v7341, 0.70710677
    %v8689 = vmul.f32 %v7468, 0.70710677
    %v8690 = vmul.f32 %v7470, 0.70710677
    %v8691 = vmul.f32 %v7597, 0.70710677
    %v8692 = vmul.f32 %v7599, 0.70710677
    %v8693 = vmul.f32 %v7726, 0.70710677
    %v8694 = vmul.f32 %v7728, 0.70710677
    %v8695 = vmul.f32 %v7855, 0.70710677
    %v8696 = vmul.f32 %v7857, 0.70710677
    %v8697 = vmul.f32 %v7984, 0.70710677
    %v8698 = vmul.f32 %v7986, 0.70710677
    %v8699 = vmul.f32 %v8113, 0.70710677
    %v8700 = vmul.f32 %v8115, 0.70710677
    %v8701 = vmul.f32 %v8242, 0.70710677
    %v8702 = vmul.f32 %v8244, 0.70710677
    %v8703 = vmul.f32 %v8371, 0.70710677
    %v8704 = vmul.f32 %v8373, 0.70710677
    %v8705 = vmul.f32 %v8500, 0.70710677
    %v8706 = vmul.f32 %v8502, 0.70710677
    %v8707 = vmul.f32 %v8629, 0.70710677
    %v8708 = vmul.f32 %v8631, 0.70710677
    %v8709 = vmul.f32 %v7214, 0.70710677
    %v8710 = vmul.f32 %v7216, 0.70710677
    %v8711 = vmul.f32 %v7343, 0.70710677
    %v8712 = vmul.f32 %v7345, 0.70710677
    %v8713 = vmul.f32 %v7472, 0.70710677
    %v8714 = vmul.f32 %v7474, 0.70710677
    %v8715 = vmul.f32 %v7601, 0.70710677
    %v8716 = vmul.f32 %v7603, 0.70710677
    %v8717 = vmul.f32 %v7730, 0.70710677
    %v8718 = vmul.f32 %v7732, 0.70710677
    %v8719 = vmul.f32 %v7859, 0.70710677
    %v8720 = vmul.f32 %v7861, 0.70710677
    %v8721 = vmul.f32 %v7988, 0.70710677
    %v8722 = vmul.f32 %v7990, 0.70710677
    %v8723 = vmul.f32 %v8117, 0.70710677
    %v8724 = vmul.f32 %v8119, 0.70710677
    %v8725 = vmul.f32 %v8246, 0.70710677
    %v8726 = vmul.f32 %v8248, 0.70710677
    %v8727 = vmul.f32 %v8375, 0.70710677
    %v8728 = vmul.f32 %v8377, 0.70710677
    %v8729 = vmul.f32 %v8504, 0.70710677
    %v8730 = vmul.f32 %v8506, 0.70710677
    %v8731 = vmul.f32 %v8633, 0.70710677
    %v8732 = vmul.f32 %v8635, 0.70710677
    %v8733 = verf.f32.pop %v8685
    %v8734 = verf.f32.pop %v8686
    %v8735 = verf.f32.pop %v8687
    %v8736 = verf.f32.pop %v8688
    %v8737 = verf.f32.pop %v8689
    %v8738 = verf.f32.pop %v8690
    %v8739 = verf.f32.pop %v8691
    %v8740 = verf.f32.pop %v8692
    %v8741 = verf.f32.pop %v8693
    %v8742 = verf.f32.pop %v8694
    %v8743 = verf.f32.pop %v8695
    %v8744 = verf.f32.pop %v8696
    %v8745 = verf.f32.pop %v8697
    %v8746 = verf.f32.pop %v8698
    %v8747 = verf.f32.pop %v8699
    %v8748 = verf.f32.pop %v8700
    %v8749 = verf.f32.pop %v8701
    %v8750 = verf.f32.pop %v8702
    %v8751 = verf.f32.pop %v8703
    %v8752 = verf.f32.pop %v8704
    %v8753 = verf.f32.pop %v8705
    %v8754 = verf.f32.pop %v8706
    %v8755 = verf.f32.pop %v8707
    %v8756 = verf.f32.pop %v8708
    %v8757 = verf.f32.pop %v8709
    %v8758 = verf.f32.pop %v8710
    %v8759 = verf.f32.pop %v8711
    %v8760 = verf.f32.pop %v8712
    %v8761 = verf.f32.pop %v8713
    %v8762 = verf.f32.pop %v8714
    %v8763 = verf.f32.pop %v8715
    %v8764 = verf.f32.pop %v8716
    %v8765 = verf.f32.pop %v8717
    %v8766 = verf.f32.pop %v8718
    %v8767 = verf.f32.pop %v8719
    %v8768 = verf.f32.pop %v8720
    %v8769 = verf.f32.pop %v8721
    %v8770 = verf.f32.pop %v8722
    %v8771 = verf.f32.pop %v8723
    %v8772 = verf.f32.pop %v8724
    %v8773 = verf.f32.pop %v8725
    %v8774 = verf.f32.pop %v8726
    %v8775 = verf.f32.pop %v8727
    %v8776 = verf.f32.pop %v8728
    %v8777 = verf.f32.pop %v8729
    %v8778 = verf.f32.pop %v8730
    %v8779 = verf.f32.pop %v8731
    %v8780 = verf.f32.pop %v8732
    %v8781 = vadd.f32 %v8733, 1.0
    %v8782 = vadd.f32 %v8734, 1.0
    %v8783 = vadd.f32 %v8735, 1.0
    %v8784 = vadd.f32 %v8736, 1.0
    %v8785 = vadd.f32 %v8737, 1.0
    %v8786 = vadd.f32 %v8738, 1.0
    %v8787 = vadd.f32 %v8739, 1.0
    %v8788 = vadd.f32 %v8740, 1.0
    %v8789 = vadd.f32 %v8741, 1.0
    %v8790 = vadd.f32 %v8742, 1.0
    %v8791 = vadd.f32 %v8743, 1.0
    %v8792 = vadd.f32 %v8744, 1.0
    %v8793 = vadd.f32 %v8745, 1.0
    %v8794 = vadd.f32 %v8746, 1.0
    %v8795 = vadd.f32 %v8747, 1.0
    %v8796 = vadd.f32 %v8748, 1.0
    %v8797 = vadd.f32 %v8749, 1.0
    %v8798 = vadd.f32 %v8750, 1.0
    %v8799 = vadd.f32 %v8751, 1.0
    %v8800 = vadd.f32 %v8752, 1.0
    %v8801 = vadd.f32 %v8753, 1.0
    %v8802 = vadd.f32 %v8754, 1.0
    %v8803 = vadd.f32 %v8755, 1.0
    %v8804 = vadd.f32 %v8756, 1.0
    %v8805 = vadd.f32 %v8757, 1.0
    %v8806 = vadd.f32 %v8758, 1.0
    %v8807 = vadd.f32 %v8759, 1.0
    %v8808 = vadd.f32 %v8760, 1.0
    %v8809 = vadd.f32 %v8761, 1.0
    %v8810 = vadd.f32 %v8762, 1.0
    %v8811 = vadd.f32 %v8763, 1.0
    %v8812 = vadd.f32 %v8764, 1.0
    %v8813 = vadd.f32 %v8765, 1.0
    %v8814 = vadd.f32 %v8766, 1.0
    %v8815 = vadd.f32 %v8767, 1.0
    %v8816 = vadd.f32 %v8768, 1.0
    %v8817 = vadd.f32 %v8769, 1.0
    %v8818 = vadd.f32 %v8770, 1.0
    %v8819 = vadd.f32 %v8771, 1.0
    %v8820 = vadd.f32 %v8772, 1.0
    %v8821 = vadd.f32 %v8773, 1.0
    %v8822 = vadd.f32 %v8774, 1.0
    %v8823 = vadd.f32 %v8775, 1.0
    %v8824 = vadd.f32 %v8776, 1.0
    %v8825 = vadd.f32 %v8777, 1.0
    %v8826 = vadd.f32 %v8778, 1.0
    %v8827 = vadd.f32 %v8779, 1.0
    %v8828 = vadd.f32 %v8780, 1.0
    %v8829 = vmul.f32 %v8637, %v8781
    %v8830 = vmul.f32 %v8638, %v8782
    %v8831 = vmul.f32 %v8639, %v8783
    %v8832 = vmul.f32 %v8640, %v8784
    %v8833 = vmul.f32 %v8641, %v8785
    %v8834 = vmul.f32 %v8642, %v8786
    %v8835 = vmul.f32 %v8643, %v8787
    %v8836 = vmul.f32 %v8644, %v8788
    %v8837 = vmul.f32 %v8645, %v8789
    %v8838 = vmul.f32 %v8646, %v8790
    %v8839 = vmul.f32 %v8647, %v8791
    %v8840 = vmul.f32 %v8648, %v8792
    %v8841 = vmul.f32 %v8649, %v8793
    %v8842 = vmul.f32 %v8650, %v8794
    %v8843 = vmul.f32 %v8651, %v8795
    %v8844 = vmul.f32 %v8652, %v8796
    %v8845 = vmul.f32 %v8653, %v8797
    %v8846 = vmul.f32 %v8654, %v8798
    %v8847 = vmul.f32 %v8655, %v8799
    %v8848 = vmul.f32 %v8656, %v8800
    %v8849 = vmul.f32 %v8657, %v8801
    %v8850 = vmul.f32 %v8658, %v8802
    %v8851 = vmul.f32 %v8659, %v8803
    %v8852 = vmul.f32 %v8660, %v8804
    %v8853 = vmul.f32 %v8661, %v8805
    %v8854 = vmul.f32 %v8662, %v8806
    %v8855 = vmul.f32 %v8663, %v8807
    %v8856 = vmul.f32 %v8664, %v8808
    %v8857 = vmul.f32 %v8665, %v8809
    %v8858 = vmul.f32 %v8666, %v8810
    %v8859 = vmul.f32 %v8667, %v8811
    %v8860 = vmul.f32 %v8668, %v8812
    %v8861 = vmul.f32 %v8669, %v8813
    %v8862 = vmul.f32 %v8670, %v8814
    %v8863 = vmul.f32 %v8671, %v8815
    %v8864 = vmul.f32 %v8672, %v8816
    %v8865 = vmul.f32 %v8673, %v8817
    %v8866 = vmul.f32 %v8674, %v8818
    %v8867 = vmul.f32 %v8675, %v8819
    %v8868 = vmul.f32 %v8676, %v8820
    %v8869 = vmul.f32 %v8677, %v8821
    %v8870 = vmul.f32 %v8678, %v8822
    %v8871 = vmul.f32 %v8679, %v8823
    %v8872 = vmul.f32 %v8680, %v8824
    %v8873 = vmul.f32 %v8681, %v8825
    %v8874 = vmul.f32 %v8682, %v8826
    %v8875 = vmul.f32 %v8683, %v8827
    %v8876 = vmul.f32 %v8684, %v8828
    %8877 = vst [vmem:[#allocation2] sm:$0xff] %v8829
    %8878 = vst [vmem:[#allocation2 + $0x8] sm:$0xff] %v8830
    %8879 = vst [vmem:[#allocation2 + $0x10] sm:$0xff] %v8831
    %8880 = vst [vmem:[#allocation2 + $0x18] sm:$0xff] %v8832
    %8881 = vst [vmem:[#allocation2 + $0x20] sm:$0xff] %v8833
    %8882 = vst [vmem:[#allocation2 + $0x28] sm:$0xff] %v8834
    %8883 = vst [vmem:[#allocation2 + $0x30] sm:$0xff] %v8835
    %8884 = vst [vmem:[#allocation2 + $0x38] sm:$0xff] %v8836
    %8885 = vst [vmem:[#allocation2 + $0x40] sm:$0xff] %v8837
    %8886 = vst [vmem:[#allocation2 + $0x48] sm:$0xff] %v8838
    %8887 = vst [vmem:[#allocation2 + $0x50] sm:$0xff] %v8839
    %8888 = vst [vmem:[#allocation2 + $0x58] sm:$0xff] %v8840
    %8889 = vst [vmem:[#allocation2 + $0x60] sm:$0xff] %v8841
    %8890 = vst [vmem:[#allocation2 + $0x68] sm:$0xff] %v8842
    %8891 = vst [vmem:[#allocation2 + $0x70] sm:$0xff] %v8843
    %8892 = vst [vmem:[#allocation2 + $0x78] sm:$0xff] %v8844
    %8893 = vst [vmem:[#allocation2 + $0x80] sm:$0xff] %v8845
    %8894 = vst [vmem:[#allocation2 + $0x88] sm:$0xff] %v8846
    %8895 = vst [vmem:[#allocation2 + $0x90] sm:$0xff] %v8847
    %8896 = vst [vmem:[#allocation2 + $0x98] sm:$0xff] %v8848
    %8897 = vst [vmem:[#allocation2 + $0xa0] sm:$0xff] %v8849
    %8898 = vst [vmem:[#allocation2 + $0xa8] sm:$0xff] %v8850
    %8899 = vst [vmem:[#allocation2 + $0xb0] sm:$0xff] %v8851
    %8900 = vst [vmem:[#allocation2 + $0xb8] sm:$0xff] %v8852
    %8901 = vst [vmem:[#allocation2 + $0xc0] sm:$0xff] %v8853
    %8902 = vst [vmem:[#allocation2 + $0xc8] sm:$0xff] %v8854
    %8903 = vst [vmem:[#allocation2 + $0xd0] sm:$0xff] %v8855
    %8904 = vst [vmem:[#allocation2 + $0xd8] sm:$0xff] %v8856
    %8905 = vst [vmem:[#allocation2 + $0xe0] sm:$0xff] %v8857
    %8906 = vst [vmem:[#allocation2 + $0xe8] sm:$0xff] %v8858
    %8907 = vst [vmem:[#allocation2 + $0xf0] sm:$0xff] %v8859
    %8908 = vst [vmem:[#allocation2 + $0xf8] sm:$0xff] %v8860
    %8909 = vst [vmem:[#allocation2 + $0x100] sm:$0xff] %v8861
    %8910 = vst [vmem:[#allocation2 + $0x108] sm:$0xff] %v8862
    %8911 = vst [vmem:[#allocation2 + $0x110] sm:$0xff] %v8863
    %8912 = vst [vmem:[#allocation2 + $0x118] sm:$0xff] %v8864
    %8913 = vst [vmem:[#allocation2 + $0x120] sm:$0xff] %v8865
    %8914 = vst [vmem:[#allocation2 + $0x128] sm:$0xff] %v8866
    %8915 = vst [vmem:[#allocation2 + $0x130] sm:$0xff] %v8867
    %8916 = vst [vmem:[#allocation2 + $0x138] sm:$0xff] %v8868
    %8917 = vst [vmem:[#allocation2 + $0x140] sm:$0xff] %v8869
    %8918 = vst [vmem:[#allocation2 + $0x148] sm:$0xff] %v8870
    %8919 = vst [vmem:[#allocation2 + $0x150] sm:$0xff] %v8871
    %8920 = vst [vmem:[#allocation2 + $0x158] sm:$0xff] %v8872
    %8921 = vst [vmem:[#allocation2 + $0x160] sm:$0xff] %v8873
    %8922 = vst [vmem:[#allocation2 + $0x168] sm:$0xff] %v8874
    %8923 = vst [vmem:[#allocation2 + $0x170] sm:$0xff] %v8875
    %8924 = vst [vmem:[#allocation2 + $0x178] sm:$0xff] %v8876
    // Predicated region
    $region14: #{transformer_intermediate.1} parent=1 // pred_check
      _
    $region15: #{transformer_intermediate.1} parent=1 // pred_check_branch
      %8926 = sbr.rel (0) target = $region17
    $region16: #{transformer_intermediate.1} parent=1 // pred_region
      %s8928 = ssub.s32 6144, 6144
      %8929 = vsyncadd [#allocation3], %s8928
      %s8930 = sshll.u32 [#allocation2], 4
      %s8931 = int_to_ptr.vmem [resolvable:$true] %s8930
      %8936 = dma.vmem_to_hbm [thread:$0]  %s8931, 6144, %s3, [#allocation3], 3072, 3072, 192
    $region17: #{transformer_intermediate.1} parent=1 // pred_fallthru
      _
    // Predicated region
    $region18: #{transformer_intermediate.1} parent=1 // pred_check
      _
    $region19: #{transformer_intermediate.1} parent=1 // pred_check_branch
      %8938 = sbr.rel (0) target = $region21
    $region20: #{transformer_intermediate.1} parent=1 // pred_region
      %8939 = dma.done [#allocation3], 6144
    $region21: #{transformer_intermediate.1} parent=1 // pred_fallthru
      _
    %8940 = vsyncpa [#allocation3], 1

</llo_original>
